<compile_context>
chip_gen: v5e
topology: v5e:2x2
jax: 0.10.0
libtpu: 0.0.40
codegen_flags: <defaults>
</compile_context>

<pallas_src>
import jax
import jax.numpy as jnp
from jax.experimental import pallas as pl
from jax.experimental.pallas import tpu as pltpu

NUM_JOINTS = 24
NPOSE = NUM_JOINTS * 6          # 144
STATE = NPOSE + 10 + 3          # 157 = pose | shape | cam
SPAD = 256                      # lane-dense packed slab: pose|shape|cam|bbox|0
HIDDEN = 1024
N_ITER = 3


def _round_up(x, m):
    return ((x + m - 1) // m) * m


def _vmem_capacity_bytes():
    """Physical per-core VMEM; conservative (v7x) fallback if query fails."""
    try:
        return int(pltpu.get_tpu_info().vmem_capacity_bytes)
    except Exception:
        return 64 << 20


def _resident_spec(shape):
    """Grid-invariant operand: fetched once; single-buffered if supported."""
    idx = lambda i, _n=len(shape): (0,) * _n
    try:
        return pl.BlockSpec(shape, idx, pipeline_mode=pl.Buffered(1))
    except (TypeError, AttributeError):
        return pl.BlockSpec(shape, idx)


# ----------------------------------------------------------------------------
# Pallas kernel: avg-pool (lane-axis mean) + 3x iterative regression (IEF)
# ----------------------------------------------------------------------------
def _cliff_kernel(feat_ref, state0_ref,
                  w1f_ref, w1s_ref, b1_ref,
                  w2_ref, b2_ref, wd_ref, bd_ref,
                  pooled_out, state_out, xc_out):
    f32 = jnp.float32
    bf16 = jnp.bfloat16

    # AdaptiveAvgPool2d(1): features arrive in native layout [TB, C, HW]
    # (bf16, spatial axis on lanes). Mean over the lane axis runs on the
    # otherwise idle XLU; accumulation is in f32.
    hw = feat_ref.shape[-1]
    pooled = jnp.sum(feat_ref[...].astype(f32), axis=-1) * (1.0 / hw)  # [TB, C]
    tb = pooled.shape[0]

    # Packed state slab: lanes [0:144]=pose, [144:154]=shape, [154:157]=cam,
    # [157:160]=bbox_info (constant across iterations), [160:256]=0.
    state = state0_ref[...]                                            # [TB, SPAD] f32

    # Resident bf16 weights, read once.
    w1s = w1s_ref[...]                                                 # [SPAD, H]
    w2 = w2_ref[...]                                                   # [H, H]
    wd = wd_ref[...]                                                   # [H, SPAD]

    # Hoist bias broadcasts out of the unrolled loop (JAX does not CSE them).
    b2b = jnp.broadcast_to(b2_ref[...], (tb, HIDDEN))
    bdb = jnp.broadcast_to(bd_ref[...], (tb, SPAD))

    # Static part of fc1 (identical every iteration), computed once:
    #   base = pooled @ W1[:C] + b1   (bbox rows live inside w1_state now)
    base = (jnp.dot(pooled.astype(bf16), w1f_ref[...],
                    preferred_element_type=f32)
            + jnp.broadcast_to(b1_ref[...], (tb, HIDDEN)))             # [TB, H] f32

    # IEF loop, n_iter=3 (static unroll).  drop1/drop2: identity (eval mode).
    for _ in range(N_ITER):
        h1 = base + jnp.dot(state.astype(bf16), w1s,
                            preferred_element_type=f32)                # fc1
        xc = jnp.dot(h1.astype(bf16), w2,
                     preferred_element_type=f32) + b2b                 # fc2
        # fused decpose | decshape | deccam (padded cols have zero weight/bias)
        delta = jnp.dot(xc.astype(bf16), wd,
                        preferred_element_type=f32) + bdb
        state = state + delta                                          # residual, f32

    pooled_out[...] = pooled
    state_out[...] = state
    xc_out[...] = xc
    # TODO(synk): training-mode nn.Dropout (p=0.5) not implemented; inference
    # (identity) semantics are used, matching module.eval().


# ----------------------------------------------------------------------------
# Glue: rot6d -> rotation matrices (matches SPIN/CLIFF rot6d_to_rotmat)
# ----------------------------------------------------------------------------
def rot6d_to_rotmat(x):
    x = x.reshape(-1, 3, 2)
    a1 = x[:, :, 0]
    a2 = x[:, :, 1]
    eps = 1e-12  # F.normalize eps
    b1 = a1 / jnp.maximum(jnp.linalg.norm(a1, axis=1, keepdims=True), eps)
    proj = jnp.sum(b1 * a2, axis=1, keepdims=True)
    v2 = a2 - proj * b1
    b2 = v2 / jnp.maximum(jnp.linalg.norm(v2, axis=1, keepdims=True), eps)
    b3 = jnp.cross(b1, b2)
    return jnp.stack([b1, b2, b3], axis=-1)            # [N, 3, 3]


# ----------------------------------------------------------------------------
# Parameter construction (deterministic, synthetic) + static re-packing
# ----------------------------------------------------------------------------
def make_params(key, num_input_features):
    d_in = num_input_features + 3 + NPOSE + 13  # fc1 input dim
    keys = jax.random.split(key, 12)

    def linear_default(kw, kb, fan_in, fan_out):
        bound = 1.0 / jnp.sqrt(fan_in)
        w = jax.random.uniform(kw, (fan_in, fan_out), jnp.float32, -bound, bound)
        b = jax.random.uniform(kb, (1, fan_out), jnp.float32, -bound, bound)
        return w, b

    def xavier001(kw, kb, fan_in, fan_out):
        bound = 0.01 * jnp.sqrt(6.0 / (fan_in + fan_out))
        w = jax.random.uniform(kw, (fan_in, fan_out), jnp.float32, -bound, bound)
        bb = 1.0 / jnp.sqrt(fan_in)
        b = jax.random.uniform(kb, (1, fan_out), jnp.float32, -bb, bb)
        return w, b

    w1, b1 = linear_default(keys[0], keys[1], d_in, HIDDEN)
    w2, b2 = linear_default(keys[2], keys[3], HIDDEN, HIDDEN)
    wp, bp = xavier001(keys[4], keys[5], HIDDEN, NPOSE)
    ws, bs = xavier001(keys[6], keys[7], HIDDEN, 10)
    wc, bc = xavier001(keys[8], keys[9], HIDDEN, 3)

    # Synthetic stand-ins for SMPL_MEAN_PARAMS (deterministic, no file I/O).
    init_pose = 0.1 * jax.random.normal(keys[10], (1, NPOSE), jnp.float32)
    init_shape = 0.1 * jax.random.normal(keys[11], (1, 10), jnp.float32)
    init_cam = jnp.array([[0.9, 0.0, 0.0]], dtype=jnp.float32)

    return dict(w1=w1, b1=b1, w2=w2, b2=b2, wp=wp, bp=bp, ws=ws, bs=bs,
                wc=wc, bc=bc, init_pose=init_pose, init_shape=init_shape,
                init_cam=init_cam)


def prepare_params(params, num_input_features):
    """Static split of fc1, bbox-fold into the state slab, decoder fusion."""
    C = num_input_features
    bf16 = jnp.bfloat16
    w1 = params['w1']                                   # [C + 3 + 157, 1024]
    w1_feat = w1[:C, :].astype(bf16)                    # pooled-feature part

    # w1_state rows follow the state-slab lane layout:
    #   [0:157]  pose|shape|cam rows of fc1
    #   [157:160] bbox rows of fc1 (folded; bbox lives in state lanes 157:160)
    #   [160:256] zero padding
    w1_state = jnp.concatenate(
        [w1[C + 3:, :],                                  # pose|shape|cam
         w1[C:C + 3, :],                                 # bbox
         jnp.zeros((SPAD - STATE - 3, HIDDEN), jnp.float32)], axis=0).astype(bf16)

    # Fused decoder; padded columns (>= STATE) are exactly zero so the bbox /
    # padding lanes of the state slab are invariant across IEF iterations.
    wdec = jnp.concatenate([params['wp'], params['ws'], params['wc']], axis=1)
    wdec = jnp.pad(wdec, ((0, 0), (0, SPAD - STATE))).astype(bf16)
    bdec = jnp.concatenate([params['bp'], params['bs'], params['bc']], axis=1)
    bdec = jnp.pad(bdec, ((0, 0), (0, SPAD - STATE))).astype(jnp.float32)

    init_state = jnp.concatenate(
        [params['init_pose'], params['init_shape'], params['init_cam']],
        axis=1).astype(jnp.float32)                      # [1, 157]

    return dict(w1_feat=w1_feat, w1_state=w1_state,
                b1=params['b1'].astype(jnp.float32),
                w2=params['w2'].astype(bf16),
                b2=params['b2'].astype(jnp.float32),
                wdec=wdec, bdec=bdec, init_state=init_state)


# ----------------------------------------------------------------------------
# Wrapper
# ----------------------------------------------------------------------------
def cliff_head_forward(features_nchw, bbox_info, prep):
    B, C, H, W = features_nchw.shape
    HW = H * W

    # Native NCHW layout: pure reshape to [B, C, H*W] (no transpose/relayout)
    # + bf16 cast (in production the backbone would already emit bf16).
    feat = features_nchw.reshape(B, C, HW).astype(jnp.bfloat16)

    # Generation-aware budgets.
    vmem_phys = _vmem_capacity_bytes()
    if vmem_phys >= (100 << 20):          # v5e / v6e: 128 MiB per core
        feat_budget, vmem_cap, tb_max = 64 << 20, 96 << 20, 256
    else:                                 # v7x: 64 MiB per core
        feat_budget, vmem_cap, tb_max = 24 << 20, 48 << 20, 128

    # Batch tiling: >=8 sublanes, capped by the MXU row count and by the
    # double-buffered bf16 feature tile (+ f32 reduce temp) staying inside
    # the feature VMEM budget.
    feat_row_bytes = HW * C * 2                              # bf16
    tb_cap = max(8, (feat_budget // (4 * feat_row_bytes)) // 8 * 8)
    TB = min(tb_max, tb_cap, _round_up(B, 8))
    B_pad = _round_up(B, TB)
    # v7x megacore: ensure >= 2 grid steps (one per TensorCore) when possible.
    if B_pad // TB < 2 and B_pad > 8:
        TB = max(8, _round_up(-(-B_pad // 2), 8))
        B_pad = _round_up(B, TB)
    grid = (B_pad // TB,)
    # TODO(synk): very large H*W*C on v7x may still exceed the 48 MiB budget
    # at the TB=8 floor; a spatial-split grid axis with pl.when-finalized
    # partial sums would bound the working set in that case.

    def pad_b(x):
        return jnp.pad(x, ((0, B_pad - B),) + ((0, 0),) * (x.ndim - 1))

    feat_p = pad_b(feat)

    # Packed initial state slab [pose|shape|cam|bbox|0]; the bbox lanes see
    # zero decoder weight/bias so they persist across the IEF iterations.
    init = jnp.broadcast_to(prep['init_state'], (B, STATE))
    state0 = jnp.concatenate(
        [init, bbox_info.astype(jnp.float32),
         jnp.zeros((B, SPAD - STATE - 3), jnp.float32)], axis=1)
    state0 = pad_b(state0)

    in_specs = [
        pl.BlockSpec((TB, C, HW), lambda i: (i, 0, 0)),    # features (bf16)
        pl.BlockSpec((TB, SPAD), lambda i: (i, 0)),        # packed state slab
        _resident_spec((C, HIDDEN)),                       # w1_feat   (bf16)
        _resident_spec((SPAD, HIDDEN)),                    # w1_state  (bf16)
        _resident_spec((1, HIDDEN)),                       # b1
        _resident_spec((HIDDEN, HIDDEN)),                  # w2        (bf16)
        _resident_spec((1, HIDDEN)),                       # b2
        _resident_spec((HIDDEN, SPAD)),                    # wdec      (bf16)
        _resident_spec((1, SPAD)),                         # bdec
    ]
    out_specs = (
        pl.BlockSpec((TB, C), lambda i: (i, 0)),           # pooled features
        pl.BlockSpec((TB, SPAD), lambda i: (i, 0)),        # packed state
        pl.BlockSpec((TB, HIDDEN), lambda i: (i, 0)),      # body_feat2 (xc)
    )

    # VMEM budget: single-buffered resident weights, double-buffered batch I/O,
    # feature tile (2x bf16 buffers + f32 reduce temp), plus flat headroom.
    weight_bytes = 2 * (C * HIDDEN + SPAD * HIDDEN
                        + HIDDEN * HIDDEN + HIDDEN * SPAD)              # bf16
    bias_bytes = 4 * (2 * HIDDEN + SPAD)
    feat_vmem = TB * HW * C * (2 * 2 + 4)
    io_vmem = 2 * 4 * TB * (SPAD + C + SPAD + HIDDEN)
    vmem_limit = int(min(weight_bytes + bias_bytes + feat_vmem + io_vmem
                         + (12 << 20), vmem_cap))

    pooled_p, state_p, xc_p = pl.pallas_call(
        _cliff_kernel,
        grid=grid,
        out_shape=(
            jax.ShapeDtypeStruct((B_pad, C), jnp.float32),
            jax.ShapeDtypeStruct((B_pad, SPAD), jnp.float32),
            jax.ShapeDtypeStruct((B_pad, HIDDEN), jnp.float32),
        ),
        in_specs=in_specs,
        out_specs=out_specs,
        compiler_params=pltpu.CompilerParams(
            dimension_semantics=("parallel",),
            vmem_limit_bytes=vmem_limit),
    )(feat_p, state0,
      prep['w1_feat'], prep['w1_state'], prep['b1'],
      prep['w2'], prep['b2'], prep['wdec'], prep['bdec'])

    pooled = pooled_p[:B]
    state = state_p[:B]
    pred_pose = state[:, :NPOSE]
    pred_shape = state[:, NPOSE:NPOSE + 10]
    pred_cam = state[:, NPOSE + 10:STATE]
    xc = xc_p[:B]

    pred_rotmat = rot6d_to_rotmat(pred_pose).reshape(B, NUM_JOINTS, 3, 3)
    return {
        'pred_pose': pred_rotmat,
        'pred_cam': pred_cam,
        'pred_shape': pred_shape,
        'pred_pose_6d': pred_pose,
        'uncert_feat': pooled,
        'body_feat2': xc,
    }


if __name__ == "__main__":
    key = jax.random.PRNGKey(0)
    k_feat, k_bbox, k_params = jax.random.split(key, 3)

    B, C, H, W = 2, 32, 8, 8
    features = jax.random.normal(k_feat, (B, C, H, W), jnp.float32)
    bbox_info = jax.random.normal(k_bbox, (B, 3), jnp.float32)
    params = make_params(k_params, num_input_features=C)
    prep = prepare_params(params, num_input_features=C)

    fwd = jax.jit(cliff_head_forward)
    out = fwd(features, bbox_info, prep)
    jax.block_until_ready(out)

    assert out['pred_pose'].shape == (B, NUM_JOINTS, 3, 3)
    assert out['pred_pose_6d'].shape == (B, NPOSE)
    assert out['pred_shape'].shape == (B, 10)
    assert out['pred_cam'].shape == (B, 3)
    assert out['uncert_feat'].shape == (B, C)
    assert out['body_feat2'].shape == (B, HIDDEN)
    print("KERNEL_OK")
</pallas_src>

<mosaic_0001>
module attributes {stable_mosaic.version = 11 : i64} {
  func.func @_cliff_kernel(%arg0: i32, %arg1: memref<8x32x64xbf16, #tpu.memory_space<vmem>>, %arg2: memref<8x256xf32, #tpu.memory_space<vmem>>, %arg3: memref<32x1024xbf16, #tpu.memory_space<vmem>>, %arg4: memref<256x1024xbf16, #tpu.memory_space<vmem>>, %arg5: memref<1x1024xf32, #tpu.memory_space<vmem>>, %arg6: memref<1024x1024xbf16, #tpu.memory_space<vmem>>, %arg7: memref<1x1024xf32, #tpu.memory_space<vmem>>, %arg8: memref<1024x256xbf16, #tpu.memory_space<vmem>>, %arg9: memref<1x256xf32, #tpu.memory_space<vmem>>, %arg10: memref<8x32xf32, #tpu.memory_space<vmem>>, %arg11: memref<8x256xf32, #tpu.memory_space<vmem>>, %arg12: memref<8x1024xf32, #tpu.memory_space<vmem>>) attributes {dimension_semantics = [#tpu.dimension_semantics<parallel>], iteration_bounds = array<i64: 1>, scalar_prefetch = 0 : i64, scratch_operands = 0 : i64, tpu.core_type = #tpu.core_type<tc>, window_params = [{transform_indices = @transform_0, window_bounds = array<i64: 8, 32, 64>}, {transform_indices = @transform_1, window_bounds = array<i64: 8, 256>}, {pipeline_mode = #tpu.pipeline_mode<synchronous>, transform_indices = @transform_2, window_bounds = array<i64: 32, 1024>}, {pipeline_mode = #tpu.pipeline_mode<synchronous>, transform_indices = @transform_3, window_bounds = array<i64: 256, 1024>}, {pipeline_mode = #tpu.pipeline_mode<synchronous>, transform_indices = @transform_4, window_bounds = array<i64: 1, 1024>}, {pipeline_mode = #tpu.pipeline_mode<synchronous>, transform_indices = @transform_5, window_bounds = array<i64: 1024, 1024>}, {pipeline_mode = #tpu.pipeline_mode<synchronous>, transform_indices = @transform_6, window_bounds = array<i64: 1, 1024>}, {pipeline_mode = #tpu.pipeline_mode<synchronous>, transform_indices = @transform_7, window_bounds = array<i64: 1024, 256>}, {pipeline_mode = #tpu.pipeline_mode<synchronous>, transform_indices = @transform_8, window_bounds = array<i64: 1, 256>}, {transform_indices = @transform_9, window_bounds = array<i64: 8, 32>}, {transform_indices = @transform_10, window_bounds = array<i64: 8, 256>}, {transform_indices = @transform_11, window_bounds = array<i64: 8, 1024>}]} {
    %c0 = arith.constant 0 : index
    %c0_0 = arith.constant 0 : index
    %c0_1 = arith.constant 0 : index
    %0 = vector.load %arg1[%c0, %c0_0, %c0_1] : memref<8x32x64xbf16, #tpu.memory_space<vmem>>, vector<8x32x64xbf16>
    %1 = arith.extf %0 : vector<8x32x64xbf16> to vector<8x32x64xf32>
    %cst = arith.constant dense<0.000000e+00> : vector<8x32xf32>
    %2 = vector.multi_reduction <add>, %1, %cst [2] : vector<8x32x64xf32> to vector<8x32xf32>
    %cst_2 = arith.constant 1.562500e-02 : f32
    %3 = vector.broadcast %cst_2 : f32 to vector<8x32xf32>
    %4 = arith.mulf %2, %3 : vector<8x32xf32>
    %c0_3 = arith.constant 0 : index
    %c0_4 = arith.constant 0 : index
    %5 = vector.load %arg2[%c0_3, %c0_4] : memref<8x256xf32, #tpu.memory_space<vmem>>, vector<8x256xf32>
    %c0_5 = arith.constant 0 : index
    %c0_6 = arith.constant 0 : index
    %6 = vector.load %arg4[%c0_5, %c0_6] : memref<256x1024xbf16, #tpu.memory_space<vmem>>, vector<256x1024xbf16>
    %c0_7 = arith.constant 0 : index
    %c0_8 = arith.constant 0 : index
    %7 = vector.load %arg6[%c0_7, %c0_8] : memref<1024x1024xbf16, #tpu.memory_space<vmem>>, vector<1024x1024xbf16>
    %c0_9 = arith.constant 0 : index
    %c0_10 = arith.constant 0 : index
    %8 = vector.load %arg8[%c0_9, %c0_10] : memref<1024x256xbf16, #tpu.memory_space<vmem>>, vector<1024x256xbf16>
    %c0_11 = arith.constant 0 : index
    %c0_12 = arith.constant 0 : index
    %9 = vector.load %arg7[%c0_11, %c0_12] : memref<1x1024xf32, #tpu.memory_space<vmem>>, vector<1x1024xf32>
    %10 = vector.shape_cast %9 : vector<1x1024xf32> to vector<1x1024xf32>
    %11 = vector.broadcast %10 : vector<1x1024xf32> to vector<8x1024xf32>
    %c0_13 = arith.constant 0 : index
    %c0_14 = arith.constant 0 : index
    %12 = vector.load %arg9[%c0_13, %c0_14] : memref<1x256xf32, #tpu.memory_space<vmem>>, vector<1x256xf32>
    %13 = vector.shape_cast %12 : vector<1x256xf32> to vector<1x256xf32>
    %14 = vector.broadcast %13 : vector<1x256xf32> to vector<8x256xf32>
    %15 = arith.truncf %4 : vector<8x32xf32> to vector<8x32xbf16>
    %c0_15 = arith.constant 0 : index
    %c0_16 = arith.constant 0 : index
    %16 = vector.load %arg3[%c0_15, %c0_16] : memref<32x1024xbf16, #tpu.memory_space<vmem>>, vector<32x1024xbf16>
    %cst_17 = arith.constant dense<0.000000e+00> : vector<8x1024xf32>
    %17 = tpu.matmul %15, %16, %cst_17 {dimension_numbers = #tpu.dot_dimension_numbers<[1], [0], [0], [1], [0, 0, 1, 1], [], []>} : vector<8x32xbf16>, vector<32x1024xbf16>, vector<8x1024xf32> -> vector<8x1024xf32>
    %c0_18 = arith.constant 0 : index
    %c0_19 = arith.constant 0 : index
    %18 = vector.load %arg5[%c0_18, %c0_19] : memref<1x1024xf32, #tpu.memory_space<vmem>>, vector<1x1024xf32>
    %19 = vector.shape_cast %18 : vector<1x1024xf32> to vector<1x1024xf32>
    %20 = vector.broadcast %19 : vector<1x1024xf32> to vector<8x1024xf32>
    %21 = arith.addf %17, %20 : vector<8x1024xf32>
    %22 = arith.truncf %5 : vector<8x256xf32> to vector<8x256xbf16>
    %cst_20 = arith.constant dense<0.000000e+00> : vector<8x1024xf32>
    %23 = tpu.matmul %22, %6, %cst_20 {dimension_numbers = #tpu.dot_dimension_numbers<[1], [0], [0], [1], [0, 0, 1, 1], [], []>} : vector<8x256xbf16>, vector<256x1024xbf16>, vector<8x1024xf32> -> vector<8x1024xf32>
    %24 = arith.addf %21, %23 : vector<8x1024xf32>
    %25 = arith.truncf %24 : vector<8x1024xf32> to vector<8x1024xbf16>
    %cst_21 = arith.constant dense<0.000000e+00> : vector<8x1024xf32>
    %26 = tpu.matmul %25, %7, %cst_21 {dimension_numbers = #tpu.dot_dimension_numbers<[1], [0], [0], [1], [0, 0, 1, 1], [], []>} : vector<8x1024xbf16>, vector<1024x1024xbf16>, vector<8x1024xf32> -> vector<8x1024xf32>
    %27 = arith.addf %26, %11 : vector<8x1024xf32>
    %28 = arith.truncf %27 : vector<8x1024xf32> to vector<8x1024xbf16>
    %cst_22 = arith.constant dense<0.000000e+00> : vector<8x256xf32>
    %29 = tpu.matmul %28, %8, %cst_22 {dimension_numbers = #tpu.dot_dimension_numbers<[1], [0], [0], [1], [0, 0, 1, 1], [], []>} : vector<8x1024xbf16>, vector<1024x256xbf16>, vector<8x256xf32> -> vector<8x256xf32>
    %30 = arith.addf %29, %14 : vector<8x256xf32>
    %31 = arith.addf %5, %30 : vector<8x256xf32>
    %32 = arith.truncf %31 : vector<8x256xf32> to vector<8x256xbf16>
    %cst_23 = arith.constant dense<0.000000e+00> : vector<8x1024xf32>
    %33 = tpu.matmul %32, %6, %cst_23 {dimension_numbers = #tpu.dot_dimension_numbers<[1], [0], [0], [1], [0, 0, 1, 1], [], []>} : vector<8x256xbf16>, vector<256x1024xbf16>, vector<8x1024xf32> -> vector<8x1024xf32>
    %34 = arith.addf %21, %33 : vector<8x1024xf32>
    %35 = arith.truncf %34 : vector<8x1024xf32> to vector<8x1024xbf16>
    %cst_24 = arith.constant dense<0.000000e+00> : vector<8x1024xf32>
    %36 = tpu.matmul %35, %7, %cst_24 {dimension_numbers = #tpu.dot_dimension_numbers<[1], [0], [0], [1], [0, 0, 1, 1], [], []>} : vector<8x1024xbf16>, vector<1024x1024xbf16>, vector<8x1024xf32> -> vector<8x1024xf32>
    %37 = arith.addf %36, %11 : vector<8x1024xf32>
    %38 = arith.truncf %37 : vector<8x1024xf32> to vector<8x1024xbf16>
    %cst_25 = arith.constant dense<0.000000e+00> : vector<8x256xf32>
    %39 = tpu.matmul %38, %8, %cst_25 {dimension_numbers = #tpu.dot_dimension_numbers<[1], [0], [0], [1], [0, 0, 1, 1], [], []>} : vector<8x1024xbf16>, vector<1024x256xbf16>, vector<8x256xf32> -> vector<8x256xf32>
    %40 = arith.addf %39, %14 : vector<8x256xf32>
    %41 = arith.addf %31, %40 : vector<8x256xf32>
    %42 = arith.truncf %41 : vector<8x256xf32> to vector<8x256xbf16>
    %cst_26 = arith.constant dense<0.000000e+00> : vector<8x1024xf32>
    %43 = tpu.matmul %42, %6, %cst_26 {dimension_numbers = #tpu.dot_dimension_numbers<[1], [0], [0], [1], [0, 0, 1, 1], [], []>} : vector<8x256xbf16>, vector<256x1024xbf16>, vector<8x1024xf32> -> vector<8x1024xf32>
    %44 = arith.addf %21, %43 : vector<8x1024xf32>
    %45 = arith.truncf %44 : vector<8x1024xf32> to vector<8x1024xbf16>
    %cst_27 = arith.constant dense<0.000000e+00> : vector<8x1024xf32>
    %46 = tpu.matmul %45, %7, %cst_27 {dimension_numbers = #tpu.dot_dimension_numbers<[1], [0], [0], [1], [0, 0, 1, 1], [], []>} : vector<8x1024xbf16>, vector<1024x1024xbf16>, vector<8x1024xf32> -> vector<8x1024xf32>
    %47 = arith.addf %46, %11 : vector<8x1024xf32>
    %48 = arith.truncf %47 : vector<8x1024xf32> to vector<8x1024xbf16>
    %cst_28 = arith.constant dense<0.000000e+00> : vector<8x256xf32>
    %49 = tpu.matmul %48, %8, %cst_28 {dimension_numbers = #tpu.dot_dimension_numbers<[1], [0], [0], [1], [0, 0, 1, 1], [], []>} : vector<8x1024xbf16>, vector<1024x256xbf16>, vector<8x256xf32> -> vector<8x256xf32>
    %50 = arith.addf %49, %14 : vector<8x256xf32>
    %51 = arith.addf %41, %50 : vector<8x256xf32>
    %c0_29 = arith.constant 0 : index
    %c0_30 = arith.constant 0 : index
    %52 = vector.load %arg10[%c0_29, %c0_30] : memref<8x32xf32, #tpu.memory_space<vmem>>, vector<8x32xf32>
    tpu.vector_store %arg10[%c0_29, %c0_30], %4 {strides = array<i32>} : memref<8x32xf32, #tpu.memory_space<vmem>>, vector<8x32xf32>,
    %c0_31 = arith.constant 0 : index
    %c0_32 = arith.constant 0 : index
    %53 = vector.load %arg11[%c0_31, %c0_32] : memref<8x256xf32, #tpu.memory_space<vmem>>, vector<8x256xf32>
    tpu.vector_store %arg11[%c0_31, %c0_32], %51 {strides = array<i32>} : memref<8x256xf32, #tpu.memory_space<vmem>>, vector<8x256xf32>,
    %c0_33 = arith.constant 0 : index
    %c0_34 = arith.constant 0 : index
    %54 = vector.load %arg12[%c0_33, %c0_34] : memref<8x1024xf32, #tpu.memory_space<vmem>>, vector<8x1024xf32>
    tpu.vector_store %arg12[%c0_33, %c0_34], %47 {strides = array<i32>} : memref<8x1024xf32, #tpu.memory_space<vmem>>, vector<8x1024xf32>,
    return
  }
  func.func @transform_0(%arg0: i32) -> (i32, i32, i32) {
    %c0_i32 = arith.constant 0 : i32
    %c0_i32_0 = arith.constant 0 : i32
    %c0_i32_1 = arith.constant 0 : i32
    return %arg0, %c0_i32, %c0_i32_0 : i32, i32, i32
  }
  func.func @transform_1(%arg0: i32) -> (i32, i32) {
    %c0_i32 = arith.constant 0 : i32
    %c0_i32_0 = arith.constant 0 : i32
    return %arg0, %c0_i32 : i32, i32
  }
  func.func @transform_2(%arg0: i32) -> (i32, i32) {
    %c0_i32 = arith.constant 0 : i32
    %c0_i32_0 = arith.constant 0 : i32
    %c0_i32_1 = arith.constant 0 : i32
    return %c0_i32, %c0_i32_0 : i32, i32
  }
  func.func @transform_3(%arg0: i32) -> (i32, i32) {
    %c0_i32 = arith.constant 0 : i32
    %c0_i32_0 = arith.constant 0 : i32
    %c0_i32_1 = arith.constant 0 : i32
    return %c0_i32, %c0_i32_0 : i32, i32
  }
  func.func @transform_4(%arg0: i32) -> (i32, i32) {
    %c0_i32 = arith.constant 0 : i32
    %c0_i32_0 = arith.constant 0 : i32
    %c0_i32_1 = arith.constant 0 : i32
    return %c0_i32, %c0_i32_0 : i32, i32
  }
  func.func @transform_5(%arg0: i32) -> (i32, i32) {
    %c0_i32 = arith.constant 0 : i32
    %c0_i32_0 = arith.constant 0 : i32
    %c0_i32_1 = arith.constant 0 : i32
    return %c0_i32, %c0_i32_0 : i32, i32
  }
  func.func @transform_6(%arg0: i32) -> (i32, i32) {
    %c0_i32 = arith.constant 0 : i32
    %c0_i32_0 = arith.constant 0 : i32
    %c0_i32_1 = arith.constant 0 : i32
    return %c0_i32, %c0_i32_0 : i32, i32
  }
  func.func @transform_7(%arg0: i32) -> (i32, i32) {
    %c0_i32 = arith.constant 0 : i32
    %c0_i32_0 = arith.constant 0 : i32
    %c0_i32_1 = arith.constant 0 : i32
    return %c0_i32, %c0_i32_0 : i32, i32
  }
  func.func @transform_8(%arg0: i32) -> (i32, i32) {
    %c0_i32 = arith.constant 0 : i32
    %c0_i32_0 = arith.constant 0 : i32
    %c0_i32_1 = arith.constant 0 : i32
    return %c0_i32, %c0_i32_0 : i32, i32
  }
  func.func @transform_9(%arg0: i32) -> (i32, i32) {
    %c0_i32 = arith.constant 0 : i32
    %c0_i32_0 = arith.constant 0 : i32
    return %arg0, %c0_i32 : i32, i32
  }
  func.func @transform_10(%arg0: i32) -> (i32, i32) {
    %c0_i32 = arith.constant 0 : i32
    %c0_i32_0 = arith.constant 0 : i32
    return %arg0, %c0_i32 : i32, i32
  }
  func.func @transform_11(%arg0: i32) -> (i32, i32) {
    %c0_i32 = arith.constant 0 : i32
    %c0_i32_0 = arith.constant 0 : i32
    return %arg0, %c0_i32 : i32, i32
  }
}

</mosaic_0001>

<llo_original>
// kernel: cliff_head_forward.1
$region0: #{cliff_head_forward.1}
  #allocation0 [shape = 'u32[]', space=smem, size = 0x4, offset = 0x4, fixed_abs, tag = 'smem constant byte address 0x4 - core index']
  #allocation1 [shape = 'u32[72,128]{1,0:T(1,128)}', space=vmem, size = 0x9000, scoped, tag = 'internal scratch']
  %s0 = inlined_call_operand.vmem [shape: bf16[8,32,64], index: 0, kind: input, shape index: {}]
  %s1 = inlined_call_operand.vmem [shape: f32[8,256], index: 1, kind: input, shape index: {}]
  %s2 = inlined_call_operand.hbm [shape: bf16[32,1024], index: 2, kind: input, shape index: {}]
  %s3 = inlined_call_operand.hbm [shape: bf16[256,1024], index: 3, kind: input, shape index: {}]
  %s4 = inlined_call_operand.hbm [shape: f32[1,1024], index: 4, kind: input, shape index: {}]
  %s5 = inlined_call_operand.hbm [shape: bf16[1024,1024], index: 5, kind: input, shape index: {}]
  %s6 = inlined_call_operand.hbm [shape: f32[1,1024], index: 6, kind: input, shape index: {}]
  %s7 = inlined_call_operand.hbm [shape: bf16[1024,256], index: 7, kind: input, shape index: {}]
  %s8 = inlined_call_operand.hbm [shape: f32[1,256], index: 8, kind: input, shape index: {}]
  %s9 = inlined_call_operand.vmem [shape: f32[8,32], index: 9, kind: output, shape index: {0}]
  %s10 = inlined_call_operand.vmem [shape: f32[8,256], index: 10, kind: output, shape index: {1}]
  %s11 = inlined_call_operand.vmem [shape: f32[8,1024], index: 11, kind: output, shape index: {2}]
  %12 = xla_tuple %s9, %s10, %s11
  %s13 = sld [smem:[#allocation0]]
  $region90: #{cliff_head_forward.1} parent=0
    _
  %s15 = ssub.s32 1, %s13
  %s16 = scalar_select 0, %s15, %s13
  $region1: #{cliff_head_forward.1} parent=0
    #allocation2 [shape = 'u8[65536]{0}', space=vmem, size = 0x10000, scoped, tag = 'input window, operand 2, single buffered']
    #allocation3 [shape = 's32[1]{0}', space=sflag, size = 0x4, scoped, tag = 'scoped memory for cliff_head_forward.1']
    #allocation4 [shape = 'u8[524288]{0}', space=vmem, size = 0x80000, scoped, tag = 'input window, operand 3, single buffered']
    #allocation5 [shape = 's32[1]{0}', space=sflag, size = 0x4, scoped, tag = 'scoped memory for cliff_head_forward.1']
    #allocation6 [shape = 'u8[4096]{0}', space=vmem, size = 0x1000, scoped, tag = 'input window, operand 4, single buffered']
    #allocation7 [shape = 'u8[2097152]{0}', space=vmem, size = 0x200000, scoped, tag = 'input window, operand 5, single buffered']
    #allocation8 [shape = 's32[1]{0}', space=sflag, size = 0x4, scoped, tag = 'scoped memory for cliff_head_forward.1']
    #allocation9 [shape = 'u8[4096]{0}', space=vmem, size = 0x1000, scoped, tag = 'input window, operand 6, single buffered']
    #allocation10 [shape = 'u8[524288]{0}', space=vmem, size = 0x80000, scoped, tag = 'input window, operand 7, single buffered']
    #allocation11 [shape = 's32[1]{0}', space=sflag, size = 0x4, scoped, tag = 'scoped memory for cliff_head_forward.1']
    #allocation12 [shape = 'u8[1024]{0}', space=vmem, size = 0x400, scoped, tag = 'input window, operand 8, single buffered']
    %17 = vsyncpa [#allocation3], 0
    %18 = vsyncpa [#allocation5], 0
    %19 = vsyncpa [#allocation8], 0
    %20 = vsyncpa [#allocation11], 0
    // Predicated region
    $region2: #{cliff_head_forward.1} parent=1 // pred_check
      _
    $region3: #{cliff_head_forward.1} parent=1 // pred_check_branch
      %22 = sbr.rel (0) target = $region5
    $region4: #{cliff_head_forward.1} parent=1 // pred_region
      _
    $region5: #{cliff_head_forward.1} parent=1 // pred_fallthru
      _
    // Predicated region
    $region6: #{cliff_head_forward.1} parent=1 // pred_check
      _
    $region7: #{cliff_head_forward.1} parent=1 // pred_check_branch
      %24 = sbr.rel (0) target = $region9
    $region8: #{cliff_head_forward.1} parent=1 // pred_region
      _
    $region9: #{cliff_head_forward.1} parent=1 // pred_fallthru
      _
    // Predicated region
    $region10: #{cliff_head_forward.1} parent=1 // pred_check
      _
    $region11: #{cliff_head_forward.1} parent=1 // pred_check_branch
      %26 = sbr.rel (0) target = $region13
    $region12: #{cliff_head_forward.1} parent=1 // pred_region
      %28 = vsyncadd [#allocation3], 0
      %s29 = sshll.u32 %s2, 4
      %s30 = int_to_ptr.hbm [resolvable:$true] %s29
      %s31 = sshll.u32 [#allocation2], 4
      %s32 = int_to_ptr.vmem [resolvable:$true] %s31
      %37 = dma.hbm_to_vmem [thread:$0]  %s30, 2048, %s32, [#allocation3], 512, 512, 32
    $region13: #{cliff_head_forward.1} parent=1 // pred_fallthru
      _
    // Predicated region
    $region14: #{cliff_head_forward.1} parent=1 // pred_check
      _
    $region15: #{cliff_head_forward.1} parent=1 // pred_check_branch
      %39 = sbr.rel (0) target = $region17
    $region16: #{cliff_head_forward.1} parent=1 // pred_region
      %41 = vsyncadd [#allocation5], 0
      %s42 = sshll.u32 %s3, 4
      %s43 = int_to_ptr.hbm [resolvable:$true] %s42
      %s44 = sshll.u32 [#allocation4], 4
      %s45 = int_to_ptr.vmem [resolvable:$true] %s44
      %50 = dma.hbm_to_vmem [thread:$0]  %s43, 16384, %s45, [#allocation5], 512, 512, 32
    $region17: #{cliff_head_forward.1} parent=1 // pred_fallthru
      _
    // Predicated region
    $region18: #{cliff_head_forward.1} parent=1 // pred_check
      _
    $region19: #{cliff_head_forward.1} parent=1 // pred_check_branch
      %52 = sbr.rel (0) target = $region21
    $region20: #{cliff_head_forward.1} parent=1 // pred_region
      %54 = vsyncadd [#allocation5], 0
      %s56 = sshll.u32 %s4, 4
      %s57 = int_to_ptr.hbm [resolvable:$true] %s56
      %s58 = sshll.u32 [#allocation6], 4
      %s59 = int_to_ptr.vmem [resolvable:$true] %s58
      %61 = dma.hbm_to_vmem [thread:$0]  %s57, 128, %s59, [#allocation5]
    $region21: #{cliff_head_forward.1} parent=1 // pred_fallthru
      _
    // Predicated region
    $region22: #{cliff_head_forward.1} parent=1 // pred_check
      _
    $region23: #{cliff_head_forward.1} parent=1 // pred_check_branch
      %63 = sbr.rel (0) target = $region25
    $region24: #{cliff_head_forward.1} parent=1 // pred_region
      %65 = vsyncadd [#allocation8], 0
      %s66 = sshll.u32 %s5, 4
      %s67 = int_to_ptr.hbm [resolvable:$true] %s66
      %s68 = sshll.u32 [#allocation7], 4
      %s69 = int_to_ptr.vmem [resolvable:$true] %s68
      %74 = dma.hbm_to_vmem [thread:$0]  %s67, 65536, %s69, [#allocation8], 512, 512, 32
    $region25: #{cliff_head_forward.1} parent=1 // pred_fallthru
      _
    // Predicated region
    $region26: #{cliff_head_forward.1} parent=1 // pred_check
      _
    $region27: #{cliff_head_forward.1} parent=1 // pred_check_branch
      %76 = sbr.rel (0) target = $region29
    $region28: #{cliff_head_forward.1} parent=1 // pred_region
      %78 = vsyncadd [#allocation8], 0
      %s80 = sshll.u32 %s6, 4
      %s81 = int_to_ptr.hbm [resolvable:$true] %s80
      %s82 = sshll.u32 [#allocation9], 4
      %s83 = int_to_ptr.vmem [resolvable:$true] %s82
      %85 = dma.hbm_to_vmem [thread:$0]  %s81, 128, %s83, [#allocation8]
    $region29: #{cliff_head_forward.1} parent=1 // pred_fallthru
      _
    // Predicated region
    $region30: #{cliff_head_forward.1} parent=1 // pred_check
      _
    $region31: #{cliff_head_forward.1} parent=1 // pred_check_branch
      %87 = sbr.rel (0) target = $region33
    $region32: #{cliff_head_forward.1} parent=1 // pred_region
      %89 = vsyncadd [#allocation11], 0
      %s90 = sshll.u32 %s7, 4
      %s91 = int_to_ptr.hbm [resolvable:$true] %s90
      %s92 = sshll.u32 [#allocation10], 4
      %s93 = int_to_ptr.vmem [resolvable:$true] %s92
      %98 = dma.hbm_to_vmem [thread:$0]  %s91, 16384, %s93, [#allocation11], 128, 128, 8
    $region33: #{cliff_head_forward.1} parent=1 // pred_fallthru
      _
    // Predicated region
    $region34: #{cliff_head_forward.1} parent=1 // pred_check
      _
    $region35: #{cliff_head_forward.1} parent=1 // pred_check_branch
      %100 = sbr.rel (0) target = $region37
    $region36: #{cliff_head_forward.1} parent=1 // pred_region
      %102 = vsyncadd [#allocation11], 0
      %s104 = sshll.u32 %s8, 4
      %s105 = int_to_ptr.hbm [resolvable:$true] %s104
      %s106 = sshll.u32 [#allocation12], 4
      %s107 = int_to_ptr.vmem [resolvable:$true] %s106
      %109 = dma.hbm_to_vmem [thread:$0]  %s105, 32, %s107, [#allocation11]
    $region37: #{cliff_head_forward.1} parent=1 // pred_fallthru
      _
    // Predicated region
    $region38: #{cliff_head_forward.1} parent=1 // pred_check
      _
    $region39: #{cliff_head_forward.1} parent=1 // pred_check_branch
      %111 = sbr.rel (0) target = $region41
    $region40: #{cliff_head_forward.1} parent=1 // pred_region
      %113 = dma.done [#allocation3], 2048
    $region41: #{cliff_head_forward.1} parent=1 // pred_fallthru
      _
    // Predicated region
    $region42: #{cliff_head_forward.1} parent=1 // pred_check
      _
    $region43: #{cliff_head_forward.1} parent=1 // pred_check_branch
      %115 = sbr.rel (0) target = $region45
    $region44: #{cliff_head_forward.1} parent=1 // pred_region
      %117 = dma.done [#allocation5], 16384
    $region45: #{cliff_head_forward.1} parent=1 // pred_fallthru
      _
    // Predicated region
    $region46: #{cliff_head_forward.1} parent=1 // pred_check
      _
    $region47: #{cliff_head_forward.1} parent=1 // pred_check_branch
      %119 = sbr.rel (0) target = $region49
    $region48: #{cliff_head_forward.1} parent=1 // pred_region
      %121 = dma.done [#allocation5], 128
    $region49: #{cliff_head_forward.1} parent=1 // pred_fallthru
      _
    // Predicated region
    $region50: #{cliff_head_forward.1} parent=1 // pred_check
      _
    $region51: #{cliff_head_forward.1} parent=1 // pred_check_branch
      %123 = sbr.rel (0) target = $region53
    $region52: #{cliff_head_forward.1} parent=1 // pred_region
      %125 = dma.done [#allocation8], 65536
    $region53: #{cliff_head_forward.1} parent=1 // pred_fallthru
      _
    // Predicated region
    $region54: #{cliff_head_forward.1} parent=1 // pred_check
      _
    $region55: #{cliff_head_forward.1} parent=1 // pred_check_branch
      %127 = sbr.rel (0) target = $region57
    $region56: #{cliff_head_forward.1} parent=1 // pred_region
      %129 = dma.done [#allocation8], 128
    $region57: #{cliff_head_forward.1} parent=1 // pred_fallthru
      _
    // Predicated region
    $region58: #{cliff_head_forward.1} parent=1 // pred_check
      _
    $region59: #{cliff_head_forward.1} parent=1 // pred_check_branch
      %131 = sbr.rel (0) target = $region61
    $region60: #{cliff_head_forward.1} parent=1 // pred_region
      %133 = dma.done [#allocation11], 16384
    $region61: #{cliff_head_forward.1} parent=1 // pred_fallthru
      _
    // Predicated region
    $region62: #{cliff_head_forward.1} parent=1 // pred_check
      _
    $region63: #{cliff_head_forward.1} parent=1 // pred_check_branch
      %135 = sbr.rel (0) target = $region65
    $region64: #{cliff_head_forward.1} parent=1 // pred_region
      %137 = dma.done [#allocation11], 32
    $region65: #{cliff_head_forward.1} parent=1 // pred_fallthru
      _
    %v139 = vld [vmem:[%s0] sm:$0xf]
    %v140 = vld [vmem:[%s0 + $0x4] sm:$0xf]
    %v141 = vld [vmem:[%s0 + $0x8] sm:$0xf]
    %v142 = vld [vmem:[%s0 + $0xc] sm:$0xf]
    %v143 = vld [vmem:[%s0 + $0x10] sm:$0xf]
    %v144 = vld [vmem:[%s0 + $0x14] sm:$0xf]
    %v145 = vld [vmem:[%s0 + $0x18] sm:$0xf]
    %v146 = vld [vmem:[%s0 + $0x1c] sm:$0xf]
    %v147 = vld [vmem:[%s0 + $0x20] sm:$0xf]
    %v148 = vld [vmem:[%s0 + $0x24] sm:$0xf]
    %v149 = vld [vmem:[%s0 + $0x28] sm:$0xf]
    %v150 = vld [vmem:[%s0 + $0x2c] sm:$0xf]
    %v151 = vld [vmem:[%s0 + $0x30] sm:$0xf]
    %v152 = vld [vmem:[%s0 + $0x34] sm:$0xf]
    %v153 = vld [vmem:[%s0 + $0x38] sm:$0xf]
    %v154 = vld [vmem:[%s0 + $0x3c] sm:$0xf]
    %v155 = vld [vmem:[%s0 + $0x40] sm:$0xf]
    %v156 = vld [vmem:[%s0 + $0x44] sm:$0xf]
    %v157 = vld [vmem:[%s0 + $0x48] sm:$0xf]
    %v158 = vld [vmem:[%s0 + $0x4c] sm:$0xf]
    %v159 = vld [vmem:[%s0 + $0x50] sm:$0xf]
    %v160 = vld [vmem:[%s0 + $0x54] sm:$0xf]
    %v161 = vld [vmem:[%s0 + $0x58] sm:$0xf]
    %v162 = vld [vmem:[%s0 + $0x5c] sm:$0xf]
    %v163 = vld [vmem:[%s0 + $0x60] sm:$0xf]
    %v164 = vld [vmem:[%s0 + $0x64] sm:$0xf]
    %v165 = vld [vmem:[%s0 + $0x68] sm:$0xf]
    %v166 = vld [vmem:[%s0 + $0x6c] sm:$0xf]
    %v167 = vld [vmem:[%s0 + $0x70] sm:$0xf]
    %v168 = vld [vmem:[%s0 + $0x74] sm:$0xf]
    %v169 = vld [vmem:[%s0 + $0x78] sm:$0xf]
    %v170 = vld [vmem:[%s0 + $0x7c] sm:$0xf]
    %v171 = vunpack.c.l.bf16 %v139
    %v172 = vunpack.c.l.bf16 %v140
    %v173 = vunpack.c.l.bf16 %v141
    %v174 = vunpack.c.l.bf16 %v142
    %v175 = vunpack.c.l.bf16 %v143
    %v176 = vunpack.c.l.bf16 %v144
    %v177 = vunpack.c.l.bf16 %v145
    %v178 = vunpack.c.l.bf16 %v146
    %v179 = vunpack.c.l.bf16 %v147
    %v180 = vunpack.c.l.bf16 %v148
    %v181 = vunpack.c.l.bf16 %v149
    %v182 = vunpack.c.l.bf16 %v150
    %v183 = vunpack.c.l.bf16 %v151
    %v184 = vunpack.c.l.bf16 %v152
    %v185 = vunpack.c.l.bf16 %v153
    %v186 = vunpack.c.l.bf16 %v154
    %v187 = vunpack.c.l.bf16 %v155
    %v188 = vunpack.c.l.bf16 %v156
    %v189 = vunpack.c.l.bf16 %v157
    %v190 = vunpack.c.l.bf16 %v158
    %v191 = vunpack.c.l.bf16 %v159
    %v192 = vunpack.c.l.bf16 %v160
    %v193 = vunpack.c.l.bf16 %v161
    %v194 = vunpack.c.l.bf16 %v162
    %v195 = vunpack.c.l.bf16 %v163
    %v196 = vunpack.c.l.bf16 %v164
    %v197 = vunpack.c.l.bf16 %v165
    %v198 = vunpack.c.l.bf16 %v166
    %v199 = vunpack.c.l.bf16 %v167
    %v200 = vunpack.c.l.bf16 %v168
    %v201 = vunpack.c.l.bf16 %v169
    %v202 = vunpack.c.l.bf16 %v170
    %vm203 = vcmask 523264
    %v204 = vsel %vm203, %v171, 0.0
    %205 = vadd.xlane.f32.xlu0 %v204
    %v206 = vpop.xlane.xlu0 %205
    %v207 = vsel %vm203, %v172, 0.0
    %208 = vadd.xlane.f32.xlu0 %v207
    %v209 = vpop.xlane.xlu0 %208
    %v210 = vsel %vm203, %v173, 0.0
    %211 = vadd.xlane.f32.xlu0 %v210
    %v212 = vpop.xlane.xlu0 %211
    %v213 = vsel %vm203, %v174, 0.0
    %214 = vadd.xlane.f32.xlu0 %v213
    %v215 = vpop.xlane.xlu0 %214
    %v216 = vsel %vm203, %v175, 0.0
    %217 = vadd.xlane.f32.xlu0 %v216
    %v218 = vpop.xlane.xlu0 %217
    %v219 = vsel %vm203, %v176, 0.0
    %220 = vadd.xlane.f32.xlu0 %v219
    %v221 = vpop.xlane.xlu0 %220
    %v222 = vsel %vm203, %v177, 0.0
    %223 = vadd.xlane.f32.xlu0 %v222
    %v224 = vpop.xlane.xlu0 %223
    %v225 = vsel %vm203, %v178, 0.0
    %226 = vadd.xlane.f32.xlu0 %v225
    %v227 = vpop.xlane.xlu0 %226
    %v228 = vsel %vm203, %v179, 0.0
    %229 = vadd.xlane.f32.xlu0 %v228
    %v230 = vpop.xlane.xlu0 %229
    %v231 = vsel %vm203, %v180, 0.0
    %232 = vadd.xlane.f32.xlu0 %v231
    %v233 = vpop.xlane.xlu0 %232
    %v234 = vsel %vm203, %v181, 0.0
    %235 = vadd.xlane.f32.xlu0 %v234
    %v236 = vpop.xlane.xlu0 %235
    %v237 = vsel %vm203, %v182, 0.0
    %238 = vadd.xlane.f32.xlu0 %v237
    %v239 = vpop.xlane.xlu0 %238
    %v240 = vsel %vm203, %v183, 0.0
    %241 = vadd.xlane.f32.xlu0 %v240
    %v242 = vpop.xlane.xlu0 %241
    %v243 = vsel %vm203, %v184, 0.0
    %244 = vadd.xlane.f32.xlu0 %v243
    %v245 = vpop.xlane.xlu0 %244
    %v246 = vsel %vm203, %v185, 0.0
    %247 = vadd.xlane.f32.xlu0 %v246
    %v248 = vpop.xlane.xlu0 %247
    %v249 = vsel %vm203, %v186, 0.0
    %250 = vadd.xlane.f32.xlu0 %v249
    %v251 = vpop.xlane.xlu0 %250
    %v252 = vsel %vm203, %v187, 0.0
    %253 = vadd.xlane.f32.xlu0 %v252
    %v254 = vpop.xlane.xlu0 %253
    %v255 = vsel %vm203, %v188, 0.0
    %256 = vadd.xlane.f32.xlu0 %v255
    %v257 = vpop.xlane.xlu0 %256
    %v258 = vsel %vm203, %v189, 0.0
    %259 = vadd.xlane.f32.xlu0 %v258
    %v260 = vpop.xlane.xlu0 %259
    %v261 = vsel %vm203, %v190, 0.0
    %262 = vadd.xlane.f32.xlu0 %v261
    %v263 = vpop.xlane.xlu0 %262
    %v264 = vsel %vm203, %v191, 0.0
    %265 = vadd.xlane.f32.xlu0 %v264
    %v266 = vpop.xlane.xlu0 %265
    %v267 = vsel %vm203, %v192, 0.0
    %268 = vadd.xlane.f32.xlu0 %v267
    %v269 = vpop.xlane.xlu0 %268
    %v270 = vsel %vm203, %v193, 0.0
    %271 = vadd.xlane.f32.xlu0 %v270
    %v272 = vpop.xlane.xlu0 %271
    %v273 = vsel %vm203, %v194, 0.0
    %274 = vadd.xlane.f32.xlu0 %v273
    %v275 = vpop.xlane.xlu0 %274
    %v276 = vsel %vm203, %v195, 0.0
    %277 = vadd.xlane.f32.xlu0 %v276
    %v278 = vpop.xlane.xlu0 %277
    %v279 = vsel %vm203, %v196, 0.0
    %280 = vadd.xlane.f32.xlu0 %v279
    %v281 = vpop.xlane.xlu0 %280
    %v282 = vsel %vm203, %v197, 0.0
    %283 = vadd.xlane.f32.xlu0 %v282
    %v284 = vpop.xlane.xlu0 %283
    %v285 = vsel %vm203, %v198, 0.0
    %286 = vadd.xlane.f32.xlu0 %v285
    %v287 = vpop.xlane.xlu0 %286
    %v288 = vsel %vm203, %v199, 0.0
    %289 = vadd.xlane.f32.xlu0 %v288
    %v290 = vpop.xlane.xlu0 %289
    %v291 = vsel %vm203, %v200, 0.0
    %292 = vadd.xlane.f32.xlu0 %v291
    %v293 = vpop.xlane.xlu0 %292
    %v294 = vsel %vm203, %v201, 0.0
    %295 = vadd.xlane.f32.xlu0 %v294
    %v296 = vpop.xlane.xlu0 %295
    %v297 = vsel %vm203, %v202, 0.0
    %298 = vadd.xlane.f32.xlu0 %v297
    %v299 = vpop.xlane.xlu0 %298
    %v300 = vmul.f32 %v206, 0.015625
    %v301 = vmul.f32 %v209, 0.015625
    %v302 = vmul.f32 %v212, 0.015625
    %v303 = vmul.f32 %v215, 0.015625
    %v304 = vmul.f32 %v218, 0.015625
    %v305 = vmul.f32 %v221, 0.015625
    %v306 = vmul.f32 %v224, 0.015625
    %v307 = vmul.f32 %v227, 0.015625
    %v308 = vmul.f32 %v230, 0.015625
    %v309 = vmul.f32 %v233, 0.015625
    %v310 = vmul.f32 %v236, 0.015625
    %v311 = vmul.f32 %v239, 0.015625
    %v312 = vmul.f32 %v242, 0.015625
    %v313 = vmul.f32 %v245, 0.015625
    %v314 = vmul.f32 %v248, 0.015625
    %v315 = vmul.f32 %v251, 0.015625
    %v316 = vmul.f32 %v254, 0.015625
    %v317 = vmul.f32 %v257, 0.015625
    %v318 = vmul.f32 %v260, 0.015625
    %v319 = vmul.f32 %v263, 0.015625
    %v320 = vmul.f32 %v266, 0.015625
    %v321 = vmul.f32 %v269, 0.015625
    %v322 = vmul.f32 %v272, 0.015625
    %v323 = vmul.f32 %v275, 0.015625
    %v324 = vmul.f32 %v278, 0.015625
    %v325 = vmul.f32 %v281, 0.015625
    %v326 = vmul.f32 %v284, 0.015625
    %v327 = vmul.f32 %v287, 0.015625
    %v328 = vmul.f32 %v290, 0.015625
    %v329 = vmul.f32 %v293, 0.015625
    %v330 = vmul.f32 %v296, 0.015625
    %v331 = vmul.f32 %v299, 0.015625
    %v332 = vld [vmem:[%s1] sm:$0xff]
    %v333 = vld [vmem:[%s1 + $0x8] sm:$0xff]
    %v334 = vld [vmem:[#allocation4] sm:$0xff]
    %v335 = vld [vmem:[#allocation4 + $0x8] sm:$0xff]
    %v336 = vld [vmem:[#allocation4 + $0x10] sm:$0xff]
    %v337 = vld [vmem:[#allocation4 + $0x18] sm:$0xff]
    %v338 = vld [vmem:[#allocation4 + $0x20] sm:$0xff]
    %v339 = vld [vmem:[#allocation4 + $0x28] sm:$0xff]
    %v340 = vld [vmem:[#allocation4 + $0x30] sm:$0xff]
    %v341 = vld [vmem:[#allocation4 + $0x38] sm:$0xff]
    %v342 = vld [vmem:[#allocation4 + $0x40] sm:$0xff]
    %v343 = vld [vmem:[#allocation4 + $0x48] sm:$0xff]
    %v344 = vld [vmem:[#allocation4 + $0x50] sm:$0xff]
    %v345 = vld [vmem:[#allocation4 + $0x58] sm:$0xff]
    %v346 = vld [vmem:[#allocation4 + $0x60] sm:$0xff]
    %v347 = vld [vmem:[#allocation4 + $0x68] sm:$0xff]
    %v348 = vld [vmem:[#allocation4 + $0x70] sm:$0xff]
    %v349 = vld [vmem:[#allocation4 + $0x78] sm:$0xff]
    %v350 = vld [vmem:[#allocation4 + $0x80] sm:$0xff]
    %v351 = vld [vmem:[#allocation4 + $0x88] sm:$0xff]
    %v352 = vld [vmem:[#allocation4 + $0x90] sm:$0xff]
    %v353 = vld [vmem:[#allocation4 + $0x98] sm:$0xff]
    %v354 = vld [vmem:[#allocation4 + $0xa0] sm:$0xff]
    %v355 = vld [vmem:[#allocation4 + $0xa8] sm:$0xff]
    %v356 = vld [vmem:[#allocation4 + $0xb0] sm:$0xff]
    %v357 = vld [vmem:[#allocation4 + $0xb8] sm:$0xff]
    %v358 = vld [vmem:[#allocation4 + $0xc0] sm:$0xff]
    %v359 = vld [vmem:[#allocation4 + $0xc8] sm:$0xff]
    %v360 = vld [vmem:[#allocation4 + $0xd0] sm:$0xff]
    %v361 = vld [vmem:[#allocation4 + $0xd8] sm:$0xff]
    %v362 = vld [vmem:[#allocation4 + $0xe0] sm:$0xff]
    %v363 = vld [vmem:[#allocation4 + $0xe8] sm:$0xff]
    %v364 = vld [vmem:[#allocation4 + $0xf0] sm:$0xff]
    %v365 = vld [vmem:[#allocation4 + $0xf8] sm:$0xff]
    %v366 = vld [vmem:[#allocation4 + $0x100] sm:$0xff]
    %v367 = vld [vmem:[#allocation4 + $0x108] sm:$0xff]
    %v368 = vld [vmem:[#allocation4 + $0x110] sm:$0xff]
    %v369 = vld [vmem:[#allocation4 + $0x118] sm:$0xff]
    %v370 = vld [vmem:[#allocation4 + $0x120] sm:$0xff]
    %v371 = vld [vmem:[#allocation4 + $0x128] sm:$0xff]
    %v372 = vld [vmem:[#allocation4 + $0x130] sm:$0xff]
    %v373 = vld [vmem:[#allocation4 + $0x138] sm:$0xff]
    %v374 = vld [vmem:[#allocation4 + $0x140] sm:$0xff]
    %v375 = vld [vmem:[#allocation4 + $0x148] sm:$0xff]
    %v376 = vld [vmem:[#allocation4 + $0x150] sm:$0xff]
    %v377 = vld [vmem:[#allocation4 + $0x158] sm:$0xff]
    %v378 = vld [vmem:[#allocation4 + $0x160] sm:$0xff]
    %v379 = vld [vmem:[#allocation4 + $0x168] sm:$0xff]
    %v380 = vld [vmem:[#allocation4 + $0x170] sm:$0xff]
    %v381 = vld [vmem:[#allocation4 + $0x178] sm:$0xff]
    %v382 = vld [vmem:[#allocation4 + $0x180] sm:$0xff]
    %v383 = vld [vmem:[#allocation4 + $0x188] sm:$0xff]
    %v384 = vld [vmem:[#allocation4 + $0x190] sm:$0xff]
    %v385 = vld [vmem:[#allocation4 + $0x198] sm:$0xff]
    %v386 = vld [vmem:[#allocation4 + $0x1a0] sm:$0xff]
    %v387 = vld [vmem:[#allocation4 + $0x1a8] sm:$0xff]
    %v388 = vld [vmem:[#allocation4 + $0x1b0] sm:$0xff]
    %v389 = vld [vmem:[#allocation4 + $0x1b8] sm:$0xff]
    %v390 = vld [vmem:[#allocation4 + $0x1c0] sm:$0xff]
    %v391 = vld [vmem:[#allocation4 + $0x1c8] sm:$0xff]
    %v392 = vld [vmem:[#allocation4 + $0x1d0] sm:$0xff]
    %v393 = vld [vmem:[#allocation4 + $0x1d8] sm:$0xff]
    %v394 = vld [vmem:[#allocation4 + $0x1e0] sm:$0xff]
    %v395 = vld [vmem:[#allocation4 + $0x1e8] sm:$0xff]
    %v396 = vld [vmem:[#allocation4 + $0x1f0] sm:$0xff]
    %v397 = vld [vmem:[#allocation4 + $0x1f8] sm:$0xff]
    %v398 = vld [vmem:[#allocation4 + $0x200] sm:$0xff]
    %v399 = vld [vmem:[#allocation4 + $0x208] sm:$0xff]
    %v400 = vld [vmem:[#allocation4 + $0x210] sm:$0xff]
    %v401 = vld [vmem:[#allocation4 + $0x218] sm:$0xff]
    %v402 = vld [vmem:[#allocation4 + $0x220] sm:$0xff]
    %v403 = vld [vmem:[#allocation4 + $0x228] sm:$0xff]
    %v404 = vld [vmem:[#allocation4 + $0x230] sm:$0xff]
    %v405 = vld [vmem:[#allocation4 + $0x238] sm:$0xff]
    %v406 = vld [vmem:[#allocation4 + $0x240] sm:$0xff]
    %v407 = vld [vmem:[#allocation4 + $0x248] sm:$0xff]
    %v408 = vld [vmem:[#allocation4 + $0x250] sm:$0xff]
    %v409 = vld [vmem:[#allocation4 + $0x258] sm:$0xff]
    %v410 = vld [vmem:[#allocation4 + $0x260] sm:$0xff]
    %v411 = vld [vmem:[#allocation4 + $0x268] sm:$0xff]
    %v412 = vld [vmem:[#allocation4 + $0x270] sm:$0xff]
    %v413 = vld [vmem:[#allocation4 + $0x278] sm:$0xff]
    %v414 = vld [vmem:[#allocation4 + $0x280] sm:$0xff]
    %v415 = vld [vmem:[#allocation4 + $0x288] sm:$0xff]
    %v416 = vld [vmem:[#allocation4 + $0x290] sm:$0xff]
    %v417 = vld [vmem:[#allocation4 + $0x298] sm:$0xff]
    %v418 = vld [vmem:[#allocation4 + $0x2a0] sm:$0xff]
    %v419 = vld [vmem:[#allocation4 + $0x2a8] sm:$0xff]
    %v420 = vld [vmem:[#allocation4 + $0x2b0] sm:$0xff]
    %v421 = vld [vmem:[#allocation4 + $0x2b8] sm:$0xff]
    %v422 = vld [vmem:[#allocation4 + $0x2c0] sm:$0xff]
    %v423 = vld [vmem:[#allocation4 + $0x2c8] sm:$0xff]
    %v424 = vld [vmem:[#allocation4 + $0x2d0] sm:$0xff]
    %v425 = vld [vmem:[#allocation4 + $0x2d8] sm:$0xff]
    %v426 = vld [vmem:[#allocation4 + $0x2e0] sm:$0xff]
    %v427 = vld [vmem:[#allocation4 + $0x2e8] sm:$0xff]
    %v428 = vld [vmem:[#allocation4 + $0x2f0] sm:$0xff]
    %v429 = vld [vmem:[#allocation4 + $0x2f8] sm:$0xff]
    %v430 = vld [vmem:[#allocation4 + $0x300] sm:$0xff]
    %v431 = vld [vmem:[#allocation4 + $0x308] sm:$0xff]
    %v432 = vld [vmem:[#allocation4 + $0x310] sm:$0xff]
    %v433 = vld [vmem:[#allocation4 + $0x318] sm:$0xff]
    %v434 = vld [vmem:[#allocation4 + $0x320] sm:$0xff]
    %v435 = vld [vmem:[#allocation4 + $0x328] sm:$0xff]
    %v436 = vld [vmem:[#allocation4 + $0x330] sm:$0xff]
    %v437 = vld [vmem:[#allocation4 + $0x338] sm:$0xff]
    %v438 = vld [vmem:[#allocation4 + $0x340] sm:$0xff]
    %v439 = vld [vmem:[#allocation4 + $0x348] sm:$0xff]
    %v440 = vld [vmem:[#allocation4 + $0x350] sm:$0xff]
    %v441 = vld [vmem:[#allocation4 + $0x358] sm:$0xff]
    %v442 = vld [vmem:[#allocation4 + $0x360] sm:$0xff]
    %v443 = vld [vmem:[#allocation4 + $0x368] sm:$0xff]
    %v444 = vld [vmem:[#allocation4 + $0x370] sm:$0xff]
    %v445 = vld [vmem:[#allocation4 + $0x378] sm:$0xff]
    %v446 = vld [vmem:[#allocation4 + $0x380] sm:$0xff]
    %v447 = vld [vmem:[#allocation4 + $0x388] sm:$0xff]
    %v448 = vld [vmem:[#allocation4 + $0x390] sm:$0xff]
    %v449 = vld [vmem:[#allocation4 + $0x398] sm:$0xff]
    %v450 = vld [vmem:[#allocation4 + $0x3a0] sm:$0xff]
    %v451 = vld [vmem:[#allocation4 + $0x3a8] sm:$0xff]
    %v452 = vld [vmem:[#allocation4 + $0x3b0] sm:$0xff]
    %v453 = vld [vmem:[#allocation4 + $0x3b8] sm:$0xff]
    %v454 = vld [vmem:[#allocation4 + $0x3c0] sm:$0xff]
    %v455 = vld [vmem:[#allocation4 + $0x3c8] sm:$0xff]
    %v456 = vld [vmem:[#allocation4 + $0x3d0] sm:$0xff]
    %v457 = vld [vmem:[#allocation4 + $0x3d8] sm:$0xff]
    %v458 = vld [vmem:[#allocation4 + $0x3e0] sm:$0xff]
    %v459 = vld [vmem:[#allocation4 + $0x3e8] sm:$0xff]
    %v460 = vld [vmem:[#allocation4 + $0x3f0] sm:$0xff]
    %v461 = vld [vmem:[#allocation4 + $0x3f8] sm:$0xff]
    %v462 = vld [vmem:[#allocation7] sm:$0xff]
    %v463 = vld [vmem:[#allocation7 + $0x8] sm:$0xff]
    %v464 = vld [vmem:[#allocation7 + $0x10] sm:$0xff]
    %v465 = vld [vmem:[#allocation7 + $0x18] sm:$0xff]
    %v466 = vld [vmem:[#allocation7 + $0x20] sm:$0xff]
    %v467 = vld [vmem:[#allocation7 + $0x28] sm:$0xff]
    %v468 = vld [vmem:[#allocation7 + $0x30] sm:$0xff]
    %v469 = vld [vmem:[#allocation7 + $0x38] sm:$0xff]
    %v470 = vld [vmem:[#allocation7 + $0x40] sm:$0xff]
    %v471 = vld [vmem:[#allocation7 + $0x48] sm:$0xff]
    %v472 = vld [vmem:[#allocation7 + $0x50] sm:$0xff]
    %v473 = vld [vmem:[#allocation7 + $0x58] sm:$0xff]
    %v474 = vld [vmem:[#allocation7 + $0x60] sm:$0xff]
    %v475 = vld [vmem:[#allocation7 + $0x68] sm:$0xff]
    %v476 = vld [vmem:[#allocation7 + $0x70] sm:$0xff]
    %v477 = vld [vmem:[#allocation7 + $0x78] sm:$0xff]
    %v478 = vld [vmem:[#allocation7 + $0x80] sm:$0xff]
    %v479 = vld [vmem:[#allocation7 + $0x88] sm:$0xff]
    %v480 = vld [vmem:[#allocation7 + $0x90] sm:$0xff]
    %v481 = vld [vmem:[#allocation7 + $0x98] sm:$0xff]
    %v482 = vld [vmem:[#allocation7 + $0xa0] sm:$0xff]
    %v483 = vld [vmem:[#allocation7 + $0xa8] sm:$0xff]
    %v484 = vld [vmem:[#allocation7 + $0xb0] sm:$0xff]
    %v485 = vld [vmem:[#allocation7 + $0xb8] sm:$0xff]
    %v486 = vld [vmem:[#allocation7 + $0xc0] sm:$0xff]
    %v487 = vld [vmem:[#allocation7 + $0xc8] sm:$0xff]
    %v488 = vld [vmem:[#allocation7 + $0xd0] sm:$0xff]
    %v489 = vld [vmem:[#allocation7 + $0xd8] sm:$0xff]
    %v490 = vld [vmem:[#allocation7 + $0xe0] sm:$0xff]
    %v491 = vld [vmem:[#allocation7 + $0xe8] sm:$0xff]
    %v492 = vld [vmem:[#allocation7 + $0xf0] sm:$0xff]
    %v493 = vld [vmem:[#allocation7 + $0xf8] sm:$0xff]
    %v494 = vld [vmem:[#allocation7 + $0x100] sm:$0xff]
    %v495 = vld [vmem:[#allocation7 + $0x108] sm:$0xff]
    %v496 = vld [vmem:[#allocation7 + $0x110] sm:$0xff]
    %v497 = vld [vmem:[#allocation7 + $0x118] sm:$0xff]
    %v498 = vld [vmem:[#allocation7 + $0x120] sm:$0xff]
    %v499 = vld [vmem:[#allocation7 + $0x128] sm:$0xff]
    %v500 = vld [vmem:[#allocation7 + $0x130] sm:$0xff]
    %v501 = vld [vmem:[#allocation7 + $0x138] sm:$0xff]
    %v502 = vld [vmem:[#allocation7 + $0x140] sm:$0xff]
    %v503 = vld [vmem:[#allocation7 + $0x148] sm:$0xff]
    %v504 = vld [vmem:[#allocation7 + $0x150] sm:$0xff]
    %v505 = vld [vmem:[#allocation7 + $0x158] sm:$0xff]
    %v506 = vld [vmem:[#allocation7 + $0x160] sm:$0xff]
    %v507 = vld [vmem:[#allocation7 + $0x168] sm:$0xff]
    %v508 = vld [vmem:[#allocation7 + $0x170] sm:$0xff]
    %v509 = vld [vmem:[#allocation7 + $0x178] sm:$0xff]
    %v510 = vld [vmem:[#allocation7 + $0x180] sm:$0xff]
    %v511 = vld [vmem:[#allocation7 + $0x188] sm:$0xff]
    %v512 = vld [vmem:[#allocation7 + $0x190] sm:$0xff]
    %v513 = vld [vmem:[#allocation7 + $0x198] sm:$0xff]
    %v514 = vld [vmem:[#allocation7 + $0x1a0] sm:$0xff]
    %v515 = vld [vmem:[#allocation7 + $0x1a8] sm:$0xff]
    %v516 = vld [vmem:[#allocation7 + $0x1b0] sm:$0xff]
    %v517 = vld [vmem:[#allocation7 + $0x1b8] sm:$0xff]
    %v518 = vld [vmem:[#allocation7 + $0x1c0] sm:$0xff]
    %v519 = vld [vmem:[#allocation7 + $0x1c8] sm:$0xff]
    %v520 = vld [vmem:[#allocation7 + $0x1d0] sm:$0xff]
    %v521 = vld [vmem:[#allocation7 + $0x1d8] sm:$0xff]
    %v522 = vld [vmem:[#allocation7 + $0x1e0] sm:$0xff]
    %v523 = vld [vmem:[#allocation7 + $0x1e8] sm:$0xff]
    %v524 = vld [vmem:[#allocation7 + $0x1f0] sm:$0xff]
    %v525 = vld [vmem:[#allocation7 + $0x1f8] sm:$0xff]
    %v526 = vld [vmem:[#allocation7 + $0x200] sm:$0xff]
    %v527 = vld [vmem:[#allocation7 + $0x208] sm:$0xff]
    %v528 = vld [vmem:[#allocation7 + $0x210] sm:$0xff]
    %v529 = vld [vmem:[#allocation7 + $0x218] sm:$0xff]
    %v530 = vld [vmem:[#allocation7 + $0x220] sm:$0xff]
    %v531 = vld [vmem:[#allocation7 + $0x228] sm:$0xff]
    %v532 = vld [vmem:[#allocation7 + $0x230] sm:$0xff]
    %v533 = vld [vmem:[#allocation7 + $0x238] sm:$0xff]
    %v534 = vld [vmem:[#allocation7 + $0x240] sm:$0xff]
    %v535 = vld [vmem:[#allocation7 + $0x248] sm:$0xff]
    %v536 = vld [vmem:[#allocation7 + $0x250] sm:$0xff]
    %v537 = vld [vmem:[#allocation7 + $0x258] sm:$0xff]
    %v538 = vld [vmem:[#allocation7 + $0x260] sm:$0xff]
    %v539 = vld [vmem:[#allocation7 + $0x268] sm:$0xff]
    %v540 = vld [vmem:[#allocation7 + $0x270] sm:$0xff]
    %v541 = vld [vmem:[#allocation7 + $0x278] sm:$0xff]
    %v542 = vld [vmem:[#allocation7 + $0x280] sm:$0xff]
    %v543 = vld [vmem:[#allocation7 + $0x288] sm:$0xff]
    %v544 = vld [vmem:[#allocation7 + $0x290] sm:$0xff]
    %v545 = vld [vmem:[#allocation7 + $0x298] sm:$0xff]
    %v546 = vld [vmem:[#allocation7 + $0x2a0] sm:$0xff]
    %v547 = vld [vmem:[#allocation7 + $0x2a8] sm:$0xff]
    %v548 = vld [vmem:[#allocation7 + $0x2b0] sm:$0xff]
    %v549 = vld [vmem:[#allocation7 + $0x2b8] sm:$0xff]
    %v550 = vld [vmem:[#allocation7 + $0x2c0] sm:$0xff]
    %v551 = vld [vmem:[#allocation7 + $0x2c8] sm:$0xff]
    %v552 = vld [vmem:[#allocation7 + $0x2d0] sm:$0xff]
    %v553 = vld [vmem:[#allocation7 + $0x2d8] sm:$0xff]
    %v554 = vld [vmem:[#allocation7 + $0x2e0] sm:$0xff]
    %v555 = vld [vmem:[#allocation7 + $0x2e8] sm:$0xff]
    %v556 = vld [vmem:[#allocation7 + $0x2f0] sm:$0xff]
    %v557 = vld [vmem:[#allocation7 + $0x2f8] sm:$0xff]
    %v558 = vld [vmem:[#allocation7 + $0x300] sm:$0xff]
    %v559 = vld [vmem:[#allocation7 + $0x308] sm:$0xff]
    %v560 = vld [vmem:[#allocation7 + $0x310] sm:$0xff]
    %v561 = vld [vmem:[#allocation7 + $0x318] sm:$0xff]
    %v562 = vld [vmem:[#allocation7 + $0x320] sm:$0xff]
    %v563 = vld [vmem:[#allocation7 + $0x328] sm:$0xff]
    %v564 = vld [vmem:[#allocation7 + $0x330] sm:$0xff]
    %v565 = vld [vmem:[#allocation7 + $0x338] sm:$0xff]
    %v566 = vld [vmem:[#allocation7 + $0x340] sm:$0xff]
    %v567 = vld [vmem:[#allocation7 + $0x348] sm:$0xff]
    %v568 = vld [vmem:[#allocation7 + $0x350] sm:$0xff]
    %v569 = vld [vmem:[#allocation7 + $0x358] sm:$0xff]
    %v570 = vld [vmem:[#allocation7 + $0x360] sm:$0xff]
    %v571 = vld [vmem:[#allocation7 + $0x368] sm:$0xff]
    %v572 = vld [vmem:[#allocation7 + $0x370] sm:$0xff]
    %v573 = vld [vmem:[#allocation7 + $0x378] sm:$0xff]
    %v574 = vld [vmem:[#allocation7 + $0x380] sm:$0xff]
    %v575 = vld [vmem:[#allocation7 + $0x388] sm:$0xff]
    %v576 = vld [vmem:[#allocation7 + $0x390] sm:$0xff]
    %v577 = vld [vmem:[#allocation7 + $0x398] sm:$0xff]
    %v578 = vld [vmem:[#allocation7 + $0x3a0] sm:$0xff]
    %v579 = vld [vmem:[#allocation7 + $0x3a8] sm:$0xff]
    %v580 = vld [vmem:[#allocation7 + $0x3b0] sm:$0xff]
    %v581 = vld [vmem:[#allocation7 + $0x3b8] sm:$0xff]
    %v582 = vld [vmem:[#allocation7 + $0x3c0] sm:$0xff]
    %v583 = vld [vmem:[#allocation7 + $0x3c8] sm:$0xff]
    %v584 = vld [vmem:[#allocation7 + $0x3d0] sm:$0xff]
    %v585 = vld [vmem:[#allocation7 + $0x3d8] sm:$0xff]
    %v586 = vld [vmem:[#allocation7 + $0x3e0] sm:$0xff]
    %v587 = vld [vmem:[#allocation7 + $0x3e8] sm:$0xff]
    %v588 = vld [vmem:[#allocation7 + $0x3f0] sm:$0xff]
    %v589 = vld [vmem:[#allocation7 + $0x3f8] sm:$0xff]
    %v590 = vld [vmem:[#allocation7 + $0x400] sm:$0xff]
    %v591 = vld [vmem:[#allocation7 + $0x408] sm:$0xff]
    %v592 = vld [vmem:[#allocation7 + $0x410] sm:$0xff]
    %v593 = vld [vmem:[#allocation7 + $0x418] sm:$0xff]
    %v594 = vld [vmem:[#allocation7 + $0x420] sm:$0xff]
    %v595 = vld [vmem:[#allocation7 + $0x428] sm:$0xff]
    %v596 = vld [vmem:[#allocation7 + $0x430] sm:$0xff]
    %v597 = vld [vmem:[#allocation7 + $0x438] sm:$0xff]
    %v598 = vld [vmem:[#allocation7 + $0x440] sm:$0xff]
    %v599 = vld [vmem:[#allocation7 + $0x448] sm:$0xff]
    %v600 = vld [vmem:[#allocation7 + $0x450] sm:$0xff]
    %v601 = vld [vmem:[#allocation7 + $0x458] sm:$0xff]
    %v602 = vld [vmem:[#allocation7 + $0x460] sm:$0xff]
    %v603 = vld [vmem:[#allocation7 + $0x468] sm:$0xff]
    %v604 = vld [vmem:[#allocation7 + $0x470] sm:$0xff]
    %v605 = vld [vmem:[#allocation7 + $0x478] sm:$0xff]
    %v606 = vld [vmem:[#allocation7 + $0x480] sm:$0xff]
    %v607 = vld [vmem:[#allocation7 + $0x488] sm:$0xff]
    %v608 = vld [vmem:[#allocation7 + $0x490] sm:$0xff]
    %v609 = vld [vmem:[#allocation7 + $0x498] sm:$0xff]
    %v610 = vld [vmem:[#allocation7 + $0x4a0] sm:$0xff]
    %v611 = vld [vmem:[#allocation7 + $0x4a8] sm:$0xff]
    %v612 = vld [vmem:[#allocation7 + $0x4b0] sm:$0xff]
    %v613 = vld [vmem:[#allocation7 + $0x4b8] sm:$0xff]
    %v614 = vld [vmem:[#allocation7 + $0x4c0] sm:$0xff]
    %v615 = vld [vmem:[#allocation7 + $0x4c8] sm:$0xff]
    %v616 = vld [vmem:[#allocation7 + $0x4d0] sm:$0xff]
    %v617 = vld [vmem:[#allocation7 + $0x4d8] sm:$0xff]
    %v618 = vld [vmem:[#allocation7 + $0x4e0] sm:$0xff]
    %v619 = vld [vmem:[#allocation7 + $0x4e8] sm:$0xff]
    %v620 = vld [vmem:[#allocation7 + $0x4f0] sm:$0xff]
    %v621 = vld [vmem:[#allocation7 + $0x4f8] sm:$0xff]
    %v622 = vld [vmem:[#allocation7 + $0x500] sm:$0xff]
    %v623 = vld [vmem:[#allocation7 + $0x508] sm:$0xff]
    %v624 = vld [vmem:[#allocation7 + $0x510] sm:$0xff]
    %v625 = vld [vmem:[#allocation7 + $0x518] sm:$0xff]
    %v626 = vld [vmem:[#allocation7 + $0x520] sm:$0xff]
    %v627 = vld [vmem:[#allocation7 + $0x528] sm:$0xff]
    %v628 = vld [vmem:[#allocation7 + $0x530] sm:$0xff]
    %v629 = vld [vmem:[#allocation7 + $0x538] sm:$0xff]
    %v630 = vld [vmem:[#allocation7 + $0x540] sm:$0xff]
    %v631 = vld [vmem:[#allocation7 + $0x548] sm:$0xff]
    %v632 = vld [vmem:[#allocation7 + $0x550] sm:$0xff]
    %v633 = vld [vmem:[#allocation7 + $0x558] sm:$0xff]
    %v634 = vld [vmem:[#allocation7 + $0x560] sm:$0xff]
    %v635 = vld [vmem:[#allocation7 + $0x568] sm:$0xff]
    %v636 = vld [vmem:[#allocation7 + $0x570] sm:$0xff]
    %v637 = vld [vmem:[#allocation7 + $0x578] sm:$0xff]
    %v638 = vld [vmem:[#allocation7 + $0x580] sm:$0xff]
    %v639 = vld [vmem:[#allocation7 + $0x588] sm:$0xff]
    %v640 = vld [vmem:[#allocation7 + $0x590] sm:$0xff]
    %v641 = vld [vmem:[#allocation7 + $0x598] sm:$0xff]
    %v642 = vld [vmem:[#allocation7 + $0x5a0] sm:$0xff]
    %v643 = vld [vmem:[#allocation7 + $0x5a8] sm:$0xff]
    %v644 = vld [vmem:[#allocation7 + $0x5b0] sm:$0xff]
    %v645 = vld [vmem:[#allocation7 + $0x5b8] sm:$0xff]
    %v646 = vld [vmem:[#allocation7 + $0x5c0] sm:$0xff]
    %v647 = vld [vmem:[#allocation7 + $0x5c8] sm:$0xff]
    %v648 = vld [vmem:[#allocation7 + $0x5d0] sm:$0xff]
    %v649 = vld [vmem:[#allocation7 + $0x5d8] sm:$0xff]
    %v650 = vld [vmem:[#allocation7 + $0x5e0] sm:$0xff]
    %v651 = vld [vmem:[#allocation7 + $0x5e8] sm:$0xff]
    %v652 = vld [vmem:[#allocation7 + $0x5f0] sm:$0xff]
    %v653 = vld [vmem:[#allocation7 + $0x5f8] sm:$0xff]
    %v654 = vld [vmem:[#allocation7 + $0x600] sm:$0xff]
    %v655 = vld [vmem:[#allocation7 + $0x608] sm:$0xff]
    %v656 = vld [vmem:[#allocation7 + $0x610] sm:$0xff]
    %v657 = vld [vmem:[#allocation7 + $0x618] sm:$0xff]
    %v658 = vld [vmem:[#allocation7 + $0x620] sm:$0xff]
    %v659 = vld [vmem:[#allocation7 + $0x628] sm:$0xff]
    %v660 = vld [vmem:[#allocation7 + $0x630] sm:$0xff]
    %v661 = vld [vmem:[#allocation7 + $0x638] sm:$0xff]
    %v662 = vld [vmem:[#allocation7 + $0x640] sm:$0xff]
    %v663 = vld [vmem:[#allocation7 + $0x648] sm:$0xff]
    %v664 = vld [vmem:[#allocation7 + $0x650] sm:$0xff]
    %v665 = vld [vmem:[#allocation7 + $0x658] sm:$0xff]
    %v666 = vld [vmem:[#allocation7 + $0x660] sm:$0xff]
    %v667 = vld [vmem:[#allocation7 + $0x668] sm:$0xff]
    %v668 = vld [vmem:[#allocation7 + $0x670] sm:$0xff]
    %v669 = vld [vmem:[#allocation7 + $0x678] sm:$0xff]
    %v670 = vld [vmem:[#allocation7 + $0x680] sm:$0xff]
    %v671 = vld [vmem:[#allocation7 + $0x688] sm:$0xff]
    %v672 = vld [vmem:[#allocation7 + $0x690] sm:$0xff]
    %v673 = vld [vmem:[#allocation7 + $0x698] sm:$0xff]
    %v674 = vld [vmem:[#allocation7 + $0x6a0] sm:$0xff]
    %v675 = vld [vmem:[#allocation7 + $0x6a8] sm:$0xff]
    %v676 = vld [vmem:[#allocation7 + $0x6b0] sm:$0xff]
    %v677 = vld [vmem:[#allocation7 + $0x6b8] sm:$0xff]
    %v678 = vld [vmem:[#allocation7 + $0x6c0] sm:$0xff]
    %v679 = vld [vmem:[#allocation7 + $0x6c8] sm:$0xff]
    %v680 = vld [vmem:[#allocation7 + $0x6d0] sm:$0xff]
    %v681 = vld [vmem:[#allocation7 + $0x6d8] sm:$0xff]
    %v682 = vld [vmem:[#allocation7 + $0x6e0] sm:$0xff]
    %v683 = vld [vmem:[#allocation7 + $0x6e8] sm:$0xff]
    %v684 = vld [vmem:[#allocation7 + $0x6f0] sm:$0xff]
    %v685 = vld [vmem:[#allocation7 + $0x6f8] sm:$0xff]
    %v686 = vld [vmem:[#allocation7 + $0x700] sm:$0xff]
    %v687 = vld [vmem:[#allocation7 + $0x708] sm:$0xff]
    %v688 = vld [vmem:[#allocation7 + $0x710] sm:$0xff]
    %v689 = vld [vmem:[#allocation7 + $0x718] sm:$0xff]
    %v690 = vld [vmem:[#allocation7 + $0x720] sm:$0xff]
    %v691 = vld [vmem:[#allocation7 + $0x728] sm:$0xff]
    %v692 = vld [vmem:[#allocation7 + $0x730] sm:$0xff]
    %v693 = vld [vmem:[#allocation7 + $0x738] sm:$0xff]
    %v694 = vld [vmem:[#allocation7 + $0x740] sm:$0xff]
    %v695 = vld [vmem:[#allocation7 + $0x748] sm:$0xff]
    %v696 = vld [vmem:[#allocation7 + $0x750] sm:$0xff]
    %v697 = vld [vmem:[#allocation7 + $0x758] sm:$0xff]
    %v698 = vld [vmem:[#allocation7 + $0x760] sm:$0xff]
    %v699 = vld [vmem:[#allocation7 + $0x768] sm:$0xff]
    %v700 = vld [vmem:[#allocation7 + $0x770] sm:$0xff]
    %v701 = vld [vmem:[#allocation7 + $0x778] sm:$0xff]
    %v702 = vld [vmem:[#allocation7 + $0x780] sm:$0xff]
    %v703 = vld [vmem:[#allocation7 + $0x788] sm:$0xff]
    %v704 = vld [vmem:[#allocation7 + $0x790] sm:$0xff]
    %v705 = vld [vmem:[#allocation7 + $0x798] sm:$0xff]
    %v706 = vld [vmem:[#allocation7 + $0x7a0] sm:$0xff]
    %v707 = vld [vmem:[#allocation7 + $0x7a8] sm:$0xff]
    %v708 = vld [vmem:[#allocation7 + $0x7b0] sm:$0xff]
    %v709 = vld [vmem:[#allocation7 + $0x7b8] sm:$0xff]
    %v710 = vld [vmem:[#allocation7 + $0x7c0] sm:$0xff]
    %v711 = vld [vmem:[#allocation7 + $0x7c8] sm:$0xff]
    %v712 = vld [vmem:[#allocation7 + $0x7d0] sm:$0xff]
    %v713 = vld [vmem:[#allocation7 + $0x7d8] sm:$0xff]
    %v714 = vld [vmem:[#allocation7 + $0x7e0] sm:$0xff]
    %v715 = vld [vmem:[#allocation7 + $0x7e8] sm:$0xff]
    %v716 = vld [vmem:[#allocation7 + $0x7f0] sm:$0xff]
    %v717 = vld [vmem:[#allocation7 + $0x7f8] sm:$0xff]
    %v718 = vld [vmem:[#allocation7 + $0x800] sm:$0xff]
    %v719 = vld [vmem:[#allocation7 + $0x808] sm:$0xff]
    %v720 = vld [vmem:[#allocation7 + $0x810] sm:$0xff]
    %v721 = vld [vmem:[#allocation7 + $0x818] sm:$0xff]
    %v722 = vld [vmem:[#allocation7 + $0x820] sm:$0xff]
    %v723 = vld [vmem:[#allocation7 + $0x828] sm:$0xff]
    %v724 = vld [vmem:[#allocation7 + $0x830] sm:$0xff]
    %v725 = vld [vmem:[#allocation7 + $0x838] sm:$0xff]
    %v726 = vld [vmem:[#allocation7 + $0x840] sm:$0xff]
    %v727 = vld [vmem:[#allocation7 + $0x848] sm:$0xff]
    %v728 = vld [vmem:[#allocation7 + $0x850] sm:$0xff]
    %v729 = vld [vmem:[#allocation7 + $0x858] sm:$0xff]
    %v730 = vld [vmem:[#allocation7 + $0x860] sm:$0xff]
    %v731 = vld [vmem:[#allocation7 + $0x868] sm:$0xff]
    %v732 = vld [vmem:[#allocation7 + $0x870] sm:$0xff]
    %v733 = vld [vmem:[#allocation7 + $0x878] sm:$0xff]
    %v734 = vld [vmem:[#allocation7 + $0x880] sm:$0xff]
    %v735 = vld [vmem:[#allocation7 + $0x888] sm:$0xff]
    %v736 = vld [vmem:[#allocation7 + $0x890] sm:$0xff]
    %v737 = vld [vmem:[#allocation7 + $0x898] sm:$0xff]
    %v738 = vld [vmem:[#allocation7 + $0x8a0] sm:$0xff]
    %v739 = vld [vmem:[#allocation7 + $0x8a8] sm:$0xff]
    %v740 = vld [vmem:[#allocation7 + $0x8b0] sm:$0xff]
    %v741 = vld [vmem:[#allocation7 + $0x8b8] sm:$0xff]
    %v742 = vld [vmem:[#allocation7 + $0x8c0] sm:$0xff]
    %v743 = vld [vmem:[#allocation7 + $0x8c8] sm:$0xff]
    %v744 = vld [vmem:[#allocation7 + $0x8d0] sm:$0xff]
    %v745 = vld [vmem:[#allocation7 + $0x8d8] sm:$0xff]
    %v746 = vld [vmem:[#allocation7 + $0x8e0] sm:$0xff]
    %v747 = vld [vmem:[#allocation7 + $0x8e8] sm:$0xff]
    %v748 = vld [vmem:[#allocation7 + $0x8f0] sm:$0xff]
    %v749 = vld [vmem:[#allocation7 + $0x8f8] sm:$0xff]
    %v750 = vld [vmem:[#allocation7 + $0x900] sm:$0xff]
    %v751 = vld [vmem:[#allocation7 + $0x908] sm:$0xff]
    %v752 = vld [vmem:[#allocation7 + $0x910] sm:$0xff]
    %v753 = vld [vmem:[#allocation7 + $0x918] sm:$0xff]
    %v754 = vld [vmem:[#allocation7 + $0x920] sm:$0xff]
    %v755 = vld [vmem:[#allocation7 + $0x928] sm:$0xff]
    %v756 = vld [vmem:[#allocation7 + $0x930] sm:$0xff]
    %v757 = vld [vmem:[#allocation7 + $0x938] sm:$0xff]
    %v758 = vld [vmem:[#allocation7 + $0x940] sm:$0xff]
    %v759 = vld [vmem:[#allocation7 + $0x948] sm:$0xff]
    %v760 = vld [vmem:[#allocation7 + $0x950] sm:$0xff]
    %v761 = vld [vmem:[#allocation7 + $0x958] sm:$0xff]
    %v762 = vld [vmem:[#allocation7 + $0x960] sm:$0xff]
    %v763 = vld [vmem:[#allocation7 + $0x968] sm:$0xff]
    %v764 = vld [vmem:[#allocation7 + $0x970] sm:$0xff]
    %v765 = vld [vmem:[#allocation7 + $0x978] sm:$0xff]
    %v766 = vld [vmem:[#allocation7 + $0x980] sm:$0xff]
    %v767 = vld [vmem:[#allocation7 + $0x988] sm:$0xff]
    %v768 = vld [vmem:[#allocation7 + $0x990] sm:$0xff]
    %v769 = vld [vmem:[#allocation7 + $0x998] sm:$0xff]
    %v770 = vld [vmem:[#allocation7 + $0x9a0] sm:$0xff]
    %v771 = vld [vmem:[#allocation7 + $0x9a8] sm:$0xff]
    %v772 = vld [vmem:[#allocation7 + $0x9b0] sm:$0xff]
    %v773 = vld [vmem:[#allocation7 + $0x9b8] sm:$0xff]
    %v774 = vld [vmem:[#allocation7 + $0x9c0] sm:$0xff]
    %v775 = vld [vmem:[#allocation7 + $0x9c8] sm:$0xff]
    %v776 = vld [vmem:[#allocation7 + $0x9d0] sm:$0xff]
    %v777 = vld [vmem:[#allocation7 + $0x9d8] sm:$0xff]
    %v778 = vld [vmem:[#allocation7 + $0x9e0] sm:$0xff]
    %v779 = vld [vmem:[#allocation7 + $0x9e8] sm:$0xff]
    %v780 = vld [vmem:[#allocation7 + $0x9f0] sm:$0xff]
    %v781 = vld [vmem:[#allocation7 + $0x9f8] sm:$0xff]
    %v782 = vld [vmem:[#allocation7 + $0xa00] sm:$0xff]
    %v783 = vld [vmem:[#allocation7 + $0xa08] sm:$0xff]
    %v784 = vld [vmem:[#allocation7 + $0xa10] sm:$0xff]
    %v785 = vld [vmem:[#allocation7 + $0xa18] sm:$0xff]
    %v786 = vld [vmem:[#allocation7 + $0xa20] sm:$0xff]
    %v787 = vld [vmem:[#allocation7 + $0xa28] sm:$0xff]
    %v788 = vld [vmem:[#allocation7 + $0xa30] sm:$0xff]
    %v789 = vld [vmem:[#allocation7 + $0xa38] sm:$0xff]
    %v790 = vld [vmem:[#allocation7 + $0xa40] sm:$0xff]
    %v791 = vld [vmem:[#allocation7 + $0xa48] sm:$0xff]
    %v792 = vld [vmem:[#allocation7 + $0xa50] sm:$0xff]
    %v793 = vld [vmem:[#allocation7 + $0xa58] sm:$0xff]
    %v794 = vld [vmem:[#allocation7 + $0xa60] sm:$0xff]
    %v795 = vld [vmem:[#allocation7 + $0xa68] sm:$0xff]
    %v796 = vld [vmem:[#allocation7 + $0xa70] sm:$0xff]
    %v797 = vld [vmem:[#allocation7 + $0xa78] sm:$0xff]
    %v798 = vld [vmem:[#allocation7 + $0xa80] sm:$0xff]
    %v799 = vld [vmem:[#allocation7 + $0xa88] sm:$0xff]
    %v800 = vld [vmem:[#allocation7 + $0xa90] sm:$0xff]
    %v801 = vld [vmem:[#allocation7 + $0xa98] sm:$0xff]
    %v802 = vld [vmem:[#allocation7 + $0xaa0] sm:$0xff]
    %v803 = vld [vmem:[#allocation7 + $0xaa8] sm:$0xff]
    %v804 = vld [vmem:[#allocation7 + $0xab0] sm:$0xff]
    %v805 = vld [vmem:[#allocation7 + $0xab8] sm:$0xff]
    %v806 = vld [vmem:[#allocation7 + $0xac0] sm:$0xff]
    %v807 = vld [vmem:[#allocation7 + $0xac8] sm:$0xff]
    %v808 = vld [vmem:[#allocation7 + $0xad0] sm:$0xff]
    %v809 = vld [vmem:[#allocation7 + $0xad8] sm:$0xff]
    %v810 = vld [vmem:[#allocation7 + $0xae0] sm:$0xff]
    %v811 = vld [vmem:[#allocation7 + $0xae8] sm:$0xff]
    %v812 = vld [vmem:[#allocation7 + $0xaf0] sm:$0xff]
    %v813 = vld [vmem:[#allocation7 + $0xaf8] sm:$0xff]
    %v814 = vld [vmem:[#allocation7 + $0xb00] sm:$0xff]
    %v815 = vld [vmem:[#allocation7 + $0xb08] sm:$0xff]
    %v816 = vld [vmem:[#allocation7 + $0xb10] sm:$0xff]
    %v817 = vld [vmem:[#allocation7 + $0xb18] sm:$0xff]
    %v818 = vld [vmem:[#allocation7 + $0xb20] sm:$0xff]
    %v819 = vld [vmem:[#allocation7 + $0xb28] sm:$0xff]
    %v820 = vld [vmem:[#allocation7 + $0xb30] sm:$0xff]
    %v821 = vld [vmem:[#allocation7 + $0xb38] sm:$0xff]
    %v822 = vld [vmem:[#allocation7 + $0xb40] sm:$0xff]
    %v823 = vld [vmem:[#allocation7 + $0xb48] sm:$0xff]
    %v824 = vld [vmem:[#allocation7 + $0xb50] sm:$0xff]
    %v825 = vld [vmem:[#allocation7 + $0xb58] sm:$0xff]
    %v826 = vld [vmem:[#allocation7 + $0xb60] sm:$0xff]
    %v827 = vld [vmem:[#allocation7 + $0xb68] sm:$0xff]
    %v828 = vld [vmem:[#allocation7 + $0xb70] sm:$0xff]
    %v829 = vld [vmem:[#allocation7 + $0xb78] sm:$0xff]
    %v830 = vld [vmem:[#allocation7 + $0xb80] sm:$0xff]
    %v831 = vld [vmem:[#allocation7 + $0xb88] sm:$0xff]
    %v832 = vld [vmem:[#allocation7 + $0xb90] sm:$0xff]
    %v833 = vld [vmem:[#allocation7 + $0xb98] sm:$0xff]
    %v834 = vld [vmem:[#allocation7 + $0xba0] sm:$0xff]
    %v835 = vld [vmem:[#allocation7 + $0xba8] sm:$0xff]
    %v836 = vld [vmem:[#allocation7 + $0xbb0] sm:$0xff]
    %v837 = vld [vmem:[#allocation7 + $0xbb8] sm:$0xff]
    %v838 = vld [vmem:[#allocation7 + $0xbc0] sm:$0xff]
    %v839 = vld [vmem:[#allocation7 + $0xbc8] sm:$0xff]
    %v840 = vld [vmem:[#allocation7 + $0xbd0] sm:$0xff]
    %v841 = vld [vmem:[#allocation7 + $0xbd8] sm:$0xff]
    %v842 = vld [vmem:[#allocation7 + $0xbe0] sm:$0xff]
    %v843 = vld [vmem:[#allocation7 + $0xbe8] sm:$0xff]
    %v844 = vld [vmem:[#allocation7 + $0xbf0] sm:$0xff]
    %v845 = vld [vmem:[#allocation7 + $0xbf8] sm:$0xff]
    %v846 = vld [vmem:[#allocation7 + $0xc00] sm:$0xff]
    %v847 = vld [vmem:[#allocation7 + $0xc08] sm:$0xff]
    %v848 = vld [vmem:[#allocation7 + $0xc10] sm:$0xff]
    %v849 = vld [vmem:[#allocation7 + $0xc18] sm:$0xff]
    %v850 = vld [vmem:[#allocation7 + $0xc20] sm:$0xff]
    %v851 = vld [vmem:[#allocation7 + $0xc28] sm:$0xff]
    %v852 = vld [vmem:[#allocation7 + $0xc30] sm:$0xff]
    %v853 = vld [vmem:[#allocation7 + $0xc38] sm:$0xff]
    %v854 = vld [vmem:[#allocation7 + $0xc40] sm:$0xff]
    %v855 = vld [vmem:[#allocation7 + $0xc48] sm:$0xff]
    %v856 = vld [vmem:[#allocation7 + $0xc50] sm:$0xff]
    %v857 = vld [vmem:[#allocation7 + $0xc58] sm:$0xff]
    %v858 = vld [vmem:[#allocation7 + $0xc60] sm:$0xff]
    %v859 = vld [vmem:[#allocation7 + $0xc68] sm:$0xff]
    %v860 = vld [vmem:[#allocation7 + $0xc70] sm:$0xff]
    %v861 = vld [vmem:[#allocation7 + $0xc78] sm:$0xff]
    %v862 = vld [vmem:[#allocation7 + $0xc80] sm:$0xff]
    %v863 = vld [vmem:[#allocation7 + $0xc88] sm:$0xff]
    %v864 = vld [vmem:[#allocation7 + $0xc90] sm:$0xff]
    %v865 = vld [vmem:[#allocation7 + $0xc98] sm:$0xff]
    %v866 = vld [vmem:[#allocation7 + $0xca0] sm:$0xff]
    %v867 = vld [vmem:[#allocation7 + $0xca8] sm:$0xff]
    %v868 = vld [vmem:[#allocation7 + $0xcb0] sm:$0xff]
    %v869 = vld [vmem:[#allocation7 + $0xcb8] sm:$0xff]
    %v870 = vld [vmem:[#allocation7 + $0xcc0] sm:$0xff]
    %v871 = vld [vmem:[#allocation7 + $0xcc8] sm:$0xff]
    %v872 = vld [vmem:[#allocation7 + $0xcd0] sm:$0xff]
    %v873 = vld [vmem:[#allocation7 + $0xcd8] sm:$0xff]
    %v874 = vld [vmem:[#allocation7 + $0xce0] sm:$0xff]
    %v875 = vld [vmem:[#allocation7 + $0xce8] sm:$0xff]
    %v876 = vld [vmem:[#allocation7 + $0xcf0] sm:$0xff]
    %v877 = vld [vmem:[#allocation7 + $0xcf8] sm:$0xff]
    %v878 = vld [vmem:[#allocation7 + $0xd00] sm:$0xff]
    %v879 = vld [vmem:[#allocation7 + $0xd08] sm:$0xff]
    %v880 = vld [vmem:[#allocation7 + $0xd10] sm:$0xff]
    %v881 = vld [vmem:[#allocation7 + $0xd18] sm:$0xff]
    %v882 = vld [vmem:[#allocation7 + $0xd20] sm:$0xff]
    %v883 = vld [vmem:[#allocation7 + $0xd28] sm:$0xff]
    %v884 = vld [vmem:[#allocation7 + $0xd30] sm:$0xff]
    %v885 = vld [vmem:[#allocation7 + $0xd38] sm:$0xff]
    %v886 = vld [vmem:[#allocation7 + $0xd40] sm:$0xff]
    %v887 = vld [vmem:[#allocation7 + $0xd48] sm:$0xff]
    %v888 = vld [vmem:[#allocation7 + $0xd50] sm:$0xff]
    %v889 = vld [vmem:[#allocation7 + $0xd58] sm:$0xff]
    %v890 = vld [vmem:[#allocation7 + $0xd60] sm:$0xff]
    %v891 = vld [vmem:[#allocation7 + $0xd68] sm:$0xff]
    %v892 = vld [vmem:[#allocation7 + $0xd70] sm:$0xff]
    %v893 = vld [vmem:[#allocation7 + $0xd78] sm:$0xff]
    %v894 = vld [vmem:[#allocation7 + $0xd80] sm:$0xff]
    %v895 = vld [vmem:[#allocation7 + $0xd88] sm:$0xff]
    %v896 = vld [vmem:[#allocation7 + $0xd90] sm:$0xff]
    %v897 = vld [vmem:[#allocation7 + $0xd98] sm:$0xff]
    %v898 = vld [vmem:[#allocation7 + $0xda0] sm:$0xff]
    %v899 = vld [vmem:[#allocation7 + $0xda8] sm:$0xff]
    %v900 = vld [vmem:[#allocation7 + $0xdb0] sm:$0xff]
    %v901 = vld [vmem:[#allocation7 + $0xdb8] sm:$0xff]
    %v902 = vld [vmem:[#allocation7 + $0xdc0] sm:$0xff]
    %v903 = vld [vmem:[#allocation7 + $0xdc8] sm:$0xff]
    %v904 = vld [vmem:[#allocation7 + $0xdd0] sm:$0xff]
    %v905 = vld [vmem:[#allocation7 + $0xdd8] sm:$0xff]
    %v906 = vld [vmem:[#allocation7 + $0xde0] sm:$0xff]
    %v907 = vld [vmem:[#allocation7 + $0xde8] sm:$0xff]
    %v908 = vld [vmem:[#allocation7 + $0xdf0] sm:$0xff]
    %v909 = vld [vmem:[#allocation7 + $0xdf8] sm:$0xff]
    %v910 = vld [vmem:[#allocation7 + $0xe00] sm:$0xff]
    %v911 = vld [vmem:[#allocation7 + $0xe08] sm:$0xff]
    %v912 = vld [vmem:[#allocation7 + $0xe10] sm:$0xff]
    %v913 = vld [vmem:[#allocation7 + $0xe18] sm:$0xff]
    %v914 = vld [vmem:[#allocation7 + $0xe20] sm:$0xff]
    %v915 = vld [vmem:[#allocation7 + $0xe28] sm:$0xff]
    %v916 = vld [vmem:[#allocation7 + $0xe30] sm:$0xff]
    %v917 = vld [vmem:[#allocation7 + $0xe38] sm:$0xff]
    %v918 = vld [vmem:[#allocation7 + $0xe40] sm:$0xff]
    %v919 = vld [vmem:[#allocation7 + $0xe48] sm:$0xff]
    %v920 = vld [vmem:[#allocation7 + $0xe50] sm:$0xff]
    %v921 = vld [vmem:[#allocation7 + $0xe58] sm:$0xff]
    %v922 = vld [vmem:[#allocation7 + $0xe60] sm:$0xff]
    %v923 = vld [vmem:[#allocation7 + $0xe68] sm:$0xff]
    %v924 = vld [vmem:[#allocation7 + $0xe70] sm:$0xff]
    %v925 = vld [vmem:[#allocation7 + $0xe78] sm:$0xff]
    %v926 = vld [vmem:[#allocation7 + $0xe80] sm:$0xff]
    %v927 = vld [vmem:[#allocation7 + $0xe88] sm:$0xff]
    %v928 = vld [vmem:[#allocation7 + $0xe90] sm:$0xff]
    %v929 = vld [vmem:[#allocation7 + $0xe98] sm:$0xff]
    %v930 = vld [vmem:[#allocation7 + $0xea0] sm:$0xff]
    %v931 = vld [vmem:[#allocation7 + $0xea8] sm:$0xff]
    %v932 = vld [vmem:[#allocation7 + $0xeb0] sm:$0xff]
    %v933 = vld [vmem:[#allocation7 + $0xeb8] sm:$0xff]
    %v934 = vld [vmem:[#allocation7 + $0xec0] sm:$0xff]
    %v935 = vld [vmem:[#allocation7 + $0xec8] sm:$0xff]
    %v936 = vld [vmem:[#allocation7 + $0xed0] sm:$0xff]
    %v937 = vld [vmem:[#allocation7 + $0xed8] sm:$0xff]
    %v938 = vld [vmem:[#allocation7 + $0xee0] sm:$0xff]
    %v939 = vld [vmem:[#allocation7 + $0xee8] sm:$0xff]
    %v940 = vld [vmem:[#allocation7 + $0xef0] sm:$0xff]
    %v941 = vld [vmem:[#allocation7 + $0xef8] sm:$0xff]
    %v942 = vld [vmem:[#allocation7 + $0xf00] sm:$0xff]
    %v943 = vld [vmem:[#allocation7 + $0xf08] sm:$0xff]
    %v944 = vld [vmem:[#allocation7 + $0xf10] sm:$0xff]
    %v945 = vld [vmem:[#allocation7 + $0xf18] sm:$0xff]
    %v946 = vld [vmem:[#allocation7 + $0xf20] sm:$0xff]
    %v947 = vld [vmem:[#allocation7 + $0xf28] sm:$0xff]
    %v948 = vld [vmem:[#allocation7 + $0xf30] sm:$0xff]
    %v949 = vld [vmem:[#allocation7 + $0xf38] sm:$0xff]
    %v950 = vld [vmem:[#allocation7 + $0xf40] sm:$0xff]
    %v951 = vld [vmem:[#allocation7 + $0xf48] sm:$0xff]
    %v952 = vld [vmem:[#allocation7 + $0xf50] sm:$0xff]
    %v953 = vld [vmem:[#allocation7 + $0xf58] sm:$0xff]
    %v954 = vld [vmem:[#allocation7 + $0xf60] sm:$0xff]
    %v955 = vld [vmem:[#allocation7 + $0xf68] sm:$0xff]
    %v956 = vld [vmem:[#allocation7 + $0xf70] sm:$0xff]
    %v957 = vld [vmem:[#allocation7 + $0xf78] sm:$0xff]
    %v958 = vld [vmem:[#allocation7 + $0xf80] sm:$0xff]
    %v959 = vld [vmem:[#allocation7 + $0xf88] sm:$0xff]
    %v960 = vld [vmem:[#allocation7 + $0xf90] sm:$0xff]
    %v961 = vld [vmem:[#allocation7 + $0xf98] sm:$0xff]
    %v962 = vld [vmem:[#allocation7 + $0xfa0] sm:$0xff]
    %v963 = vld [vmem:[#allocation7 + $0xfa8] sm:$0xff]
    %v964 = vld [vmem:[#allocation7 + $0xfb0] sm:$0xff]
    %v965 = vld [vmem:[#allocation7 + $0xfb8] sm:$0xff]
    %v966 = vld [vmem:[#allocation7 + $0xfc0] sm:$0xff]
    %v967 = vld [vmem:[#allocation7 + $0xfc8] sm:$0xff]
    %v968 = vld [vmem:[#allocation7 + $0xfd0] sm:$0xff]
    %v969 = vld [vmem:[#allocation7 + $0xfd8] sm:$0xff]
    %v970 = vld [vmem:[#allocation7 + $0xfe0] sm:$0xff]
    %v971 = vld [vmem:[#allocation7 + $0xfe8] sm:$0xff]
    %v972 = vld [vmem:[#allocation7 + $0xff0] sm:$0xff]
    %v973 = vld [vmem:[#allocation7 + $0xff8] sm:$0xff]
    %v974 = vld [vmem:[#allocation10] sm:$0xff]
    %v975 = vld [vmem:[#allocation10 + $0x8] sm:$0xff]
    %v976 = vld [vmem:[#allocation10 + $0x10] sm:$0xff]
    %v977 = vld [vmem:[#allocation10 + $0x18] sm:$0xff]
    %v978 = vld [vmem:[#allocation10 + $0x20] sm:$0xff]
    %v979 = vld [vmem:[#allocation10 + $0x28] sm:$0xff]
    %v980 = vld [vmem:[#allocation10 + $0x30] sm:$0xff]
    %v981 = vld [vmem:[#allocation10 + $0x38] sm:$0xff]
    %v982 = vld [vmem:[#allocation10 + $0x40] sm:$0xff]
    %v983 = vld [vmem:[#allocation10 + $0x48] sm:$0xff]
    %v984 = vld [vmem:[#allocation10 + $0x50] sm:$0xff]
    %v985 = vld [vmem:[#allocation10 + $0x58] sm:$0xff]
    %v986 = vld [vmem:[#allocation10 + $0x60] sm:$0xff]
    %v987 = vld [vmem:[#allocation10 + $0x68] sm:$0xff]
    %v988 = vld [vmem:[#allocation10 + $0x70] sm:$0xff]
    %v989 = vld [vmem:[#allocation10 + $0x78] sm:$0xff]
    %v990 = vld [vmem:[#allocation10 + $0x80] sm:$0xff]
    %v991 = vld [vmem:[#allocation10 + $0x88] sm:$0xff]
    %v992 = vld [vmem:[#allocation10 + $0x90] sm:$0xff]
    %v993 = vld [vmem:[#allocation10 + $0x98] sm:$0xff]
    %v994 = vld [vmem:[#allocation10 + $0xa0] sm:$0xff]
    %v995 = vld [vmem:[#allocation10 + $0xa8] sm:$0xff]
    %v996 = vld [vmem:[#allocation10 + $0xb0] sm:$0xff]
    %v997 = vld [vmem:[#allocation10 + $0xb8] sm:$0xff]
    %v998 = vld [vmem:[#allocation10 + $0xc0] sm:$0xff]
    %v999 = vld [vmem:[#allocation10 + $0xc8] sm:$0xff]
    %v1000 = vld [vmem:[#allocation10 + $0xd0] sm:$0xff]
    %v1001 = vld [vmem:[#allocation10 + $0xd8] sm:$0xff]
    %v1002 = vld [vmem:[#allocation10 + $0xe0] sm:$0xff]
    %v1003 = vld [vmem:[#allocation10 + $0xe8] sm:$0xff]
    %v1004 = vld [vmem:[#allocation10 + $0xf0] sm:$0xff]
    %v1005 = vld [vmem:[#allocation10 + $0xf8] sm:$0xff]
    %v1006 = vld [vmem:[#allocation10 + $0x100] sm:$0xff]
    %v1007 = vld [vmem:[#allocation10 + $0x108] sm:$0xff]
    %v1008 = vld [vmem:[#allocation10 + $0x110] sm:$0xff]
    %v1009 = vld [vmem:[#allocation10 + $0x118] sm:$0xff]
    %v1010 = vld [vmem:[#allocation10 + $0x120] sm:$0xff]
    %v1011 = vld [vmem:[#allocation10 + $0x128] sm:$0xff]
    %v1012 = vld [vmem:[#allocation10 + $0x130] sm:$0xff]
    %v1013 = vld [vmem:[#allocation10 + $0x138] sm:$0xff]
    %v1014 = vld [vmem:[#allocation10 + $0x140] sm:$0xff]
    %v1015 = vld [vmem:[#allocation10 + $0x148] sm:$0xff]
    %v1016 = vld [vmem:[#allocation10 + $0x150] sm:$0xff]
    %v1017 = vld [vmem:[#allocation10 + $0x158] sm:$0xff]
    %v1018 = vld [vmem:[#allocation10 + $0x160] sm:$0xff]
    %v1019 = vld [vmem:[#allocation10 + $0x168] sm:$0xff]
    %v1020 = vld [vmem:[#allocation10 + $0x170] sm:$0xff]
    %v1021 = vld [vmem:[#allocation10 + $0x178] sm:$0xff]
    %v1022 = vld [vmem:[#allocation10 + $0x180] sm:$0xff]
    %v1023 = vld [vmem:[#allocation10 + $0x188] sm:$0xff]
    %v1024 = vld [vmem:[#allocation10 + $0x190] sm:$0xff]
    %v1025 = vld [vmem:[#allocation10 + $0x198] sm:$0xff]
    %v1026 = vld [vmem:[#allocation10 + $0x1a0] sm:$0xff]
    %v1027 = vld [vmem:[#allocation10 + $0x1a8] sm:$0xff]
    %v1028 = vld [vmem:[#allocation10 + $0x1b0] sm:$0xff]
    %v1029 = vld [vmem:[#allocation10 + $0x1b8] sm:$0xff]
    %v1030 = vld [vmem:[#allocation10 + $0x1c0] sm:$0xff]
    %v1031 = vld [vmem:[#allocation10 + $0x1c8] sm:$0xff]
    %v1032 = vld [vmem:[#allocation10 + $0x1d0] sm:$0xff]
    %v1033 = vld [vmem:[#allocation10 + $0x1d8] sm:$0xff]
    %v1034 = vld [vmem:[#allocation10 + $0x1e0] sm:$0xff]
    %v1035 = vld [vmem:[#allocation10 + $0x1e8] sm:$0xff]
    %v1036 = vld [vmem:[#allocation10 + $0x1f0] sm:$0xff]
    %v1037 = vld [vmem:[#allocation10 + $0x1f8] sm:$0xff]
    %v1038 = vld [vmem:[#allocation10 + $0x200] sm:$0xff]
    %v1039 = vld [vmem:[#allocation10 + $0x208] sm:$0xff]
    %v1040 = vld [vmem:[#allocation10 + $0x210] sm:$0xff]
    %v1041 = vld [vmem:[#allocation10 + $0x218] sm:$0xff]
    %v1042 = vld [vmem:[#allocation10 + $0x220] sm:$0xff]
    %v1043 = vld [vmem:[#allocation10 + $0x228] sm:$0xff]
    %v1044 = vld [vmem:[#allocation10 + $0x230] sm:$0xff]
    %v1045 = vld [vmem:[#allocation10 + $0x238] sm:$0xff]
    %v1046 = vld [vmem:[#allocation10 + $0x240] sm:$0xff]
    %v1047 = vld [vmem:[#allocation10 + $0x248] sm:$0xff]
    %v1048 = vld [vmem:[#allocation10 + $0x250] sm:$0xff]
    %v1049 = vld [vmem:[#allocation10 + $0x258] sm:$0xff]
    %v1050 = vld [vmem:[#allocation10 + $0x260] sm:$0xff]
    %v1051 = vld [vmem:[#allocation10 + $0x268] sm:$0xff]
    %v1052 = vld [vmem:[#allocation10 + $0x270] sm:$0xff]
    %v1053 = vld [vmem:[#allocation10 + $0x278] sm:$0xff]
    %v1054 = vld [vmem:[#allocation10 + $0x280] sm:$0xff]
    %v1055 = vld [vmem:[#allocation10 + $0x288] sm:$0xff]
    %v1056 = vld [vmem:[#allocation10 + $0x290] sm:$0xff]
    %v1057 = vld [vmem:[#allocation10 + $0x298] sm:$0xff]
    %v1058 = vld [vmem:[#allocation10 + $0x2a0] sm:$0xff]
    %v1059 = vld [vmem:[#allocation10 + $0x2a8] sm:$0xff]
    %v1060 = vld [vmem:[#allocation10 + $0x2b0] sm:$0xff]
    %v1061 = vld [vmem:[#allocation10 + $0x2b8] sm:$0xff]
    %v1062 = vld [vmem:[#allocation10 + $0x2c0] sm:$0xff]
    %v1063 = vld [vmem:[#allocation10 + $0x2c8] sm:$0xff]
    %v1064 = vld [vmem:[#allocation10 + $0x2d0] sm:$0xff]
    %v1065 = vld [vmem:[#allocation10 + $0x2d8] sm:$0xff]
    %v1066 = vld [vmem:[#allocation10 + $0x2e0] sm:$0xff]
    %v1067 = vld [vmem:[#allocation10 + $0x2e8] sm:$0xff]
    %v1068 = vld [vmem:[#allocation10 + $0x2f0] sm:$0xff]
    %v1069 = vld [vmem:[#allocation10 + $0x2f8] sm:$0xff]
    %v1070 = vld [vmem:[#allocation10 + $0x300] sm:$0xff]
    %v1071 = vld [vmem:[#allocation10 + $0x308] sm:$0xff]
    %v1072 = vld [vmem:[#allocation10 + $0x310] sm:$0xff]
    %v1073 = vld [vmem:[#allocation10 + $0x318] sm:$0xff]
    %v1074 = vld [vmem:[#allocation10 + $0x320] sm:$0xff]
    %v1075 = vld [vmem:[#allocation10 + $0x328] sm:$0xff]
    %v1076 = vld [vmem:[#allocation10 + $0x330] sm:$0xff]
    %v1077 = vld [vmem:[#allocation10 + $0x338] sm:$0xff]
    %v1078 = vld [vmem:[#allocation10 + $0x340] sm:$0xff]
    %v1079 = vld [vmem:[#allocation10 + $0x348] sm:$0xff]
    %v1080 = vld [vmem:[#allocation10 + $0x350] sm:$0xff]
    %v1081 = vld [vmem:[#allocation10 + $0x358] sm:$0xff]
    %v1082 = vld [vmem:[#allocation10 + $0x360] sm:$0xff]
    %v1083 = vld [vmem:[#allocation10 + $0x368] sm:$0xff]
    %v1084 = vld [vmem:[#allocation10 + $0x370] sm:$0xff]
    %v1085 = vld [vmem:[#allocation10 + $0x378] sm:$0xff]
    %v1086 = vld [vmem:[#allocation10 + $0x380] sm:$0xff]
    %v1087 = vld [vmem:[#allocation10 + $0x388] sm:$0xff]
    %v1088 = vld [vmem:[#allocation10 + $0x390] sm:$0xff]
    %v1089 = vld [vmem:[#allocation10 + $0x398] sm:$0xff]
    %v1090 = vld [vmem:[#allocation10 + $0x3a0] sm:$0xff]
    %v1091 = vld [vmem:[#allocation10 + $0x3a8] sm:$0xff]
    %v1092 = vld [vmem:[#allocation10 + $0x3b0] sm:$0xff]
    %v1093 = vld [vmem:[#allocation10 + $0x3b8] sm:$0xff]
    %v1094 = vld [vmem:[#allocation10 + $0x3c0] sm:$0xff]
    %v1095 = vld [vmem:[#allocation10 + $0x3c8] sm:$0xff]
    %v1096 = vld [vmem:[#allocation10 + $0x3d0] sm:$0xff]
    %v1097 = vld [vmem:[#allocation10 + $0x3d8] sm:$0xff]
    %v1098 = vld [vmem:[#allocation10 + $0x3e0] sm:$0xff]
    %v1099 = vld [vmem:[#allocation10 + $0x3e8] sm:$0xff]
    %v1100 = vld [vmem:[#allocation10 + $0x3f0] sm:$0xff]
    %v1101 = vld [vmem:[#allocation10 + $0x3f8] sm:$0xff]
    %v1102 = vld [vmem:[#allocation9] sm:$0xff]
    %v1104 = vperm.slane %v1102, 0
    %v1105 = vperm.slane %v1102, 1
    %v1106 = vperm.slane %v1102, 2
    %v1107 = vperm.slane %v1102, 3
    %v1108 = vperm.slane %v1102, 4
    %v1109 = vperm.slane %v1102, 5
    %v1110 = vperm.slane %v1102, 6
    %v1111 = vperm.slane %v1102, 7
    %v1120 = vld [vmem:[#allocation12] sm:$0x3]
    %v1122 = vperm.slane %v1120, 0
    %v1123 = vperm.slane %v1120, 1
    %v1126 = vpack.c.bf16 %v301, %v300
    %v1127 = vpack.c.bf16 %v303, %v302
    %v1128 = vpack.c.bf16 %v305, %v304
    %v1129 = vpack.c.bf16 %v307, %v306
    %v1130 = vpack.c.bf16 %v309, %v308
    %v1131 = vpack.c.bf16 %v311, %v310
    %v1132 = vpack.c.bf16 %v313, %v312
    %v1133 = vpack.c.bf16 %v315, %v314
    %v1134 = vpack.c.bf16 %v317, %v316
    %v1135 = vpack.c.bf16 %v319, %v318
    %v1136 = vpack.c.bf16 %v321, %v320
    %v1137 = vpack.c.bf16 %v323, %v322
    %v1138 = vpack.c.bf16 %v325, %v324
    %v1139 = vpack.c.bf16 %v327, %v326
    %v1140 = vpack.c.bf16 %v329, %v328
    %v1141 = vpack.c.bf16 %v331, %v330
    %v1142 = vld [vmem:[#allocation2] sm:$0xff]
    %v1143 = vld [vmem:[#allocation2 + $0x8] sm:$0xff]
    %v1144 = vld [vmem:[#allocation2 + $0x10] sm:$0xff]
    %v1145 = vld [vmem:[#allocation2 + $0x18] sm:$0xff]
    %v1146 = vld [vmem:[#allocation2 + $0x20] sm:$0xff]
    %v1147 = vld [vmem:[#allocation2 + $0x28] sm:$0xff]
    %v1148 = vld [vmem:[#allocation2 + $0x30] sm:$0xff]
    %v1149 = vld [vmem:[#allocation2 + $0x38] sm:$0xff]
    %v1150 = vld [vmem:[#allocation2 + $0x40] sm:$0xff]
    %v1151 = vld [vmem:[#allocation2 + $0x48] sm:$0xff]
    %v1152 = vld [vmem:[#allocation2 + $0x50] sm:$0xff]
    %v1153 = vld [vmem:[#allocation2 + $0x58] sm:$0xff]
    %v1154 = vld [vmem:[#allocation2 + $0x60] sm:$0xff]
    %v1155 = vld [vmem:[#allocation2 + $0x68] sm:$0xff]
    %v1156 = vld [vmem:[#allocation2 + $0x70] sm:$0xff]
    %v1157 = vld [vmem:[#allocation2 + $0x78] sm:$0xff]
    %v1158 = vld [vmem:[#allocation6] sm:$0xff]
    %v1160 = vperm.slane %v1158, 0
    %v1161 = vperm.slane %v1158, 1
    %v1162 = vperm.slane %v1158, 2
    %v1163 = vperm.slane %v1158, 3
    %v1164 = vperm.slane %v1158, 4
    %v1165 = vperm.slane %v1158, 5
    %v1166 = vperm.slane %v1158, 6
    %v1167 = vperm.slane %v1158, 7
    %v1192 = vunpack.c.l.b16 %v1126
    %v1193 = vunpack.c.h.b16 %v1126
    %v1194 = vunpack.c.l.b16 %v1127
    %v1195 = vunpack.c.h.b16 %v1127
    %v1196 = vunpack.c.l.b16 %v1128
    %v1197 = vunpack.c.h.b16 %v1128
    %v1198 = vunpack.c.l.b16 %v1129
    %v1199 = vunpack.c.h.b16 %v1129
    %v1200 = vunpack.c.l.b16 %v1130
    %v1201 = vunpack.c.h.b16 %v1130
    %v1202 = vunpack.c.l.b16 %v1131
    %v1203 = vunpack.c.h.b16 %v1131
    %v1204 = vunpack.c.l.b16 %v1132
    %v1205 = vunpack.c.h.b16 %v1132
    %v1206 = vunpack.c.l.b16 %v1133
    %v1207 = vunpack.c.h.b16 %v1133
    %v1208 = vunpack.c.l.b16 %v1134
    %v1209 = vunpack.c.h.b16 %v1134
    %v1210 = vunpack.c.l.b16 %v1135
    %v1211 = vunpack.c.h.b16 %v1135
    %v1212 = vunpack.c.l.b16 %v1136
    %v1213 = vunpack.c.h.b16 %v1136
    %v1214 = vunpack.c.l.b16 %v1137
    %v1215 = vunpack.c.h.b16 %v1137
    %v1216 = vunpack.c.l.b16 %v1138
    %v1217 = vunpack.c.h.b16 %v1138
    %v1218 = vunpack.c.l.b16 %v1139
    %v1219 = vunpack.c.h.b16 %v1139
    %v1220 = vunpack.c.l.b16 %v1140
    %v1221 = vunpack.c.h.b16 %v1140
    %v1222 = vunpack.c.l.b16 %v1141
    %v1223 = vunpack.c.h.b16 %v1141
    %v1224 = vlaneseq
    %v1225 = vand.u32 %v1224, 127
    %v1226 = vperm.slane %v1192, %v1225
    %v1227 = vadd.s32 %v1225, 4294967288
    %v1228 = vperm.slane %v1193, %v1227
    %vm1229 = vcmask 130112
    %v1230 = vsel %vm1229, %v1228, %v1226
    %v1231 = vadd.s32 %v1225, 4294967280
    %v1232 = vperm.slane %v1194, %v1231
    %vm1233 = vcmask 195712
    %v1234 = vsel %vm1233, %v1232, %v1230
    %v1235 = vadd.s32 %v1225, 4294967272
    %v1236 = vperm.slane %v1195, %v1235
    %vm1237 = vcmask 261312
    %v1238 = vsel %vm1237, %v1236, %v1234
    %v1239 = vperm.slane %v1196, %v1225
    %v1240 = vperm.slane %v1197, %v1227
    %v1241 = vsel %vm1229, %v1240, %v1239
    %v1242 = vperm.slane %v1198, %v1231
    %v1243 = vsel %vm1233, %v1242, %v1241
    %v1244 = vperm.slane %v1199, %v1235
    %v1245 = vsel %vm1237, %v1244, %v1243
    %v1246 = vperm.slane %v1200, %v1225
    %v1247 = vperm.slane %v1201, %v1227
    %v1248 = vsel %vm1229, %v1247, %v1246
    %v1249 = vperm.slane %v1202, %v1231
    %v1250 = vsel %vm1233, %v1249, %v1248
    %v1251 = vperm.slane %v1203, %v1235
    %v1252 = vsel %vm1237, %v1251, %v1250
    %v1253 = vperm.slane %v1204, %v1225
    %v1254 = vperm.slane %v1205, %v1227
    %v1255 = vsel %vm1229, %v1254, %v1253
    %v1256 = vperm.slane %v1206, %v1231
    %v1257 = vsel %vm1233, %v1256, %v1255
    %v1258 = vperm.slane %v1207, %v1235
    %v1259 = vsel %vm1237, %v1258, %v1257
    %v1260 = vperm.slane %v1208, %v1225
    %v1261 = vperm.slane %v1209, %v1227
    %v1262 = vsel %vm1229, %v1261, %v1260
    %v1263 = vperm.slane %v1210, %v1231
    %v1264 = vsel %vm1233, %v1263, %v1262
    %v1265 = vperm.slane %v1211, %v1235
    %v1266 = vsel %vm1237, %v1265, %v1264
    %v1267 = vperm.slane %v1212, %v1225
    %v1268 = vperm.slane %v1213, %v1227
    %v1269 = vsel %vm1229, %v1268, %v1267
    %v1270 = vperm.slane %v1214, %v1231
    %v1271 = vsel %vm1233, %v1270, %v1269
    %v1272 = vperm.slane %v1215, %v1235
    %v1273 = vsel %vm1237, %v1272, %v1271
    %v1274 = vperm.slane %v1216, %v1225
    %v1275 = vperm.slane %v1217, %v1227
    %v1276 = vsel %vm1229, %v1275, %v1274
    %v1277 = vperm.slane %v1218, %v1231
    %v1278 = vsel %vm1233, %v1277, %v1276
    %v1279 = vperm.slane %v1219, %v1235
    %v1280 = vsel %vm1237, %v1279, %v1278
    %v1281 = vperm.slane %v1220, %v1225
    %v1282 = vperm.slane %v1221, %v1227
    %v1283 = vsel %vm1229, %v1282, %v1281
    %v1284 = vperm.slane %v1222, %v1231
    %v1285 = vsel %vm1233, %v1284, %v1283
    %v1286 = vperm.slane %v1223, %v1235
    %v1287 = vsel %vm1237, %v1286, %v1285
    %vm1288 = vcmask 1041409
    %v1289 = vsel %vm1288, %v1245, %v1238
    %vm1290 = vcmask 1042434
    %v1291 = vsel %vm1290, %v1252, %v1289
    %vm1292 = vcmask 1043459
    %v1293 = vsel %vm1292, %v1259, %v1291
    %vm1294 = vcmask 1044484
    %v1295 = vsel %vm1294, %v1266, %v1293
    %vm1296 = vcmask 1045509
    %v1297 = vsel %vm1296, %v1273, %v1295
    %vm1298 = vcmask 1046534
    %v1299 = vsel %vm1298, %v1280, %v1297
    %vm1300 = vcmask 1047559
    %v1301 = vsel %vm1300, %v1287, %v1299
    %v1302 = vpack.c.b16 %v1301, %v1301
    %v1319 = vunpack.c.l.b16 %v1142
    %v1320 = vunpack.c.h.b16 %v1142
    %v1321 = vunpack.c.l.b16 %v1143
    %v1322 = vunpack.c.h.b16 %v1143
    %v1323 = vunpack.c.l.b16 %v1144
    %v1324 = vunpack.c.h.b16 %v1144
    %v1325 = vunpack.c.l.b16 %v1145
    %v1326 = vunpack.c.h.b16 %v1145
    %v1327 = vunpack.c.l.b16 %v1146
    %v1328 = vunpack.c.h.b16 %v1146
    %v1329 = vunpack.c.l.b16 %v1147
    %v1330 = vunpack.c.h.b16 %v1147
    %v1331 = vunpack.c.l.b16 %v1148
    %v1332 = vunpack.c.h.b16 %v1148
    %v1333 = vunpack.c.l.b16 %v1149
    %v1334 = vunpack.c.h.b16 %v1149
    %v1335 = vunpack.c.l.b16 %v1150
    %v1336 = vunpack.c.h.b16 %v1150
    %v1337 = vunpack.c.l.b16 %v1151
    %v1338 = vunpack.c.h.b16 %v1151
    %v1339 = vunpack.c.l.b16 %v1152
    %v1340 = vunpack.c.h.b16 %v1152
    %v1341 = vunpack.c.l.b16 %v1153
    %v1342 = vunpack.c.h.b16 %v1153
    %v1343 = vunpack.c.l.b16 %v1154
    %v1344 = vunpack.c.h.b16 %v1154
    %v1345 = vunpack.c.l.b16 %v1155
    %v1346 = vunpack.c.h.b16 %v1155
    %v1347 = vunpack.c.l.b16 %v1156
    %v1348 = vunpack.c.h.b16 %v1156
    %v1349 = vunpack.c.l.b16 %v1157
    %v1350 = vunpack.c.h.b16 %v1157
    %v1351 = vpack.c.b16 %v1327, %v1319
    %v1352 = vpack.c.b16 %v1328, %v1320
    %v1353 = vpack.c.b16 %v1329, %v1321
    %v1354 = vpack.c.b16 %v1330, %v1322
    %v1355 = vpack.c.b16 %v1331, %v1323
    %v1356 = vpack.c.b16 %v1332, %v1324
    %v1357 = vpack.c.b16 %v1333, %v1325
    %v1358 = vpack.c.b16 %v1334, %v1326
    %v1359 = vpack.c.b16 %v1343, %v1335
    %v1360 = vpack.c.b16 %v1344, %v1336
    %v1361 = vpack.c.b16 %v1345, %v1337
    %v1362 = vpack.c.b16 %v1346, %v1338
    %v1363 = vpack.c.b16 %v1347, %v1339
    %v1364 = vpack.c.b16 %v1348, %v1340
    %v1365 = vpack.c.b16 %v1349, %v1341
    %v1366 = vpack.c.b16 %v1350, %v1342
    %vm1383 = vcmask 261120
    %v1385 = vsel %vm1383, %v1302, 0
    %1387 = vmatpush.bf16.msra.mxu0 0
    %1388 = vmatpush.bf16.msra.mxu0 0
    %1389 = vmatpush.bf16.msra.mxu0 0
    %1390 = vmatpush.bf16.msra.mxu0 0
    %1391 = vmatpush.bf16.msra.mxu0 0
    %1392 = vmatpush.bf16.msra.mxu0 0
    %1393 = vmatpush.bf16.msra.mxu0 %v1359
    %1394 = vmatpush.bf16.msra.mxu0 %v1351
    %1395 = vmatmul.bf16.gmra.mxu0 %v1385
    %v1396 = vpop.f32.mrf.mxu0
    %v1397 = vadd.f32 %v1160, %v1396
    %v1398 = vpop.f32.mrf.mxu0
    %1399 = vdwg.mxu0
    %1400 = vmatpush.bf16.msra.mxu0 0
    %1401 = vmatpush.bf16.msra.mxu0 0
    %1402 = vmatpush.bf16.msra.mxu0 0
    %1403 = vmatpush.bf16.msra.mxu0 0
    %1404 = vmatpush.bf16.msra.mxu0 0
    %1405 = vmatpush.bf16.msra.mxu0 0
    %1406 = vmatpush.bf16.msra.mxu0 %v1360
    %1407 = vmatpush.bf16.msra.mxu0 %v1352
    %1408 = vmatmul.bf16.gmra.mxu0 %v1385
    %v1409 = vpop.f32.mrf.mxu0
    %v1410 = vadd.f32 %v1161, %v1409
    %v1411 = vpop.f32.mrf.mxu0
    %1412 = vdwg.mxu0
    %1413 = vmatpush.bf16.msra.mxu0 0
    %1414 = vmatpush.bf16.msra.mxu0 0
    %1415 = vmatpush.bf16.msra.mxu0 0
    %1416 = vmatpush.bf16.msra.mxu0 0
    %1417 = vmatpush.bf16.msra.mxu0 0
    %1418 = vmatpush.bf16.msra.mxu0 0
    %1419 = vmatpush.bf16.msra.mxu0 %v1361
    %1420 = vmatpush.bf16.msra.mxu0 %v1353
    %1421 = vmatmul.bf16.gmra.mxu0 %v1385
    %v1422 = vpop.f32.mrf.mxu0
    %v1423 = vadd.f32 %v1162, %v1422
    %v1424 = vpop.f32.mrf.mxu0
    %1425 = vdwg.mxu0
    %1426 = vmatpush.bf16.msra.mxu0 0
    %1427 = vmatpush.bf16.msra.mxu0 0
    %1428 = vmatpush.bf16.msra.mxu0 0
    %1429 = vmatpush.bf16.msra.mxu0 0
    %1430 = vmatpush.bf16.msra.mxu0 0
    %1431 = vmatpush.bf16.msra.mxu0 0
    %1432 = vmatpush.bf16.msra.mxu0 %v1362
    %1433 = vmatpush.bf16.msra.mxu0 %v1354
    %1434 = vmatmul.bf16.gmra.mxu0 %v1385
    %v1435 = vpop.f32.mrf.mxu0
    %v1436 = vadd.f32 %v1163, %v1435
    %v1437 = vpop.f32.mrf.mxu0
    %1438 = vdwg.mxu0
    %1439 = vmatpush.bf16.msra.mxu0 0
    %1440 = vmatpush.bf16.msra.mxu0 0
    %1441 = vmatpush.bf16.msra.mxu0 0
    %1442 = vmatpush.bf16.msra.mxu0 0
    %1443 = vmatpush.bf16.msra.mxu0 0
    %1444 = vmatpush.bf16.msra.mxu0 0
    %1445 = vmatpush.bf16.msra.mxu0 %v1363
    %1446 = vmatpush.bf16.msra.mxu0 %v1355
    %1447 = vmatmul.bf16.gmra.mxu0 %v1385
    %v1448 = vpop.f32.mrf.mxu0
    %v1449 = vadd.f32 %v1164, %v1448
    %v1450 = vpop.f32.mrf.mxu0
    %1451 = vdwg.mxu0
    %1452 = vmatpush.bf16.msra.mxu0 0
    %1453 = vmatpush.bf16.msra.mxu0 0
    %1454 = vmatpush.bf16.msra.mxu0 0
    %1455 = vmatpush.bf16.msra.mxu0 0
    %1456 = vmatpush.bf16.msra.mxu0 0
    %1457 = vmatpush.bf16.msra.mxu0 0
    %1458 = vmatpush.bf16.msra.mxu0 %v1364
    %1459 = vmatpush.bf16.msra.mxu0 %v1356
    %1460 = vmatmul.bf16.gmra.mxu0 %v1385
    %v1461 = vpop.f32.mrf.mxu0
    %v1462 = vadd.f32 %v1165, %v1461
    %v1463 = vpop.f32.mrf.mxu0
    %1464 = vdwg.mxu0
    %1465 = vmatpush.bf16.msra.mxu0 0
    %1466 = vmatpush.bf16.msra.mxu0 0
    %1467 = vmatpush.bf16.msra.mxu0 0
    %1468 = vmatpush.bf16.msra.mxu0 0
    %1469 = vmatpush.bf16.msra.mxu0 0
    %1470 = vmatpush.bf16.msra.mxu0 0
    %1471 = vmatpush.bf16.msra.mxu0 %v1365
    %1472 = vmatpush.bf16.msra.mxu0 %v1357
    %1473 = vmatmul.bf16.gmra.mxu0 %v1385
    %v1474 = vpop.f32.mrf.mxu0
    %v1475 = vadd.f32 %v1166, %v1474
    %v1476 = vpop.f32.mrf.mxu0
    %1477 = vdwg.mxu0
    %1478 = vmatpush.bf16.msra.mxu0 0
    %1479 = vmatpush.bf16.msra.mxu0 0
    %1480 = vmatpush.bf16.msra.mxu0 0
    %1481 = vmatpush.bf16.msra.mxu0 0
    %1482 = vmatpush.bf16.msra.mxu0 0
    %1483 = vmatpush.bf16.msra.mxu0 0
    %1484 = vmatpush.bf16.msra.mxu0 %v1366
    %1485 = vmatpush.bf16.msra.mxu0 %v1358
    %1486 = vmatmul.bf16.gmra.mxu0 %v1385
    %v1487 = vpop.f32.mrf.mxu0
    %v1488 = vadd.f32 %v1167, %v1487
    %v1489 = vpop.f32.mrf.mxu0
    %1490 = vdwg.mxu0
    %v1491 = vpack.c.bf16 %v332, %v332
    %v1492 = vpack.c.bf16 %v333, %v333
    %v1621 = vunpack.c.l.b16 %v334
    %v1622 = vunpack.c.h.b16 %v334
    %v1623 = vunpack.c.l.b16 %v335
    %v1624 = vunpack.c.h.b16 %v335
    %v1625 = vunpack.c.l.b16 %v336
    %v1626 = vunpack.c.h.b16 %v336
    %v1627 = vunpack.c.l.b16 %v337
    %v1628 = vunpack.c.h.b16 %v337
    %v1629 = vunpack.c.l.b16 %v338
    %v1630 = vunpack.c.h.b16 %v338
    %v1631 = vunpack.c.l.b16 %v339
    %v1632 = vunpack.c.h.b16 %v339
    %v1633 = vunpack.c.l.b16 %v340
    %v1634 = vunpack.c.h.b16 %v340
    %v1635 = vunpack.c.l.b16 %v341
    %v1636 = vunpack.c.h.b16 %v341
    %v1637 = vunpack.c.l.b16 %v342
    %v1638 = vunpack.c.h.b16 %v342
    %v1639 = vunpack.c.l.b16 %v343
    %v1640 = vunpack.c.h.b16 %v343
    %v1641 = vunpack.c.l.b16 %v344
    %v1642 = vunpack.c.h.b16 %v344
    %v1643 = vunpack.c.l.b16 %v345
    %v1644 = vunpack.c.h.b16 %v345
    %v1645 = vunpack.c.l.b16 %v346
    %v1646 = vunpack.c.h.b16 %v346
    %v1647 = vunpack.c.l.b16 %v347
    %v1648 = vunpack.c.h.b16 %v347
    %v1649 = vunpack.c.l.b16 %v348
    %v1650 = vunpack.c.h.b16 %v348
    %v1651 = vunpack.c.l.b16 %v349
    %v1652 = vunpack.c.h.b16 %v349
    %v1653 = vunpack.c.l.b16 %v350
    %v1654 = vunpack.c.h.b16 %v350
    %v1655 = vunpack.c.l.b16 %v351
    %v1656 = vunpack.c.h.b16 %v351
    %v1657 = vunpack.c.l.b16 %v352
    %v1658 = vunpack.c.h.b16 %v352
    %v1659 = vunpack.c.l.b16 %v353
    %v1660 = vunpack.c.h.b16 %v353
    %v1661 = vunpack.c.l.b16 %v354
    %v1662 = vunpack.c.h.b16 %v354
    %v1663 = vunpack.c.l.b16 %v355
    %v1664 = vunpack.c.h.b16 %v355
    %v1665 = vunpack.c.l.b16 %v356
    %v1666 = vunpack.c.h.b16 %v356
    %v1667 = vunpack.c.l.b16 %v357
    %v1668 = vunpack.c.h.b16 %v357
    %v1669 = vunpack.c.l.b16 %v358
    %v1670 = vunpack.c.h.b16 %v358
    %v1671 = vunpack.c.l.b16 %v359
    %v1672 = vunpack.c.h.b16 %v359
    %v1673 = vunpack.c.l.b16 %v360
    %v1674 = vunpack.c.h.b16 %v360
    %v1675 = vunpack.c.l.b16 %v361
    %v1676 = vunpack.c.h.b16 %v361
    %v1677 = vunpack.c.l.b16 %v362
    %v1678 = vunpack.c.h.b16 %v362
    %v1679 = vunpack.c.l.b16 %v363
    %v1680 = vunpack.c.h.b16 %v363
    %v1681 = vunpack.c.l.b16 %v364
    %v1682 = vunpack.c.h.b16 %v364
    %v1683 = vunpack.c.l.b16 %v365
    %v1684 = vunpack.c.h.b16 %v365
    %v1685 = vunpack.c.l.b16 %v366
    %v1686 = vunpack.c.h.b16 %v366
    %v1687 = vunpack.c.l.b16 %v367
    %v1688 = vunpack.c.h.b16 %v367
    %v1689 = vunpack.c.l.b16 %v368
    %v1690 = vunpack.c.h.b16 %v368
    %v1691 = vunpack.c.l.b16 %v369
    %v1692 = vunpack.c.h.b16 %v369
    %v1693 = vunpack.c.l.b16 %v370
    %v1694 = vunpack.c.h.b16 %v370
    %v1695 = vunpack.c.l.b16 %v371
    %v1696 = vunpack.c.h.b16 %v371
    %v1697 = vunpack.c.l.b16 %v372
    %v1698 = vunpack.c.h.b16 %v372
    %v1699 = vunpack.c.l.b16 %v373
    %v1700 = vunpack.c.h.b16 %v373
    %v1701 = vunpack.c.l.b16 %v374
    %v1702 = vunpack.c.h.b16 %v374
    %v1703 = vunpack.c.l.b16 %v375
    %v1704 = vunpack.c.h.b16 %v375
    %v1705 = vunpack.c.l.b16 %v376
    %v1706 = vunpack.c.h.b16 %v376
    %v1707 = vunpack.c.l.b16 %v377
    %v1708 = vunpack.c.h.b16 %v377
    %v1709 = vunpack.c.l.b16 %v378
    %v1710 = vunpack.c.h.b16 %v378
    %v1711 = vunpack.c.l.b16 %v379
    %v1712 = vunpack.c.h.b16 %v379
    %v1713 = vunpack.c.l.b16 %v380
    %v1714 = vunpack.c.h.b16 %v380
    %v1715 = vunpack.c.l.b16 %v381
    %v1716 = vunpack.c.h.b16 %v381
    %v1717 = vunpack.c.l.b16 %v382
    %v1718 = vunpack.c.h.b16 %v382
    %v1719 = vunpack.c.l.b16 %v383
    %v1720 = vunpack.c.h.b16 %v383
    %v1721 = vunpack.c.l.b16 %v384
    %v1722 = vunpack.c.h.b16 %v384
    %v1723 = vunpack.c.l.b16 %v385
    %v1724 = vunpack.c.h.b16 %v385
    %v1725 = vunpack.c.l.b16 %v386
    %v1726 = vunpack.c.h.b16 %v386
    %v1727 = vunpack.c.l.b16 %v387
    %v1728 = vunpack.c.h.b16 %v387
    %v1729 = vunpack.c.l.b16 %v388
    %v1730 = vunpack.c.h.b16 %v388
    %v1731 = vunpack.c.l.b16 %v389
    %v1732 = vunpack.c.h.b16 %v389
    %v1733 = vunpack.c.l.b16 %v390
    %v1734 = vunpack.c.h.b16 %v390
    %v1735 = vunpack.c.l.b16 %v391
    %v1736 = vunpack.c.h.b16 %v391
    %v1737 = vunpack.c.l.b16 %v392
    %v1738 = vunpack.c.h.b16 %v392
    %v1739 = vunpack.c.l.b16 %v393
    %v1740 = vunpack.c.h.b16 %v393
    %v1741 = vunpack.c.l.b16 %v394
    %v1742 = vunpack.c.h.b16 %v394
    %v1743 = vunpack.c.l.b16 %v395
    %v1744 = vunpack.c.h.b16 %v395
    %v1745 = vunpack.c.l.b16 %v396
    %v1746 = vunpack.c.h.b16 %v396
    %v1747 = vunpack.c.l.b16 %v397
    %v1748 = vunpack.c.h.b16 %v397
    %v1749 = vunpack.c.l.b16 %v398
    %v1750 = vunpack.c.h.b16 %v398
    %v1751 = vunpack.c.l.b16 %v399
    %v1752 = vunpack.c.h.b16 %v399
    %v1753 = vunpack.c.l.b16 %v400
    %v1754 = vunpack.c.h.b16 %v400
    %v1755 = vunpack.c.l.b16 %v401
    %v1756 = vunpack.c.h.b16 %v401
    %v1757 = vunpack.c.l.b16 %v402
    %v1758 = vunpack.c.h.b16 %v402
    %v1759 = vunpack.c.l.b16 %v403
    %v1760 = vunpack.c.h.b16 %v403
    %v1761 = vunpack.c.l.b16 %v404
    %v1762 = vunpack.c.h.b16 %v404
    %v1763 = vunpack.c.l.b16 %v405
    %v1764 = vunpack.c.h.b16 %v405
    %v1765 = vunpack.c.l.b16 %v406
    %v1766 = vunpack.c.h.b16 %v406
    %v1767 = vunpack.c.l.b16 %v407
    %v1768 = vunpack.c.h.b16 %v407
    %v1769 = vunpack.c.l.b16 %v408
    %v1770 = vunpack.c.h.b16 %v408
    %v1771 = vunpack.c.l.b16 %v409
    %v1772 = vunpack.c.h.b16 %v409
    %v1773 = vunpack.c.l.b16 %v410
    %v1774 = vunpack.c.h.b16 %v410
    %v1775 = vunpack.c.l.b16 %v411
    %v1776 = vunpack.c.h.b16 %v411
    %v1777 = vunpack.c.l.b16 %v412
    %v1778 = vunpack.c.h.b16 %v412
    %v1779 = vunpack.c.l.b16 %v413
    %v1780 = vunpack.c.h.b16 %v413
    %v1781 = vunpack.c.l.b16 %v414
    %v1782 = vunpack.c.h.b16 %v414
    %v1783 = vunpack.c.l.b16 %v415
    %v1784 = vunpack.c.h.b16 %v415
    %v1785 = vunpack.c.l.b16 %v416
    %v1786 = vunpack.c.h.b16 %v416
    %v1787 = vunpack.c.l.b16 %v417
    %v1788 = vunpack.c.h.b16 %v417
    %v1789 = vunpack.c.l.b16 %v418
    %v1790 = vunpack.c.h.b16 %v418
    %v1791 = vunpack.c.l.b16 %v419
    %v1792 = vunpack.c.h.b16 %v419
    %v1793 = vunpack.c.l.b16 %v420
    %v1794 = vunpack.c.h.b16 %v420
    %v1795 = vunpack.c.l.b16 %v421
    %v1796 = vunpack.c.h.b16 %v421
    %v1797 = vunpack.c.l.b16 %v422
    %v1798 = vunpack.c.h.b16 %v422
    %v1799 = vunpack.c.l.b16 %v423
    %v1800 = vunpack.c.h.b16 %v423
    %v1801 = vunpack.c.l.b16 %v424
    %v1802 = vunpack.c.h.b16 %v424
    %v1803 = vunpack.c.l.b16 %v425
    %v1804 = vunpack.c.h.b16 %v425
    %v1805 = vunpack.c.l.b16 %v426
    %v1806 = vunpack.c.h.b16 %v426
    %v1807 = vunpack.c.l.b16 %v427
    %v1808 = vunpack.c.h.b16 %v427
    %v1809 = vunpack.c.l.b16 %v428
    %v1810 = vunpack.c.h.b16 %v428
    %v1811 = vunpack.c.l.b16 %v429
    %v1812 = vunpack.c.h.b16 %v429
    %v1813 = vunpack.c.l.b16 %v430
    %v1814 = vunpack.c.h.b16 %v430
    %v1815 = vunpack.c.l.b16 %v431
    %v1816 = vunpack.c.h.b16 %v431
    %v1817 = vunpack.c.l.b16 %v432
    %v1818 = vunpack.c.h.b16 %v432
    %v1819 = vunpack.c.l.b16 %v433
    %v1820 = vunpack.c.h.b16 %v433
    %v1821 = vunpack.c.l.b16 %v434
    %v1822 = vunpack.c.h.b16 %v434
    %v1823 = vunpack.c.l.b16 %v435
    %v1824 = vunpack.c.h.b16 %v435
    %v1825 = vunpack.c.l.b16 %v436
    %v1826 = vunpack.c.h.b16 %v436
    %v1827 = vunpack.c.l.b16 %v437
    %v1828 = vunpack.c.h.b16 %v437
    %v1829 = vunpack.c.l.b16 %v438
    %v1830 = vunpack.c.h.b16 %v438
    %v1831 = vunpack.c.l.b16 %v439
    %v1832 = vunpack.c.h.b16 %v439
    %v1833 = vunpack.c.l.b16 %v440
    %v1834 = vunpack.c.h.b16 %v440
    %v1835 = vunpack.c.l.b16 %v441
    %v1836 = vunpack.c.h.b16 %v441
    %v1837 = vunpack.c.l.b16 %v442
    %v1838 = vunpack.c.h.b16 %v442
    %v1839 = vunpack.c.l.b16 %v443
    %v1840 = vunpack.c.h.b16 %v443
    %v1841 = vunpack.c.l.b16 %v444
    %v1842 = vunpack.c.h.b16 %v444
    %v1843 = vunpack.c.l.b16 %v445
    %v1844 = vunpack.c.h.b16 %v445
    %v1845 = vunpack.c.l.b16 %v446
    %v1846 = vunpack.c.h.b16 %v446
    %v1847 = vunpack.c.l.b16 %v447
    %v1848 = vunpack.c.h.b16 %v447
    %v1849 = vunpack.c.l.b16 %v448
    %v1850 = vunpack.c.h.b16 %v448
    %v1851 = vunpack.c.l.b16 %v449
    %v1852 = vunpack.c.h.b16 %v449
    %v1853 = vunpack.c.l.b16 %v450
    %v1854 = vunpack.c.h.b16 %v450
    %v1855 = vunpack.c.l.b16 %v451
    %v1856 = vunpack.c.h.b16 %v451
    %v1857 = vunpack.c.l.b16 %v452
    %v1858 = vunpack.c.h.b16 %v452
    %v1859 = vunpack.c.l.b16 %v453
    %v1860 = vunpack.c.h.b16 %v453
    %v1861 = vunpack.c.l.b16 %v454
    %v1862 = vunpack.c.h.b16 %v454
    %v1863 = vunpack.c.l.b16 %v455
    %v1864 = vunpack.c.h.b16 %v455
    %v1865 = vunpack.c.l.b16 %v456
    %v1866 = vunpack.c.h.b16 %v456
    %v1867 = vunpack.c.l.b16 %v457
    %v1868 = vunpack.c.h.b16 %v457
    %v1869 = vunpack.c.l.b16 %v458
    %v1870 = vunpack.c.h.b16 %v458
    %v1871 = vunpack.c.l.b16 %v459
    %v1872 = vunpack.c.h.b16 %v459
    %v1873 = vunpack.c.l.b16 %v460
    %v1874 = vunpack.c.h.b16 %v460
    %v1875 = vunpack.c.l.b16 %v461
    %v1876 = vunpack.c.h.b16 %v461
    %v1877 = vpack.c.b16 %v1629, %v1621
    %v1878 = vpack.c.b16 %v1630, %v1622
    %v1879 = vpack.c.b16 %v1631, %v1623
    %v1880 = vpack.c.b16 %v1632, %v1624
    %v1881 = vpack.c.b16 %v1633, %v1625
    %v1882 = vpack.c.b16 %v1634, %v1626
    %v1883 = vpack.c.b16 %v1635, %v1627
    %v1884 = vpack.c.b16 %v1636, %v1628
    %v1885 = vpack.c.b16 %v1645, %v1637
    %v1886 = vpack.c.b16 %v1646, %v1638
    %v1887 = vpack.c.b16 %v1647, %v1639
    %v1888 = vpack.c.b16 %v1648, %v1640
    %v1889 = vpack.c.b16 %v1649, %v1641
    %v1890 = vpack.c.b16 %v1650, %v1642
    %v1891 = vpack.c.b16 %v1651, %v1643
    %v1892 = vpack.c.b16 %v1652, %v1644
    %v1893 = vpack.c.b16 %v1661, %v1653
    %v1894 = vpack.c.b16 %v1662, %v1654
    %v1895 = vpack.c.b16 %v1663, %v1655
    %v1896 = vpack.c.b16 %v1664, %v1656
    %v1897 = vpack.c.b16 %v1665, %v1657
    %v1898 = vpack.c.b16 %v1666, %v1658
    %v1899 = vpack.c.b16 %v1667, %v1659
    %v1900 = vpack.c.b16 %v1668, %v1660
    %v1901 = vpack.c.b16 %v1677, %v1669
    %v1902 = vpack.c.b16 %v1678, %v1670
    %v1903 = vpack.c.b16 %v1679, %v1671
    %v1904 = vpack.c.b16 %v1680, %v1672
    %v1905 = vpack.c.b16 %v1681, %v1673
    %v1906 = vpack.c.b16 %v1682, %v1674
    %v1907 = vpack.c.b16 %v1683, %v1675
    %v1908 = vpack.c.b16 %v1684, %v1676
    %v1909 = vpack.c.b16 %v1693, %v1685
    %v1910 = vpack.c.b16 %v1694, %v1686
    %v1911 = vpack.c.b16 %v1695, %v1687
    %v1912 = vpack.c.b16 %v1696, %v1688
    %v1913 = vpack.c.b16 %v1697, %v1689
    %v1914 = vpack.c.b16 %v1698, %v1690
    %v1915 = vpack.c.b16 %v1699, %v1691
    %v1916 = vpack.c.b16 %v1700, %v1692
    %v1917 = vpack.c.b16 %v1709, %v1701
    %v1918 = vpack.c.b16 %v1710, %v1702
    %v1919 = vpack.c.b16 %v1711, %v1703
    %v1920 = vpack.c.b16 %v1712, %v1704
    %v1921 = vpack.c.b16 %v1713, %v1705
    %v1922 = vpack.c.b16 %v1714, %v1706
    %v1923 = vpack.c.b16 %v1715, %v1707
    %v1924 = vpack.c.b16 %v1716, %v1708
    %v1925 = vpack.c.b16 %v1725, %v1717
    %v1926 = vpack.c.b16 %v1726, %v1718
    %v1927 = vpack.c.b16 %v1727, %v1719
    %v1928 = vpack.c.b16 %v1728, %v1720
    %v1929 = vpack.c.b16 %v1729, %v1721
    %v1930 = vpack.c.b16 %v1730, %v1722
    %v1931 = vpack.c.b16 %v1731, %v1723
    %v1932 = vpack.c.b16 %v1732, %v1724
    %v1933 = vpack.c.b16 %v1741, %v1733
    %v1934 = vpack.c.b16 %v1742, %v1734
    %v1935 = vpack.c.b16 %v1743, %v1735
    %v1936 = vpack.c.b16 %v1744, %v1736
    %v1937 = vpack.c.b16 %v1745, %v1737
    %v1938 = vpack.c.b16 %v1746, %v1738
    %v1939 = vpack.c.b16 %v1747, %v1739
    %v1940 = vpack.c.b16 %v1748, %v1740
    %v1941 = vpack.c.b16 %v1757, %v1749
    %v1942 = vpack.c.b16 %v1758, %v1750
    %v1943 = vpack.c.b16 %v1759, %v1751
    %v1944 = vpack.c.b16 %v1760, %v1752
    %v1945 = vpack.c.b16 %v1761, %v1753
    %v1946 = vpack.c.b16 %v1762, %v1754
    %v1947 = vpack.c.b16 %v1763, %v1755
    %v1948 = vpack.c.b16 %v1764, %v1756
    %v1949 = vpack.c.b16 %v1773, %v1765
    %v1950 = vpack.c.b16 %v1774, %v1766
    %v1951 = vpack.c.b16 %v1775, %v1767
    %v1952 = vpack.c.b16 %v1776, %v1768
    %v1953 = vpack.c.b16 %v1777, %v1769
    %v1954 = vpack.c.b16 %v1778, %v1770
    %v1955 = vpack.c.b16 %v1779, %v1771
    %v1956 = vpack.c.b16 %v1780, %v1772
    %v1957 = vpack.c.b16 %v1789, %v1781
    %v1958 = vpack.c.b16 %v1790, %v1782
    %v1959 = vpack.c.b16 %v1791, %v1783
    %v1960 = vpack.c.b16 %v1792, %v1784
    %v1961 = vpack.c.b16 %v1793, %v1785
    %v1962 = vpack.c.b16 %v1794, %v1786
    %v1963 = vpack.c.b16 %v1795, %v1787
    %v1964 = vpack.c.b16 %v1796, %v1788
    %v1965 = vpack.c.b16 %v1805, %v1797
    %v1966 = vpack.c.b16 %v1806, %v1798
    %v1967 = vpack.c.b16 %v1807, %v1799
    %v1968 = vpack.c.b16 %v1808, %v1800
    %v1969 = vpack.c.b16 %v1809, %v1801
    %v1970 = vpack.c.b16 %v1810, %v1802
    %v1971 = vpack.c.b16 %v1811, %v1803
    %v1972 = vpack.c.b16 %v1812, %v1804
    %v1973 = vpack.c.b16 %v1821, %v1813
    %v1974 = vpack.c.b16 %v1822, %v1814
    %v1975 = vpack.c.b16 %v1823, %v1815
    %v1976 = vpack.c.b16 %v1824, %v1816
    %v1977 = vpack.c.b16 %v1825, %v1817
    %v1978 = vpack.c.b16 %v1826, %v1818
    %v1979 = vpack.c.b16 %v1827, %v1819
    %v1980 = vpack.c.b16 %v1828, %v1820
    %v1981 = vpack.c.b16 %v1837, %v1829
    %v1982 = vpack.c.b16 %v1838, %v1830
    %v1983 = vpack.c.b16 %v1839, %v1831
    %v1984 = vpack.c.b16 %v1840, %v1832
    %v1985 = vpack.c.b16 %v1841, %v1833
    %v1986 = vpack.c.b16 %v1842, %v1834
    %v1987 = vpack.c.b16 %v1843, %v1835
    %v1988 = vpack.c.b16 %v1844, %v1836
    %v1989 = vpack.c.b16 %v1853, %v1845
    %v1990 = vpack.c.b16 %v1854, %v1846
    %v1991 = vpack.c.b16 %v1855, %v1847
    %v1992 = vpack.c.b16 %v1856, %v1848
    %v1993 = vpack.c.b16 %v1857, %v1849
    %v1994 = vpack.c.b16 %v1858, %v1850
    %v1995 = vpack.c.b16 %v1859, %v1851
    %v1996 = vpack.c.b16 %v1860, %v1852
    %v1997 = vpack.c.b16 %v1869, %v1861
    %v1998 = vpack.c.b16 %v1870, %v1862
    %v1999 = vpack.c.b16 %v1871, %v1863
    %v2000 = vpack.c.b16 %v1872, %v1864
    %v2001 = vpack.c.b16 %v1873, %v1865
    %v2002 = vpack.c.b16 %v1874, %v1866
    %v2003 = vpack.c.b16 %v1875, %v1867
    %v2004 = vpack.c.b16 %v1876, %v1868
    %2133 = vmatpush.bf16.msra.mxu0 %v1933
    %2134 = vmatpush.bf16.msra.mxu0 %v1925
    %2135 = vmatpush.bf16.msra.mxu0 %v1917
    %2136 = vmatpush.bf16.msra.mxu0 %v1909
    %2137 = vmatpush.bf16.msra.mxu0 %v1901
    %2138 = vmatpush.bf16.msra.mxu0 %v1893
    %2139 = vmatpush.bf16.msra.mxu0 %v1885
    %2140 = vmatpush.bf16.msra.mxu0 %v1877
    %2141 = vmatmul.bf16.gmra.mxu0 %v1491
    %v2142 = vpop.f32.mrf.mxu0
    %v2143 = vadd.f32 0.0, %v2142
    %v2144 = vpop.f32.mrf.mxu0
    %2145 = vdwg.mxu0
    %2146 = vmatpush.bf16.msra.mxu0 %v1997
    %2147 = vmatpush.bf16.msra.mxu0 %v1989
    %2148 = vmatpush.bf16.msra.mxu0 %v1981
    %2149 = vmatpush.bf16.msra.mxu0 %v1973
    %2150 = vmatpush.bf16.msra.mxu0 %v1965
    %2151 = vmatpush.bf16.msra.mxu0 %v1957
    %2152 = vmatpush.bf16.msra.mxu0 %v1949
    %2153 = vmatpush.bf16.msra.mxu0 %v1941
    %2154 = vmatmul.bf16.gmra.mxu0 %v1492
    %v2155 = vpop.f32.mrf.mxu0
    %v2156 = vadd.f32 %v2143, %v2155
    %v2157 = vpop.f32.mrf.mxu0
    %2158 = vdwg.mxu0
    %2159 = vmatpush.bf16.msra.mxu0 %v1934
    %2160 = vmatpush.bf16.msra.mxu0 %v1926
    %2161 = vmatpush.bf16.msra.mxu0 %v1918
    %2162 = vmatpush.bf16.msra.mxu0 %v1910
    %2163 = vmatpush.bf16.msra.mxu0 %v1902
    %2164 = vmatpush.bf16.msra.mxu0 %v1894
    %2165 = vmatpush.bf16.msra.mxu0 %v1886
    %2166 = vmatpush.bf16.msra.mxu0 %v1878
    %2167 = vmatmul.bf16.gmra.mxu0 %v1491
    %v2168 = vpop.f32.mrf.mxu0
    %v2169 = vadd.f32 0.0, %v2168
    %v2170 = vpop.f32.mrf.mxu0
    %2171 = vdwg.mxu0
    %2172 = vmatpush.bf16.msra.mxu0 %v1998
    %2173 = vmatpush.bf16.msra.mxu0 %v1990
    %2174 = vmatpush.bf16.msra.mxu0 %v1982
    %2175 = vmatpush.bf16.msra.mxu0 %v1974
    %2176 = vmatpush.bf16.msra.mxu0 %v1966
    %2177 = vmatpush.bf16.msra.mxu0 %v1958
    %2178 = vmatpush.bf16.msra.mxu0 %v1950
    %2179 = vmatpush.bf16.msra.mxu0 %v1942
    %2180 = vmatmul.bf16.gmra.mxu0 %v1492
    %v2181 = vpop.f32.mrf.mxu0
    %v2182 = vadd.f32 %v2169, %v2181
    %v2183 = vpop.f32.mrf.mxu0
    %2184 = vdwg.mxu0
    %2185 = vmatpush.bf16.msra.mxu0 %v1935
    %2186 = vmatpush.bf16.msra.mxu0 %v1927
    %2187 = vmatpush.bf16.msra.mxu0 %v1919
    %2188 = vmatpush.bf16.msra.mxu0 %v1911
    %2189 = vmatpush.bf16.msra.mxu0 %v1903
    %2190 = vmatpush.bf16.msra.mxu0 %v1895
    %2191 = vmatpush.bf16.msra.mxu0 %v1887
    %2192 = vmatpush.bf16.msra.mxu0 %v1879
    %2193 = vmatmul.bf16.gmra.mxu0 %v1491
    %v2194 = vpop.f32.mrf.mxu0
    %v2195 = vadd.f32 0.0, %v2194
    %v2196 = vpop.f32.mrf.mxu0
    %2197 = vdwg.mxu0
    %2198 = vmatpush.bf16.msra.mxu0 %v1999
    %2199 = vmatpush.bf16.msra.mxu0 %v1991
    %2200 = vmatpush.bf16.msra.mxu0 %v1983
    %2201 = vmatpush.bf16.msra.mxu0 %v1975
    %2202 = vmatpush.bf16.msra.mxu0 %v1967
    %2203 = vmatpush.bf16.msra.mxu0 %v1959
    %2204 = vmatpush.bf16.msra.mxu0 %v1951
    %2205 = vmatpush.bf16.msra.mxu0 %v1943
    %2206 = vmatmul.bf16.gmra.mxu0 %v1492
    %v2207 = vpop.f32.mrf.mxu0
    %v2208 = vadd.f32 %v2195, %v2207
    %v2209 = vpop.f32.mrf.mxu0
    %2210 = vdwg.mxu0
    %2211 = vmatpush.bf16.msra.mxu0 %v1936
    %2212 = vmatpush.bf16.msra.mxu0 %v1928
    %2213 = vmatpush.bf16.msra.mxu0 %v1920
    %2214 = vmatpush.bf16.msra.mxu0 %v1912
    %2215 = vmatpush.bf16.msra.mxu0 %v1904
    %2216 = vmatpush.bf16.msra.mxu0 %v1896
    %2217 = vmatpush.bf16.msra.mxu0 %v1888
    %2218 = vmatpush.bf16.msra.mxu0 %v1880
    %2219 = vmatmul.bf16.gmra.mxu0 %v1491
    %v2220 = vpop.f32.mrf.mxu0
    %v2221 = vadd.f32 0.0, %v2220
    %v2222 = vpop.f32.mrf.mxu0
    %2223 = vdwg.mxu0
    %2224 = vmatpush.bf16.msra.mxu0 %v2000
    %2225 = vmatpush.bf16.msra.mxu0 %v1992
    %2226 = vmatpush.bf16.msra.mxu0 %v1984
    %2227 = vmatpush.bf16.msra.mxu0 %v1976
    %2228 = vmatpush.bf16.msra.mxu0 %v1968
    %2229 = vmatpush.bf16.msra.mxu0 %v1960
    %2230 = vmatpush.bf16.msra.mxu0 %v1952
    %2231 = vmatpush.bf16.msra.mxu0 %v1944
    %2232 = vmatmul.bf16.gmra.mxu0 %v1492
    %v2233 = vpop.f32.mrf.mxu0
    %v2234 = vadd.f32 %v2221, %v2233
    %v2235 = vpop.f32.mrf.mxu0
    %2236 = vdwg.mxu0
    %2237 = vmatpush.bf16.msra.mxu0 %v1937
    %2238 = vmatpush.bf16.msra.mxu0 %v1929
    %2239 = vmatpush.bf16.msra.mxu0 %v1921
    %2240 = vmatpush.bf16.msra.mxu0 %v1913
    %2241 = vmatpush.bf16.msra.mxu0 %v1905
    %2242 = vmatpush.bf16.msra.mxu0 %v1897
    %2243 = vmatpush.bf16.msra.mxu0 %v1889
    %2244 = vmatpush.bf16.msra.mxu0 %v1881
    %2245 = vmatmul.bf16.gmra.mxu0 %v1491
    %v2246 = vpop.f32.mrf.mxu0
    %v2247 = vadd.f32 0.0, %v2246
    %v2248 = vpop.f32.mrf.mxu0
    %2249 = vdwg.mxu0
    %2250 = vmatpush.bf16.msra.mxu0 %v2001
    %2251 = vmatpush.bf16.msra.mxu0 %v1993
    %2252 = vmatpush.bf16.msra.mxu0 %v1985
    %2253 = vmatpush.bf16.msra.mxu0 %v1977
    %2254 = vmatpush.bf16.msra.mxu0 %v1969
    %2255 = vmatpush.bf16.msra.mxu0 %v1961
    %2256 = vmatpush.bf16.msra.mxu0 %v1953
    %2257 = vmatpush.bf16.msra.mxu0 %v1945
    %2258 = vmatmul.bf16.gmra.mxu0 %v1492
    %v2259 = vpop.f32.mrf.mxu0
    %v2260 = vadd.f32 %v2247, %v2259
    %v2261 = vpop.f32.mrf.mxu0
    %2262 = vdwg.mxu0
    %2263 = vmatpush.bf16.msra.mxu0 %v1938
    %2264 = vmatpush.bf16.msra.mxu0 %v1930
    %2265 = vmatpush.bf16.msra.mxu0 %v1922
    %2266 = vmatpush.bf16.msra.mxu0 %v1914
    %2267 = vmatpush.bf16.msra.mxu0 %v1906
    %2268 = vmatpush.bf16.msra.mxu0 %v1898
    %2269 = vmatpush.bf16.msra.mxu0 %v1890
    %2270 = vmatpush.bf16.msra.mxu0 %v1882
    %2271 = vmatmul.bf16.gmra.mxu0 %v1491
    %v2272 = vpop.f32.mrf.mxu0
    %v2273 = vadd.f32 0.0, %v2272
    %v2274 = vpop.f32.mrf.mxu0
    %2275 = vdwg.mxu0
    %2276 = vmatpush.bf16.msra.mxu0 %v2002
    %2277 = vmatpush.bf16.msra.mxu0 %v1994
    %2278 = vmatpush.bf16.msra.mxu0 %v1986
    %2279 = vmatpush.bf16.msra.mxu0 %v1978
    %2280 = vmatpush.bf16.msra.mxu0 %v1970
    %2281 = vmatpush.bf16.msra.mxu0 %v1962
    %2282 = vmatpush.bf16.msra.mxu0 %v1954
    %2283 = vmatpush.bf16.msra.mxu0 %v1946
    %2284 = vmatmul.bf16.gmra.mxu0 %v1492
    %v2285 = vpop.f32.mrf.mxu0
    %v2286 = vadd.f32 %v2273, %v2285
    %v2287 = vpop.f32.mrf.mxu0
    %2288 = vdwg.mxu0
    %2289 = vmatpush.bf16.msra.mxu0 %v1939
    %2290 = vmatpush.bf16.msra.mxu0 %v1931
    %2291 = vmatpush.bf16.msra.mxu0 %v1923
    %2292 = vmatpush.bf16.msra.mxu0 %v1915
    %2293 = vmatpush.bf16.msra.mxu0 %v1907
    %2294 = vmatpush.bf16.msra.mxu0 %v1899
    %2295 = vmatpush.bf16.msra.mxu0 %v1891
    %2296 = vmatpush.bf16.msra.mxu0 %v1883
    %2297 = vmatmul.bf16.gmra.mxu0 %v1491
    %v2298 = vpop.f32.mrf.mxu0
    %v2299 = vadd.f32 0.0, %v2298
    %v2300 = vpop.f32.mrf.mxu0
    %2301 = vdwg.mxu0
    %2302 = vmatpush.bf16.msra.mxu0 %v2003
    %2303 = vmatpush.bf16.msra.mxu0 %v1995
    %2304 = vmatpush.bf16.msra.mxu0 %v1987
    %2305 = vmatpush.bf16.msra.mxu0 %v1979
    %2306 = vmatpush.bf16.msra.mxu0 %v1971
    %2307 = vmatpush.bf16.msra.mxu0 %v1963
    %2308 = vmatpush.bf16.msra.mxu0 %v1955
    %2309 = vmatpush.bf16.msra.mxu0 %v1947
    %2310 = vmatmul.bf16.gmra.mxu0 %v1492
    %v2311 = vpop.f32.mrf.mxu0
    %v2312 = vadd.f32 %v2299, %v2311
    %v2313 = vpop.f32.mrf.mxu0
    %2314 = vdwg.mxu0
    %2315 = vmatpush.bf16.msra.mxu0 %v1940
    %2316 = vmatpush.bf16.msra.mxu0 %v1932
    %2317 = vmatpush.bf16.msra.mxu0 %v1924
    %2318 = vmatpush.bf16.msra.mxu0 %v1916
    %2319 = vmatpush.bf16.msra.mxu0 %v1908
    %2320 = vmatpush.bf16.msra.mxu0 %v1900
    %2321 = vmatpush.bf16.msra.mxu0 %v1892
    %2322 = vmatpush.bf16.msra.mxu0 %v1884
    %2323 = vmatmul.bf16.gmra.mxu0 %v1491
    %v2324 = vpop.f32.mrf.mxu0
    %v2325 = vadd.f32 0.0, %v2324
    %v2326 = vpop.f32.mrf.mxu0
    %2327 = vdwg.mxu0
    %2328 = vmatpush.bf16.msra.mxu0 %v2004
    %2329 = vmatpush.bf16.msra.mxu0 %v1996
    %2330 = vmatpush.bf16.msra.mxu0 %v1988
    %2331 = vmatpush.bf16.msra.mxu0 %v1980
    %2332 = vmatpush.bf16.msra.mxu0 %v1972
    %2333 = vmatpush.bf16.msra.mxu0 %v1964
    %2334 = vmatpush.bf16.msra.mxu0 %v1956
    %2335 = vmatpush.bf16.msra.mxu0 %v1948
    %2336 = vmatmul.bf16.gmra.mxu0 %v1492
    %v2337 = vpop.f32.mrf.mxu0
    %v2338 = vadd.f32 %v2325, %v2337
    %v2339 = vpop.f32.mrf.mxu0
    %2340 = vdwg.mxu0
    %v2341 = vadd.f32 %v1397, %v2156
    %v2342 = vadd.f32 %v1410, %v2182
    %v2343 = vadd.f32 %v1423, %v2208
    %v2344 = vadd.f32 %v1436, %v2234
    %v2345 = vadd.f32 %v1449, %v2260
    %v2346 = vadd.f32 %v1462, %v2286
    %v2347 = vadd.f32 %v1475, %v2312
    %v2348 = vadd.f32 %v1488, %v2338
    %v2349 = vpack.c.bf16 %v2341, %v2341
    %v2350 = vpack.c.bf16 %v2342, %v2342
    %v2351 = vpack.c.bf16 %v2343, %v2343
    %v2352 = vpack.c.bf16 %v2344, %v2344
    %v2353 = vpack.c.bf16 %v2345, %v2345
    %v2354 = vpack.c.bf16 %v2346, %v2346
    %v2355 = vpack.c.bf16 %v2347, %v2347
    %v2356 = vpack.c.bf16 %v2348, %v2348
    %v2869 = vunpack.c.l.b16 %v462
    %v2870 = vunpack.c.h.b16 %v462
    %v2871 = vunpack.c.l.b16 %v463
    %v2872 = vunpack.c.h.b16 %v463
    %v2873 = vunpack.c.l.b16 %v464
    %v2874 = vunpack.c.h.b16 %v464
    %v2875 = vunpack.c.l.b16 %v465
    %v2876 = vunpack.c.h.b16 %v465
    %v2877 = vunpack.c.l.b16 %v466
    %v2878 = vunpack.c.h.b16 %v466
    %v2879 = vunpack.c.l.b16 %v467
    %v2880 = vunpack.c.h.b16 %v467
    %v2881 = vunpack.c.l.b16 %v468
    %v2882 = vunpack.c.h.b16 %v468
    %v2883 = vunpack.c.l.b16 %v469
    %v2884 = vunpack.c.h.b16 %v469
    %v2885 = vunpack.c.l.b16 %v470
    %v2886 = vunpack.c.h.b16 %v470
    %v2887 = vunpack.c.l.b16 %v471
    %v2888 = vunpack.c.h.b16 %v471
    %v2889 = vunpack.c.l.b16 %v472
    %v2890 = vunpack.c.h.b16 %v472
    %v2891 = vunpack.c.l.b16 %v473
    %v2892 = vunpack.c.h.b16 %v473
    %v2893 = vunpack.c.l.b16 %v474
    %v2894 = vunpack.c.h.b16 %v474
    %v2895 = vunpack.c.l.b16 %v475
    %v2896 = vunpack.c.h.b16 %v475
    %v2897 = vunpack.c.l.b16 %v476
    %v2898 = vunpack.c.h.b16 %v476
    %v2899 = vunpack.c.l.b16 %v477
    %v2900 = vunpack.c.h.b16 %v477
    %v2901 = vunpack.c.l.b16 %v478
    %v2902 = vunpack.c.h.b16 %v478
    %v2903 = vunpack.c.l.b16 %v479
    %v2904 = vunpack.c.h.b16 %v479
    %v2905 = vunpack.c.l.b16 %v480
    %v2906 = vunpack.c.h.b16 %v480
    %v2907 = vunpack.c.l.b16 %v481
    %v2908 = vunpack.c.h.b16 %v481
    %v2909 = vunpack.c.l.b16 %v482
    %v2910 = vunpack.c.h.b16 %v482
    %v2911 = vunpack.c.l.b16 %v483
    %v2912 = vunpack.c.h.b16 %v483
    %v2913 = vunpack.c.l.b16 %v484
    %v2914 = vunpack.c.h.b16 %v484
    %v2915 = vunpack.c.l.b16 %v485
    %v2916 = vunpack.c.h.b16 %v485
    %v2917 = vunpack.c.l.b16 %v486
    %v2918 = vunpack.c.h.b16 %v486
    %v2919 = vunpack.c.l.b16 %v487
    %v2920 = vunpack.c.h.b16 %v487
    %v2921 = vunpack.c.l.b16 %v488
    %v2922 = vunpack.c.h.b16 %v488
    %v2923 = vunpack.c.l.b16 %v489
    %v2924 = vunpack.c.h.b16 %v489
    %v2925 = vunpack.c.l.b16 %v490
    %v2926 = vunpack.c.h.b16 %v490
    %v2927 = vunpack.c.l.b16 %v491
    %v2928 = vunpack.c.h.b16 %v491
    %v2929 = vunpack.c.l.b16 %v492
    %v2930 = vunpack.c.h.b16 %v492
    %v2931 = vunpack.c.l.b16 %v493
    %v2932 = vunpack.c.h.b16 %v493
    %v2933 = vunpack.c.l.b16 %v494
    %v2934 = vunpack.c.h.b16 %v494
    %v2935 = vunpack.c.l.b16 %v495
    %v2936 = vunpack.c.h.b16 %v495
    %v2937 = vunpack.c.l.b16 %v496
    %v2938 = vunpack.c.h.b16 %v496
    %v2939 = vunpack.c.l.b16 %v497
    %v2940 = vunpack.c.h.b16 %v497
    %v2941 = vunpack.c.l.b16 %v498
    %v2942 = vunpack.c.h.b16 %v498
    %v2943 = vunpack.c.l.b16 %v499
    %v2944 = vunpack.c.h.b16 %v499
    %v2945 = vunpack.c.l.b16 %v500
    %v2946 = vunpack.c.h.b16 %v500
    %v2947 = vunpack.c.l.b16 %v501
    %v2948 = vunpack.c.h.b16 %v501
    %v2949 = vunpack.c.l.b16 %v502
    %v2950 = vunpack.c.h.b16 %v502
    %v2951 = vunpack.c.l.b16 %v503
    %v2952 = vunpack.c.h.b16 %v503
    %v2953 = vunpack.c.l.b16 %v504
    %v2954 = vunpack.c.h.b16 %v504
    %v2955 = vunpack.c.l.b16 %v505
    %v2956 = vunpack.c.h.b16 %v505
    %v2957 = vunpack.c.l.b16 %v506
    %v2958 = vunpack.c.h.b16 %v506
    %v2959 = vunpack.c.l.b16 %v507
    %v2960 = vunpack.c.h.b16 %v507
    %v2961 = vunpack.c.l.b16 %v508
    %v2962 = vunpack.c.h.b16 %v508
    %v2963 = vunpack.c.l.b16 %v509
    %v2964 = vunpack.c.h.b16 %v509
    %v2965 = vunpack.c.l.b16 %v510
    %v2966 = vunpack.c.h.b16 %v510
    %v2967 = vunpack.c.l.b16 %v511
    %v2968 = vunpack.c.h.b16 %v511
    %v2969 = vunpack.c.l.b16 %v512
    %v2970 = vunpack.c.h.b16 %v512
    %v2971 = vunpack.c.l.b16 %v513
    %v2972 = vunpack.c.h.b16 %v513
    %v2973 = vunpack.c.l.b16 %v514
    %v2974 = vunpack.c.h.b16 %v514
    %v2975 = vunpack.c.l.b16 %v515
    %v2976 = vunpack.c.h.b16 %v515
    %v2977 = vunpack.c.l.b16 %v516
    %v2978 = vunpack.c.h.b16 %v516
    %v2979 = vunpack.c.l.b16 %v517
    %v2980 = vunpack.c.h.b16 %v517
    %v2981 = vunpack.c.l.b16 %v518
    %v2982 = vunpack.c.h.b16 %v518
    %v2983 = vunpack.c.l.b16 %v519
    %v2984 = vunpack.c.h.b16 %v519
    %v2985 = vunpack.c.l.b16 %v520
    %v2986 = vunpack.c.h.b16 %v520
    %v2987 = vunpack.c.l.b16 %v521
    %v2988 = vunpack.c.h.b16 %v521
    %v2989 = vunpack.c.l.b16 %v522
    %v2990 = vunpack.c.h.b16 %v522
    %v2991 = vunpack.c.l.b16 %v523
    %v2992 = vunpack.c.h.b16 %v523
    %v2993 = vunpack.c.l.b16 %v524
    %v2994 = vunpack.c.h.b16 %v524
    %v2995 = vunpack.c.l.b16 %v525
    %v2996 = vunpack.c.h.b16 %v525
    %v2997 = vunpack.c.l.b16 %v526
    %v2998 = vunpack.c.h.b16 %v526
    %v2999 = vunpack.c.l.b16 %v527
    %v3000 = vunpack.c.h.b16 %v527
    %v3001 = vunpack.c.l.b16 %v528
    %v3002 = vunpack.c.h.b16 %v528
    %v3003 = vunpack.c.l.b16 %v529
    %v3004 = vunpack.c.h.b16 %v529
    %v3005 = vunpack.c.l.b16 %v530
    %v3006 = vunpack.c.h.b16 %v530
    %v3007 = vunpack.c.l.b16 %v531
    %v3008 = vunpack.c.h.b16 %v531
    %v3009 = vunpack.c.l.b16 %v532
    %v3010 = vunpack.c.h.b16 %v532
    %v3011 = vunpack.c.l.b16 %v533
    %v3012 = vunpack.c.h.b16 %v533
    %v3013 = vunpack.c.l.b16 %v534
    %v3014 = vunpack.c.h.b16 %v534
    %v3015 = vunpack.c.l.b16 %v535
    %v3016 = vunpack.c.h.b16 %v535
    %v3017 = vunpack.c.l.b16 %v536
    %v3018 = vunpack.c.h.b16 %v536
    %v3019 = vunpack.c.l.b16 %v537
    %v3020 = vunpack.c.h.b16 %v537
    %v3021 = vunpack.c.l.b16 %v538
    %v3022 = vunpack.c.h.b16 %v538
    %v3023 = vunpack.c.l.b16 %v539
    %v3024 = vunpack.c.h.b16 %v539
    %v3025 = vunpack.c.l.b16 %v540
    %v3026 = vunpack.c.h.b16 %v540
    %v3027 = vunpack.c.l.b16 %v541
    %v3028 = vunpack.c.h.b16 %v541
    %v3029 = vunpack.c.l.b16 %v542
    %v3030 = vunpack.c.h.b16 %v542
    %v3031 = vunpack.c.l.b16 %v543
    %v3032 = vunpack.c.h.b16 %v543
    %v3033 = vunpack.c.l.b16 %v544
    %v3034 = vunpack.c.h.b16 %v544
    %v3035 = vunpack.c.l.b16 %v545
    %v3036 = vunpack.c.h.b16 %v545
    %v3037 = vunpack.c.l.b16 %v546
    %v3038 = vunpack.c.h.b16 %v546
    %v3039 = vunpack.c.l.b16 %v547
    %v3040 = vunpack.c.h.b16 %v547
    %v3041 = vunpack.c.l.b16 %v548
    %v3042 = vunpack.c.h.b16 %v548
    %v3043 = vunpack.c.l.b16 %v549
    %v3044 = vunpack.c.h.b16 %v549
    %v3045 = vunpack.c.l.b16 %v550
    %v3046 = vunpack.c.h.b16 %v550
    %v3047 = vunpack.c.l.b16 %v551
    %v3048 = vunpack.c.h.b16 %v551
    %v3049 = vunpack.c.l.b16 %v552
    %v3050 = vunpack.c.h.b16 %v552
    %v3051 = vunpack.c.l.b16 %v553
    %v3052 = vunpack.c.h.b16 %v553
    %v3053 = vunpack.c.l.b16 %v554
    %v3054 = vunpack.c.h.b16 %v554
    %v3055 = vunpack.c.l.b16 %v555
    %v3056 = vunpack.c.h.b16 %v555
    %v3057 = vunpack.c.l.b16 %v556
    %v3058 = vunpack.c.h.b16 %v556
    %v3059 = vunpack.c.l.b16 %v557
    %v3060 = vunpack.c.h.b16 %v557
    %v3061 = vunpack.c.l.b16 %v558
    %v3062 = vunpack.c.h.b16 %v558
    %v3063 = vunpack.c.l.b16 %v559
    %v3064 = vunpack.c.h.b16 %v559
    %v3065 = vunpack.c.l.b16 %v560
    %v3066 = vunpack.c.h.b16 %v560
    %v3067 = vunpack.c.l.b16 %v561
    %v3068 = vunpack.c.h.b16 %v561
    %v3069 = vunpack.c.l.b16 %v562
    %v3070 = vunpack.c.h.b16 %v562
    %v3071 = vunpack.c.l.b16 %v563
    %v3072 = vunpack.c.h.b16 %v563
    %v3073 = vunpack.c.l.b16 %v564
    %v3074 = vunpack.c.h.b16 %v564
    %v3075 = vunpack.c.l.b16 %v565
    %v3076 = vunpack.c.h.b16 %v565
    %v3077 = vunpack.c.l.b16 %v566
    %v3078 = vunpack.c.h.b16 %v566
    %v3079 = vunpack.c.l.b16 %v567
    %v3080 = vunpack.c.h.b16 %v567
    %v3081 = vunpack.c.l.b16 %v568
    %v3082 = vunpack.c.h.b16 %v568
    %v3083 = vunpack.c.l.b16 %v569
    %v3084 = vunpack.c.h.b16 %v569
    %v3085 = vunpack.c.l.b16 %v570
    %v3086 = vunpack.c.h.b16 %v570
    %v3087 = vunpack.c.l.b16 %v571
    %v3088 = vunpack.c.h.b16 %v571
    %v3089 = vunpack.c.l.b16 %v572
    %v3090 = vunpack.c.h.b16 %v572
    %v3091 = vunpack.c.l.b16 %v573
    %v3092 = vunpack.c.h.b16 %v573
    %v3093 = vunpack.c.l.b16 %v574
    %v3094 = vunpack.c.h.b16 %v574
    %v3095 = vunpack.c.l.b16 %v575
    %v3096 = vunpack.c.h.b16 %v575
    %v3097 = vunpack.c.l.b16 %v576
    %v3098 = vunpack.c.h.b16 %v576
    %v3099 = vunpack.c.l.b16 %v577
    %v3100 = vunpack.c.h.b16 %v577
    %v3101 = vunpack.c.l.b16 %v578
    %v3102 = vunpack.c.h.b16 %v578
    %v3103 = vunpack.c.l.b16 %v579
    %v3104 = vunpack.c.h.b16 %v579
    %v3105 = vunpack.c.l.b16 %v580
    %v3106 = vunpack.c.h.b16 %v580
    %v3107 = vunpack.c.l.b16 %v581
    %v3108 = vunpack.c.h.b16 %v581
    %v3109 = vunpack.c.l.b16 %v582
    %v3110 = vunpack.c.h.b16 %v582
    %v3111 = vunpack.c.l.b16 %v583
    %v3112 = vunpack.c.h.b16 %v583
    %v3113 = vunpack.c.l.b16 %v584
    %v3114 = vunpack.c.h.b16 %v584
    %v3115 = vunpack.c.l.b16 %v585
    %v3116 = vunpack.c.h.b16 %v585
    %v3117 = vunpack.c.l.b16 %v586
    %v3118 = vunpack.c.h.b16 %v586
    %v3119 = vunpack.c.l.b16 %v587
    %v3120 = vunpack.c.h.b16 %v587
    %v3121 = vunpack.c.l.b16 %v588
    %v3122 = vunpack.c.h.b16 %v588
    %v3123 = vunpack.c.l.b16 %v589
    %v3124 = vunpack.c.h.b16 %v589
    %v3125 = vunpack.c.l.b16 %v590
    %v3126 = vunpack.c.h.b16 %v590
    %v3127 = vunpack.c.l.b16 %v591
    %v3128 = vunpack.c.h.b16 %v591
    %v3129 = vunpack.c.l.b16 %v592
    %v3130 = vunpack.c.h.b16 %v592
    %v3131 = vunpack.c.l.b16 %v593
    %v3132 = vunpack.c.h.b16 %v593
    %v3133 = vunpack.c.l.b16 %v594
    %v3134 = vunpack.c.h.b16 %v594
    %v3135 = vunpack.c.l.b16 %v595
    %v3136 = vunpack.c.h.b16 %v595
    %v3137 = vunpack.c.l.b16 %v596
    %v3138 = vunpack.c.h.b16 %v596
    %v3139 = vunpack.c.l.b16 %v597
    %v3140 = vunpack.c.h.b16 %v597
    %v3141 = vunpack.c.l.b16 %v598
    %v3142 = vunpack.c.h.b16 %v598
    %v3143 = vunpack.c.l.b16 %v599
    %v3144 = vunpack.c.h.b16 %v599
    %v3145 = vunpack.c.l.b16 %v600
    %v3146 = vunpack.c.h.b16 %v600
    %v3147 = vunpack.c.l.b16 %v601
    %v3148 = vunpack.c.h.b16 %v601
    %v3149 = vunpack.c.l.b16 %v602
    %v3150 = vunpack.c.h.b16 %v602
    %v3151 = vunpack.c.l.b16 %v603
    %v3152 = vunpack.c.h.b16 %v603
    %v3153 = vunpack.c.l.b16 %v604
    %v3154 = vunpack.c.h.b16 %v604
    %v3155 = vunpack.c.l.b16 %v605
    %v3156 = vunpack.c.h.b16 %v605
    %v3157 = vunpack.c.l.b16 %v606
    %v3158 = vunpack.c.h.b16 %v606
    %v3159 = vunpack.c.l.b16 %v607
    %v3160 = vunpack.c.h.b16 %v607
    %v3161 = vunpack.c.l.b16 %v608
    %v3162 = vunpack.c.h.b16 %v608
    %v3163 = vunpack.c.l.b16 %v609
    %v3164 = vunpack.c.h.b16 %v609
    %v3165 = vunpack.c.l.b16 %v610
    %v3166 = vunpack.c.h.b16 %v610
    %v3167 = vunpack.c.l.b16 %v611
    %v3168 = vunpack.c.h.b16 %v611
    %v3169 = vunpack.c.l.b16 %v612
    %v3170 = vunpack.c.h.b16 %v612
    %v3171 = vunpack.c.l.b16 %v613
    %v3172 = vunpack.c.h.b16 %v613
    %v3173 = vunpack.c.l.b16 %v614
    %v3174 = vunpack.c.h.b16 %v614
    %v3175 = vunpack.c.l.b16 %v615
    %v3176 = vunpack.c.h.b16 %v615
    %v3177 = vunpack.c.l.b16 %v616
    %v3178 = vunpack.c.h.b16 %v616
    %v3179 = vunpack.c.l.b16 %v617
    %v3180 = vunpack.c.h.b16 %v617
    %v3181 = vunpack.c.l.b16 %v618
    %v3182 = vunpack.c.h.b16 %v618
    %v3183 = vunpack.c.l.b16 %v619
    %v3184 = vunpack.c.h.b16 %v619
    %v3185 = vunpack.c.l.b16 %v620
    %v3186 = vunpack.c.h.b16 %v620
    %v3187 = vunpack.c.l.b16 %v621
    %v3188 = vunpack.c.h.b16 %v621
    %v3189 = vunpack.c.l.b16 %v622
    %v3190 = vunpack.c.h.b16 %v622
    %v3191 = vunpack.c.l.b16 %v623
    %v3192 = vunpack.c.h.b16 %v623
    %v3193 = vunpack.c.l.b16 %v624
    %v3194 = vunpack.c.h.b16 %v624
    %v3195 = vunpack.c.l.b16 %v625
    %v3196 = vunpack.c.h.b16 %v625
    %v3197 = vunpack.c.l.b16 %v626
    %v3198 = vunpack.c.h.b16 %v626
    %v3199 = vunpack.c.l.b16 %v627
    %v3200 = vunpack.c.h.b16 %v627
    %v3201 = vunpack.c.l.b16 %v628
    %v3202 = vunpack.c.h.b16 %v628
    %v3203 = vunpack.c.l.b16 %v629
    %v3204 = vunpack.c.h.b16 %v629
    %v3205 = vunpack.c.l.b16 %v630
    %v3206 = vunpack.c.h.b16 %v630
    %v3207 = vunpack.c.l.b16 %v631
    %v3208 = vunpack.c.h.b16 %v631
    %v3209 = vunpack.c.l.b16 %v632
    %v3210 = vunpack.c.h.b16 %v632
    %v3211 = vunpack.c.l.b16 %v633
    %v3212 = vunpack.c.h.b16 %v633
    %v3213 = vunpack.c.l.b16 %v634
    %v3214 = vunpack.c.h.b16 %v634
    %v3215 = vunpack.c.l.b16 %v635
    %v3216 = vunpack.c.h.b16 %v635
    %v3217 = vunpack.c.l.b16 %v636
    %v3218 = vunpack.c.h.b16 %v636
    %v3219 = vunpack.c.l.b16 %v637
    %v3220 = vunpack.c.h.b16 %v637
    %v3221 = vunpack.c.l.b16 %v638
    %v3222 = vunpack.c.h.b16 %v638
    %v3223 = vunpack.c.l.b16 %v639
    %v3224 = vunpack.c.h.b16 %v639
    %v3225 = vunpack.c.l.b16 %v640
    %v3226 = vunpack.c.h.b16 %v640
    %v3227 = vunpack.c.l.b16 %v641
    %v3228 = vunpack.c.h.b16 %v641
    %v3229 = vunpack.c.l.b16 %v642
    %v3230 = vunpack.c.h.b16 %v642
    %v3231 = vunpack.c.l.b16 %v643
    %v3232 = vunpack.c.h.b16 %v643
    %v3233 = vunpack.c.l.b16 %v644
    %v3234 = vunpack.c.h.b16 %v644
    %v3235 = vunpack.c.l.b16 %v645
    %v3236 = vunpack.c.h.b16 %v645
    %v3237 = vunpack.c.l.b16 %v646
    %v3238 = vunpack.c.h.b16 %v646
    %v3239 = vunpack.c.l.b16 %v647
    %v3240 = vunpack.c.h.b16 %v647
    %v3241 = vunpack.c.l.b16 %v648
    %v3242 = vunpack.c.h.b16 %v648
    %v3243 = vunpack.c.l.b16 %v649
    %v3244 = vunpack.c.h.b16 %v649
    %v3245 = vunpack.c.l.b16 %v650
    %v3246 = vunpack.c.h.b16 %v650
    %v3247 = vunpack.c.l.b16 %v651
    %v3248 = vunpack.c.h.b16 %v651
    %v3249 = vunpack.c.l.b16 %v652
    %v3250 = vunpack.c.h.b16 %v652
    %v3251 = vunpack.c.l.b16 %v653
    %v3252 = vunpack.c.h.b16 %v653
    %v3253 = vunpack.c.l.b16 %v654
    %v3254 = vunpack.c.h.b16 %v654
    %v3255 = vunpack.c.l.b16 %v655
    %v3256 = vunpack.c.h.b16 %v655
    %v3257 = vunpack.c.l.b16 %v656
    %v3258 = vunpack.c.h.b16 %v656
    %v3259 = vunpack.c.l.b16 %v657
    %v3260 = vunpack.c.h.b16 %v657
    %v3261 = vunpack.c.l.b16 %v658
    %v3262 = vunpack.c.h.b16 %v658
    %v3263 = vunpack.c.l.b16 %v659
    %v3264 = vunpack.c.h.b16 %v659
    %v3265 = vunpack.c.l.b16 %v660
    %v3266 = vunpack.c.h.b16 %v660
    %v3267 = vunpack.c.l.b16 %v661
    %v3268 = vunpack.c.h.b16 %v661
    %v3269 = vunpack.c.l.b16 %v662
    %v3270 = vunpack.c.h.b16 %v662
    %v3271 = vunpack.c.l.b16 %v663
    %v3272 = vunpack.c.h.b16 %v663
    %v3273 = vunpack.c.l.b16 %v664
    %v3274 = vunpack.c.h.b16 %v664
    %v3275 = vunpack.c.l.b16 %v665
    %v3276 = vunpack.c.h.b16 %v665
    %v3277 = vunpack.c.l.b16 %v666
    %v3278 = vunpack.c.h.b16 %v666
    %v3279 = vunpack.c.l.b16 %v667
    %v3280 = vunpack.c.h.b16 %v667
    %v3281 = vunpack.c.l.b16 %v668
    %v3282 = vunpack.c.h.b16 %v668
    %v3283 = vunpack.c.l.b16 %v669
    %v3284 = vunpack.c.h.b16 %v669
    %v3285 = vunpack.c.l.b16 %v670
    %v3286 = vunpack.c.h.b16 %v670
    %v3287 = vunpack.c.l.b16 %v671
    %v3288 = vunpack.c.h.b16 %v671
    %v3289 = vunpack.c.l.b16 %v672
    %v3290 = vunpack.c.h.b16 %v672
    %v3291 = vunpack.c.l.b16 %v673
    %v3292 = vunpack.c.h.b16 %v673
    %v3293 = vunpack.c.l.b16 %v674
    %v3294 = vunpack.c.h.b16 %v674
    %v3295 = vunpack.c.l.b16 %v675
    %v3296 = vunpack.c.h.b16 %v675
    %v3297 = vunpack.c.l.b16 %v676
    %v3298 = vunpack.c.h.b16 %v676
    %v3299 = vunpack.c.l.b16 %v677
    %v3300 = vunpack.c.h.b16 %v677
    %v3301 = vunpack.c.l.b16 %v678
    %v3302 = vunpack.c.h.b16 %v678
    %v3303 = vunpack.c.l.b16 %v679
    %v3304 = vunpack.c.h.b16 %v679
    %v3305 = vunpack.c.l.b16 %v680
    %v3306 = vunpack.c.h.b16 %v680
    %v3307 = vunpack.c.l.b16 %v681
    %v3308 = vunpack.c.h.b16 %v681
    %v3309 = vunpack.c.l.b16 %v682
    %v3310 = vunpack.c.h.b16 %v682
    %v3311 = vunpack.c.l.b16 %v683
    %v3312 = vunpack.c.h.b16 %v683
    %v3313 = vunpack.c.l.b16 %v684
    %v3314 = vunpack.c.h.b16 %v684
    %v3315 = vunpack.c.l.b16 %v685
    %v3316 = vunpack.c.h.b16 %v685
    %v3317 = vunpack.c.l.b16 %v686
    %v3318 = vunpack.c.h.b16 %v686
    %v3319 = vunpack.c.l.b16 %v687
    %v3320 = vunpack.c.h.b16 %v687
    %v3321 = vunpack.c.l.b16 %v688
    %v3322 = vunpack.c.h.b16 %v688
    %v3323 = vunpack.c.l.b16 %v689
    %v3324 = vunpack.c.h.b16 %v689
    %v3325 = vunpack.c.l.b16 %v690
    %v3326 = vunpack.c.h.b16 %v690
    %v3327 = vunpack.c.l.b16 %v691
    %v3328 = vunpack.c.h.b16 %v691
    %v3329 = vunpack.c.l.b16 %v692
    %v3330 = vunpack.c.h.b16 %v692
    %v3331 = vunpack.c.l.b16 %v693
    %v3332 = vunpack.c.h.b16 %v693
    %v3333 = vunpack.c.l.b16 %v694
    %v3334 = vunpack.c.h.b16 %v694
    %v3335 = vunpack.c.l.b16 %v695
    %v3336 = vunpack.c.h.b16 %v695
    %v3337 = vunpack.c.l.b16 %v696
    %v3338 = vunpack.c.h.b16 %v696
    %v3339 = vunpack.c.l.b16 %v697
    %v3340 = vunpack.c.h.b16 %v697
    %v3341 = vunpack.c.l.b16 %v698
    %v3342 = vunpack.c.h.b16 %v698
    %v3343 = vunpack.c.l.b16 %v699
    %v3344 = vunpack.c.h.b16 %v699
    %v3345 = vunpack.c.l.b16 %v700
    %v3346 = vunpack.c.h.b16 %v700
    %v3347 = vunpack.c.l.b16 %v701
    %v3348 = vunpack.c.h.b16 %v701
    %v3349 = vunpack.c.l.b16 %v702
    %v3350 = vunpack.c.h.b16 %v702
    %v3351 = vunpack.c.l.b16 %v703
    %v3352 = vunpack.c.h.b16 %v703
    %v3353 = vunpack.c.l.b16 %v704
    %v3354 = vunpack.c.h.b16 %v704
    %v3355 = vunpack.c.l.b16 %v705
    %v3356 = vunpack.c.h.b16 %v705
    %v3357 = vunpack.c.l.b16 %v706
    %v3358 = vunpack.c.h.b16 %v706
    %v3359 = vunpack.c.l.b16 %v707
    %v3360 = vunpack.c.h.b16 %v707
    %v3361 = vunpack.c.l.b16 %v708
    %v3362 = vunpack.c.h.b16 %v708
    %v3363 = vunpack.c.l.b16 %v709
    %v3364 = vunpack.c.h.b16 %v709
    %v3365 = vunpack.c.l.b16 %v710
    %v3366 = vunpack.c.h.b16 %v710
    %v3367 = vunpack.c.l.b16 %v711
    %v3368 = vunpack.c.h.b16 %v711
    %v3369 = vunpack.c.l.b16 %v712
    %v3370 = vunpack.c.h.b16 %v712
    %v3371 = vunpack.c.l.b16 %v713
    %v3372 = vunpack.c.h.b16 %v713
    %v3373 = vunpack.c.l.b16 %v714
    %v3374 = vunpack.c.h.b16 %v714
    %v3375 = vunpack.c.l.b16 %v715
    %v3376 = vunpack.c.h.b16 %v715
    %v3377 = vunpack.c.l.b16 %v716
    %v3378 = vunpack.c.h.b16 %v716
    %v3379 = vunpack.c.l.b16 %v717
    %v3380 = vunpack.c.h.b16 %v717
    %v3381 = vunpack.c.l.b16 %v718
    %v3382 = vunpack.c.h.b16 %v718
    %v3383 = vunpack.c.l.b16 %v719
    %v3384 = vunpack.c.h.b16 %v719
    %v3385 = vunpack.c.l.b16 %v720
    %v3386 = vunpack.c.h.b16 %v720
    %v3387 = vunpack.c.l.b16 %v721
    %v3388 = vunpack.c.h.b16 %v721
    %v3389 = vunpack.c.l.b16 %v722
    %v3390 = vunpack.c.h.b16 %v722
    %v3391 = vunpack.c.l.b16 %v723
    %v3392 = vunpack.c.h.b16 %v723
    %v3393 = vunpack.c.l.b16 %v724
    %v3394 = vunpack.c.h.b16 %v724
    %v3395 = vunpack.c.l.b16 %v725
    %v3396 = vunpack.c.h.b16 %v725
    %v3397 = vunpack.c.l.b16 %v726
    %v3398 = vunpack.c.h.b16 %v726
    %v3399 = vunpack.c.l.b16 %v727
    %v3400 = vunpack.c.h.b16 %v727
    %v3401 = vunpack.c.l.b16 %v728
    %v3402 = vunpack.c.h.b16 %v728
    %v3403 = vunpack.c.l.b16 %v729
    %v3404 = vunpack.c.h.b16 %v729
    %v3405 = vunpack.c.l.b16 %v730
    %v3406 = vunpack.c.h.b16 %v730
    %v3407 = vunpack.c.l.b16 %v731
    %v3408 = vunpack.c.h.b16 %v731
    %v3409 = vunpack.c.l.b16 %v732
    %v3410 = vunpack.c.h.b16 %v732
    %v3411 = vunpack.c.l.b16 %v733
    %v3412 = vunpack.c.h.b16 %v733
    %v3413 = vunpack.c.l.b16 %v734
    %v3414 = vunpack.c.h.b16 %v734
    %v3415 = vunpack.c.l.b16 %v735
    %v3416 = vunpack.c.h.b16 %v735
    %v3417 = vunpack.c.l.b16 %v736
    %v3418 = vunpack.c.h.b16 %v736
    %v3419 = vunpack.c.l.b16 %v737
    %v3420 = vunpack.c.h.b16 %v737
    %v3421 = vunpack.c.l.b16 %v738
    %v3422 = vunpack.c.h.b16 %v738
    %v3423 = vunpack.c.l.b16 %v739
    %v3424 = vunpack.c.h.b16 %v739
    %v3425 = vunpack.c.l.b16 %v740
    %v3426 = vunpack.c.h.b16 %v740
    %v3427 = vunpack.c.l.b16 %v741
    %v3428 = vunpack.c.h.b16 %v741
    %v3429 = vunpack.c.l.b16 %v742
    %v3430 = vunpack.c.h.b16 %v742
    %v3431 = vunpack.c.l.b16 %v743
    %v3432 = vunpack.c.h.b16 %v743
    %v3433 = vunpack.c.l.b16 %v744
    %v3434 = vunpack.c.h.b16 %v744
    %v3435 = vunpack.c.l.b16 %v745
    %v3436 = vunpack.c.h.b16 %v745
    %v3437 = vunpack.c.l.b16 %v746
    %v3438 = vunpack.c.h.b16 %v746
    %v3439 = vunpack.c.l.b16 %v747
    %v3440 = vunpack.c.h.b16 %v747
    %v3441 = vunpack.c.l.b16 %v748
    %v3442 = vunpack.c.h.b16 %v748
    %v3443 = vunpack.c.l.b16 %v749
    %v3444 = vunpack.c.h.b16 %v749
    %v3445 = vunpack.c.l.b16 %v750
    %v3446 = vunpack.c.h.b16 %v750
    %v3447 = vunpack.c.l.b16 %v751
    %v3448 = vunpack.c.h.b16 %v751
    %v3449 = vunpack.c.l.b16 %v752
    %v3450 = vunpack.c.h.b16 %v752
    %v3451 = vunpack.c.l.b16 %v753
    %v3452 = vunpack.c.h.b16 %v753
    %v3453 = vunpack.c.l.b16 %v754
    %v3454 = vunpack.c.h.b16 %v754
    %v3455 = vunpack.c.l.b16 %v755
    %v3456 = vunpack.c.h.b16 %v755
    %v3457 = vunpack.c.l.b16 %v756
    %v3458 = vunpack.c.h.b16 %v756
    %v3459 = vunpack.c.l.b16 %v757
    %v3460 = vunpack.c.h.b16 %v757
    %v3461 = vunpack.c.l.b16 %v758
    %v3462 = vunpack.c.h.b16 %v758
    %v3463 = vunpack.c.l.b16 %v759
    %v3464 = vunpack.c.h.b16 %v759
    %v3465 = vunpack.c.l.b16 %v760
    %v3466 = vunpack.c.h.b16 %v760
    %v3467 = vunpack.c.l.b16 %v761
    %v3468 = vunpack.c.h.b16 %v761
    %v3469 = vunpack.c.l.b16 %v762
    %v3470 = vunpack.c.h.b16 %v762
    %v3471 = vunpack.c.l.b16 %v763
    %v3472 = vunpack.c.h.b16 %v763
    %v3473 = vunpack.c.l.b16 %v764
    %v3474 = vunpack.c.h.b16 %v764
    %v3475 = vunpack.c.l.b16 %v765
    %v3476 = vunpack.c.h.b16 %v765
    %v3477 = vunpack.c.l.b16 %v766
    %v3478 = vunpack.c.h.b16 %v766
    %v3479 = vunpack.c.l.b16 %v767
    %v3480 = vunpack.c.h.b16 %v767
    %v3481 = vunpack.c.l.b16 %v768
    %v3482 = vunpack.c.h.b16 %v768
    %v3483 = vunpack.c.l.b16 %v769
    %v3484 = vunpack.c.h.b16 %v769
    %v3485 = vunpack.c.l.b16 %v770
    %v3486 = vunpack.c.h.b16 %v770
    %v3487 = vunpack.c.l.b16 %v771
    %v3488 = vunpack.c.h.b16 %v771
    %v3489 = vunpack.c.l.b16 %v772
    %v3490 = vunpack.c.h.b16 %v772
    %v3491 = vunpack.c.l.b16 %v773
    %v3492 = vunpack.c.h.b16 %v773
    %v3493 = vunpack.c.l.b16 %v774
    %v3494 = vunpack.c.h.b16 %v774
    %v3495 = vunpack.c.l.b16 %v775
    %v3496 = vunpack.c.h.b16 %v775
    %v3497 = vunpack.c.l.b16 %v776
    %v3498 = vunpack.c.h.b16 %v776
    %v3499 = vunpack.c.l.b16 %v777
    %v3500 = vunpack.c.h.b16 %v777
    %v3501 = vunpack.c.l.b16 %v778
    %v3502 = vunpack.c.h.b16 %v778
    %v3503 = vunpack.c.l.b16 %v779
    %v3504 = vunpack.c.h.b16 %v779
    %v3505 = vunpack.c.l.b16 %v780
    %v3506 = vunpack.c.h.b16 %v780
    %v3507 = vunpack.c.l.b16 %v781
    %v3508 = vunpack.c.h.b16 %v781
    %v3509 = vunpack.c.l.b16 %v782
    %v3510 = vunpack.c.h.b16 %v782
    %v3511 = vunpack.c.l.b16 %v783
    %v3512 = vunpack.c.h.b16 %v783
    %v3513 = vunpack.c.l.b16 %v784
    %v3514 = vunpack.c.h.b16 %v784
    %v3515 = vunpack.c.l.b16 %v785
    %v3516 = vunpack.c.h.b16 %v785
    %v3517 = vunpack.c.l.b16 %v786
    %v3518 = vunpack.c.h.b16 %v786
    %v3519 = vunpack.c.l.b16 %v787
    %v3520 = vunpack.c.h.b16 %v787
    %v3521 = vunpack.c.l.b16 %v788
    %v3522 = vunpack.c.h.b16 %v788
    %v3523 = vunpack.c.l.b16 %v789
    %v3524 = vunpack.c.h.b16 %v789
    %v3525 = vunpack.c.l.b16 %v790
    %v3526 = vunpack.c.h.b16 %v790
    %v3527 = vunpack.c.l.b16 %v791
    %v3528 = vunpack.c.h.b16 %v791
    %v3529 = vunpack.c.l.b16 %v792
    %v3530 = vunpack.c.h.b16 %v792
    %v3531 = vunpack.c.l.b16 %v793
    %v3532 = vunpack.c.h.b16 %v793
    %v3533 = vunpack.c.l.b16 %v794
    %v3534 = vunpack.c.h.b16 %v794
    %v3535 = vunpack.c.l.b16 %v795
    %v3536 = vunpack.c.h.b16 %v795
    %v3537 = vunpack.c.l.b16 %v796
    %v3538 = vunpack.c.h.b16 %v796
    %v3539 = vunpack.c.l.b16 %v797
    %v3540 = vunpack.c.h.b16 %v797
    %v3541 = vunpack.c.l.b16 %v798
    %v3542 = vunpack.c.h.b16 %v798
    %v3543 = vunpack.c.l.b16 %v799
    %v3544 = vunpack.c.h.b16 %v799
    %v3545 = vunpack.c.l.b16 %v800
    %v3546 = vunpack.c.h.b16 %v800
    %v3547 = vunpack.c.l.b16 %v801
    %v3548 = vunpack.c.h.b16 %v801
    %v3549 = vunpack.c.l.b16 %v802
    %v3550 = vunpack.c.h.b16 %v802
    %v3551 = vunpack.c.l.b16 %v803
    %v3552 = vunpack.c.h.b16 %v803
    %v3553 = vunpack.c.l.b16 %v804
    %v3554 = vunpack.c.h.b16 %v804
    %v3555 = vunpack.c.l.b16 %v805
    %v3556 = vunpack.c.h.b16 %v805
    %v3557 = vunpack.c.l.b16 %v806
    %v3558 = vunpack.c.h.b16 %v806
    %v3559 = vunpack.c.l.b16 %v807
    %v3560 = vunpack.c.h.b16 %v807
    %v3561 = vunpack.c.l.b16 %v808
    %v3562 = vunpack.c.h.b16 %v808
    %v3563 = vunpack.c.l.b16 %v809
    %v3564 = vunpack.c.h.b16 %v809
    %v3565 = vunpack.c.l.b16 %v810
    %v3566 = vunpack.c.h.b16 %v810
    %v3567 = vunpack.c.l.b16 %v811
    %v3568 = vunpack.c.h.b16 %v811
    %v3569 = vunpack.c.l.b16 %v812
    %v3570 = vunpack.c.h.b16 %v812
    %v3571 = vunpack.c.l.b16 %v813
    %v3572 = vunpack.c.h.b16 %v813
    %v3573 = vunpack.c.l.b16 %v814
    %v3574 = vunpack.c.h.b16 %v814
    %v3575 = vunpack.c.l.b16 %v815
    %v3576 = vunpack.c.h.b16 %v815
    %v3577 = vunpack.c.l.b16 %v816
    %v3578 = vunpack.c.h.b16 %v816
    %v3579 = vunpack.c.l.b16 %v817
    %v3580 = vunpack.c.h.b16 %v817
    %v3581 = vunpack.c.l.b16 %v818
    %v3582 = vunpack.c.h.b16 %v818
    %v3583 = vunpack.c.l.b16 %v819
    %v3584 = vunpack.c.h.b16 %v819
    %v3585 = vunpack.c.l.b16 %v820
    %v3586 = vunpack.c.h.b16 %v820
    %v3587 = vunpack.c.l.b16 %v821
    %v3588 = vunpack.c.h.b16 %v821
    %v3589 = vunpack.c.l.b16 %v822
    %v3590 = vunpack.c.h.b16 %v822
    %v3591 = vunpack.c.l.b16 %v823
    %v3592 = vunpack.c.h.b16 %v823
    %v3593 = vunpack.c.l.b16 %v824
    %v3594 = vunpack.c.h.b16 %v824
    %v3595 = vunpack.c.l.b16 %v825
    %v3596 = vunpack.c.h.b16 %v825
    %v3597 = vunpack.c.l.b16 %v826
    %v3598 = vunpack.c.h.b16 %v826
    %v3599 = vunpack.c.l.b16 %v827
    %v3600 = vunpack.c.h.b16 %v827
    %v3601 = vunpack.c.l.b16 %v828
    %v3602 = vunpack.c.h.b16 %v828
    %v3603 = vunpack.c.l.b16 %v829
    %v3604 = vunpack.c.h.b16 %v829
    %v3605 = vunpack.c.l.b16 %v830
    %v3606 = vunpack.c.h.b16 %v830
    %v3607 = vunpack.c.l.b16 %v831
    %v3608 = vunpack.c.h.b16 %v831
    %v3609 = vunpack.c.l.b16 %v832
    %v3610 = vunpack.c.h.b16 %v832
    %v3611 = vunpack.c.l.b16 %v833
    %v3612 = vunpack.c.h.b16 %v833
    %v3613 = vunpack.c.l.b16 %v834
    %v3614 = vunpack.c.h.b16 %v834
    %v3615 = vunpack.c.l.b16 %v835
    %v3616 = vunpack.c.h.b16 %v835
    %v3617 = vunpack.c.l.b16 %v836
    %v3618 = vunpack.c.h.b16 %v836
    %v3619 = vunpack.c.l.b16 %v837
    %v3620 = vunpack.c.h.b16 %v837
    %v3621 = vunpack.c.l.b16 %v838
    %v3622 = vunpack.c.h.b16 %v838
    %v3623 = vunpack.c.l.b16 %v839
    %v3624 = vunpack.c.h.b16 %v839
    %v3625 = vunpack.c.l.b16 %v840
    %v3626 = vunpack.c.h.b16 %v840
    %v3627 = vunpack.c.l.b16 %v841
    %v3628 = vunpack.c.h.b16 %v841
    %v3629 = vunpack.c.l.b16 %v842
    %v3630 = vunpack.c.h.b16 %v842
    %v3631 = vunpack.c.l.b16 %v843
    %v3632 = vunpack.c.h.b16 %v843
    %v3633 = vunpack.c.l.b16 %v844
    %v3634 = vunpack.c.h.b16 %v844
    %v3635 = vunpack.c.l.b16 %v845
    %v3636 = vunpack.c.h.b16 %v845
    %v3637 = vunpack.c.l.b16 %v846
    %v3638 = vunpack.c.h.b16 %v846
    %v3639 = vunpack.c.l.b16 %v847
    %v3640 = vunpack.c.h.b16 %v847
    %v3641 = vunpack.c.l.b16 %v848
    %v3642 = vunpack.c.h.b16 %v848
    %v3643 = vunpack.c.l.b16 %v849
    %v3644 = vunpack.c.h.b16 %v849
    %v3645 = vunpack.c.l.b16 %v850
    %v3646 = vunpack.c.h.b16 %v850
    %v3647 = vunpack.c.l.b16 %v851
    %v3648 = vunpack.c.h.b16 %v851
    %v3649 = vunpack.c.l.b16 %v852
    %v3650 = vunpack.c.h.b16 %v852
    %v3651 = vunpack.c.l.b16 %v853
    %v3652 = vunpack.c.h.b16 %v853
    %v3653 = vunpack.c.l.b16 %v854
    %v3654 = vunpack.c.h.b16 %v854
    %v3655 = vunpack.c.l.b16 %v855
    %v3656 = vunpack.c.h.b16 %v855
    %v3657 = vunpack.c.l.b16 %v856
    %v3658 = vunpack.c.h.b16 %v856
    %v3659 = vunpack.c.l.b16 %v857
    %v3660 = vunpack.c.h.b16 %v857
    %v3661 = vunpack.c.l.b16 %v858
    %v3662 = vunpack.c.h.b16 %v858
    %v3663 = vunpack.c.l.b16 %v859
    %v3664 = vunpack.c.h.b16 %v859
    %v3665 = vunpack.c.l.b16 %v860
    %v3666 = vunpack.c.h.b16 %v860
    %v3667 = vunpack.c.l.b16 %v861
    %v3668 = vunpack.c.h.b16 %v861
    %v3669 = vunpack.c.l.b16 %v862
    %v3670 = vunpack.c.h.b16 %v862
    %v3671 = vunpack.c.l.b16 %v863
    %v3672 = vunpack.c.h.b16 %v863
    %v3673 = vunpack.c.l.b16 %v864
    %v3674 = vunpack.c.h.b16 %v864
    %v3675 = vunpack.c.l.b16 %v865
    %v3676 = vunpack.c.h.b16 %v865
    %v3677 = vunpack.c.l.b16 %v866
    %v3678 = vunpack.c.h.b16 %v866
    %v3679 = vunpack.c.l.b16 %v867
    %v3680 = vunpack.c.h.b16 %v867
    %v3681 = vunpack.c.l.b16 %v868
    %v3682 = vunpack.c.h.b16 %v868
    %v3683 = vunpack.c.l.b16 %v869
    %v3684 = vunpack.c.h.b16 %v869
    %v3685 = vunpack.c.l.b16 %v870
    %v3686 = vunpack.c.h.b16 %v870
    %v3687 = vunpack.c.l.b16 %v871
    %v3688 = vunpack.c.h.b16 %v871
    %v3689 = vunpack.c.l.b16 %v872
    %v3690 = vunpack.c.h.b16 %v872
    %v3691 = vunpack.c.l.b16 %v873
    %v3692 = vunpack.c.h.b16 %v873
    %v3693 = vunpack.c.l.b16 %v874
    %v3694 = vunpack.c.h.b16 %v874
    %v3695 = vunpack.c.l.b16 %v875
    %v3696 = vunpack.c.h.b16 %v875
    %v3697 = vunpack.c.l.b16 %v876
    %v3698 = vunpack.c.h.b16 %v876
    %v3699 = vunpack.c.l.b16 %v877
    %v3700 = vunpack.c.h.b16 %v877
    %v3701 = vunpack.c.l.b16 %v878
    %v3702 = vunpack.c.h.b16 %v878
    %v3703 = vunpack.c.l.b16 %v879
    %v3704 = vunpack.c.h.b16 %v879
    %v3705 = vunpack.c.l.b16 %v880
    %v3706 = vunpack.c.h.b16 %v880
    %v3707 = vunpack.c.l.b16 %v881
    %v3708 = vunpack.c.h.b16 %v881
    %v3709 = vunpack.c.l.b16 %v882
    %v3710 = vunpack.c.h.b16 %v882
    %v3711 = vunpack.c.l.b16 %v883
    %v3712 = vunpack.c.h.b16 %v883
    %v3713 = vunpack.c.l.b16 %v884
    %v3714 = vunpack.c.h.b16 %v884
    %v3715 = vunpack.c.l.b16 %v885
    %v3716 = vunpack.c.h.b16 %v885
    %v3717 = vunpack.c.l.b16 %v886
    %v3718 = vunpack.c.h.b16 %v886
    %v3719 = vunpack.c.l.b16 %v887
    %v3720 = vunpack.c.h.b16 %v887
    %v3721 = vunpack.c.l.b16 %v888
    %v3722 = vunpack.c.h.b16 %v888
    %v3723 = vunpack.c.l.b16 %v889
    %v3724 = vunpack.c.h.b16 %v889
    %v3725 = vunpack.c.l.b16 %v890
    %v3726 = vunpack.c.h.b16 %v890
    %v3727 = vunpack.c.l.b16 %v891
    %v3728 = vunpack.c.h.b16 %v891
    %v3729 = vunpack.c.l.b16 %v892
    %v3730 = vunpack.c.h.b16 %v892
    %v3731 = vunpack.c.l.b16 %v893
    %v3732 = vunpack.c.h.b16 %v893
    %v3733 = vunpack.c.l.b16 %v894
    %v3734 = vunpack.c.h.b16 %v894
    %v3735 = vunpack.c.l.b16 %v895
    %v3736 = vunpack.c.h.b16 %v895
    %v3737 = vunpack.c.l.b16 %v896
    %v3738 = vunpack.c.h.b16 %v896
    %v3739 = vunpack.c.l.b16 %v897
    %v3740 = vunpack.c.h.b16 %v897
    %v3741 = vunpack.c.l.b16 %v898
    %v3742 = vunpack.c.h.b16 %v898
    %v3743 = vunpack.c.l.b16 %v899
    %v3744 = vunpack.c.h.b16 %v899
    %v3745 = vunpack.c.l.b16 %v900
    %v3746 = vunpack.c.h.b16 %v900
    %v3747 = vunpack.c.l.b16 %v901
    %v3748 = vunpack.c.h.b16 %v901
    %v3749 = vunpack.c.l.b16 %v902
    %v3750 = vunpack.c.h.b16 %v902
    %v3751 = vunpack.c.l.b16 %v903
    %v3752 = vunpack.c.h.b16 %v903
    %v3753 = vunpack.c.l.b16 %v904
    %v3754 = vunpack.c.h.b16 %v904
    %v3755 = vunpack.c.l.b16 %v905
    %v3756 = vunpack.c.h.b16 %v905
    %v3757 = vunpack.c.l.b16 %v906
    %v3758 = vunpack.c.h.b16 %v906
    %v3759 = vunpack.c.l.b16 %v907
    %v3760 = vunpack.c.h.b16 %v907
    %v3761 = vunpack.c.l.b16 %v908
    %v3762 = vunpack.c.h.b16 %v908
    %v3763 = vunpack.c.l.b16 %v909
    %v3764 = vunpack.c.h.b16 %v909
    %v3765 = vunpack.c.l.b16 %v910
    %v3766 = vunpack.c.h.b16 %v910
    %v3767 = vunpack.c.l.b16 %v911
    %v3768 = vunpack.c.h.b16 %v911
    %v3769 = vunpack.c.l.b16 %v912
    %v3770 = vunpack.c.h.b16 %v912
    %v3771 = vunpack.c.l.b16 %v913
    %v3772 = vunpack.c.h.b16 %v913
    %v3773 = vunpack.c.l.b16 %v914
    %v3774 = vunpack.c.h.b16 %v914
    %v3775 = vunpack.c.l.b16 %v915
    %v3776 = vunpack.c.h.b16 %v915
    %v3777 = vunpack.c.l.b16 %v916
    %v3778 = vunpack.c.h.b16 %v916
    %v3779 = vunpack.c.l.b16 %v917
    %v3780 = vunpack.c.h.b16 %v917
    %v3781 = vunpack.c.l.b16 %v918
    %v3782 = vunpack.c.h.b16 %v918
    %v3783 = vunpack.c.l.b16 %v919
    %v3784 = vunpack.c.h.b16 %v919
    %v3785 = vunpack.c.l.b16 %v920
    %v3786 = vunpack.c.h.b16 %v920
    %v3787 = vunpack.c.l.b16 %v921
    %v3788 = vunpack.c.h.b16 %v921
    %v3789 = vunpack.c.l.b16 %v922
    %v3790 = vunpack.c.h.b16 %v922
    %v3791 = vunpack.c.l.b16 %v923
    %v3792 = vunpack.c.h.b16 %v923
    %v3793 = vunpack.c.l.b16 %v924
    %v3794 = vunpack.c.h.b16 %v924
    %v3795 = vunpack.c.l.b16 %v925
    %v3796 = vunpack.c.h.b16 %v925
    %v3797 = vunpack.c.l.b16 %v926
    %v3798 = vunpack.c.h.b16 %v926
    %v3799 = vunpack.c.l.b16 %v927
    %v3800 = vunpack.c.h.b16 %v927
    %v3801 = vunpack.c.l.b16 %v928
    %v3802 = vunpack.c.h.b16 %v928
    %v3803 = vunpack.c.l.b16 %v929
    %v3804 = vunpack.c.h.b16 %v929
    %v3805 = vunpack.c.l.b16 %v930
    %v3806 = vunpack.c.h.b16 %v930
    %v3807 = vunpack.c.l.b16 %v931
    %v3808 = vunpack.c.h.b16 %v931
    %v3809 = vunpack.c.l.b16 %v932
    %v3810 = vunpack.c.h.b16 %v932
    %v3811 = vunpack.c.l.b16 %v933
    %v3812 = vunpack.c.h.b16 %v933
    %v3813 = vunpack.c.l.b16 %v934
    %v3814 = vunpack.c.h.b16 %v934
    %v3815 = vunpack.c.l.b16 %v935
    %v3816 = vunpack.c.h.b16 %v935
    %v3817 = vunpack.c.l.b16 %v936
    %v3818 = vunpack.c.h.b16 %v936
    %v3819 = vunpack.c.l.b16 %v937
    %v3820 = vunpack.c.h.b16 %v937
    %v3821 = vunpack.c.l.b16 %v938
    %v3822 = vunpack.c.h.b16 %v938
    %v3823 = vunpack.c.l.b16 %v939
    %v3824 = vunpack.c.h.b16 %v939
    %v3825 = vunpack.c.l.b16 %v940
    %v3826 = vunpack.c.h.b16 %v940
    %v3827 = vunpack.c.l.b16 %v941
    %v3828 = vunpack.c.h.b16 %v941
    %v3829 = vunpack.c.l.b16 %v942
    %v3830 = vunpack.c.h.b16 %v942
    %v3831 = vunpack.c.l.b16 %v943
    %v3832 = vunpack.c.h.b16 %v943
    %v3833 = vunpack.c.l.b16 %v944
    %v3834 = vunpack.c.h.b16 %v944
    %v3835 = vunpack.c.l.b16 %v945
    %v3836 = vunpack.c.h.b16 %v945
    %v3837 = vunpack.c.l.b16 %v946
    %v3838 = vunpack.c.h.b16 %v946
    %v3839 = vunpack.c.l.b16 %v947
    %v3840 = vunpack.c.h.b16 %v947
    %v3841 = vunpack.c.l.b16 %v948
    %v3842 = vunpack.c.h.b16 %v948
    %v3843 = vunpack.c.l.b16 %v949
    %v3844 = vunpack.c.h.b16 %v949
    %v3845 = vunpack.c.l.b16 %v950
    %v3846 = vunpack.c.h.b16 %v950
    %v3847 = vunpack.c.l.b16 %v951
    %v3848 = vunpack.c.h.b16 %v951
    %v3849 = vunpack.c.l.b16 %v952
    %v3850 = vunpack.c.h.b16 %v952
    %v3851 = vunpack.c.l.b16 %v953
    %v3852 = vunpack.c.h.b16 %v953
    %v3853 = vunpack.c.l.b16 %v954
    %v3854 = vunpack.c.h.b16 %v954
    %v3855 = vunpack.c.l.b16 %v955
    %v3856 = vunpack.c.h.b16 %v955
    %v3857 = vunpack.c.l.b16 %v956
    %v3858 = vunpack.c.h.b16 %v956
    %v3859 = vunpack.c.l.b16 %v957
    %v3860 = vunpack.c.h.b16 %v957
    %v3861 = vunpack.c.l.b16 %v958
    %v3862 = vunpack.c.h.b16 %v958
    %v3863 = vunpack.c.l.b16 %v959
    %v3864 = vunpack.c.h.b16 %v959
    %v3865 = vunpack.c.l.b16 %v960
    %v3866 = vunpack.c.h.b16 %v960
    %v3867 = vunpack.c.l.b16 %v961
    %v3868 = vunpack.c.h.b16 %v961
    %v3869 = vunpack.c.l.b16 %v962
    %v3870 = vunpack.c.h.b16 %v962
    %v3871 = vunpack.c.l.b16 %v963
    %v3872 = vunpack.c.h.b16 %v963
    %v3873 = vunpack.c.l.b16 %v964
    %v3874 = vunpack.c.h.b16 %v964
    %v3875 = vunpack.c.l.b16 %v965
    %v3876 = vunpack.c.h.b16 %v965
    %v3877 = vunpack.c.l.b16 %v966
    %v3878 = vunpack.c.h.b16 %v966
    %v3879 = vunpack.c.l.b16 %v967
    %v3880 = vunpack.c.h.b16 %v967
    %v3881 = vunpack.c.l.b16 %v968
    %v3882 = vunpack.c.h.b16 %v968
    %v3883 = vunpack.c.l.b16 %v969
    %v3884 = vunpack.c.h.b16 %v969
    %v3885 = vunpack.c.l.b16 %v970
    %v3886 = vunpack.c.h.b16 %v970
    %v3887 = vunpack.c.l.b16 %v971
    %v3888 = vunpack.c.h.b16 %v971
    %v3889 = vunpack.c.l.b16 %v972
    %v3890 = vunpack.c.h.b16 %v972
    %v3891 = vunpack.c.l.b16 %v973
    %v3892 = vunpack.c.h.b16 %v973
    %v3893 = vpack.c.b16 %v2877, %v2869
    %v3894 = vpack.c.b16 %v2878, %v2870
    %v3895 = vpack.c.b16 %v2879, %v2871
    %v3896 = vpack.c.b16 %v2880, %v2872
    %v3897 = vpack.c.b16 %v2881, %v2873
    %v3898 = vpack.c.b16 %v2882, %v2874
    %v3899 = vpack.c.b16 %v2883, %v2875
    %v3900 = vpack.c.b16 %v2884, %v2876
    %v3901 = vpack.c.b16 %v2893, %v2885
    %v3902 = vpack.c.b16 %v2894, %v2886
    %v3903 = vpack.c.b16 %v2895, %v2887
    %v3904 = vpack.c.b16 %v2896, %v2888
    %v3905 = vpack.c.b16 %v2897, %v2889
    %v3906 = vpack.c.b16 %v2898, %v2890
    %v3907 = vpack.c.b16 %v2899, %v2891
    %v3908 = vpack.c.b16 %v2900, %v2892
    %v3909 = vpack.c.b16 %v2909, %v2901
    %v3910 = vpack.c.b16 %v2910, %v2902
    %v3911 = vpack.c.b16 %v2911, %v2903
    %v3912 = vpack.c.b16 %v2912, %v2904
    %v3913 = vpack.c.b16 %v2913, %v2905
    %v3914 = vpack.c.b16 %v2914, %v2906
    %v3915 = vpack.c.b16 %v2915, %v2907
    %v3916 = vpack.c.b16 %v2916, %v2908
    %v3917 = vpack.c.b16 %v2925, %v2917
    %v3918 = vpack.c.b16 %v2926, %v2918
    %v3919 = vpack.c.b16 %v2927, %v2919
    %v3920 = vpack.c.b16 %v2928, %v2920
    %v3921 = vpack.c.b16 %v2929, %v2921
    %v3922 = vpack.c.b16 %v2930, %v2922
    %v3923 = vpack.c.b16 %v2931, %v2923
    %v3924 = vpack.c.b16 %v2932, %v2924
    %v3925 = vpack.c.b16 %v2941, %v2933
    %v3926 = vpack.c.b16 %v2942, %v2934
    %v3927 = vpack.c.b16 %v2943, %v2935
    %v3928 = vpack.c.b16 %v2944, %v2936
    %v3929 = vpack.c.b16 %v2945, %v2937
    %v3930 = vpack.c.b16 %v2946, %v2938
    %v3931 = vpack.c.b16 %v2947, %v2939
    %v3932 = vpack.c.b16 %v2948, %v2940
    %v3933 = vpack.c.b16 %v2957, %v2949
    %v3934 = vpack.c.b16 %v2958, %v2950
    %v3935 = vpack.c.b16 %v2959, %v2951
    %v3936 = vpack.c.b16 %v2960, %v2952
    %v3937 = vpack.c.b16 %v2961, %v2953
    %v3938 = vpack.c.b16 %v2962, %v2954
    %v3939 = vpack.c.b16 %v2963, %v2955
    %v3940 = vpack.c.b16 %v2964, %v2956
    %v3941 = vpack.c.b16 %v2973, %v2965
    %v3942 = vpack.c.b16 %v2974, %v2966
    %v3943 = vpack.c.b16 %v2975, %v2967
    %v3944 = vpack.c.b16 %v2976, %v2968
    %v3945 = vpack.c.b16 %v2977, %v2969
    %v3946 = vpack.c.b16 %v2978, %v2970
    %v3947 = vpack.c.b16 %v2979, %v2971
    %v3948 = vpack.c.b16 %v2980, %v2972
    %v3949 = vpack.c.b16 %v2989, %v2981
    %v3950 = vpack.c.b16 %v2990, %v2982
    %v3951 = vpack.c.b16 %v2991, %v2983
    %v3952 = vpack.c.b16 %v2992, %v2984
    %v3953 = vpack.c.b16 %v2993, %v2985
    %v3954 = vpack.c.b16 %v2994, %v2986
    %v3955 = vpack.c.b16 %v2995, %v2987
    %v3956 = vpack.c.b16 %v2996, %v2988
    %v3957 = vpack.c.b16 %v3005, %v2997
    %v3958 = vpack.c.b16 %v3006, %v2998
    %v3959 = vpack.c.b16 %v3007, %v2999
    %v3960 = vpack.c.b16 %v3008, %v3000
    %v3961 = vpack.c.b16 %v3009, %v3001
    %v3962 = vpack.c.b16 %v3010, %v3002
    %v3963 = vpack.c.b16 %v3011, %v3003
    %v3964 = vpack.c.b16 %v3012, %v3004
    %v3965 = vpack.c.b16 %v3021, %v3013
    %v3966 = vpack.c.b16 %v3022, %v3014
    %v3967 = vpack.c.b16 %v3023, %v3015
    %v3968 = vpack.c.b16 %v3024, %v3016
    %v3969 = vpack.c.b16 %v3025, %v3017
    %v3970 = vpack.c.b16 %v3026, %v3018
    %v3971 = vpack.c.b16 %v3027, %v3019
    %v3972 = vpack.c.b16 %v3028, %v3020
    %v3973 = vpack.c.b16 %v3037, %v3029
    %v3974 = vpack.c.b16 %v3038, %v3030
    %v3975 = vpack.c.b16 %v3039, %v3031
    %v3976 = vpack.c.b16 %v3040, %v3032
    %v3977 = vpack.c.b16 %v3041, %v3033
    %v3978 = vpack.c.b16 %v3042, %v3034
    %v3979 = vpack.c.b16 %v3043, %v3035
    %v3980 = vpack.c.b16 %v3044, %v3036
    %v3981 = vpack.c.b16 %v3053, %v3045
    %v3982 = vpack.c.b16 %v3054, %v3046
    %v3983 = vpack.c.b16 %v3055, %v3047
    %v3984 = vpack.c.b16 %v3056, %v3048
    %v3985 = vpack.c.b16 %v3057, %v3049
    %v3986 = vpack.c.b16 %v3058, %v3050
    %v3987 = vpack.c.b16 %v3059, %v3051
    %v3988 = vpack.c.b16 %v3060, %v3052
    %v3989 = vpack.c.b16 %v3069, %v3061
    %v3990 = vpack.c.b16 %v3070, %v3062
    %v3991 = vpack.c.b16 %v3071, %v3063
    %v3992 = vpack.c.b16 %v3072, %v3064
    %v3993 = vpack.c.b16 %v3073, %v3065
    %v3994 = vpack.c.b16 %v3074, %v3066
    %v3995 = vpack.c.b16 %v3075, %v3067
    %v3996 = vpack.c.b16 %v3076, %v3068
    %v3997 = vpack.c.b16 %v3085, %v3077
    %v3998 = vpack.c.b16 %v3086, %v3078
    %v3999 = vpack.c.b16 %v3087, %v3079
    %v4000 = vpack.c.b16 %v3088, %v3080
    %v4001 = vpack.c.b16 %v3089, %v3081
    %v4002 = vpack.c.b16 %v3090, %v3082
    %v4003 = vpack.c.b16 %v3091, %v3083
    %v4004 = vpack.c.b16 %v3092, %v3084
    %v4005 = vpack.c.b16 %v3101, %v3093
    %v4006 = vpack.c.b16 %v3102, %v3094
    %v4007 = vpack.c.b16 %v3103, %v3095
    %v4008 = vpack.c.b16 %v3104, %v3096
    %v4009 = vpack.c.b16 %v3105, %v3097
    %v4010 = vpack.c.b16 %v3106, %v3098
    %v4011 = vpack.c.b16 %v3107, %v3099
    %v4012 = vpack.c.b16 %v3108, %v3100
    %v4013 = vpack.c.b16 %v3117, %v3109
    %v4014 = vpack.c.b16 %v3118, %v3110
    %v4015 = vpack.c.b16 %v3119, %v3111
    %v4016 = vpack.c.b16 %v3120, %v3112
    %v4017 = vpack.c.b16 %v3121, %v3113
    %v4018 = vpack.c.b16 %v3122, %v3114
    %v4019 = vpack.c.b16 %v3123, %v3115
    %v4020 = vpack.c.b16 %v3124, %v3116
    %v4021 = vpack.c.b16 %v3133, %v3125
    %v4022 = vpack.c.b16 %v3134, %v3126
    %v4023 = vpack.c.b16 %v3135, %v3127
    %v4024 = vpack.c.b16 %v3136, %v3128
    %v4025 = vpack.c.b16 %v3137, %v3129
    %v4026 = vpack.c.b16 %v3138, %v3130
    %v4027 = vpack.c.b16 %v3139, %v3131
    %v4028 = vpack.c.b16 %v3140, %v3132
    %v4029 = vpack.c.b16 %v3149, %v3141
    %v4030 = vpack.c.b16 %v3150, %v3142
    %v4031 = vpack.c.b16 %v3151, %v3143
    %v4032 = vpack.c.b16 %v3152, %v3144
    %v4033 = vpack.c.b16 %v3153, %v3145
    %v4034 = vpack.c.b16 %v3154, %v3146
    %v4035 = vpack.c.b16 %v3155, %v3147
    %v4036 = vpack.c.b16 %v3156, %v3148
    %v4037 = vpack.c.b16 %v3165, %v3157
    %v4038 = vpack.c.b16 %v3166, %v3158
    %v4039 = vpack.c.b16 %v3167, %v3159
    %v4040 = vpack.c.b16 %v3168, %v3160
    %v4041 = vpack.c.b16 %v3169, %v3161
    %v4042 = vpack.c.b16 %v3170, %v3162
    %v4043 = vpack.c.b16 %v3171, %v3163
    %v4044 = vpack.c.b16 %v3172, %v3164
    %v4045 = vpack.c.b16 %v3181, %v3173
    %v4046 = vpack.c.b16 %v3182, %v3174
    %v4047 = vpack.c.b16 %v3183, %v3175
    %v4048 = vpack.c.b16 %v3184, %v3176
    %v4049 = vpack.c.b16 %v3185, %v3177
    %v4050 = vpack.c.b16 %v3186, %v3178
    %v4051 = vpack.c.b16 %v3187, %v3179
    %v4052 = vpack.c.b16 %v3188, %v3180
    %v4053 = vpack.c.b16 %v3197, %v3189
    %v4054 = vpack.c.b16 %v3198, %v3190
    %v4055 = vpack.c.b16 %v3199, %v3191
    %v4056 = vpack.c.b16 %v3200, %v3192
    %v4057 = vpack.c.b16 %v3201, %v3193
    %v4058 = vpack.c.b16 %v3202, %v3194
    %v4059 = vpack.c.b16 %v3203, %v3195
    %v4060 = vpack.c.b16 %v3204, %v3196
    %v4061 = vpack.c.b16 %v3213, %v3205
    %v4062 = vpack.c.b16 %v3214, %v3206
    %v4063 = vpack.c.b16 %v3215, %v3207
    %v4064 = vpack.c.b16 %v3216, %v3208
    %v4065 = vpack.c.b16 %v3217, %v3209
    %v4066 = vpack.c.b16 %v3218, %v3210
    %v4067 = vpack.c.b16 %v3219, %v3211
    %v4068 = vpack.c.b16 %v3220, %v3212
    %v4069 = vpack.c.b16 %v3229, %v3221
    %v4070 = vpack.c.b16 %v3230, %v3222
    %v4071 = vpack.c.b16 %v3231, %v3223
    %v4072 = vpack.c.b16 %v3232, %v3224
    %v4073 = vpack.c.b16 %v3233, %v3225
    %v4074 = vpack.c.b16 %v3234, %v3226
    %v4075 = vpack.c.b16 %v3235, %v3227
    %v4076 = vpack.c.b16 %v3236, %v3228
    %v4077 = vpack.c.b16 %v3245, %v3237
    %v4078 = vpack.c.b16 %v3246, %v3238
    %v4079 = vpack.c.b16 %v3247, %v3239
    %v4080 = vpack.c.b16 %v3248, %v3240
    %v4081 = vpack.c.b16 %v3249, %v3241
    %v4082 = vpack.c.b16 %v3250, %v3242
    %v4083 = vpack.c.b16 %v3251, %v3243
    %v4084 = vpack.c.b16 %v3252, %v3244
    %v4085 = vpack.c.b16 %v3261, %v3253
    %v4086 = vpack.c.b16 %v3262, %v3254
    %v4087 = vpack.c.b16 %v3263, %v3255
    %v4088 = vpack.c.b16 %v3264, %v3256
    %v4089 = vpack.c.b16 %v3265, %v3257
    %v4090 = vpack.c.b16 %v3266, %v3258
    %v4091 = vpack.c.b16 %v3267, %v3259
    %v4092 = vpack.c.b16 %v3268, %v3260
    %v4093 = vpack.c.b16 %v3277, %v3269
    %v4094 = vpack.c.b16 %v3278, %v3270
    %v4095 = vpack.c.b16 %v3279, %v3271
    %v4096 = vpack.c.b16 %v3280, %v3272
    %v4097 = vpack.c.b16 %v3281, %v3273
    %v4098 = vpack.c.b16 %v3282, %v3274
    %v4099 = vpack.c.b16 %v3283, %v3275
    %v4100 = vpack.c.b16 %v3284, %v3276
    %v4101 = vpack.c.b16 %v3293, %v3285
    %v4102 = vpack.c.b16 %v3294, %v3286
    %v4103 = vpack.c.b16 %v3295, %v3287
    %v4104 = vpack.c.b16 %v3296, %v3288
    %v4105 = vpack.c.b16 %v3297, %v3289
    %v4106 = vpack.c.b16 %v3298, %v3290
    %v4107 = vpack.c.b16 %v3299, %v3291
    %v4108 = vpack.c.b16 %v3300, %v3292
    %v4109 = vpack.c.b16 %v3309, %v3301
    %v4110 = vpack.c.b16 %v3310, %v3302
    %v4111 = vpack.c.b16 %v3311, %v3303
    %v4112 = vpack.c.b16 %v3312, %v3304
    %v4113 = vpack.c.b16 %v3313, %v3305
    %v4114 = vpack.c.b16 %v3314, %v3306
    %v4115 = vpack.c.b16 %v3315, %v3307
    %v4116 = vpack.c.b16 %v3316, %v3308
    %v4117 = vpack.c.b16 %v3325, %v3317
    %v4118 = vpack.c.b16 %v3326, %v3318
    %v4119 = vpack.c.b16 %v3327, %v3319
    %v4120 = vpack.c.b16 %v3328, %v3320
    %v4121 = vpack.c.b16 %v3329, %v3321
    %v4122 = vpack.c.b16 %v3330, %v3322
    %v4123 = vpack.c.b16 %v3331, %v3323
    %v4124 = vpack.c.b16 %v3332, %v3324
    %v4125 = vpack.c.b16 %v3341, %v3333
    %v4126 = vpack.c.b16 %v3342, %v3334
    %v4127 = vpack.c.b16 %v3343, %v3335
    %v4128 = vpack.c.b16 %v3344, %v3336
    %v4129 = vpack.c.b16 %v3345, %v3337
    %v4130 = vpack.c.b16 %v3346, %v3338
    %v4131 = vpack.c.b16 %v3347, %v3339
    %v4132 = vpack.c.b16 %v3348, %v3340
    %v4133 = vpack.c.b16 %v3357, %v3349
    %v4134 = vpack.c.b16 %v3358, %v3350
    %v4135 = vpack.c.b16 %v3359, %v3351
    %v4136 = vpack.c.b16 %v3360, %v3352
    %v4137 = vpack.c.b16 %v3361, %v3353
    %v4138 = vpack.c.b16 %v3362, %v3354
    %v4139 = vpack.c.b16 %v3363, %v3355
    %v4140 = vpack.c.b16 %v3364, %v3356
    %v4141 = vpack.c.b16 %v3373, %v3365
    %v4142 = vpack.c.b16 %v3374, %v3366
    %v4143 = vpack.c.b16 %v3375, %v3367
    %v4144 = vpack.c.b16 %v3376, %v3368
    %v4145 = vpack.c.b16 %v3377, %v3369
    %v4146 = vpack.c.b16 %v3378, %v3370
    %v4147 = vpack.c.b16 %v3379, %v3371
    %v4148 = vpack.c.b16 %v3380, %v3372
    %v4149 = vpack.c.b16 %v3389, %v3381
    %v4150 = vpack.c.b16 %v3390, %v3382
    %v4151 = vpack.c.b16 %v3391, %v3383
    %v4152 = vpack.c.b16 %v3392, %v3384
    %v4153 = vpack.c.b16 %v3393, %v3385
    %v4154 = vpack.c.b16 %v3394, %v3386
    %v4155 = vpack.c.b16 %v3395, %v3387
    %v4156 = vpack.c.b16 %v3396, %v3388
    %v4157 = vpack.c.b16 %v3405, %v3397
    %v4158 = vpack.c.b16 %v3406, %v3398
    %v4159 = vpack.c.b16 %v3407, %v3399
    %v4160 = vpack.c.b16 %v3408, %v3400
    %v4161 = vpack.c.b16 %v3409, %v3401
    %v4162 = vpack.c.b16 %v3410, %v3402
    %v4163 = vpack.c.b16 %v3411, %v3403
    %v4164 = vpack.c.b16 %v3412, %v3404
    %v4165 = vpack.c.b16 %v3421, %v3413
    %v4166 = vpack.c.b16 %v3422, %v3414
    %v4167 = vpack.c.b16 %v3423, %v3415
    %v4168 = vpack.c.b16 %v3424, %v3416
    %v4169 = vpack.c.b16 %v3425, %v3417
    %v4170 = vpack.c.b16 %v3426, %v3418
    %v4171 = vpack.c.b16 %v3427, %v3419
    %v4172 = vpack.c.b16 %v3428, %v3420
    %v4173 = vpack.c.b16 %v3437, %v3429
    %v4174 = vpack.c.b16 %v3438, %v3430
    %v4175 = vpack.c.b16 %v3439, %v3431
    %v4176 = vpack.c.b16 %v3440, %v3432
    %v4177 = vpack.c.b16 %v3441, %v3433
    %v4178 = vpack.c.b16 %v3442, %v3434
    %v4179 = vpack.c.b16 %v3443, %v3435
    %v4180 = vpack.c.b16 %v3444, %v3436
    %v4181 = vpack.c.b16 %v3453, %v3445
    %v4182 = vpack.c.b16 %v3454, %v3446
    %v4183 = vpack.c.b16 %v3455, %v3447
    %v4184 = vpack.c.b16 %v3456, %v3448
    %v4185 = vpack.c.b16 %v3457, %v3449
    %v4186 = vpack.c.b16 %v3458, %v3450
    %v4187 = vpack.c.b16 %v3459, %v3451
    %v4188 = vpack.c.b16 %v3460, %v3452
    %v4189 = vpack.c.b16 %v3469, %v3461
    %v4190 = vpack.c.b16 %v3470, %v3462
    %v4191 = vpack.c.b16 %v3471, %v3463
    %v4192 = vpack.c.b16 %v3472, %v3464
    %v4193 = vpack.c.b16 %v3473, %v3465
    %v4194 = vpack.c.b16 %v3474, %v3466
    %v4195 = vpack.c.b16 %v3475, %v3467
    %v4196 = vpack.c.b16 %v3476, %v3468
    %v4197 = vpack.c.b16 %v3485, %v3477
    %v4198 = vpack.c.b16 %v3486, %v3478
    %v4199 = vpack.c.b16 %v3487, %v3479
    %v4200 = vpack.c.b16 %v3488, %v3480
    %v4201 = vpack.c.b16 %v3489, %v3481
    %v4202 = vpack.c.b16 %v3490, %v3482
    %v4203 = vpack.c.b16 %v3491, %v3483
    %v4204 = vpack.c.b16 %v3492, %v3484
    %v4205 = vpack.c.b16 %v3501, %v3493
    %v4206 = vpack.c.b16 %v3502, %v3494
    %v4207 = vpack.c.b16 %v3503, %v3495
    %v4208 = vpack.c.b16 %v3504, %v3496
    %v4209 = vpack.c.b16 %v3505, %v3497
    %v4210 = vpack.c.b16 %v3506, %v3498
    %v4211 = vpack.c.b16 %v3507, %v3499
    %v4212 = vpack.c.b16 %v3508, %v3500
    %v4213 = vpack.c.b16 %v3517, %v3509
    %v4214 = vpack.c.b16 %v3518, %v3510
    %v4215 = vpack.c.b16 %v3519, %v3511
    %v4216 = vpack.c.b16 %v3520, %v3512
    %v4217 = vpack.c.b16 %v3521, %v3513
    %v4218 = vpack.c.b16 %v3522, %v3514
    %v4219 = vpack.c.b16 %v3523, %v3515
    %v4220 = vpack.c.b16 %v3524, %v3516
    %v4221 = vpack.c.b16 %v3533, %v3525
    %v4222 = vpack.c.b16 %v3534, %v3526
    %v4223 = vpack.c.b16 %v3535, %v3527
    %v4224 = vpack.c.b16 %v3536, %v3528
    %v4225 = vpack.c.b16 %v3537, %v3529
    %v4226 = vpack.c.b16 %v3538, %v3530
    %v4227 = vpack.c.b16 %v3539, %v3531
    %v4228 = vpack.c.b16 %v3540, %v3532
    %v4229 = vpack.c.b16 %v3549, %v3541
    %v4230 = vpack.c.b16 %v3550, %v3542
    %v4231 = vpack.c.b16 %v3551, %v3543
    %v4232 = vpack.c.b16 %v3552, %v3544
    %v4233 = vpack.c.b16 %v3553, %v3545
    %v4234 = vpack.c.b16 %v3554, %v3546
    %v4235 = vpack.c.b16 %v3555, %v3547
    %v4236 = vpack.c.b16 %v3556, %v3548
    %v4237 = vpack.c.b16 %v3565, %v3557
    %v4238 = vpack.c.b16 %v3566, %v3558
    %v4239 = vpack.c.b16 %v3567, %v3559
    %v4240 = vpack.c.b16 %v3568, %v3560
    %v4241 = vpack.c.b16 %v3569, %v3561
    %v4242 = vpack.c.b16 %v3570, %v3562
    %v4243 = vpack.c.b16 %v3571, %v3563
    %v4244 = vpack.c.b16 %v3572, %v3564
    %v4245 = vpack.c.b16 %v3581, %v3573
    %v4246 = vpack.c.b16 %v3582, %v3574
    %v4247 = vpack.c.b16 %v3583, %v3575
    %v4248 = vpack.c.b16 %v3584, %v3576
    %v4249 = vpack.c.b16 %v3585, %v3577
    %v4250 = vpack.c.b16 %v3586, %v3578
    %v4251 = vpack.c.b16 %v3587, %v3579
    %v4252 = vpack.c.b16 %v3588, %v3580
    %v4253 = vpack.c.b16 %v3597, %v3589
    %v4254 = vpack.c.b16 %v3598, %v3590
    %v4255 = vpack.c.b16 %v3599, %v3591
    %v4256 = vpack.c.b16 %v3600, %v3592
    %v4257 = vpack.c.b16 %v3601, %v3593
    %v4258 = vpack.c.b16 %v3602, %v3594
    %v4259 = vpack.c.b16 %v3603, %v3595
    %v4260 = vpack.c.b16 %v3604, %v3596
    %v4261 = vpack.c.b16 %v3613, %v3605
    %v4262 = vpack.c.b16 %v3614, %v3606
    %v4263 = vpack.c.b16 %v3615, %v3607
    %v4264 = vpack.c.b16 %v3616, %v3608
    %v4265 = vpack.c.b16 %v3617, %v3609
    %v4266 = vpack.c.b16 %v3618, %v3610
    %v4267 = vpack.c.b16 %v3619, %v3611
    %v4268 = vpack.c.b16 %v3620, %v3612
    %v4269 = vpack.c.b16 %v3629, %v3621
    %v4270 = vpack.c.b16 %v3630, %v3622
    %v4271 = vpack.c.b16 %v3631, %v3623
    %v4272 = vpack.c.b16 %v3632, %v3624
    %v4273 = vpack.c.b16 %v3633, %v3625
    %v4274 = vpack.c.b16 %v3634, %v3626
    %v4275 = vpack.c.b16 %v3635, %v3627
    %v4276 = vpack.c.b16 %v3636, %v3628
    %v4277 = vpack.c.b16 %v3645, %v3637
    %v4278 = vpack.c.b16 %v3646, %v3638
    %v4279 = vpack.c.b16 %v3647, %v3639
    %v4280 = vpack.c.b16 %v3648, %v3640
    %v4281 = vpack.c.b16 %v3649, %v3641
    %v4282 = vpack.c.b16 %v3650, %v3642
    %v4283 = vpack.c.b16 %v3651, %v3643
    %v4284 = vpack.c.b16 %v3652, %v3644
    %v4285 = vpack.c.b16 %v3661, %v3653
    %v4286 = vpack.c.b16 %v3662, %v3654
    %v4287 = vpack.c.b16 %v3663, %v3655
    %v4288 = vpack.c.b16 %v3664, %v3656
    %v4289 = vpack.c.b16 %v3665, %v3657
    %v4290 = vpack.c.b16 %v3666, %v3658
    %v4291 = vpack.c.b16 %v3667, %v3659
    %v4292 = vpack.c.b16 %v3668, %v3660
    %v4293 = vpack.c.b16 %v3677, %v3669
    %v4294 = vpack.c.b16 %v3678, %v3670
    %v4295 = vpack.c.b16 %v3679, %v3671
    %v4296 = vpack.c.b16 %v3680, %v3672
    %v4297 = vpack.c.b16 %v3681, %v3673
    %v4298 = vpack.c.b16 %v3682, %v3674
    %v4299 = vpack.c.b16 %v3683, %v3675
    %v4300 = vpack.c.b16 %v3684, %v3676
    %v4301 = vpack.c.b16 %v3693, %v3685
    %v4302 = vpack.c.b16 %v3694, %v3686
    %v4303 = vpack.c.b16 %v3695, %v3687
    %v4304 = vpack.c.b16 %v3696, %v3688
    %v4305 = vpack.c.b16 %v3697, %v3689
    %v4306 = vpack.c.b16 %v3698, %v3690
    %v4307 = vpack.c.b16 %v3699, %v3691
    %v4308 = vpack.c.b16 %v3700, %v3692
    %v4309 = vpack.c.b16 %v3709, %v3701
    %v4310 = vpack.c.b16 %v3710, %v3702
    %v4311 = vpack.c.b16 %v3711, %v3703
    %v4312 = vpack.c.b16 %v3712, %v3704
    %v4313 = vpack.c.b16 %v3713, %v3705
    %v4314 = vpack.c.b16 %v3714, %v3706
    %v4315 = vpack.c.b16 %v3715, %v3707
    %v4316 = vpack.c.b16 %v3716, %v3708
    %v4317 = vpack.c.b16 %v3725, %v3717
    %v4318 = vpack.c.b16 %v3726, %v3718
    %v4319 = vpack.c.b16 %v3727, %v3719
    %v4320 = vpack.c.b16 %v3728, %v3720
    %v4321 = vpack.c.b16 %v3729, %v3721
    %v4322 = vpack.c.b16 %v3730, %v3722
    %v4323 = vpack.c.b16 %v3731, %v3723
    %v4324 = vpack.c.b16 %v3732, %v3724
    %v4325 = vpack.c.b16 %v3741, %v3733
    %v4326 = vpack.c.b16 %v3742, %v3734
    %v4327 = vpack.c.b16 %v3743, %v3735
    %v4328 = vpack.c.b16 %v3744, %v3736
    %v4329 = vpack.c.b16 %v3745, %v3737
    %v4330 = vpack.c.b16 %v3746, %v3738
    %v4331 = vpack.c.b16 %v3747, %v3739
    %v4332 = vpack.c.b16 %v3748, %v3740
    %v4333 = vpack.c.b16 %v3757, %v3749
    %v4334 = vpack.c.b16 %v3758, %v3750
    %v4335 = vpack.c.b16 %v3759, %v3751
    %v4336 = vpack.c.b16 %v3760, %v3752
    %v4337 = vpack.c.b16 %v3761, %v3753
    %v4338 = vpack.c.b16 %v3762, %v3754
    %v4339 = vpack.c.b16 %v3763, %v3755
    %v4340 = vpack.c.b16 %v3764, %v3756
    %v4341 = vpack.c.b16 %v3773, %v3765
    %v4342 = vpack.c.b16 %v3774, %v3766
    %v4343 = vpack.c.b16 %v3775, %v3767
    %v4344 = vpack.c.b16 %v3776, %v3768
    %v4345 = vpack.c.b16 %v3777, %v3769
    %v4346 = vpack.c.b16 %v3778, %v3770
    %v4347 = vpack.c.b16 %v3779, %v3771
    %v4348 = vpack.c.b16 %v3780, %v3772
    %v4349 = vpack.c.b16 %v3789, %v3781
    %v4350 = vpack.c.b16 %v3790, %v3782
    %v4351 = vpack.c.b16 %v3791, %v3783
    %v4352 = vpack.c.b16 %v3792, %v3784
    %v4353 = vpack.c.b16 %v3793, %v3785
    %v4354 = vpack.c.b16 %v3794, %v3786
    %v4355 = vpack.c.b16 %v3795, %v3787
    %v4356 = vpack.c.b16 %v3796, %v3788
    %v4357 = vpack.c.b16 %v3805, %v3797
    %v4358 = vpack.c.b16 %v3806, %v3798
    %v4359 = vpack.c.b16 %v3807, %v3799
    %v4360 = vpack.c.b16 %v3808, %v3800
    %v4361 = vpack.c.b16 %v3809, %v3801
    %v4362 = vpack.c.b16 %v3810, %v3802
    %v4363 = vpack.c.b16 %v3811, %v3803
    %v4364 = vpack.c.b16 %v3812, %v3804
    %v4365 = vpack.c.b16 %v3821, %v3813
    %v4366 = vpack.c.b16 %v3822, %v3814
    %v4367 = vpack.c.b16 %v3823, %v3815
    %v4368 = vpack.c.b16 %v3824, %v3816
    %v4369 = vpack.c.b16 %v3825, %v3817
    %v4370 = vpack.c.b16 %v3826, %v3818
    %v4371 = vpack.c.b16 %v3827, %v3819
    %v4372 = vpack.c.b16 %v3828, %v3820
    %v4373 = vpack.c.b16 %v3837, %v3829
    %v4374 = vpack.c.b16 %v3838, %v3830
    %v4375 = vpack.c.b16 %v3839, %v3831
    %v4376 = vpack.c.b16 %v3840, %v3832
    %v4377 = vpack.c.b16 %v3841, %v3833
    %v4378 = vpack.c.b16 %v3842, %v3834
    %v4379 = vpack.c.b16 %v3843, %v3835
    %v4380 = vpack.c.b16 %v3844, %v3836
    %v4381 = vpack.c.b16 %v3853, %v3845
    %v4382 = vpack.c.b16 %v3854, %v3846
    %v4383 = vpack.c.b16 %v3855, %v3847
    %v4384 = vpack.c.b16 %v3856, %v3848
    %v4385 = vpack.c.b16 %v3857, %v3849
    %v4386 = vpack.c.b16 %v3858, %v3850
    %v4387 = vpack.c.b16 %v3859, %v3851
    %v4388 = vpack.c.b16 %v3860, %v3852
    %v4389 = vpack.c.b16 %v3869, %v3861
    %v4390 = vpack.c.b16 %v3870, %v3862
    %v4391 = vpack.c.b16 %v3871, %v3863
    %v4392 = vpack.c.b16 %v3872, %v3864
    %v4393 = vpack.c.b16 %v3873, %v3865
    %v4394 = vpack.c.b16 %v3874, %v3866
    %v4395 = vpack.c.b16 %v3875, %v3867
    %v4396 = vpack.c.b16 %v3876, %v3868
    %v4397 = vpack.c.b16 %v3885, %v3877
    %v4398 = vpack.c.b16 %v3886, %v3878
    %v4399 = vpack.c.b16 %v3887, %v3879
    %v4400 = vpack.c.b16 %v3888, %v3880
    %v4401 = vpack.c.b16 %v3889, %v3881
    %v4402 = vpack.c.b16 %v3890, %v3882
    %v4403 = vpack.c.b16 %v3891, %v3883
    %v4404 = vpack.c.b16 %v3892, %v3884
    %4917 = vmatpush.bf16.msra.mxu0 %v3949
    %4918 = vmatpush.bf16.msra.mxu0 %v3941
    %4919 = vmatpush.bf16.msra.mxu0 %v3933
    %4920 = vmatpush.bf16.msra.mxu0 %v3925
    %4921 = vmatpush.bf16.msra.mxu0 %v3917
    %4922 = vmatpush.bf16.msra.mxu0 %v3909
    %4923 = vmatpush.bf16.msra.mxu0 %v3901
    %4924 = vmatpush.bf16.msra.mxu0 %v3893
    %4925 = vmatmul.bf16.gmra.mxu0 %v2349
    %v4926 = vpop.f32.mrf.mxu0
    %v4927 = vadd.f32 %v1104, %v4926
    %v4928 = vpop.f32.mrf.mxu0
    %4929 = vdwg.mxu0
    %4930 = vmatpush.bf16.msra.mxu0 %v4013
    %4931 = vmatpush.bf16.msra.mxu0 %v4005
    %4932 = vmatpush.bf16.msra.mxu0 %v3997
    %4933 = vmatpush.bf16.msra.mxu0 %v3989
    %4934 = vmatpush.bf16.msra.mxu0 %v3981
    %4935 = vmatpush.bf16.msra.mxu0 %v3973
    %4936 = vmatpush.bf16.msra.mxu0 %v3965
    %4937 = vmatpush.bf16.msra.mxu0 %v3957
    %4938 = vmatmul.bf16.gmra.mxu0 %v2350
    %v4939 = vpop.f32.mrf.mxu0
    %v4940 = vadd.f32 %v4927, %v4939
    %v4941 = vpop.f32.mrf.mxu0
    %4942 = vdwg.mxu0
    %4943 = vmatpush.bf16.msra.mxu0 %v4077
    %4944 = vmatpush.bf16.msra.mxu0 %v4069
    %4945 = vmatpush.bf16.msra.mxu0 %v4061
    %4946 = vmatpush.bf16.msra.mxu0 %v4053
    %4947 = vmatpush.bf16.msra.mxu0 %v4045
    %4948 = vmatpush.bf16.msra.mxu0 %v4037
    %4949 = vmatpush.bf16.msra.mxu0 %v4029
    %4950 = vmatpush.bf16.msra.mxu0 %v4021
    %4951 = vmatmul.bf16.gmra.mxu0 %v2351
    %v4952 = vpop.f32.mrf.mxu0
    %v4953 = vadd.f32 %v4940, %v4952
    %v4954 = vpop.f32.mrf.mxu0
    %4955 = vdwg.mxu0
    %4956 = vmatpush.bf16.msra.mxu0 %v4141
    %4957 = vmatpush.bf16.msra.mxu0 %v4133
    %4958 = vmatpush.bf16.msra.mxu0 %v4125
    %4959 = vmatpush.bf16.msra.mxu0 %v4117
    %4960 = vmatpush.bf16.msra.mxu0 %v4109
    %4961 = vmatpush.bf16.msra.mxu0 %v4101
    %4962 = vmatpush.bf16.msra.mxu0 %v4093
    %4963 = vmatpush.bf16.msra.mxu0 %v4085
    %4964 = vmatmul.bf16.gmra.mxu0 %v2352
    %v4965 = vpop.f32.mrf.mxu0
    %v4966 = vadd.f32 %v4953, %v4965
    %v4967 = vpop.f32.mrf.mxu0
    %4968 = vdwg.mxu0
    %4969 = vmatpush.bf16.msra.mxu0 %v4205
    %4970 = vmatpush.bf16.msra.mxu0 %v4197
    %4971 = vmatpush.bf16.msra.mxu0 %v4189
    %4972 = vmatpush.bf16.msra.mxu0 %v4181
    %4973 = vmatpush.bf16.msra.mxu0 %v4173
    %4974 = vmatpush.bf16.msra.mxu0 %v4165
    %4975 = vmatpush.bf16.msra.mxu0 %v4157
    %4976 = vmatpush.bf16.msra.mxu0 %v4149
    %4977 = vmatmul.bf16.gmra.mxu0 %v2353
    %v4978 = vpop.f32.mrf.mxu0
    %v4979 = vadd.f32 %v4966, %v4978
    %v4980 = vpop.f32.mrf.mxu0
    %4981 = vdwg.mxu0
    %4982 = vmatpush.bf16.msra.mxu0 %v4269
    %4983 = vmatpush.bf16.msra.mxu0 %v4261
    %4984 = vmatpush.bf16.msra.mxu0 %v4253
    %4985 = vmatpush.bf16.msra.mxu0 %v4245
    %4986 = vmatpush.bf16.msra.mxu0 %v4237
    %4987 = vmatpush.bf16.msra.mxu0 %v4229
    %4988 = vmatpush.bf16.msra.mxu0 %v4221
    %4989 = vmatpush.bf16.msra.mxu0 %v4213
    %4990 = vmatmul.bf16.gmra.mxu0 %v2354
    %v4991 = vpop.f32.mrf.mxu0
    %v4992 = vadd.f32 %v4979, %v4991
    %v4993 = vpop.f32.mrf.mxu0
    %4994 = vdwg.mxu0
    %4995 = vmatpush.bf16.msra.mxu0 %v4333
    %4996 = vmatpush.bf16.msra.mxu0 %v4325
    %4997 = vmatpush.bf16.msra.mxu0 %v4317
    %4998 = vmatpush.bf16.msra.mxu0 %v4309
    %4999 = vmatpush.bf16.msra.mxu0 %v4301
    %5000 = vmatpush.bf16.msra.mxu0 %v4293
    %5001 = vmatpush.bf16.msra.mxu0 %v4285
    %5002 = vmatpush.bf16.msra.mxu0 %v4277
    %5003 = vmatmul.bf16.gmra.mxu0 %v2355
    %v5004 = vpop.f32.mrf.mxu0
    %v5005 = vadd.f32 %v4992, %v5004
    %v5006 = vpop.f32.mrf.mxu0
    %5007 = vdwg.mxu0
    %5008 = vmatpush.bf16.msra.mxu0 %v4397
    %5009 = vmatpush.bf16.msra.mxu0 %v4389
    %5010 = vmatpush.bf16.msra.mxu0 %v4381
    %5011 = vmatpush.bf16.msra.mxu0 %v4373
    %5012 = vmatpush.bf16.msra.mxu0 %v4365
    %5013 = vmatpush.bf16.msra.mxu0 %v4357
    %5014 = vmatpush.bf16.msra.mxu0 %v4349
    %5015 = vmatpush.bf16.msra.mxu0 %v4341
    %5016 = vmatmul.bf16.gmra.mxu0 %v2356
    %v5017 = vpop.f32.mrf.mxu0
    %v5018 = vadd.f32 %v5005, %v5017
    %v5019 = vpop.f32.mrf.mxu0
    %5020 = vdwg.mxu0
    %5021 = vmatpush.bf16.msra.mxu0 %v3950
    %5022 = vmatpush.bf16.msra.mxu0 %v3942
    %5023 = vmatpush.bf16.msra.mxu0 %v3934
    %5024 = vmatpush.bf16.msra.mxu0 %v3926
    %5025 = vmatpush.bf16.msra.mxu0 %v3918
    %5026 = vmatpush.bf16.msra.mxu0 %v3910
    %5027 = vmatpush.bf16.msra.mxu0 %v3902
    %5028 = vmatpush.bf16.msra.mxu0 %v3894
    %5029 = vmatmul.bf16.gmra.mxu0 %v2349
    %v5030 = vpop.f32.mrf.mxu0
    %v5031 = vadd.f32 %v1105, %v5030
    %v5032 = vpop.f32.mrf.mxu0
    %5033 = vdwg.mxu0
    %5034 = vmatpush.bf16.msra.mxu0 %v4014
    %5035 = vmatpush.bf16.msra.mxu0 %v4006
    %5036 = vmatpush.bf16.msra.mxu0 %v3998
    %5037 = vmatpush.bf16.msra.mxu0 %v3990
    %5038 = vmatpush.bf16.msra.mxu0 %v3982
    %5039 = vmatpush.bf16.msra.mxu0 %v3974
    %5040 = vmatpush.bf16.msra.mxu0 %v3966
    %5041 = vmatpush.bf16.msra.mxu0 %v3958
    %5042 = vmatmul.bf16.gmra.mxu0 %v2350
    %v5043 = vpop.f32.mrf.mxu0
    %v5044 = vadd.f32 %v5031, %v5043
    %v5045 = vpop.f32.mrf.mxu0
    %5046 = vdwg.mxu0
    %5047 = vmatpush.bf16.msra.mxu0 %v4078
    %5048 = vmatpush.bf16.msra.mxu0 %v4070
    %5049 = vmatpush.bf16.msra.mxu0 %v4062
    %5050 = vmatpush.bf16.msra.mxu0 %v4054
    %5051 = vmatpush.bf16.msra.mxu0 %v4046
    %5052 = vmatpush.bf16.msra.mxu0 %v4038
    %5053 = vmatpush.bf16.msra.mxu0 %v4030
    %5054 = vmatpush.bf16.msra.mxu0 %v4022
    %5055 = vmatmul.bf16.gmra.mxu0 %v2351
    %v5056 = vpop.f32.mrf.mxu0
    %v5057 = vadd.f32 %v5044, %v5056
    %v5058 = vpop.f32.mrf.mxu0
    %5059 = vdwg.mxu0
    %5060 = vmatpush.bf16.msra.mxu0 %v4142
    %5061 = vmatpush.bf16.msra.mxu0 %v4134
    %5062 = vmatpush.bf16.msra.mxu0 %v4126
    %5063 = vmatpush.bf16.msra.mxu0 %v4118
    %5064 = vmatpush.bf16.msra.mxu0 %v4110
    %5065 = vmatpush.bf16.msra.mxu0 %v4102
    %5066 = vmatpush.bf16.msra.mxu0 %v4094
    %5067 = vmatpush.bf16.msra.mxu0 %v4086
    %5068 = vmatmul.bf16.gmra.mxu0 %v2352
    %v5069 = vpop.f32.mrf.mxu0
    %v5070 = vadd.f32 %v5057, %v5069
    %v5071 = vpop.f32.mrf.mxu0
    %5072 = vdwg.mxu0
    %5073 = vmatpush.bf16.msra.mxu0 %v4206
    %5074 = vmatpush.bf16.msra.mxu0 %v4198
    %5075 = vmatpush.bf16.msra.mxu0 %v4190
    %5076 = vmatpush.bf16.msra.mxu0 %v4182
    %5077 = vmatpush.bf16.msra.mxu0 %v4174
    %5078 = vmatpush.bf16.msra.mxu0 %v4166
    %5079 = vmatpush.bf16.msra.mxu0 %v4158
    %5080 = vmatpush.bf16.msra.mxu0 %v4150
    %5081 = vmatmul.bf16.gmra.mxu0 %v2353
    %v5082 = vpop.f32.mrf.mxu0
    %v5083 = vadd.f32 %v5070, %v5082
    %v5084 = vpop.f32.mrf.mxu0
    %5085 = vdwg.mxu0
    %5086 = vmatpush.bf16.msra.mxu0 %v4270
    %5087 = vmatpush.bf16.msra.mxu0 %v4262
    %5088 = vmatpush.bf16.msra.mxu0 %v4254
    %5089 = vmatpush.bf16.msra.mxu0 %v4246
    %5090 = vmatpush.bf16.msra.mxu0 %v4238
    %5091 = vmatpush.bf16.msra.mxu0 %v4230
    %5092 = vmatpush.bf16.msra.mxu0 %v4222
    %5093 = vmatpush.bf16.msra.mxu0 %v4214
    %5094 = vmatmul.bf16.gmra.mxu0 %v2354
    %v5095 = vpop.f32.mrf.mxu0
    %v5096 = vadd.f32 %v5083, %v5095
    %v5097 = vpop.f32.mrf.mxu0
    %5098 = vdwg.mxu0
    %5099 = vmatpush.bf16.msra.mxu0 %v4334
    %5100 = vmatpush.bf16.msra.mxu0 %v4326
    %5101 = vmatpush.bf16.msra.mxu0 %v4318
    %5102 = vmatpush.bf16.msra.mxu0 %v4310
    %5103 = vmatpush.bf16.msra.mxu0 %v4302
    %5104 = vmatpush.bf16.msra.mxu0 %v4294
    %5105 = vmatpush.bf16.msra.mxu0 %v4286
    %5106 = vmatpush.bf16.msra.mxu0 %v4278
    %5107 = vmatmul.bf16.gmra.mxu0 %v2355
    %v5108 = vpop.f32.mrf.mxu0
    %v5109 = vadd.f32 %v5096, %v5108
    %v5110 = vpop.f32.mrf.mxu0
    %5111 = vdwg.mxu0
    %5112 = vmatpush.bf16.msra.mxu0 %v4398
    %5113 = vmatpush.bf16.msra.mxu0 %v4390
    %5114 = vmatpush.bf16.msra.mxu0 %v4382
    %5115 = vmatpush.bf16.msra.mxu0 %v4374
    %5116 = vmatpush.bf16.msra.mxu0 %v4366
    %5117 = vmatpush.bf16.msra.mxu0 %v4358
    %5118 = vmatpush.bf16.msra.mxu0 %v4350
    %5119 = vmatpush.bf16.msra.mxu0 %v4342
    %5120 = vmatmul.bf16.gmra.mxu0 %v2356
    %v5121 = vpop.f32.mrf.mxu0
    %v5122 = vadd.f32 %v5109, %v5121
    %v5123 = vpop.f32.mrf.mxu0
    %5124 = vdwg.mxu0
    %5125 = vmatpush.bf16.msra.mxu0 %v3951
    %5126 = vmatpush.bf16.msra.mxu0 %v3943
    %5127 = vmatpush.bf16.msra.mxu0 %v3935
    %5128 = vmatpush.bf16.msra.mxu0 %v3927
    %5129 = vmatpush.bf16.msra.mxu0 %v3919
    %5130 = vmatpush.bf16.msra.mxu0 %v3911
    %5131 = vmatpush.bf16.msra.mxu0 %v3903
    %5132 = vmatpush.bf16.msra.mxu0 %v3895
    %5133 = vmatmul.bf16.gmra.mxu0 %v2349
    %v5134 = vpop.f32.mrf.mxu0
    %v5135 = vadd.f32 %v1106, %v5134
    %v5136 = vpop.f32.mrf.mxu0
    %5137 = vdwg.mxu0
    %5138 = vmatpush.bf16.msra.mxu0 %v4015
    %5139 = vmatpush.bf16.msra.mxu0 %v4007
    %5140 = vmatpush.bf16.msra.mxu0 %v3999
    %5141 = vmatpush.bf16.msra.mxu0 %v3991
    %5142 = vmatpush.bf16.msra.mxu0 %v3983
    %5143 = vmatpush.bf16.msra.mxu0 %v3975
    %5144 = vmatpush.bf16.msra.mxu0 %v3967
    %5145 = vmatpush.bf16.msra.mxu0 %v3959
    %5146 = vmatmul.bf16.gmra.mxu0 %v2350
    %v5147 = vpop.f32.mrf.mxu0
    %v5148 = vadd.f32 %v5135, %v5147
    %v5149 = vpop.f32.mrf.mxu0
    %5150 = vdwg.mxu0
    %5151 = vmatpush.bf16.msra.mxu0 %v4079
    %5152 = vmatpush.bf16.msra.mxu0 %v4071
    %5153 = vmatpush.bf16.msra.mxu0 %v4063
    %5154 = vmatpush.bf16.msra.mxu0 %v4055
    %5155 = vmatpush.bf16.msra.mxu0 %v4047
    %5156 = vmatpush.bf16.msra.mxu0 %v4039
    %5157 = vmatpush.bf16.msra.mxu0 %v4031
    %5158 = vmatpush.bf16.msra.mxu0 %v4023
    %5159 = vmatmul.bf16.gmra.mxu0 %v2351
    %v5160 = vpop.f32.mrf.mxu0
    %v5161 = vadd.f32 %v5148, %v5160
    %v5162 = vpop.f32.mrf.mxu0
    %5163 = vdwg.mxu0
    %5164 = vmatpush.bf16.msra.mxu0 %v4143
    %5165 = vmatpush.bf16.msra.mxu0 %v4135
    %5166 = vmatpush.bf16.msra.mxu0 %v4127
    %5167 = vmatpush.bf16.msra.mxu0 %v4119
    %5168 = vmatpush.bf16.msra.mxu0 %v4111
    %5169 = vmatpush.bf16.msra.mxu0 %v4103
    %5170 = vmatpush.bf16.msra.mxu0 %v4095
    %5171 = vmatpush.bf16.msra.mxu0 %v4087
    %5172 = vmatmul.bf16.gmra.mxu0 %v2352
    %v5173 = vpop.f32.mrf.mxu0
    %v5174 = vadd.f32 %v5161, %v5173
    %v5175 = vpop.f32.mrf.mxu0
    %5176 = vdwg.mxu0
    %5177 = vmatpush.bf16.msra.mxu0 %v4207
    %5178 = vmatpush.bf16.msra.mxu0 %v4199
    %5179 = vmatpush.bf16.msra.mxu0 %v4191
    %5180 = vmatpush.bf16.msra.mxu0 %v4183
    %5181 = vmatpush.bf16.msra.mxu0 %v4175
    %5182 = vmatpush.bf16.msra.mxu0 %v4167
    %5183 = vmatpush.bf16.msra.mxu0 %v4159
    %5184 = vmatpush.bf16.msra.mxu0 %v4151
    %5185 = vmatmul.bf16.gmra.mxu0 %v2353
    %v5186 = vpop.f32.mrf.mxu0
    %v5187 = vadd.f32 %v5174, %v5186
    %v5188 = vpop.f32.mrf.mxu0
    %5189 = vdwg.mxu0
    %5190 = vmatpush.bf16.msra.mxu0 %v4271
    %5191 = vmatpush.bf16.msra.mxu0 %v4263
    %5192 = vmatpush.bf16.msra.mxu0 %v4255
    %5193 = vmatpush.bf16.msra.mxu0 %v4247
    %5194 = vmatpush.bf16.msra.mxu0 %v4239
    %5195 = vmatpush.bf16.msra.mxu0 %v4231
    %5196 = vmatpush.bf16.msra.mxu0 %v4223
    %5197 = vmatpush.bf16.msra.mxu0 %v4215
    %5198 = vmatmul.bf16.gmra.mxu0 %v2354
    %v5199 = vpop.f32.mrf.mxu0
    %v5200 = vadd.f32 %v5187, %v5199
    %v5201 = vpop.f32.mrf.mxu0
    %5202 = vdwg.mxu0
    %5203 = vmatpush.bf16.msra.mxu0 %v4335
    %5204 = vmatpush.bf16.msra.mxu0 %v4327
    %5205 = vmatpush.bf16.msra.mxu0 %v4319
    %5206 = vmatpush.bf16.msra.mxu0 %v4311
    %5207 = vmatpush.bf16.msra.mxu0 %v4303
    %5208 = vmatpush.bf16.msra.mxu0 %v4295
    %5209 = vmatpush.bf16.msra.mxu0 %v4287
    %5210 = vmatpush.bf16.msra.mxu0 %v4279
    %5211 = vmatmul.bf16.gmra.mxu0 %v2355
    %v5212 = vpop.f32.mrf.mxu0
    %v5213 = vadd.f32 %v5200, %v5212
    %v5214 = vpop.f32.mrf.mxu0
    %5215 = vdwg.mxu0
    %5216 = vmatpush.bf16.msra.mxu0 %v4399
    %5217 = vmatpush.bf16.msra.mxu0 %v4391
    %5218 = vmatpush.bf16.msra.mxu0 %v4383
    %5219 = vmatpush.bf16.msra.mxu0 %v4375
    %5220 = vmatpush.bf16.msra.mxu0 %v4367
    %5221 = vmatpush.bf16.msra.mxu0 %v4359
    %5222 = vmatpush.bf16.msra.mxu0 %v4351
    %5223 = vmatpush.bf16.msra.mxu0 %v4343
    %5224 = vmatmul.bf16.gmra.mxu0 %v2356
    %v5225 = vpop.f32.mrf.mxu0
    %v5226 = vadd.f32 %v5213, %v5225
    %v5227 = vpop.f32.mrf.mxu0
    %5228 = vdwg.mxu0
    %5229 = vmatpush.bf16.msra.mxu0 %v3952
    %5230 = vmatpush.bf16.msra.mxu0 %v3944
    %5231 = vmatpush.bf16.msra.mxu0 %v3936
    %5232 = vmatpush.bf16.msra.mxu0 %v3928
    %5233 = vmatpush.bf16.msra.mxu0 %v3920
    %5234 = vmatpush.bf16.msra.mxu0 %v3912
    %5235 = vmatpush.bf16.msra.mxu0 %v3904
    %5236 = vmatpush.bf16.msra.mxu0 %v3896
    %5237 = vmatmul.bf16.gmra.mxu0 %v2349
    %v5238 = vpop.f32.mrf.mxu0
    %v5239 = vadd.f32 %v1107, %v5238
    %v5240 = vpop.f32.mrf.mxu0
    %5241 = vdwg.mxu0
    %5242 = vmatpush.bf16.msra.mxu0 %v4016
    %5243 = vmatpush.bf16.msra.mxu0 %v4008
    %5244 = vmatpush.bf16.msra.mxu0 %v4000
    %5245 = vmatpush.bf16.msra.mxu0 %v3992
    %5246 = vmatpush.bf16.msra.mxu0 %v3984
    %5247 = vmatpush.bf16.msra.mxu0 %v3976
    %5248 = vmatpush.bf16.msra.mxu0 %v3968
    %5249 = vmatpush.bf16.msra.mxu0 %v3960
    %5250 = vmatmul.bf16.gmra.mxu0 %v2350
    %v5251 = vpop.f32.mrf.mxu0
    %v5252 = vadd.f32 %v5239, %v5251
    %v5253 = vpop.f32.mrf.mxu0
    %5254 = vdwg.mxu0
    %5255 = vmatpush.bf16.msra.mxu0 %v4080
    %5256 = vmatpush.bf16.msra.mxu0 %v4072
    %5257 = vmatpush.bf16.msra.mxu0 %v4064
    %5258 = vmatpush.bf16.msra.mxu0 %v4056
    %5259 = vmatpush.bf16.msra.mxu0 %v4048
    %5260 = vmatpush.bf16.msra.mxu0 %v4040
    %5261 = vmatpush.bf16.msra.mxu0 %v4032
    %5262 = vmatpush.bf16.msra.mxu0 %v4024
    %5263 = vmatmul.bf16.gmra.mxu0 %v2351
    %v5264 = vpop.f32.mrf.mxu0
    %v5265 = vadd.f32 %v5252, %v5264
    %v5266 = vpop.f32.mrf.mxu0
    %5267 = vdwg.mxu0
    %5268 = vmatpush.bf16.msra.mxu0 %v4144
    %5269 = vmatpush.bf16.msra.mxu0 %v4136
    %5270 = vmatpush.bf16.msra.mxu0 %v4128
    %5271 = vmatpush.bf16.msra.mxu0 %v4120
    %5272 = vmatpush.bf16.msra.mxu0 %v4112
    %5273 = vmatpush.bf16.msra.mxu0 %v4104
    %5274 = vmatpush.bf16.msra.mxu0 %v4096
    %5275 = vmatpush.bf16.msra.mxu0 %v4088
    %5276 = vmatmul.bf16.gmra.mxu0 %v2352
    %v5277 = vpop.f32.mrf.mxu0
    %v5278 = vadd.f32 %v5265, %v5277
    %v5279 = vpop.f32.mrf.mxu0
    %5280 = vdwg.mxu0
    %5281 = vmatpush.bf16.msra.mxu0 %v4208
    %5282 = vmatpush.bf16.msra.mxu0 %v4200
    %5283 = vmatpush.bf16.msra.mxu0 %v4192
    %5284 = vmatpush.bf16.msra.mxu0 %v4184
    %5285 = vmatpush.bf16.msra.mxu0 %v4176
    %5286 = vmatpush.bf16.msra.mxu0 %v4168
    %5287 = vmatpush.bf16.msra.mxu0 %v4160
    %5288 = vmatpush.bf16.msra.mxu0 %v4152
    %5289 = vmatmul.bf16.gmra.mxu0 %v2353
    %v5290 = vpop.f32.mrf.mxu0
    %v5291 = vadd.f32 %v5278, %v5290
    %v5292 = vpop.f32.mrf.mxu0
    %5293 = vdwg.mxu0
    %5294 = vmatpush.bf16.msra.mxu0 %v4272
    %5295 = vmatpush.bf16.msra.mxu0 %v4264
    %5296 = vmatpush.bf16.msra.mxu0 %v4256
    %5297 = vmatpush.bf16.msra.mxu0 %v4248
    %5298 = vmatpush.bf16.msra.mxu0 %v4240
    %5299 = vmatpush.bf16.msra.mxu0 %v4232
    %5300 = vmatpush.bf16.msra.mxu0 %v4224
    %5301 = vmatpush.bf16.msra.mxu0 %v4216
    %5302 = vmatmul.bf16.gmra.mxu0 %v2354
    %v5303 = vpop.f32.mrf.mxu0
    %v5304 = vadd.f32 %v5291, %v5303
    %v5305 = vpop.f32.mrf.mxu0
    %5306 = vdwg.mxu0
    %5307 = vmatpush.bf16.msra.mxu0 %v4336
    %5308 = vmatpush.bf16.msra.mxu0 %v4328
    %5309 = vmatpush.bf16.msra.mxu0 %v4320
    %5310 = vmatpush.bf16.msra.mxu0 %v4312
    %5311 = vmatpush.bf16.msra.mxu0 %v4304
    %5312 = vmatpush.bf16.msra.mxu0 %v4296
    %5313 = vmatpush.bf16.msra.mxu0 %v4288
    %5314 = vmatpush.bf16.msra.mxu0 %v4280
    %5315 = vmatmul.bf16.gmra.mxu0 %v2355
    %v5316 = vpop.f32.mrf.mxu0
    %v5317 = vadd.f32 %v5304, %v5316
    %v5318 = vpop.f32.mrf.mxu0
    %5319 = vdwg.mxu0
    %5320 = vmatpush.bf16.msra.mxu0 %v4400
    %5321 = vmatpush.bf16.msra.mxu0 %v4392
    %5322 = vmatpush.bf16.msra.mxu0 %v4384
    %5323 = vmatpush.bf16.msra.mxu0 %v4376
    %5324 = vmatpush.bf16.msra.mxu0 %v4368
    %5325 = vmatpush.bf16.msra.mxu0 %v4360
    %5326 = vmatpush.bf16.msra.mxu0 %v4352
    %5327 = vmatpush.bf16.msra.mxu0 %v4344
    %5328 = vmatmul.bf16.gmra.mxu0 %v2356
    %v5329 = vpop.f32.mrf.mxu0
    %v5330 = vadd.f32 %v5317, %v5329
    %v5331 = vpop.f32.mrf.mxu0
    %5332 = vdwg.mxu0
    %5333 = vmatpush.bf16.msra.mxu0 %v3953
    %5334 = vmatpush.bf16.msra.mxu0 %v3945
    %5335 = vmatpush.bf16.msra.mxu0 %v3937
    %5336 = vmatpush.bf16.msra.mxu0 %v3929
    %5337 = vmatpush.bf16.msra.mxu0 %v3921
    %5338 = vmatpush.bf16.msra.mxu0 %v3913
    %5339 = vmatpush.bf16.msra.mxu0 %v3905
    %5340 = vmatpush.bf16.msra.mxu0 %v3897
    %5341 = vmatmul.bf16.gmra.mxu0 %v2349
    %v5342 = vpop.f32.mrf.mxu0
    %v5343 = vadd.f32 %v1108, %v5342
    %v5344 = vpop.f32.mrf.mxu0
    %5345 = vdwg.mxu0
    %5346 = vmatpush.bf16.msra.mxu0 %v4017
    %5347 = vmatpush.bf16.msra.mxu0 %v4009
    %5348 = vmatpush.bf16.msra.mxu0 %v4001
    %5349 = vmatpush.bf16.msra.mxu0 %v3993
    %5350 = vmatpush.bf16.msra.mxu0 %v3985
    %5351 = vmatpush.bf16.msra.mxu0 %v3977
    %5352 = vmatpush.bf16.msra.mxu0 %v3969
    %5353 = vmatpush.bf16.msra.mxu0 %v3961
    %5354 = vmatmul.bf16.gmra.mxu0 %v2350
    %v5355 = vpop.f32.mrf.mxu0
    %v5356 = vadd.f32 %v5343, %v5355
    %v5357 = vpop.f32.mrf.mxu0
    %5358 = vdwg.mxu0
    %5359 = vmatpush.bf16.msra.mxu0 %v4081
    %5360 = vmatpush.bf16.msra.mxu0 %v4073
    %5361 = vmatpush.bf16.msra.mxu0 %v4065
    %5362 = vmatpush.bf16.msra.mxu0 %v4057
    %5363 = vmatpush.bf16.msra.mxu0 %v4049
    %5364 = vmatpush.bf16.msra.mxu0 %v4041
    %5365 = vmatpush.bf16.msra.mxu0 %v4033
    %5366 = vmatpush.bf16.msra.mxu0 %v4025
    %5367 = vmatmul.bf16.gmra.mxu0 %v2351
    %v5368 = vpop.f32.mrf.mxu0
    %v5369 = vadd.f32 %v5356, %v5368
    %v5370 = vpop.f32.mrf.mxu0
    %5371 = vdwg.mxu0
    %5372 = vmatpush.bf16.msra.mxu0 %v4145
    %5373 = vmatpush.bf16.msra.mxu0 %v4137
    %5374 = vmatpush.bf16.msra.mxu0 %v4129
    %5375 = vmatpush.bf16.msra.mxu0 %v4121
    %5376 = vmatpush.bf16.msra.mxu0 %v4113
    %5377 = vmatpush.bf16.msra.mxu0 %v4105
    %5378 = vmatpush.bf16.msra.mxu0 %v4097
    %5379 = vmatpush.bf16.msra.mxu0 %v4089
    %5380 = vmatmul.bf16.gmra.mxu0 %v2352
    %v5381 = vpop.f32.mrf.mxu0
    %v5382 = vadd.f32 %v5369, %v5381
    %v5383 = vpop.f32.mrf.mxu0
    %5384 = vdwg.mxu0
    %5385 = vmatpush.bf16.msra.mxu0 %v4209
    %5386 = vmatpush.bf16.msra.mxu0 %v4201
    %5387 = vmatpush.bf16.msra.mxu0 %v4193
    %5388 = vmatpush.bf16.msra.mxu0 %v4185
    %5389 = vmatpush.bf16.msra.mxu0 %v4177
    %5390 = vmatpush.bf16.msra.mxu0 %v4169
    %5391 = vmatpush.bf16.msra.mxu0 %v4161
    %5392 = vmatpush.bf16.msra.mxu0 %v4153
    %5393 = vmatmul.bf16.gmra.mxu0 %v2353
    %v5394 = vpop.f32.mrf.mxu0
    %v5395 = vadd.f32 %v5382, %v5394
    %v5396 = vpop.f32.mrf.mxu0
    %5397 = vdwg.mxu0
    %5398 = vmatpush.bf16.msra.mxu0 %v4273
    %5399 = vmatpush.bf16.msra.mxu0 %v4265
    %5400 = vmatpush.bf16.msra.mxu0 %v4257
    %5401 = vmatpush.bf16.msra.mxu0 %v4249
    %5402 = vmatpush.bf16.msra.mxu0 %v4241
    %5403 = vmatpush.bf16.msra.mxu0 %v4233
    %5404 = vmatpush.bf16.msra.mxu0 %v4225
    %5405 = vmatpush.bf16.msra.mxu0 %v4217
    %5406 = vmatmul.bf16.gmra.mxu0 %v2354
    %v5407 = vpop.f32.mrf.mxu0
    %v5408 = vadd.f32 %v5395, %v5407
    %v5409 = vpop.f32.mrf.mxu0
    %5410 = vdwg.mxu0
    %5411 = vmatpush.bf16.msra.mxu0 %v4337
    %5412 = vmatpush.bf16.msra.mxu0 %v4329
    %5413 = vmatpush.bf16.msra.mxu0 %v4321
    %5414 = vmatpush.bf16.msra.mxu0 %v4313
    %5415 = vmatpush.bf16.msra.mxu0 %v4305
    %5416 = vmatpush.bf16.msra.mxu0 %v4297
    %5417 = vmatpush.bf16.msra.mxu0 %v4289
    %5418 = vmatpush.bf16.msra.mxu0 %v4281
    %5419 = vmatmul.bf16.gmra.mxu0 %v2355
    %v5420 = vpop.f32.mrf.mxu0
    %v5421 = vadd.f32 %v5408, %v5420
    %v5422 = vpop.f32.mrf.mxu0
    %5423 = vdwg.mxu0
    %5424 = vmatpush.bf16.msra.mxu0 %v4401
    %5425 = vmatpush.bf16.msra.mxu0 %v4393
    %5426 = vmatpush.bf16.msra.mxu0 %v4385
    %5427 = vmatpush.bf16.msra.mxu0 %v4377
    %5428 = vmatpush.bf16.msra.mxu0 %v4369
    %5429 = vmatpush.bf16.msra.mxu0 %v4361
    %5430 = vmatpush.bf16.msra.mxu0 %v4353
    %5431 = vmatpush.bf16.msra.mxu0 %v4345
    %5432 = vmatmul.bf16.gmra.mxu0 %v2356
    %v5433 = vpop.f32.mrf.mxu0
    %v5434 = vadd.f32 %v5421, %v5433
    %v5435 = vpop.f32.mrf.mxu0
    %5436 = vdwg.mxu0
    %5437 = vmatpush.bf16.msra.mxu0 %v3954
    %5438 = vmatpush.bf16.msra.mxu0 %v3946
    %5439 = vmatpush.bf16.msra.mxu0 %v3938
    %5440 = vmatpush.bf16.msra.mxu0 %v3930
    %5441 = vmatpush.bf16.msra.mxu0 %v3922
    %5442 = vmatpush.bf16.msra.mxu0 %v3914
    %5443 = vmatpush.bf16.msra.mxu0 %v3906
    %5444 = vmatpush.bf16.msra.mxu0 %v3898
    %5445 = vmatmul.bf16.gmra.mxu0 %v2349
    %v5446 = vpop.f32.mrf.mxu0
    %v5447 = vadd.f32 %v1109, %v5446
    %v5448 = vpop.f32.mrf.mxu0
    %5449 = vdwg.mxu0
    %5450 = vmatpush.bf16.msra.mxu0 %v4018
    %5451 = vmatpush.bf16.msra.mxu0 %v4010
    %5452 = vmatpush.bf16.msra.mxu0 %v4002
    %5453 = vmatpush.bf16.msra.mxu0 %v3994
    %5454 = vmatpush.bf16.msra.mxu0 %v3986
    %5455 = vmatpush.bf16.msra.mxu0 %v3978
    %5456 = vmatpush.bf16.msra.mxu0 %v3970
    %5457 = vmatpush.bf16.msra.mxu0 %v3962
    %5458 = vmatmul.bf16.gmra.mxu0 %v2350
    %v5459 = vpop.f32.mrf.mxu0
    %v5460 = vadd.f32 %v5447, %v5459
    %v5461 = vpop.f32.mrf.mxu0
    %5462 = vdwg.mxu0
    %5463 = vmatpush.bf16.msra.mxu0 %v4082
    %5464 = vmatpush.bf16.msra.mxu0 %v4074
    %5465 = vmatpush.bf16.msra.mxu0 %v4066
    %5466 = vmatpush.bf16.msra.mxu0 %v4058
    %5467 = vmatpush.bf16.msra.mxu0 %v4050
    %5468 = vmatpush.bf16.msra.mxu0 %v4042
    %5469 = vmatpush.bf16.msra.mxu0 %v4034
    %5470 = vmatpush.bf16.msra.mxu0 %v4026
    %5471 = vmatmul.bf16.gmra.mxu0 %v2351
    %v5472 = vpop.f32.mrf.mxu0
    %v5473 = vadd.f32 %v5460, %v5472
    %v5474 = vpop.f32.mrf.mxu0
    %5475 = vdwg.mxu0
    %5476 = vmatpush.bf16.msra.mxu0 %v4146
    %5477 = vmatpush.bf16.msra.mxu0 %v4138
    %5478 = vmatpush.bf16.msra.mxu0 %v4130
    %5479 = vmatpush.bf16.msra.mxu0 %v4122
    %5480 = vmatpush.bf16.msra.mxu0 %v4114
    %5481 = vmatpush.bf16.msra.mxu0 %v4106
    %5482 = vmatpush.bf16.msra.mxu0 %v4098
    %5483 = vmatpush.bf16.msra.mxu0 %v4090
    %5484 = vmatmul.bf16.gmra.mxu0 %v2352
    %v5485 = vpop.f32.mrf.mxu0
    %v5486 = vadd.f32 %v5473, %v5485
    %v5487 = vpop.f32.mrf.mxu0
    %5488 = vdwg.mxu0
    %5489 = vmatpush.bf16.msra.mxu0 %v4210
    %5490 = vmatpush.bf16.msra.mxu0 %v4202
    %5491 = vmatpush.bf16.msra.mxu0 %v4194
    %5492 = vmatpush.bf16.msra.mxu0 %v4186
    %5493 = vmatpush.bf16.msra.mxu0 %v4178
    %5494 = vmatpush.bf16.msra.mxu0 %v4170
    %5495 = vmatpush.bf16.msra.mxu0 %v4162
    %5496 = vmatpush.bf16.msra.mxu0 %v4154
    %5497 = vmatmul.bf16.gmra.mxu0 %v2353
    %v5498 = vpop.f32.mrf.mxu0
    %v5499 = vadd.f32 %v5486, %v5498
    %v5500 = vpop.f32.mrf.mxu0
    %5501 = vdwg.mxu0
    %5502 = vmatpush.bf16.msra.mxu0 %v4274
    %5503 = vmatpush.bf16.msra.mxu0 %v4266
    %5504 = vmatpush.bf16.msra.mxu0 %v4258
    %5505 = vmatpush.bf16.msra.mxu0 %v4250
    %5506 = vmatpush.bf16.msra.mxu0 %v4242
    %5507 = vmatpush.bf16.msra.mxu0 %v4234
    %5508 = vmatpush.bf16.msra.mxu0 %v4226
    %5509 = vmatpush.bf16.msra.mxu0 %v4218
    %5510 = vmatmul.bf16.gmra.mxu0 %v2354
    %v5511 = vpop.f32.mrf.mxu0
    %v5512 = vadd.f32 %v5499, %v5511
    %v5513 = vpop.f32.mrf.mxu0
    %5514 = vdwg.mxu0
    %5515 = vmatpush.bf16.msra.mxu0 %v4338
    %5516 = vmatpush.bf16.msra.mxu0 %v4330
    %5517 = vmatpush.bf16.msra.mxu0 %v4322
    %5518 = vmatpush.bf16.msra.mxu0 %v4314
    %5519 = vmatpush.bf16.msra.mxu0 %v4306
    %5520 = vmatpush.bf16.msra.mxu0 %v4298
    %5521 = vmatpush.bf16.msra.mxu0 %v4290
    %5522 = vmatpush.bf16.msra.mxu0 %v4282
    %5523 = vmatmul.bf16.gmra.mxu0 %v2355
    %v5524 = vpop.f32.mrf.mxu0
    %v5525 = vadd.f32 %v5512, %v5524
    %v5526 = vpop.f32.mrf.mxu0
    %5527 = vdwg.mxu0
    %5528 = vmatpush.bf16.msra.mxu0 %v4402
    %5529 = vmatpush.bf16.msra.mxu0 %v4394
    %5530 = vmatpush.bf16.msra.mxu0 %v4386
    %5531 = vmatpush.bf16.msra.mxu0 %v4378
    %5532 = vmatpush.bf16.msra.mxu0 %v4370
    %5533 = vmatpush.bf16.msra.mxu0 %v4362
    %5534 = vmatpush.bf16.msra.mxu0 %v4354
    %5535 = vmatpush.bf16.msra.mxu0 %v4346
    %5536 = vmatmul.bf16.gmra.mxu0 %v2356
    %v5537 = vpop.f32.mrf.mxu0
    %v5538 = vadd.f32 %v5525, %v5537
    %v5539 = vpop.f32.mrf.mxu0
    %5540 = vdwg.mxu0
    %5541 = vmatpush.bf16.msra.mxu0 %v3955
    %5542 = vmatpush.bf16.msra.mxu0 %v3947
    %5543 = vmatpush.bf16.msra.mxu0 %v3939
    %5544 = vmatpush.bf16.msra.mxu0 %v3931
    %5545 = vmatpush.bf16.msra.mxu0 %v3923
    %5546 = vmatpush.bf16.msra.mxu0 %v3915
    %5547 = vmatpush.bf16.msra.mxu0 %v3907
    %5548 = vmatpush.bf16.msra.mxu0 %v3899
    %5549 = vmatmul.bf16.gmra.mxu0 %v2349
    %v5550 = vpop.f32.mrf.mxu0
    %v5551 = vadd.f32 %v1110, %v5550
    %v5552 = vpop.f32.mrf.mxu0
    %5553 = vdwg.mxu0
    %5554 = vmatpush.bf16.msra.mxu0 %v4019
    %5555 = vmatpush.bf16.msra.mxu0 %v4011
    %5556 = vmatpush.bf16.msra.mxu0 %v4003
    %5557 = vmatpush.bf16.msra.mxu0 %v3995
    %5558 = vmatpush.bf16.msra.mxu0 %v3987
    %5559 = vmatpush.bf16.msra.mxu0 %v3979
    %5560 = vmatpush.bf16.msra.mxu0 %v3971
    %5561 = vmatpush.bf16.msra.mxu0 %v3963
    %5562 = vmatmul.bf16.gmra.mxu0 %v2350
    %v5563 = vpop.f32.mrf.mxu0
    %v5564 = vadd.f32 %v5551, %v5563
    %v5565 = vpop.f32.mrf.mxu0
    %5566 = vdwg.mxu0
    %5567 = vmatpush.bf16.msra.mxu0 %v4083
    %5568 = vmatpush.bf16.msra.mxu0 %v4075
    %5569 = vmatpush.bf16.msra.mxu0 %v4067
    %5570 = vmatpush.bf16.msra.mxu0 %v4059
    %5571 = vmatpush.bf16.msra.mxu0 %v4051
    %5572 = vmatpush.bf16.msra.mxu0 %v4043
    %5573 = vmatpush.bf16.msra.mxu0 %v4035
    %5574 = vmatpush.bf16.msra.mxu0 %v4027
    %5575 = vmatmul.bf16.gmra.mxu0 %v2351
    %v5576 = vpop.f32.mrf.mxu0
    %v5577 = vadd.f32 %v5564, %v5576
    %v5578 = vpop.f32.mrf.mxu0
    %5579 = vdwg.mxu0
    %5580 = vmatpush.bf16.msra.mxu0 %v4147
    %5581 = vmatpush.bf16.msra.mxu0 %v4139
    %5582 = vmatpush.bf16.msra.mxu0 %v4131
    %5583 = vmatpush.bf16.msra.mxu0 %v4123
    %5584 = vmatpush.bf16.msra.mxu0 %v4115
    %5585 = vmatpush.bf16.msra.mxu0 %v4107
    %5586 = vmatpush.bf16.msra.mxu0 %v4099
    %5587 = vmatpush.bf16.msra.mxu0 %v4091
    %5588 = vmatmul.bf16.gmra.mxu0 %v2352
    %v5589 = vpop.f32.mrf.mxu0
    %v5590 = vadd.f32 %v5577, %v5589
    %v5591 = vpop.f32.mrf.mxu0
    %5592 = vdwg.mxu0
    %5593 = vmatpush.bf16.msra.mxu0 %v4211
    %5594 = vmatpush.bf16.msra.mxu0 %v4203
    %5595 = vmatpush.bf16.msra.mxu0 %v4195
    %5596 = vmatpush.bf16.msra.mxu0 %v4187
    %5597 = vmatpush.bf16.msra.mxu0 %v4179
    %5598 = vmatpush.bf16.msra.mxu0 %v4171
    %5599 = vmatpush.bf16.msra.mxu0 %v4163
    %5600 = vmatpush.bf16.msra.mxu0 %v4155
    %5601 = vmatmul.bf16.gmra.mxu0 %v2353
    %v5602 = vpop.f32.mrf.mxu0
    %v5603 = vadd.f32 %v5590, %v5602
    %v5604 = vpop.f32.mrf.mxu0
    %5605 = vdwg.mxu0
    %5606 = vmatpush.bf16.msra.mxu0 %v4275
    %5607 = vmatpush.bf16.msra.mxu0 %v4267
    %5608 = vmatpush.bf16.msra.mxu0 %v4259
    %5609 = vmatpush.bf16.msra.mxu0 %v4251
    %5610 = vmatpush.bf16.msra.mxu0 %v4243
    %5611 = vmatpush.bf16.msra.mxu0 %v4235
    %5612 = vmatpush.bf16.msra.mxu0 %v4227
    %5613 = vmatpush.bf16.msra.mxu0 %v4219
    %5614 = vmatmul.bf16.gmra.mxu0 %v2354
    %v5615 = vpop.f32.mrf.mxu0
    %v5616 = vadd.f32 %v5603, %v5615
    %v5617 = vpop.f32.mrf.mxu0
    %5618 = vdwg.mxu0
    %5619 = vmatpush.bf16.msra.mxu0 %v4339
    %5620 = vmatpush.bf16.msra.mxu0 %v4331
    %5621 = vmatpush.bf16.msra.mxu0 %v4323
    %5622 = vmatpush.bf16.msra.mxu0 %v4315
    %5623 = vmatpush.bf16.msra.mxu0 %v4307
    %5624 = vmatpush.bf16.msra.mxu0 %v4299
    %5625 = vmatpush.bf16.msra.mxu0 %v4291
    %5626 = vmatpush.bf16.msra.mxu0 %v4283
    %5627 = vmatmul.bf16.gmra.mxu0 %v2355
    %v5628 = vpop.f32.mrf.mxu0
    %v5629 = vadd.f32 %v5616, %v5628
    %v5630 = vpop.f32.mrf.mxu0
    %5631 = vdwg.mxu0
    %5632 = vmatpush.bf16.msra.mxu0 %v4403
    %5633 = vmatpush.bf16.msra.mxu0 %v4395
    %5634 = vmatpush.bf16.msra.mxu0 %v4387
    %5635 = vmatpush.bf16.msra.mxu0 %v4379
    %5636 = vmatpush.bf16.msra.mxu0 %v4371
    %5637 = vmatpush.bf16.msra.mxu0 %v4363
    %5638 = vmatpush.bf16.msra.mxu0 %v4355
    %5639 = vmatpush.bf16.msra.mxu0 %v4347
    %5640 = vmatmul.bf16.gmra.mxu0 %v2356
    %v5641 = vpop.f32.mrf.mxu0
    %v5642 = vadd.f32 %v5629, %v5641
    %v5643 = vpop.f32.mrf.mxu0
    %5644 = vdwg.mxu0
    %5645 = vmatpush.bf16.msra.mxu0 %v3956
    %5646 = vmatpush.bf16.msra.mxu0 %v3948
    %5647 = vmatpush.bf16.msra.mxu0 %v3940
    %5648 = vmatpush.bf16.msra.mxu0 %v3932
    %5649 = vmatpush.bf16.msra.mxu0 %v3924
    %5650 = vmatpush.bf16.msra.mxu0 %v3916
    %5651 = vmatpush.bf16.msra.mxu0 %v3908
    %5652 = vmatpush.bf16.msra.mxu0 %v3900
    %5653 = vmatmul.bf16.gmra.mxu0 %v2349
    %v5654 = vpop.f32.mrf.mxu0
    %v5655 = vadd.f32 %v1111, %v5654
    %v5656 = vpop.f32.mrf.mxu0
    %5657 = vdwg.mxu0
    %5658 = vmatpush.bf16.msra.mxu0 %v4020
    %5659 = vmatpush.bf16.msra.mxu0 %v4012
    %5660 = vmatpush.bf16.msra.mxu0 %v4004
    %5661 = vmatpush.bf16.msra.mxu0 %v3996
    %5662 = vmatpush.bf16.msra.mxu0 %v3988
    %5663 = vmatpush.bf16.msra.mxu0 %v3980
    %5664 = vmatpush.bf16.msra.mxu0 %v3972
    %5665 = vmatpush.bf16.msra.mxu0 %v3964
    %5666 = vmatmul.bf16.gmra.mxu0 %v2350
    %v5667 = vpop.f32.mrf.mxu0
    %v5668 = vadd.f32 %v5655, %v5667
    %v5669 = vpop.f32.mrf.mxu0
    %5670 = vdwg.mxu0
    %5671 = vmatpush.bf16.msra.mxu0 %v4084
    %5672 = vmatpush.bf16.msra.mxu0 %v4076
    %5673 = vmatpush.bf16.msra.mxu0 %v4068
    %5674 = vmatpush.bf16.msra.mxu0 %v4060
    %5675 = vmatpush.bf16.msra.mxu0 %v4052
    %5676 = vmatpush.bf16.msra.mxu0 %v4044
    %5677 = vmatpush.bf16.msra.mxu0 %v4036
    %5678 = vmatpush.bf16.msra.mxu0 %v4028
    %5679 = vmatmul.bf16.gmra.mxu0 %v2351
    %v5680 = vpop.f32.mrf.mxu0
    %v5681 = vadd.f32 %v5668, %v5680
    %v5682 = vpop.f32.mrf.mxu0
    %5683 = vdwg.mxu0
    %5684 = vmatpush.bf16.msra.mxu0 %v4148
    %5685 = vmatpush.bf16.msra.mxu0 %v4140
    %5686 = vmatpush.bf16.msra.mxu0 %v4132
    %5687 = vmatpush.bf16.msra.mxu0 %v4124
    %5688 = vmatpush.bf16.msra.mxu0 %v4116
    %5689 = vmatpush.bf16.msra.mxu0 %v4108
    %5690 = vmatpush.bf16.msra.mxu0 %v4100
    %5691 = vmatpush.bf16.msra.mxu0 %v4092
    %5692 = vmatmul.bf16.gmra.mxu0 %v2352
    %v5693 = vpop.f32.mrf.mxu0
    %v5694 = vadd.f32 %v5681, %v5693
    %v5695 = vpop.f32.mrf.mxu0
    %5696 = vdwg.mxu0
    %5697 = vmatpush.bf16.msra.mxu0 %v4212
    %5698 = vmatpush.bf16.msra.mxu0 %v4204
    %5699 = vmatpush.bf16.msra.mxu0 %v4196
    %5700 = vmatpush.bf16.msra.mxu0 %v4188
    %5701 = vmatpush.bf16.msra.mxu0 %v4180
    %5702 = vmatpush.bf16.msra.mxu0 %v4172
    %5703 = vmatpush.bf16.msra.mxu0 %v4164
    %5704 = vmatpush.bf16.msra.mxu0 %v4156
    %5705 = vmatmul.bf16.gmra.mxu0 %v2353
    %v5706 = vpop.f32.mrf.mxu0
    %v5707 = vadd.f32 %v5694, %v5706
    %v5708 = vpop.f32.mrf.mxu0
    %5709 = vdwg.mxu0
    %5710 = vmatpush.bf16.msra.mxu0 %v4276
    %5711 = vmatpush.bf16.msra.mxu0 %v4268
    %5712 = vmatpush.bf16.msra.mxu0 %v4260
    %5713 = vmatpush.bf16.msra.mxu0 %v4252
    %5714 = vmatpush.bf16.msra.mxu0 %v4244
    %5715 = vmatpush.bf16.msra.mxu0 %v4236
    %5716 = vmatpush.bf16.msra.mxu0 %v4228
    %5717 = vmatpush.bf16.msra.mxu0 %v4220
    %5718 = vmatmul.bf16.gmra.mxu0 %v2354
    %v5719 = vpop.f32.mrf.mxu0
    %v5720 = vadd.f32 %v5707, %v5719
    %v5721 = vpop.f32.mrf.mxu0
    %5722 = vdwg.mxu0
    %5723 = vmatpush.bf16.msra.mxu0 %v4340
    %5724 = vmatpush.bf16.msra.mxu0 %v4332
    %5725 = vmatpush.bf16.msra.mxu0 %v4324
    %5726 = vmatpush.bf16.msra.mxu0 %v4316
    %5727 = vmatpush.bf16.msra.mxu0 %v4308
    %5728 = vmatpush.bf16.msra.mxu0 %v4300
    %5729 = vmatpush.bf16.msra.mxu0 %v4292
    %5730 = vmatpush.bf16.msra.mxu0 %v4284
    %5731 = vmatmul.bf16.gmra.mxu0 %v2355
    %v5732 = vpop.f32.mrf.mxu0
    %v5733 = vadd.f32 %v5720, %v5732
    %v5734 = vpop.f32.mrf.mxu0
    %5735 = vdwg.mxu0
    %5736 = vmatpush.bf16.msra.mxu0 %v4404
    %5737 = vmatpush.bf16.msra.mxu0 %v4396
    %5738 = vmatpush.bf16.msra.mxu0 %v4388
    %5739 = vmatpush.bf16.msra.mxu0 %v4380
    %5740 = vmatpush.bf16.msra.mxu0 %v4372
    %5741 = vmatpush.bf16.msra.mxu0 %v4364
    %5742 = vmatpush.bf16.msra.mxu0 %v4356
    %5743 = vmatpush.bf16.msra.mxu0 %v4348
    %5744 = vmatmul.bf16.gmra.mxu0 %v2356
    %v5745 = vpop.f32.mrf.mxu0
    %v5746 = vadd.f32 %v5733, %v5745
    %v5747 = vpop.f32.mrf.mxu0
    %5748 = vdwg.mxu0
    %v5749 = vpack.c.bf16 %v5018, %v5018
    %v5750 = vpack.c.bf16 %v5122, %v5122
    %v5751 = vpack.c.bf16 %v5226, %v5226
    %v5752 = vpack.c.bf16 %v5330, %v5330
    %v5753 = vpack.c.bf16 %v5434, %v5434
    %v5754 = vpack.c.bf16 %v5538, %v5538
    %v5755 = vpack.c.bf16 %v5642, %v5642
    %v5756 = vpack.c.bf16 %v5746, %v5746
    %v5885 = vunpack.c.l.b16 %v974
    %v5886 = vunpack.c.h.b16 %v974
    %v5887 = vunpack.c.l.b16 %v975
    %v5888 = vunpack.c.h.b16 %v975
    %v5889 = vunpack.c.l.b16 %v976
    %v5890 = vunpack.c.h.b16 %v976
    %v5891 = vunpack.c.l.b16 %v977
    %v5892 = vunpack.c.h.b16 %v977
    %v5893 = vunpack.c.l.b16 %v978
    %v5894 = vunpack.c.h.b16 %v978
    %v5895 = vunpack.c.l.b16 %v979
    %v5896 = vunpack.c.h.b16 %v979
    %v5897 = vunpack.c.l.b16 %v980
    %v5898 = vunpack.c.h.b16 %v980
    %v5899 = vunpack.c.l.b16 %v981
    %v5900 = vunpack.c.h.b16 %v981
    %v5901 = vunpack.c.l.b16 %v982
    %v5902 = vunpack.c.h.b16 %v982
    %v5903 = vunpack.c.l.b16 %v983
    %v5904 = vunpack.c.h.b16 %v983
    %v5905 = vunpack.c.l.b16 %v984
    %v5906 = vunpack.c.h.b16 %v984
    %v5907 = vunpack.c.l.b16 %v985
    %v5908 = vunpack.c.h.b16 %v985
    %v5909 = vunpack.c.l.b16 %v986
    %v5910 = vunpack.c.h.b16 %v986
    %v5911 = vunpack.c.l.b16 %v987
    %v5912 = vunpack.c.h.b16 %v987
    %v5913 = vunpack.c.l.b16 %v988
    %v5914 = vunpack.c.h.b16 %v988
    %v5915 = vunpack.c.l.b16 %v989
    %v5916 = vunpack.c.h.b16 %v989
    %v5917 = vunpack.c.l.b16 %v990
    %v5918 = vunpack.c.h.b16 %v990
    %v5919 = vunpack.c.l.b16 %v991
    %v5920 = vunpack.c.h.b16 %v991
    %v5921 = vunpack.c.l.b16 %v992
    %v5922 = vunpack.c.h.b16 %v992
    %v5923 = vunpack.c.l.b16 %v993
    %v5924 = vunpack.c.h.b16 %v993
    %v5925 = vunpack.c.l.b16 %v994
    %v5926 = vunpack.c.h.b16 %v994
    %v5927 = vunpack.c.l.b16 %v995
    %v5928 = vunpack.c.h.b16 %v995
    %v5929 = vunpack.c.l.b16 %v996
    %v5930 = vunpack.c.h.b16 %v996
    %v5931 = vunpack.c.l.b16 %v997
    %v5932 = vunpack.c.h.b16 %v997
    %v5933 = vunpack.c.l.b16 %v998
    %v5934 = vunpack.c.h.b16 %v998
    %v5935 = vunpack.c.l.b16 %v999
    %v5936 = vunpack.c.h.b16 %v999
    %v5937 = vunpack.c.l.b16 %v1000
    %v5938 = vunpack.c.h.b16 %v1000
    %v5939 = vunpack.c.l.b16 %v1001
    %v5940 = vunpack.c.h.b16 %v1001
    %v5941 = vunpack.c.l.b16 %v1002
    %v5942 = vunpack.c.h.b16 %v1002
    %v5943 = vunpack.c.l.b16 %v1003
    %v5944 = vunpack.c.h.b16 %v1003
    %v5945 = vunpack.c.l.b16 %v1004
    %v5946 = vunpack.c.h.b16 %v1004
    %v5947 = vunpack.c.l.b16 %v1005
    %v5948 = vunpack.c.h.b16 %v1005
    %v5949 = vunpack.c.l.b16 %v1006
    %v5950 = vunpack.c.h.b16 %v1006
    %v5951 = vunpack.c.l.b16 %v1007
    %v5952 = vunpack.c.h.b16 %v1007
    %v5953 = vunpack.c.l.b16 %v1008
    %v5954 = vunpack.c.h.b16 %v1008
    %v5955 = vunpack.c.l.b16 %v1009
    %v5956 = vunpack.c.h.b16 %v1009
    %v5957 = vunpack.c.l.b16 %v1010
    %v5958 = vunpack.c.h.b16 %v1010
    %v5959 = vunpack.c.l.b16 %v1011
    %v5960 = vunpack.c.h.b16 %v1011
    %v5961 = vunpack.c.l.b16 %v1012
    %v5962 = vunpack.c.h.b16 %v1012
    %v5963 = vunpack.c.l.b16 %v1013
    %v5964 = vunpack.c.h.b16 %v1013
    %v5965 = vunpack.c.l.b16 %v1014
    %v5966 = vunpack.c.h.b16 %v1014
    %v5967 = vunpack.c.l.b16 %v1015
    %v5968 = vunpack.c.h.b16 %v1015
    %v5969 = vunpack.c.l.b16 %v1016
    %v5970 = vunpack.c.h.b16 %v1016
    %v5971 = vunpack.c.l.b16 %v1017
    %v5972 = vunpack.c.h.b16 %v1017
    %v5973 = vunpack.c.l.b16 %v1018
    %v5974 = vunpack.c.h.b16 %v1018
    %v5975 = vunpack.c.l.b16 %v1019
    %v5976 = vunpack.c.h.b16 %v1019
    %v5977 = vunpack.c.l.b16 %v1020
    %v5978 = vunpack.c.h.b16 %v1020
    %v5979 = vunpack.c.l.b16 %v1021
    %v5980 = vunpack.c.h.b16 %v1021
    %v5981 = vunpack.c.l.b16 %v1022
    %v5982 = vunpack.c.h.b16 %v1022
    %v5983 = vunpack.c.l.b16 %v1023
    %v5984 = vunpack.c.h.b16 %v1023
    %v5985 = vunpack.c.l.b16 %v1024
    %v5986 = vunpack.c.h.b16 %v1024
    %v5987 = vunpack.c.l.b16 %v1025
    %v5988 = vunpack.c.h.b16 %v1025
    %v5989 = vunpack.c.l.b16 %v1026
    %v5990 = vunpack.c.h.b16 %v1026
    %v5991 = vunpack.c.l.b16 %v1027
    %v5992 = vunpack.c.h.b16 %v1027
    %v5993 = vunpack.c.l.b16 %v1028
    %v5994 = vunpack.c.h.b16 %v1028
    %v5995 = vunpack.c.l.b16 %v1029
    %v5996 = vunpack.c.h.b16 %v1029
    %v5997 = vunpack.c.l.b16 %v1030
    %v5998 = vunpack.c.h.b16 %v1030
    %v5999 = vunpack.c.l.b16 %v1031
    %v6000 = vunpack.c.h.b16 %v1031
    %v6001 = vunpack.c.l.b16 %v1032
    %v6002 = vunpack.c.h.b16 %v1032
    %v6003 = vunpack.c.l.b16 %v1033
    %v6004 = vunpack.c.h.b16 %v1033
    %v6005 = vunpack.c.l.b16 %v1034
    %v6006 = vunpack.c.h.b16 %v1034
    %v6007 = vunpack.c.l.b16 %v1035
    %v6008 = vunpack.c.h.b16 %v1035
    %v6009 = vunpack.c.l.b16 %v1036
    %v6010 = vunpack.c.h.b16 %v1036
    %v6011 = vunpack.c.l.b16 %v1037
    %v6012 = vunpack.c.h.b16 %v1037
    %v6013 = vunpack.c.l.b16 %v1038
    %v6014 = vunpack.c.h.b16 %v1038
    %v6015 = vunpack.c.l.b16 %v1039
    %v6016 = vunpack.c.h.b16 %v1039
    %v6017 = vunpack.c.l.b16 %v1040
    %v6018 = vunpack.c.h.b16 %v1040
    %v6019 = vunpack.c.l.b16 %v1041
    %v6020 = vunpack.c.h.b16 %v1041
    %v6021 = vunpack.c.l.b16 %v1042
    %v6022 = vunpack.c.h.b16 %v1042
    %v6023 = vunpack.c.l.b16 %v1043
    %v6024 = vunpack.c.h.b16 %v1043
    %v6025 = vunpack.c.l.b16 %v1044
    %v6026 = vunpack.c.h.b16 %v1044
    %v6027 = vunpack.c.l.b16 %v1045
    %v6028 = vunpack.c.h.b16 %v1045
    %v6029 = vunpack.c.l.b16 %v1046
    %v6030 = vunpack.c.h.b16 %v1046
    %v6031 = vunpack.c.l.b16 %v1047
    %v6032 = vunpack.c.h.b16 %v1047
    %v6033 = vunpack.c.l.b16 %v1048
    %v6034 = vunpack.c.h.b16 %v1048
    %v6035 = vunpack.c.l.b16 %v1049
    %v6036 = vunpack.c.h.b16 %v1049
    %v6037 = vunpack.c.l.b16 %v1050
    %v6038 = vunpack.c.h.b16 %v1050
    %v6039 = vunpack.c.l.b16 %v1051
    %v6040 = vunpack.c.h.b16 %v1051
    %v6041 = vunpack.c.l.b16 %v1052
    %v6042 = vunpack.c.h.b16 %v1052
    %v6043 = vunpack.c.l.b16 %v1053
    %v6044 = vunpack.c.h.b16 %v1053
    %v6045 = vunpack.c.l.b16 %v1054
    %v6046 = vunpack.c.h.b16 %v1054
    %v6047 = vunpack.c.l.b16 %v1055
    %v6048 = vunpack.c.h.b16 %v1055
    %v6049 = vunpack.c.l.b16 %v1056
    %v6050 = vunpack.c.h.b16 %v1056
    %v6051 = vunpack.c.l.b16 %v1057
    %v6052 = vunpack.c.h.b16 %v1057
    %v6053 = vunpack.c.l.b16 %v1058
    %v6054 = vunpack.c.h.b16 %v1058
    %v6055 = vunpack.c.l.b16 %v1059
    %v6056 = vunpack.c.h.b16 %v1059
    %v6057 = vunpack.c.l.b16 %v1060
    %v6058 = vunpack.c.h.b16 %v1060
    %v6059 = vunpack.c.l.b16 %v1061
    %v6060 = vunpack.c.h.b16 %v1061
    %v6061 = vunpack.c.l.b16 %v1062
    %v6062 = vunpack.c.h.b16 %v1062
    %v6063 = vunpack.c.l.b16 %v1063
    %v6064 = vunpack.c.h.b16 %v1063
    %v6065 = vunpack.c.l.b16 %v1064
    %v6066 = vunpack.c.h.b16 %v1064
    %v6067 = vunpack.c.l.b16 %v1065
    %v6068 = vunpack.c.h.b16 %v1065
    %v6069 = vunpack.c.l.b16 %v1066
    %v6070 = vunpack.c.h.b16 %v1066
    %v6071 = vunpack.c.l.b16 %v1067
    %v6072 = vunpack.c.h.b16 %v1067
    %v6073 = vunpack.c.l.b16 %v1068
    %v6074 = vunpack.c.h.b16 %v1068
    %v6075 = vunpack.c.l.b16 %v1069
    %v6076 = vunpack.c.h.b16 %v1069
    %v6077 = vunpack.c.l.b16 %v1070
    %v6078 = vunpack.c.h.b16 %v1070
    %v6079 = vunpack.c.l.b16 %v1071
    %v6080 = vunpack.c.h.b16 %v1071
    %v6081 = vunpack.c.l.b16 %v1072
    %v6082 = vunpack.c.h.b16 %v1072
    %v6083 = vunpack.c.l.b16 %v1073
    %v6084 = vunpack.c.h.b16 %v1073
    %v6085 = vunpack.c.l.b16 %v1074
    %v6086 = vunpack.c.h.b16 %v1074
    %v6087 = vunpack.c.l.b16 %v1075
    %v6088 = vunpack.c.h.b16 %v1075
    %v6089 = vunpack.c.l.b16 %v1076
    %v6090 = vunpack.c.h.b16 %v1076
    %v6091 = vunpack.c.l.b16 %v1077
    %v6092 = vunpack.c.h.b16 %v1077
    %v6093 = vunpack.c.l.b16 %v1078
    %v6094 = vunpack.c.h.b16 %v1078
    %v6095 = vunpack.c.l.b16 %v1079
    %v6096 = vunpack.c.h.b16 %v1079
    %v6097 = vunpack.c.l.b16 %v1080
    %v6098 = vunpack.c.h.b16 %v1080
    %v6099 = vunpack.c.l.b16 %v1081
    %v6100 = vunpack.c.h.b16 %v1081
    %v6101 = vunpack.c.l.b16 %v1082
    %v6102 = vunpack.c.h.b16 %v1082
    %v6103 = vunpack.c.l.b16 %v1083
    %v6104 = vunpack.c.h.b16 %v1083
    %v6105 = vunpack.c.l.b16 %v1084
    %v6106 = vunpack.c.h.b16 %v1084
    %v6107 = vunpack.c.l.b16 %v1085
    %v6108 = vunpack.c.h.b16 %v1085
    %v6109 = vunpack.c.l.b16 %v1086
    %v6110 = vunpack.c.h.b16 %v1086
    %v6111 = vunpack.c.l.b16 %v1087
    %v6112 = vunpack.c.h.b16 %v1087
    %v6113 = vunpack.c.l.b16 %v1088
    %v6114 = vunpack.c.h.b16 %v1088
    %v6115 = vunpack.c.l.b16 %v1089
    %v6116 = vunpack.c.h.b16 %v1089
    %v6117 = vunpack.c.l.b16 %v1090
    %v6118 = vunpack.c.h.b16 %v1090
    %v6119 = vunpack.c.l.b16 %v1091
    %v6120 = vunpack.c.h.b16 %v1091
    %v6121 = vunpack.c.l.b16 %v1092
    %v6122 = vunpack.c.h.b16 %v1092
    %v6123 = vunpack.c.l.b16 %v1093
    %v6124 = vunpack.c.h.b16 %v1093
    %v6125 = vunpack.c.l.b16 %v1094
    %v6126 = vunpack.c.h.b16 %v1094
    %v6127 = vunpack.c.l.b16 %v1095
    %v6128 = vunpack.c.h.b16 %v1095
    %v6129 = vunpack.c.l.b16 %v1096
    %v6130 = vunpack.c.h.b16 %v1096
    %v6131 = vunpack.c.l.b16 %v1097
    %v6132 = vunpack.c.h.b16 %v1097
    %v6133 = vunpack.c.l.b16 %v1098
    %v6134 = vunpack.c.h.b16 %v1098
    %v6135 = vunpack.c.l.b16 %v1099
    %v6136 = vunpack.c.h.b16 %v1099
    %v6137 = vunpack.c.l.b16 %v1100
    %v6138 = vunpack.c.h.b16 %v1100
    %v6139 = vunpack.c.l.b16 %v1101
    %v6140 = vunpack.c.h.b16 %v1101
    %v6141 = vpack.c.b16 %v5887, %v5885
    %v6142 = vpack.c.b16 %v5888, %v5886
    %v6143 = vpack.c.b16 %v5891, %v5889
    %v6144 = vpack.c.b16 %v5892, %v5890
    %v6145 = vpack.c.b16 %v5895, %v5893
    %v6146 = vpack.c.b16 %v5896, %v5894
    %v6147 = vpack.c.b16 %v5899, %v5897
    %v6148 = vpack.c.b16 %v5900, %v5898
    %v6149 = vpack.c.b16 %v5903, %v5901
    %v6150 = vpack.c.b16 %v5904, %v5902
    %v6151 = vpack.c.b16 %v5907, %v5905
    %v6152 = vpack.c.b16 %v5908, %v5906
    %v6153 = vpack.c.b16 %v5911, %v5909
    %v6154 = vpack.c.b16 %v5912, %v5910
    %v6155 = vpack.c.b16 %v5915, %v5913
    %v6156 = vpack.c.b16 %v5916, %v5914
    %v6157 = vpack.c.b16 %v5919, %v5917
    %v6158 = vpack.c.b16 %v5920, %v5918
    %v6159 = vpack.c.b16 %v5923, %v5921
    %v6160 = vpack.c.b16 %v5924, %v5922
    %v6161 = vpack.c.b16 %v5927, %v5925
    %v6162 = vpack.c.b16 %v5928, %v5926
    %v6163 = vpack.c.b16 %v5931, %v5929
    %v6164 = vpack.c.b16 %v5932, %v5930
    %v6165 = vpack.c.b16 %v5935, %v5933
    %v6166 = vpack.c.b16 %v5936, %v5934
    %v6167 = vpack.c.b16 %v5939, %v5937
    %v6168 = vpack.c.b16 %v5940, %v5938
    %v6169 = vpack.c.b16 %v5943, %v5941
    %v6170 = vpack.c.b16 %v5944, %v5942
    %v6171 = vpack.c.b16 %v5947, %v5945
    %v6172 = vpack.c.b16 %v5948, %v5946
    %v6173 = vpack.c.b16 %v5951, %v5949
    %v6174 = vpack.c.b16 %v5952, %v5950
    %v6175 = vpack.c.b16 %v5955, %v5953
    %v6176 = vpack.c.b16 %v5956, %v5954
    %v6177 = vpack.c.b16 %v5959, %v5957
    %v6178 = vpack.c.b16 %v5960, %v5958
    %v6179 = vpack.c.b16 %v5963, %v5961
    %v6180 = vpack.c.b16 %v5964, %v5962
    %v6181 = vpack.c.b16 %v5967, %v5965
    %v6182 = vpack.c.b16 %v5968, %v5966
    %v6183 = vpack.c.b16 %v5971, %v5969
    %v6184 = vpack.c.b16 %v5972, %v5970
    %v6185 = vpack.c.b16 %v5975, %v5973
    %v6186 = vpack.c.b16 %v5976, %v5974
    %v6187 = vpack.c.b16 %v5979, %v5977
    %v6188 = vpack.c.b16 %v5980, %v5978
    %v6189 = vpack.c.b16 %v5983, %v5981
    %v6190 = vpack.c.b16 %v5984, %v5982
    %v6191 = vpack.c.b16 %v5987, %v5985
    %v6192 = vpack.c.b16 %v5988, %v5986
    %v6193 = vpack.c.b16 %v5991, %v5989
    %v6194 = vpack.c.b16 %v5992, %v5990
    %v6195 = vpack.c.b16 %v5995, %v5993
    %v6196 = vpack.c.b16 %v5996, %v5994
    %v6197 = vpack.c.b16 %v5999, %v5997
    %v6198 = vpack.c.b16 %v6000, %v5998
    %v6199 = vpack.c.b16 %v6003, %v6001
    %v6200 = vpack.c.b16 %v6004, %v6002
    %v6201 = vpack.c.b16 %v6007, %v6005
    %v6202 = vpack.c.b16 %v6008, %v6006
    %v6203 = vpack.c.b16 %v6011, %v6009
    %v6204 = vpack.c.b16 %v6012, %v6010
    %v6205 = vpack.c.b16 %v6015, %v6013
    %v6206 = vpack.c.b16 %v6016, %v6014
    %v6207 = vpack.c.b16 %v6019, %v6017
    %v6208 = vpack.c.b16 %v6020, %v6018
    %v6209 = vpack.c.b16 %v6023, %v6021
    %v6210 = vpack.c.b16 %v6024, %v6022
    %v6211 = vpack.c.b16 %v6027, %v6025
    %v6212 = vpack.c.b16 %v6028, %v6026
    %v6213 = vpack.c.b16 %v6031, %v6029
    %v6214 = vpack.c.b16 %v6032, %v6030
    %v6215 = vpack.c.b16 %v6035, %v6033
    %v6216 = vpack.c.b16 %v6036, %v6034
    %v6217 = vpack.c.b16 %v6039, %v6037
    %v6218 = vpack.c.b16 %v6040, %v6038
    %v6219 = vpack.c.b16 %v6043, %v6041
    %v6220 = vpack.c.b16 %v6044, %v6042
    %v6221 = vpack.c.b16 %v6047, %v6045
    %v6222 = vpack.c.b16 %v6048, %v6046
    %v6223 = vpack.c.b16 %v6051, %v6049
    %v6224 = vpack.c.b16 %v6052, %v6050
    %v6225 = vpack.c.b16 %v6055, %v6053
    %v6226 = vpack.c.b16 %v6056, %v6054
    %v6227 = vpack.c.b16 %v6059, %v6057
    %v6228 = vpack.c.b16 %v6060, %v6058
    %v6229 = vpack.c.b16 %v6063, %v6061
    %v6230 = vpack.c.b16 %v6064, %v6062
    %v6231 = vpack.c.b16 %v6067, %v6065
    %v6232 = vpack.c.b16 %v6068, %v6066
    %v6233 = vpack.c.b16 %v6071, %v6069
    %v6234 = vpack.c.b16 %v6072, %v6070
    %v6235 = vpack.c.b16 %v6075, %v6073
    %v6236 = vpack.c.b16 %v6076, %v6074
    %v6237 = vpack.c.b16 %v6079, %v6077
    %v6238 = vpack.c.b16 %v6080, %v6078
    %v6239 = vpack.c.b16 %v6083, %v6081
    %v6240 = vpack.c.b16 %v6084, %v6082
    %v6241 = vpack.c.b16 %v6087, %v6085
    %v6242 = vpack.c.b16 %v6088, %v6086
    %v6243 = vpack.c.b16 %v6091, %v6089
    %v6244 = vpack.c.b16 %v6092, %v6090
    %v6245 = vpack.c.b16 %v6095, %v6093
    %v6246 = vpack.c.b16 %v6096, %v6094
    %v6247 = vpack.c.b16 %v6099, %v6097
    %v6248 = vpack.c.b16 %v6100, %v6098
    %v6249 = vpack.c.b16 %v6103, %v6101
    %v6250 = vpack.c.b16 %v6104, %v6102
    %v6251 = vpack.c.b16 %v6107, %v6105
    %v6252 = vpack.c.b16 %v6108, %v6106
    %v6253 = vpack.c.b16 %v6111, %v6109
    %v6254 = vpack.c.b16 %v6112, %v6110
    %v6255 = vpack.c.b16 %v6115, %v6113
    %v6256 = vpack.c.b16 %v6116, %v6114
    %v6257 = vpack.c.b16 %v6119, %v6117
    %v6258 = vpack.c.b16 %v6120, %v6118
    %v6259 = vpack.c.b16 %v6123, %v6121
    %v6260 = vpack.c.b16 %v6124, %v6122
    %v6261 = vpack.c.b16 %v6127, %v6125
    %v6262 = vpack.c.b16 %v6128, %v6126
    %v6263 = vpack.c.b16 %v6131, %v6129
    %v6264 = vpack.c.b16 %v6132, %v6130
    %v6265 = vpack.c.b16 %v6135, %v6133
    %v6266 = vpack.c.b16 %v6136, %v6134
    %v6267 = vpack.c.b16 %v6139, %v6137
    %v6268 = vpack.c.b16 %v6140, %v6138
    %6397 = vmatpush.bf16.msra.mxu0 %v6155
    %6398 = vmatpush.bf16.msra.mxu0 %v6153
    %6399 = vmatpush.bf16.msra.mxu0 %v6151
    %6400 = vmatpush.bf16.msra.mxu0 %v6149
    %6401 = vmatpush.bf16.msra.mxu0 %v6147
    %6402 = vmatpush.bf16.msra.mxu0 %v6145
    %6403 = vmatpush.bf16.msra.mxu0 %v6143
    %6404 = vmatpush.bf16.msra.mxu0 %v6141
    %6405 = vmatmul.bf16.gmra.mxu0 %v5749
    %v6406 = vpop.f32.mrf.mxu0
    %v6407 = vadd.f32 %v1122, %v6406
    %v6408 = vpop.f32.mrf.mxu0
    %6409 = vdwg.mxu0
    %6410 = vmatpush.bf16.msra.mxu0 %v6171
    %6411 = vmatpush.bf16.msra.mxu0 %v6169
    %6412 = vmatpush.bf16.msra.mxu0 %v6167
    %6413 = vmatpush.bf16.msra.mxu0 %v6165
    %6414 = vmatpush.bf16.msra.mxu0 %v6163
    %6415 = vmatpush.bf16.msra.mxu0 %v6161
    %6416 = vmatpush.bf16.msra.mxu0 %v6159
    %6417 = vmatpush.bf16.msra.mxu0 %v6157
    %6418 = vmatmul.bf16.gmra.mxu0 %v5750
    %v6419 = vpop.f32.mrf.mxu0
    %v6420 = vadd.f32 %v6407, %v6419
    %v6421 = vpop.f32.mrf.mxu0
    %6422 = vdwg.mxu0
    %6423 = vmatpush.bf16.msra.mxu0 %v6187
    %6424 = vmatpush.bf16.msra.mxu0 %v6185
    %6425 = vmatpush.bf16.msra.mxu0 %v6183
    %6426 = vmatpush.bf16.msra.mxu0 %v6181
    %6427 = vmatpush.bf16.msra.mxu0 %v6179
    %6428 = vmatpush.bf16.msra.mxu0 %v6177
    %6429 = vmatpush.bf16.msra.mxu0 %v6175
    %6430 = vmatpush.bf16.msra.mxu0 %v6173
    %6431 = vmatmul.bf16.gmra.mxu0 %v5751
    %v6432 = vpop.f32.mrf.mxu0
    %v6433 = vadd.f32 %v6420, %v6432
    %v6434 = vpop.f32.mrf.mxu0
    %6435 = vdwg.mxu0
    %6436 = vmatpush.bf16.msra.mxu0 %v6203
    %6437 = vmatpush.bf16.msra.mxu0 %v6201
    %6438 = vmatpush.bf16.msra.mxu0 %v6199
    %6439 = vmatpush.bf16.msra.mxu0 %v6197
    %6440 = vmatpush.bf16.msra.mxu0 %v6195
    %6441 = vmatpush.bf16.msra.mxu0 %v6193
    %6442 = vmatpush.bf16.msra.mxu0 %v6191
    %6443 = vmatpush.bf16.msra.mxu0 %v6189
    %6444 = vmatmul.bf16.gmra.mxu0 %v5752
    %v6445 = vpop.f32.mrf.mxu0
    %v6446 = vadd.f32 %v6433, %v6445
    %v6447 = vpop.f32.mrf.mxu0
    %6448 = vdwg.mxu0
    %6449 = vmatpush.bf16.msra.mxu0 %v6219
    %6450 = vmatpush.bf16.msra.mxu0 %v6217
    %6451 = vmatpush.bf16.msra.mxu0 %v6215
    %6452 = vmatpush.bf16.msra.mxu0 %v6213
    %6453 = vmatpush.bf16.msra.mxu0 %v6211
    %6454 = vmatpush.bf16.msra.mxu0 %v6209
    %6455 = vmatpush.bf16.msra.mxu0 %v6207
    %6456 = vmatpush.bf16.msra.mxu0 %v6205
    %6457 = vmatmul.bf16.gmra.mxu0 %v5753
    %v6458 = vpop.f32.mrf.mxu0
    %v6459 = vadd.f32 %v6446, %v6458
    %v6460 = vpop.f32.mrf.mxu0
    %6461 = vdwg.mxu0
    %6462 = vmatpush.bf16.msra.mxu0 %v6235
    %6463 = vmatpush.bf16.msra.mxu0 %v6233
    %6464 = vmatpush.bf16.msra.mxu0 %v6231
    %6465 = vmatpush.bf16.msra.mxu0 %v6229
    %6466 = vmatpush.bf16.msra.mxu0 %v6227
    %6467 = vmatpush.bf16.msra.mxu0 %v6225
    %6468 = vmatpush.bf16.msra.mxu0 %v6223
    %6469 = vmatpush.bf16.msra.mxu0 %v6221
    %6470 = vmatmul.bf16.gmra.mxu0 %v5754
    %v6471 = vpop.f32.mrf.mxu0
    %v6472 = vadd.f32 %v6459, %v6471
    %v6473 = vpop.f32.mrf.mxu0
    %6474 = vdwg.mxu0
    %6475 = vmatpush.bf16.msra.mxu0 %v6251
    %6476 = vmatpush.bf16.msra.mxu0 %v6249
    %6477 = vmatpush.bf16.msra.mxu0 %v6247
    %6478 = vmatpush.bf16.msra.mxu0 %v6245
    %6479 = vmatpush.bf16.msra.mxu0 %v6243
    %6480 = vmatpush.bf16.msra.mxu0 %v6241
    %6481 = vmatpush.bf16.msra.mxu0 %v6239
    %6482 = vmatpush.bf16.msra.mxu0 %v6237
    %6483 = vmatmul.bf16.gmra.mxu0 %v5755
    %v6484 = vpop.f32.mrf.mxu0
    %v6485 = vadd.f32 %v6472, %v6484
    %v6486 = vpop.f32.mrf.mxu0
    %6487 = vdwg.mxu0
    %6488 = vmatpush.bf16.msra.mxu0 %v6267
    %6489 = vmatpush.bf16.msra.mxu0 %v6265
    %6490 = vmatpush.bf16.msra.mxu0 %v6263
    %6491 = vmatpush.bf16.msra.mxu0 %v6261
    %6492 = vmatpush.bf16.msra.mxu0 %v6259
    %6493 = vmatpush.bf16.msra.mxu0 %v6257
    %6494 = vmatpush.bf16.msra.mxu0 %v6255
    %6495 = vmatpush.bf16.msra.mxu0 %v6253
    %6496 = vmatmul.bf16.gmra.mxu0 %v5756
    %v6497 = vpop.f32.mrf.mxu0
    %v6498 = vadd.f32 %v6485, %v6497
    %v6499 = vpop.f32.mrf.mxu0
    %6500 = vdwg.mxu0
    %6501 = vmatpush.bf16.msra.mxu0 %v6156
    %6502 = vmatpush.bf16.msra.mxu0 %v6154
    %6503 = vmatpush.bf16.msra.mxu0 %v6152
    %6504 = vmatpush.bf16.msra.mxu0 %v6150
    %6505 = vmatpush.bf16.msra.mxu0 %v6148
    %6506 = vmatpush.bf16.msra.mxu0 %v6146
    %6507 = vmatpush.bf16.msra.mxu0 %v6144
    %6508 = vmatpush.bf16.msra.mxu0 %v6142
    %6509 = vmatmul.bf16.gmra.mxu0 %v5749
    %v6510 = vpop.f32.mrf.mxu0
    %v6511 = vadd.f32 %v1123, %v6510
    %v6512 = vpop.f32.mrf.mxu0
    %6513 = vdwg.mxu0
    %6514 = vmatpush.bf16.msra.mxu0 %v6172
    %6515 = vmatpush.bf16.msra.mxu0 %v6170
    %6516 = vmatpush.bf16.msra.mxu0 %v6168
    %6517 = vmatpush.bf16.msra.mxu0 %v6166
    %6518 = vmatpush.bf16.msra.mxu0 %v6164
    %6519 = vmatpush.bf16.msra.mxu0 %v6162
    %6520 = vmatpush.bf16.msra.mxu0 %v6160
    %6521 = vmatpush.bf16.msra.mxu0 %v6158
    %6522 = vmatmul.bf16.gmra.mxu0 %v5750
    %v6523 = vpop.f32.mrf.mxu0
    %v6524 = vadd.f32 %v6511, %v6523
    %v6525 = vpop.f32.mrf.mxu0
    %6526 = vdwg.mxu0
    %6527 = vmatpush.bf16.msra.mxu0 %v6188
    %6528 = vmatpush.bf16.msra.mxu0 %v6186
    %6529 = vmatpush.bf16.msra.mxu0 %v6184
    %6530 = vmatpush.bf16.msra.mxu0 %v6182
    %6531 = vmatpush.bf16.msra.mxu0 %v6180
    %6532 = vmatpush.bf16.msra.mxu0 %v6178
    %6533 = vmatpush.bf16.msra.mxu0 %v6176
    %6534 = vmatpush.bf16.msra.mxu0 %v6174
    %6535 = vmatmul.bf16.gmra.mxu0 %v5751
    %v6536 = vpop.f32.mrf.mxu0
    %v6537 = vadd.f32 %v6524, %v6536
    %v6538 = vpop.f32.mrf.mxu0
    %6539 = vdwg.mxu0
    %6540 = vmatpush.bf16.msra.mxu0 %v6204
    %6541 = vmatpush.bf16.msra.mxu0 %v6202
    %6542 = vmatpush.bf16.msra.mxu0 %v6200
    %6543 = vmatpush.bf16.msra.mxu0 %v6198
    %6544 = vmatpush.bf16.msra.mxu0 %v6196
    %6545 = vmatpush.bf16.msra.mxu0 %v6194
    %6546 = vmatpush.bf16.msra.mxu0 %v6192
    %6547 = vmatpush.bf16.msra.mxu0 %v6190
    %6548 = vmatmul.bf16.gmra.mxu0 %v5752
    %v6549 = vpop.f32.mrf.mxu0
    %v6550 = vadd.f32 %v6537, %v6549
    %v6551 = vpop.f32.mrf.mxu0
    %6552 = vdwg.mxu0
    %6553 = vmatpush.bf16.msra.mxu0 %v6220
    %6554 = vmatpush.bf16.msra.mxu0 %v6218
    %6555 = vmatpush.bf16.msra.mxu0 %v6216
    %6556 = vmatpush.bf16.msra.mxu0 %v6214
    %6557 = vmatpush.bf16.msra.mxu0 %v6212
    %6558 = vmatpush.bf16.msra.mxu0 %v6210
    %6559 = vmatpush.bf16.msra.mxu0 %v6208
    %6560 = vmatpush.bf16.msra.mxu0 %v6206
    %6561 = vmatmul.bf16.gmra.mxu0 %v5753
    %v6562 = vpop.f32.mrf.mxu0
    %v6563 = vadd.f32 %v6550, %v6562
    %v6564 = vpop.f32.mrf.mxu0
    %6565 = vdwg.mxu0
    %6566 = vmatpush.bf16.msra.mxu0 %v6236
    %6567 = vmatpush.bf16.msra.mxu0 %v6234
    %6568 = vmatpush.bf16.msra.mxu0 %v6232
    %6569 = vmatpush.bf16.msra.mxu0 %v6230
    %6570 = vmatpush.bf16.msra.mxu0 %v6228
    %6571 = vmatpush.bf16.msra.mxu0 %v6226
    %6572 = vmatpush.bf16.msra.mxu0 %v6224
    %6573 = vmatpush.bf16.msra.mxu0 %v6222
    %6574 = vmatmul.bf16.gmra.mxu0 %v5754
    %v6575 = vpop.f32.mrf.mxu0
    %v6576 = vadd.f32 %v6563, %v6575
    %v6577 = vpop.f32.mrf.mxu0
    %6578 = vdwg.mxu0
    %6579 = vmatpush.bf16.msra.mxu0 %v6252
    %6580 = vmatpush.bf16.msra.mxu0 %v6250
    %6581 = vmatpush.bf16.msra.mxu0 %v6248
    %6582 = vmatpush.bf16.msra.mxu0 %v6246
    %6583 = vmatpush.bf16.msra.mxu0 %v6244
    %6584 = vmatpush.bf16.msra.mxu0 %v6242
    %6585 = vmatpush.bf16.msra.mxu0 %v6240
    %6586 = vmatpush.bf16.msra.mxu0 %v6238
    %6587 = vmatmul.bf16.gmra.mxu0 %v5755
    %v6588 = vpop.f32.mrf.mxu0
    %v6589 = vadd.f32 %v6576, %v6588
    %v6590 = vpop.f32.mrf.mxu0
    %6591 = vdwg.mxu0
    %6592 = vmatpush.bf16.msra.mxu0 %v6268
    %6593 = vmatpush.bf16.msra.mxu0 %v6266
    %6594 = vmatpush.bf16.msra.mxu0 %v6264
    %6595 = vmatpush.bf16.msra.mxu0 %v6262
    %6596 = vmatpush.bf16.msra.mxu0 %v6260
    %6597 = vmatpush.bf16.msra.mxu0 %v6258
    %6598 = vmatpush.bf16.msra.mxu0 %v6256
    %6599 = vmatpush.bf16.msra.mxu0 %v6254
    %6600 = vmatmul.bf16.gmra.mxu0 %v5756
    %v6601 = vpop.f32.mrf.mxu0
    %v6602 = vadd.f32 %v6589, %v6601
    %v6603 = vpop.f32.mrf.mxu0
    %6604 = vdwg.mxu0
    %v6605 = vadd.f32 %v332, %v6498
    %v6606 = vadd.f32 %v333, %v6602
    %v6607 = vpack.c.bf16 %v6605, %v6605
    %v6608 = vpack.c.bf16 %v6606, %v6606
    %6609 = vmatpush.bf16.msra.mxu0 %v1933
    %6610 = vmatpush.bf16.msra.mxu0 %v1925
    %6611 = vmatpush.bf16.msra.mxu0 %v1917
    %6612 = vmatpush.bf16.msra.mxu0 %v1909
    %6613 = vmatpush.bf16.msra.mxu0 %v1901
    %6614 = vmatpush.bf16.msra.mxu0 %v1893
    %6615 = vmatpush.bf16.msra.mxu0 %v1885
    %6616 = vmatpush.bf16.msra.mxu0 %v1877
    %6617 = vmatmul.bf16.gmra.mxu0 %v6607
    %v6618 = vpop.f32.mrf.mxu0
    %v6619 = vadd.f32 0.0, %v6618
    %v6620 = vpop.f32.mrf.mxu0
    %6621 = vdwg.mxu0
    %6622 = vmatpush.bf16.msra.mxu0 %v1997
    %6623 = vmatpush.bf16.msra.mxu0 %v1989
    %6624 = vmatpush.bf16.msra.mxu0 %v1981
    %6625 = vmatpush.bf16.msra.mxu0 %v1973
    %6626 = vmatpush.bf16.msra.mxu0 %v1965
    %6627 = vmatpush.bf16.msra.mxu0 %v1957
    %6628 = vmatpush.bf16.msra.mxu0 %v1949
    %6629 = vmatpush.bf16.msra.mxu0 %v1941
    %6630 = vmatmul.bf16.gmra.mxu0 %v6608
    %v6631 = vpop.f32.mrf.mxu0
    %v6632 = vadd.f32 %v6619, %v6631
    %v6633 = vpop.f32.mrf.mxu0
    %6634 = vdwg.mxu0
    %6635 = vmatpush.bf16.msra.mxu0 %v1934
    %6636 = vmatpush.bf16.msra.mxu0 %v1926
    %6637 = vmatpush.bf16.msra.mxu0 %v1918
    %6638 = vmatpush.bf16.msra.mxu0 %v1910
    %6639 = vmatpush.bf16.msra.mxu0 %v1902
    %6640 = vmatpush.bf16.msra.mxu0 %v1894
    %6641 = vmatpush.bf16.msra.mxu0 %v1886
    %6642 = vmatpush.bf16.msra.mxu0 %v1878
    %6643 = vmatmul.bf16.gmra.mxu0 %v6607
    %v6644 = vpop.f32.mrf.mxu0
    %v6645 = vadd.f32 0.0, %v6644
    %v6646 = vpop.f32.mrf.mxu0
    %6647 = vdwg.mxu0
    %6648 = vmatpush.bf16.msra.mxu0 %v1998
    %6649 = vmatpush.bf16.msra.mxu0 %v1990
    %6650 = vmatpush.bf16.msra.mxu0 %v1982
    %6651 = vmatpush.bf16.msra.mxu0 %v1974
    %6652 = vmatpush.bf16.msra.mxu0 %v1966
    %6653 = vmatpush.bf16.msra.mxu0 %v1958
    %6654 = vmatpush.bf16.msra.mxu0 %v1950
    %6655 = vmatpush.bf16.msra.mxu0 %v1942
    %6656 = vmatmul.bf16.gmra.mxu0 %v6608
    %v6657 = vpop.f32.mrf.mxu0
    %v6658 = vadd.f32 %v6645, %v6657
    %v6659 = vpop.f32.mrf.mxu0
    %6660 = vdwg.mxu0
    %6661 = vmatpush.bf16.msra.mxu0 %v1935
    %6662 = vmatpush.bf16.msra.mxu0 %v1927
    %6663 = vmatpush.bf16.msra.mxu0 %v1919
    %6664 = vmatpush.bf16.msra.mxu0 %v1911
    %6665 = vmatpush.bf16.msra.mxu0 %v1903
    %6666 = vmatpush.bf16.msra.mxu0 %v1895
    %6667 = vmatpush.bf16.msra.mxu0 %v1887
    %6668 = vmatpush.bf16.msra.mxu0 %v1879
    %6669 = vmatmul.bf16.gmra.mxu0 %v6607
    %v6670 = vpop.f32.mrf.mxu0
    %v6671 = vadd.f32 0.0, %v6670
    %v6672 = vpop.f32.mrf.mxu0
    %6673 = vdwg.mxu0
    %6674 = vmatpush.bf16.msra.mxu0 %v1999
    %6675 = vmatpush.bf16.msra.mxu0 %v1991
    %6676 = vmatpush.bf16.msra.mxu0 %v1983
    %6677 = vmatpush.bf16.msra.mxu0 %v1975
    %6678 = vmatpush.bf16.msra.mxu0 %v1967
    %6679 = vmatpush.bf16.msra.mxu0 %v1959
    %6680 = vmatpush.bf16.msra.mxu0 %v1951
    %6681 = vmatpush.bf16.msra.mxu0 %v1943
    %6682 = vmatmul.bf16.gmra.mxu0 %v6608
    %v6683 = vpop.f32.mrf.mxu0
    %v6684 = vadd.f32 %v6671, %v6683
    %v6685 = vpop.f32.mrf.mxu0
    %6686 = vdwg.mxu0
    %6687 = vmatpush.bf16.msra.mxu0 %v1936
    %6688 = vmatpush.bf16.msra.mxu0 %v1928
    %6689 = vmatpush.bf16.msra.mxu0 %v1920
    %6690 = vmatpush.bf16.msra.mxu0 %v1912
    %6691 = vmatpush.bf16.msra.mxu0 %v1904
    %6692 = vmatpush.bf16.msra.mxu0 %v1896
    %6693 = vmatpush.bf16.msra.mxu0 %v1888
    %6694 = vmatpush.bf16.msra.mxu0 %v1880
    %6695 = vmatmul.bf16.gmra.mxu0 %v6607
    %v6696 = vpop.f32.mrf.mxu0
    %v6697 = vadd.f32 0.0, %v6696
    %v6698 = vpop.f32.mrf.mxu0
    %6699 = vdwg.mxu0
    %6700 = vmatpush.bf16.msra.mxu0 %v2000
    %6701 = vmatpush.bf16.msra.mxu0 %v1992
    %6702 = vmatpush.bf16.msra.mxu0 %v1984
    %6703 = vmatpush.bf16.msra.mxu0 %v1976
    %6704 = vmatpush.bf16.msra.mxu0 %v1968
    %6705 = vmatpush.bf16.msra.mxu0 %v1960
    %6706 = vmatpush.bf16.msra.mxu0 %v1952
    %6707 = vmatpush.bf16.msra.mxu0 %v1944
    %6708 = vmatmul.bf16.gmra.mxu0 %v6608
    %v6709 = vpop.f32.mrf.mxu0
    %v6710 = vadd.f32 %v6697, %v6709
    %v6711 = vpop.f32.mrf.mxu0
    %6712 = vdwg.mxu0
    %6713 = vmatpush.bf16.msra.mxu0 %v1937
    %6714 = vmatpush.bf16.msra.mxu0 %v1929
    %6715 = vmatpush.bf16.msra.mxu0 %v1921
    %6716 = vmatpush.bf16.msra.mxu0 %v1913
    %6717 = vmatpush.bf16.msra.mxu0 %v1905
    %6718 = vmatpush.bf16.msra.mxu0 %v1897
    %6719 = vmatpush.bf16.msra.mxu0 %v1889
    %6720 = vmatpush.bf16.msra.mxu0 %v1881
    %6721 = vmatmul.bf16.gmra.mxu0 %v6607
    %v6722 = vpop.f32.mrf.mxu0
    %v6723 = vadd.f32 0.0, %v6722
    %v6724 = vpop.f32.mrf.mxu0
    %6725 = vdwg.mxu0
    %6726 = vmatpush.bf16.msra.mxu0 %v2001
    %6727 = vmatpush.bf16.msra.mxu0 %v1993
    %6728 = vmatpush.bf16.msra.mxu0 %v1985
    %6729 = vmatpush.bf16.msra.mxu0 %v1977
    %6730 = vmatpush.bf16.msra.mxu0 %v1969
    %6731 = vmatpush.bf16.msra.mxu0 %v1961
    %6732 = vmatpush.bf16.msra.mxu0 %v1953
    %6733 = vmatpush.bf16.msra.mxu0 %v1945
    %6734 = vmatmul.bf16.gmra.mxu0 %v6608
    %v6735 = vpop.f32.mrf.mxu0
    %v6736 = vadd.f32 %v6723, %v6735
    %v6737 = vpop.f32.mrf.mxu0
    %6738 = vdwg.mxu0
    %6739 = vmatpush.bf16.msra.mxu0 %v1938
    %6740 = vmatpush.bf16.msra.mxu0 %v1930
    %6741 = vmatpush.bf16.msra.mxu0 %v1922
    %6742 = vmatpush.bf16.msra.mxu0 %v1914
    %6743 = vmatpush.bf16.msra.mxu0 %v1906
    %6744 = vmatpush.bf16.msra.mxu0 %v1898
    %6745 = vmatpush.bf16.msra.mxu0 %v1890
    %6746 = vmatpush.bf16.msra.mxu0 %v1882
    %6747 = vmatmul.bf16.gmra.mxu0 %v6607
    %v6748 = vpop.f32.mrf.mxu0
    %v6749 = vadd.f32 0.0, %v6748
    %v6750 = vpop.f32.mrf.mxu0
    %6751 = vdwg.mxu0
    %6752 = vmatpush.bf16.msra.mxu0 %v2002
    %6753 = vmatpush.bf16.msra.mxu0 %v1994
    %6754 = vmatpush.bf16.msra.mxu0 %v1986
    %6755 = vmatpush.bf16.msra.mxu0 %v1978
    %6756 = vmatpush.bf16.msra.mxu0 %v1970
    %6757 = vmatpush.bf16.msra.mxu0 %v1962
    %6758 = vmatpush.bf16.msra.mxu0 %v1954
    %6759 = vmatpush.bf16.msra.mxu0 %v1946
    %6760 = vmatmul.bf16.gmra.mxu0 %v6608
    %v6761 = vpop.f32.mrf.mxu0
    %v6762 = vadd.f32 %v6749, %v6761
    %v6763 = vpop.f32.mrf.mxu0
    %6764 = vdwg.mxu0
    %6765 = vmatpush.bf16.msra.mxu0 %v1939
    %6766 = vmatpush.bf16.msra.mxu0 %v1931
    %6767 = vmatpush.bf16.msra.mxu0 %v1923
    %6768 = vmatpush.bf16.msra.mxu0 %v1915
    %6769 = vmatpush.bf16.msra.mxu0 %v1907
    %6770 = vmatpush.bf16.msra.mxu0 %v1899
    %6771 = vmatpush.bf16.msra.mxu0 %v1891
    %6772 = vmatpush.bf16.msra.mxu0 %v1883
    %6773 = vmatmul.bf16.gmra.mxu0 %v6607
    %v6774 = vpop.f32.mrf.mxu0
    %v6775 = vadd.f32 0.0, %v6774
    %v6776 = vpop.f32.mrf.mxu0
    %6777 = vdwg.mxu0
    %6778 = vmatpush.bf16.msra.mxu0 %v2003
    %6779 = vmatpush.bf16.msra.mxu0 %v1995
    %6780 = vmatpush.bf16.msra.mxu0 %v1987
    %6781 = vmatpush.bf16.msra.mxu0 %v1979
    %6782 = vmatpush.bf16.msra.mxu0 %v1971
    %6783 = vmatpush.bf16.msra.mxu0 %v1963
    %6784 = vmatpush.bf16.msra.mxu0 %v1955
    %6785 = vmatpush.bf16.msra.mxu0 %v1947
    %6786 = vmatmul.bf16.gmra.mxu0 %v6608
    %v6787 = vpop.f32.mrf.mxu0
    %v6788 = vadd.f32 %v6775, %v6787
    %v6789 = vpop.f32.mrf.mxu0
    %6790 = vdwg.mxu0
    %6791 = vmatpush.bf16.msra.mxu0 %v1940
    %6792 = vmatpush.bf16.msra.mxu0 %v1932
    %6793 = vmatpush.bf16.msra.mxu0 %v1924
    %6794 = vmatpush.bf16.msra.mxu0 %v1916
    %6795 = vmatpush.bf16.msra.mxu0 %v1908
    %6796 = vmatpush.bf16.msra.mxu0 %v1900
    %6797 = vmatpush.bf16.msra.mxu0 %v1892
    %6798 = vmatpush.bf16.msra.mxu0 %v1884
    %6799 = vmatmul.bf16.gmra.mxu0 %v6607
    %v6800 = vpop.f32.mrf.mxu0
    %v6801 = vadd.f32 0.0, %v6800
    %v6802 = vpop.f32.mrf.mxu0
    %6803 = vdwg.mxu0
    %6804 = vmatpush.bf16.msra.mxu0 %v2004
    %6805 = vmatpush.bf16.msra.mxu0 %v1996
    %6806 = vmatpush.bf16.msra.mxu0 %v1988
    %6807 = vmatpush.bf16.msra.mxu0 %v1980
    %6808 = vmatpush.bf16.msra.mxu0 %v1972
    %6809 = vmatpush.bf16.msra.mxu0 %v1964
    %6810 = vmatpush.bf16.msra.mxu0 %v1956
    %6811 = vmatpush.bf16.msra.mxu0 %v1948
    %6812 = vmatmul.bf16.gmra.mxu0 %v6608
    %v6813 = vpop.f32.mrf.mxu0
    %v6814 = vadd.f32 %v6801, %v6813
    %v6815 = vpop.f32.mrf.mxu0
    %6816 = vdwg.mxu0
    %v6817 = vadd.f32 %v1397, %v6632
    %v6818 = vadd.f32 %v1410, %v6658
    %v6819 = vadd.f32 %v1423, %v6684
    %v6820 = vadd.f32 %v1436, %v6710
    %v6821 = vadd.f32 %v1449, %v6736
    %v6822 = vadd.f32 %v1462, %v6762
    %v6823 = vadd.f32 %v1475, %v6788
    %v6824 = vadd.f32 %v1488, %v6814
    %v6825 = vpack.c.bf16 %v6817, %v6817
    %v6826 = vpack.c.bf16 %v6818, %v6818
    %v6827 = vpack.c.bf16 %v6819, %v6819
    %v6828 = vpack.c.bf16 %v6820, %v6820
    %v6829 = vpack.c.bf16 %v6821, %v6821
    %v6830 = vpack.c.bf16 %v6822, %v6822
    %v6831 = vpack.c.bf16 %v6823, %v6823
    %v6832 = vpack.c.bf16 %v6824, %v6824
    %6833 = vmatpush.bf16.msra.mxu0 %v3949
    %6834 = vmatpush.bf16.msra.mxu0 %v3941
    %6835 = vmatpush.bf16.msra.mxu0 %v3933
    %6836 = vmatpush.bf16.msra.mxu0 %v3925
    %6837 = vmatpush.bf16.msra.mxu0 %v3917
    %6838 = vmatpush.bf16.msra.mxu0 %v3909
    %6839 = vmatpush.bf16.msra.mxu0 %v3901
    %6840 = vmatpush.bf16.msra.mxu0 %v3893
    %6841 = vmatmul.bf16.gmra.mxu0 %v6825
    %v6842 = vpop.f32.mrf.mxu0
    %v6843 = vadd.f32 %v1104, %v6842
    %v6844 = vpop.f32.mrf.mxu0
    %6845 = vdwg.mxu0
    %6846 = vmatpush.bf16.msra.mxu0 %v4013
    %6847 = vmatpush.bf16.msra.mxu0 %v4005
    %6848 = vmatpush.bf16.msra.mxu0 %v3997
    %6849 = vmatpush.bf16.msra.mxu0 %v3989
    %6850 = vmatpush.bf16.msra.mxu0 %v3981
    %6851 = vmatpush.bf16.msra.mxu0 %v3973
    %6852 = vmatpush.bf16.msra.mxu0 %v3965
    %6853 = vmatpush.bf16.msra.mxu0 %v3957
    %6854 = vmatmul.bf16.gmra.mxu0 %v6826
    %v6855 = vpop.f32.mrf.mxu0
    %v6856 = vadd.f32 %v6843, %v6855
    %v6857 = vpop.f32.mrf.mxu0
    %6858 = vdwg.mxu0
    %6859 = vmatpush.bf16.msra.mxu0 %v4077
    %6860 = vmatpush.bf16.msra.mxu0 %v4069
    %6861 = vmatpush.bf16.msra.mxu0 %v4061
    %6862 = vmatpush.bf16.msra.mxu0 %v4053
    %6863 = vmatpush.bf16.msra.mxu0 %v4045
    %6864 = vmatpush.bf16.msra.mxu0 %v4037
    %6865 = vmatpush.bf16.msra.mxu0 %v4029
    %6866 = vmatpush.bf16.msra.mxu0 %v4021
    %6867 = vmatmul.bf16.gmra.mxu0 %v6827
    %v6868 = vpop.f32.mrf.mxu0
    %v6869 = vadd.f32 %v6856, %v6868
    %v6870 = vpop.f32.mrf.mxu0
    %6871 = vdwg.mxu0
    %6872 = vmatpush.bf16.msra.mxu0 %v4141
    %6873 = vmatpush.bf16.msra.mxu0 %v4133
    %6874 = vmatpush.bf16.msra.mxu0 %v4125
    %6875 = vmatpush.bf16.msra.mxu0 %v4117
    %6876 = vmatpush.bf16.msra.mxu0 %v4109
    %6877 = vmatpush.bf16.msra.mxu0 %v4101
    %6878 = vmatpush.bf16.msra.mxu0 %v4093
    %6879 = vmatpush.bf16.msra.mxu0 %v4085
    %6880 = vmatmul.bf16.gmra.mxu0 %v6828
    %v6881 = vpop.f32.mrf.mxu0
    %v6882 = vadd.f32 %v6869, %v6881
    %v6883 = vpop.f32.mrf.mxu0
    %6884 = vdwg.mxu0
    %6885 = vmatpush.bf16.msra.mxu0 %v4205
    %6886 = vmatpush.bf16.msra.mxu0 %v4197
    %6887 = vmatpush.bf16.msra.mxu0 %v4189
    %6888 = vmatpush.bf16.msra.mxu0 %v4181
    %6889 = vmatpush.bf16.msra.mxu0 %v4173
    %6890 = vmatpush.bf16.msra.mxu0 %v4165
    %6891 = vmatpush.bf16.msra.mxu0 %v4157
    %6892 = vmatpush.bf16.msra.mxu0 %v4149
    %6893 = vmatmul.bf16.gmra.mxu0 %v6829
    %v6894 = vpop.f32.mrf.mxu0
    %v6895 = vadd.f32 %v6882, %v6894
    %v6896 = vpop.f32.mrf.mxu0
    %6897 = vdwg.mxu0
    %6898 = vmatpush.bf16.msra.mxu0 %v4269
    %6899 = vmatpush.bf16.msra.mxu0 %v4261
    %6900 = vmatpush.bf16.msra.mxu0 %v4253
    %6901 = vmatpush.bf16.msra.mxu0 %v4245
    %6902 = vmatpush.bf16.msra.mxu0 %v4237
    %6903 = vmatpush.bf16.msra.mxu0 %v4229
    %6904 = vmatpush.bf16.msra.mxu0 %v4221
    %6905 = vmatpush.bf16.msra.mxu0 %v4213
    %6906 = vmatmul.bf16.gmra.mxu0 %v6830
    %v6907 = vpop.f32.mrf.mxu0
    %v6908 = vadd.f32 %v6895, %v6907
    %v6909 = vpop.f32.mrf.mxu0
    %6910 = vdwg.mxu0
    %6911 = vmatpush.bf16.msra.mxu0 %v4333
    %6912 = vmatpush.bf16.msra.mxu0 %v4325
    %6913 = vmatpush.bf16.msra.mxu0 %v4317
    %6914 = vmatpush.bf16.msra.mxu0 %v4309
    %6915 = vmatpush.bf16.msra.mxu0 %v4301
    %6916 = vmatpush.bf16.msra.mxu0 %v4293
    %6917 = vmatpush.bf16.msra.mxu0 %v4285
    %6918 = vmatpush.bf16.msra.mxu0 %v4277
    %6919 = vmatmul.bf16.gmra.mxu0 %v6831
    %v6920 = vpop.f32.mrf.mxu0
    %v6921 = vadd.f32 %v6908, %v6920
    %v6922 = vpop.f32.mrf.mxu0
    %6923 = vdwg.mxu0
    %6924 = vmatpush.bf16.msra.mxu0 %v4397
    %6925 = vmatpush.bf16.msra.mxu0 %v4389
    %6926 = vmatpush.bf16.msra.mxu0 %v4381
    %6927 = vmatpush.bf16.msra.mxu0 %v4373
    %6928 = vmatpush.bf16.msra.mxu0 %v4365
    %6929 = vmatpush.bf16.msra.mxu0 %v4357
    %6930 = vmatpush.bf16.msra.mxu0 %v4349
    %6931 = vmatpush.bf16.msra.mxu0 %v4341
    %6932 = vmatmul.bf16.gmra.mxu0 %v6832
    %v6933 = vpop.f32.mrf.mxu0
    %v6934 = vadd.f32 %v6921, %v6933
    %v6935 = vpop.f32.mrf.mxu0
    %6936 = vdwg.mxu0
    %6937 = vmatpush.bf16.msra.mxu0 %v3950
    %6938 = vmatpush.bf16.msra.mxu0 %v3942
    %6939 = vmatpush.bf16.msra.mxu0 %v3934
    %6940 = vmatpush.bf16.msra.mxu0 %v3926
    %6941 = vmatpush.bf16.msra.mxu0 %v3918
    %6942 = vmatpush.bf16.msra.mxu0 %v3910
    %6943 = vmatpush.bf16.msra.mxu0 %v3902
    %6944 = vmatpush.bf16.msra.mxu0 %v3894
    %6945 = vmatmul.bf16.gmra.mxu0 %v6825
    %v6946 = vpop.f32.mrf.mxu0
    %v6947 = vadd.f32 %v1105, %v6946
    %v6948 = vpop.f32.mrf.mxu0
    %6949 = vdwg.mxu0
    %6950 = vmatpush.bf16.msra.mxu0 %v4014
    %6951 = vmatpush.bf16.msra.mxu0 %v4006
    %6952 = vmatpush.bf16.msra.mxu0 %v3998
    %6953 = vmatpush.bf16.msra.mxu0 %v3990
    %6954 = vmatpush.bf16.msra.mxu0 %v3982
    %6955 = vmatpush.bf16.msra.mxu0 %v3974
    %6956 = vmatpush.bf16.msra.mxu0 %v3966
    %6957 = vmatpush.bf16.msra.mxu0 %v3958
    %6958 = vmatmul.bf16.gmra.mxu0 %v6826
    %v6959 = vpop.f32.mrf.mxu0
    %v6960 = vadd.f32 %v6947, %v6959
    %v6961 = vpop.f32.mrf.mxu0
    %6962 = vdwg.mxu0
    %6963 = vmatpush.bf16.msra.mxu0 %v4078
    %6964 = vmatpush.bf16.msra.mxu0 %v4070
    %6965 = vmatpush.bf16.msra.mxu0 %v4062
    %6966 = vmatpush.bf16.msra.mxu0 %v4054
    %6967 = vmatpush.bf16.msra.mxu0 %v4046
    %6968 = vmatpush.bf16.msra.mxu0 %v4038
    %6969 = vmatpush.bf16.msra.mxu0 %v4030
    %6970 = vmatpush.bf16.msra.mxu0 %v4022
    %6971 = vmatmul.bf16.gmra.mxu0 %v6827
    %v6972 = vpop.f32.mrf.mxu0
    %v6973 = vadd.f32 %v6960, %v6972
    %v6974 = vpop.f32.mrf.mxu0
    %6975 = vdwg.mxu0
    %6976 = vmatpush.bf16.msra.mxu0 %v4142
    %6977 = vmatpush.bf16.msra.mxu0 %v4134
    %6978 = vmatpush.bf16.msra.mxu0 %v4126
    %6979 = vmatpush.bf16.msra.mxu0 %v4118
    %6980 = vmatpush.bf16.msra.mxu0 %v4110
    %6981 = vmatpush.bf16.msra.mxu0 %v4102
    %6982 = vmatpush.bf16.msra.mxu0 %v4094
    %6983 = vmatpush.bf16.msra.mxu0 %v4086
    %6984 = vmatmul.bf16.gmra.mxu0 %v6828
    %v6985 = vpop.f32.mrf.mxu0
    %v6986 = vadd.f32 %v6973, %v6985
    %v6987 = vpop.f32.mrf.mxu0
    %6988 = vdwg.mxu0
    %6989 = vmatpush.bf16.msra.mxu0 %v4206
    %6990 = vmatpush.bf16.msra.mxu0 %v4198
    %6991 = vmatpush.bf16.msra.mxu0 %v4190
    %6992 = vmatpush.bf16.msra.mxu0 %v4182
    %6993 = vmatpush.bf16.msra.mxu0 %v4174
    %6994 = vmatpush.bf16.msra.mxu0 %v4166
    %6995 = vmatpush.bf16.msra.mxu0 %v4158
    %6996 = vmatpush.bf16.msra.mxu0 %v4150
    %6997 = vmatmul.bf16.gmra.mxu0 %v6829
    %v6998 = vpop.f32.mrf.mxu0
    %v6999 = vadd.f32 %v6986, %v6998
    %v7000 = vpop.f32.mrf.mxu0
    %7001 = vdwg.mxu0
    %7002 = vmatpush.bf16.msra.mxu0 %v4270
    %7003 = vmatpush.bf16.msra.mxu0 %v4262
    %7004 = vmatpush.bf16.msra.mxu0 %v4254
    %7005 = vmatpush.bf16.msra.mxu0 %v4246
    %7006 = vmatpush.bf16.msra.mxu0 %v4238
    %7007 = vmatpush.bf16.msra.mxu0 %v4230
    %7008 = vmatpush.bf16.msra.mxu0 %v4222
    %7009 = vmatpush.bf16.msra.mxu0 %v4214
    %7010 = vmatmul.bf16.gmra.mxu0 %v6830
    %v7011 = vpop.f32.mrf.mxu0
    %v7012 = vadd.f32 %v6999, %v7011
    %v7013 = vpop.f32.mrf.mxu0
    %7014 = vdwg.mxu0
    %7015 = vmatpush.bf16.msra.mxu0 %v4334
    %7016 = vmatpush.bf16.msra.mxu0 %v4326
    %7017 = vmatpush.bf16.msra.mxu0 %v4318
    %7018 = vmatpush.bf16.msra.mxu0 %v4310
    %7019 = vmatpush.bf16.msra.mxu0 %v4302
    %7020 = vmatpush.bf16.msra.mxu0 %v4294
    %7021 = vmatpush.bf16.msra.mxu0 %v4286
    %7022 = vmatpush.bf16.msra.mxu0 %v4278
    %7023 = vmatmul.bf16.gmra.mxu0 %v6831
    %v7024 = vpop.f32.mrf.mxu0
    %v7025 = vadd.f32 %v7012, %v7024
    %v7026 = vpop.f32.mrf.mxu0
    %7027 = vdwg.mxu0
    %7028 = vmatpush.bf16.msra.mxu0 %v4398
    %7029 = vmatpush.bf16.msra.mxu0 %v4390
    %7030 = vmatpush.bf16.msra.mxu0 %v4382
    %7031 = vmatpush.bf16.msra.mxu0 %v4374
    %7032 = vmatpush.bf16.msra.mxu0 %v4366
    %7033 = vmatpush.bf16.msra.mxu0 %v4358
    %7034 = vmatpush.bf16.msra.mxu0 %v4350
    %7035 = vmatpush.bf16.msra.mxu0 %v4342
    %7036 = vmatmul.bf16.gmra.mxu0 %v6832
    %v7037 = vpop.f32.mrf.mxu0
    %v7038 = vadd.f32 %v7025, %v7037
    %v7039 = vpop.f32.mrf.mxu0
    %7040 = vdwg.mxu0
    %7041 = vmatpush.bf16.msra.mxu0 %v3951
    %7042 = vmatpush.bf16.msra.mxu0 %v3943
    %7043 = vmatpush.bf16.msra.mxu0 %v3935
    %7044 = vmatpush.bf16.msra.mxu0 %v3927
    %7045 = vmatpush.bf16.msra.mxu0 %v3919
    %7046 = vmatpush.bf16.msra.mxu0 %v3911
    %7047 = vmatpush.bf16.msra.mxu0 %v3903
    %7048 = vmatpush.bf16.msra.mxu0 %v3895
    %7049 = vmatmul.bf16.gmra.mxu0 %v6825
    %v7050 = vpop.f32.mrf.mxu0
    %v7051 = vadd.f32 %v1106, %v7050
    %v7052 = vpop.f32.mrf.mxu0
    %7053 = vdwg.mxu0
    %7054 = vmatpush.bf16.msra.mxu0 %v4015
    %7055 = vmatpush.bf16.msra.mxu0 %v4007
    %7056 = vmatpush.bf16.msra.mxu0 %v3999
    %7057 = vmatpush.bf16.msra.mxu0 %v3991
    %7058 = vmatpush.bf16.msra.mxu0 %v3983
    %7059 = vmatpush.bf16.msra.mxu0 %v3975
    %7060 = vmatpush.bf16.msra.mxu0 %v3967
    %7061 = vmatpush.bf16.msra.mxu0 %v3959
    %7062 = vmatmul.bf16.gmra.mxu0 %v6826
    %v7063 = vpop.f32.mrf.mxu0
    %v7064 = vadd.f32 %v7051, %v7063
    %v7065 = vpop.f32.mrf.mxu0
    %7066 = vdwg.mxu0
    %7067 = vmatpush.bf16.msra.mxu0 %v4079
    %7068 = vmatpush.bf16.msra.mxu0 %v4071
    %7069 = vmatpush.bf16.msra.mxu0 %v4063
    %7070 = vmatpush.bf16.msra.mxu0 %v4055
    %7071 = vmatpush.bf16.msra.mxu0 %v4047
    %7072 = vmatpush.bf16.msra.mxu0 %v4039
    %7073 = vmatpush.bf16.msra.mxu0 %v4031
    %7074 = vmatpush.bf16.msra.mxu0 %v4023
    %7075 = vmatmul.bf16.gmra.mxu0 %v6827
    %v7076 = vpop.f32.mrf.mxu0
    %v7077 = vadd.f32 %v7064, %v7076
    %v7078 = vpop.f32.mrf.mxu0
    %7079 = vdwg.mxu0
    %7080 = vmatpush.bf16.msra.mxu0 %v4143
    %7081 = vmatpush.bf16.msra.mxu0 %v4135
    %7082 = vmatpush.bf16.msra.mxu0 %v4127
    %7083 = vmatpush.bf16.msra.mxu0 %v4119
    %7084 = vmatpush.bf16.msra.mxu0 %v4111
    %7085 = vmatpush.bf16.msra.mxu0 %v4103
    %7086 = vmatpush.bf16.msra.mxu0 %v4095
    %7087 = vmatpush.bf16.msra.mxu0 %v4087
    %7088 = vmatmul.bf16.gmra.mxu0 %v6828
    %v7089 = vpop.f32.mrf.mxu0
    %v7090 = vadd.f32 %v7077, %v7089
    %v7091 = vpop.f32.mrf.mxu0
    %7092 = vdwg.mxu0
    %7093 = vmatpush.bf16.msra.mxu0 %v4207
    %7094 = vmatpush.bf16.msra.mxu0 %v4199
    %7095 = vmatpush.bf16.msra.mxu0 %v4191
    %7096 = vmatpush.bf16.msra.mxu0 %v4183
    %7097 = vmatpush.bf16.msra.mxu0 %v4175
    %7098 = vmatpush.bf16.msra.mxu0 %v4167
    %7099 = vmatpush.bf16.msra.mxu0 %v4159
    %7100 = vmatpush.bf16.msra.mxu0 %v4151
    %7101 = vmatmul.bf16.gmra.mxu0 %v6829
    %v7102 = vpop.f32.mrf.mxu0
    %v7103 = vadd.f32 %v7090, %v7102
    %v7104 = vpop.f32.mrf.mxu0
    %7105 = vdwg.mxu0
    %7106 = vmatpush.bf16.msra.mxu0 %v4271
    %7107 = vmatpush.bf16.msra.mxu0 %v4263
    %7108 = vmatpush.bf16.msra.mxu0 %v4255
    %7109 = vmatpush.bf16.msra.mxu0 %v4247
    %7110 = vmatpush.bf16.msra.mxu0 %v4239
    %7111 = vmatpush.bf16.msra.mxu0 %v4231
    %7112 = vmatpush.bf16.msra.mxu0 %v4223
    %7113 = vmatpush.bf16.msra.mxu0 %v4215
    %7114 = vmatmul.bf16.gmra.mxu0 %v6830
    %v7115 = vpop.f32.mrf.mxu0
    %v7116 = vadd.f32 %v7103, %v7115
    %v7117 = vpop.f32.mrf.mxu0
    %7118 = vdwg.mxu0
    %7119 = vmatpush.bf16.msra.mxu0 %v4335
    %7120 = vmatpush.bf16.msra.mxu0 %v4327
    %7121 = vmatpush.bf16.msra.mxu0 %v4319
    %7122 = vmatpush.bf16.msra.mxu0 %v4311
    %7123 = vmatpush.bf16.msra.mxu0 %v4303
    %7124 = vmatpush.bf16.msra.mxu0 %v4295
    %7125 = vmatpush.bf16.msra.mxu0 %v4287
    %7126 = vmatpush.bf16.msra.mxu0 %v4279
    %7127 = vmatmul.bf16.gmra.mxu0 %v6831
    %v7128 = vpop.f32.mrf.mxu0
    %v7129 = vadd.f32 %v7116, %v7128
    %v7130 = vpop.f32.mrf.mxu0
    %7131 = vdwg.mxu0
    %7132 = vmatpush.bf16.msra.mxu0 %v4399
    %7133 = vmatpush.bf16.msra.mxu0 %v4391
    %7134 = vmatpush.bf16.msra.mxu0 %v4383
    %7135 = vmatpush.bf16.msra.mxu0 %v4375
    %7136 = vmatpush.bf16.msra.mxu0 %v4367
    %7137 = vmatpush.bf16.msra.mxu0 %v4359
    %7138 = vmatpush.bf16.msra.mxu0 %v4351
    %7139 = vmatpush.bf16.msra.mxu0 %v4343
    %7140 = vmatmul.bf16.gmra.mxu0 %v6832
    %v7141 = vpop.f32.mrf.mxu0
    %v7142 = vadd.f32 %v7129, %v7141
    %v7143 = vpop.f32.mrf.mxu0
    %7144 = vdwg.mxu0
    %7145 = vmatpush.bf16.msra.mxu0 %v3952
    %7146 = vmatpush.bf16.msra.mxu0 %v3944
    %7147 = vmatpush.bf16.msra.mxu0 %v3936
    %7148 = vmatpush.bf16.msra.mxu0 %v3928
    %7149 = vmatpush.bf16.msra.mxu0 %v3920
    %7150 = vmatpush.bf16.msra.mxu0 %v3912
    %7151 = vmatpush.bf16.msra.mxu0 %v3904
    %7152 = vmatpush.bf16.msra.mxu0 %v3896
    %7153 = vmatmul.bf16.gmra.mxu0 %v6825
    %v7154 = vpop.f32.mrf.mxu0
    %v7155 = vadd.f32 %v1107, %v7154
    %v7156 = vpop.f32.mrf.mxu0
    %7157 = vdwg.mxu0
    %7158 = vmatpush.bf16.msra.mxu0 %v4016
    %7159 = vmatpush.bf16.msra.mxu0 %v4008
    %7160 = vmatpush.bf16.msra.mxu0 %v4000
    %7161 = vmatpush.bf16.msra.mxu0 %v3992
    %7162 = vmatpush.bf16.msra.mxu0 %v3984
    %7163 = vmatpush.bf16.msra.mxu0 %v3976
    %7164 = vmatpush.bf16.msra.mxu0 %v3968
    %7165 = vmatpush.bf16.msra.mxu0 %v3960
    %7166 = vmatmul.bf16.gmra.mxu0 %v6826
    %v7167 = vpop.f32.mrf.mxu0
    %v7168 = vadd.f32 %v7155, %v7167
    %v7169 = vpop.f32.mrf.mxu0
    %7170 = vdwg.mxu0
    %7171 = vmatpush.bf16.msra.mxu0 %v4080
    %7172 = vmatpush.bf16.msra.mxu0 %v4072
    %7173 = vmatpush.bf16.msra.mxu0 %v4064
    %7174 = vmatpush.bf16.msra.mxu0 %v4056
    %7175 = vmatpush.bf16.msra.mxu0 %v4048
    %7176 = vmatpush.bf16.msra.mxu0 %v4040
    %7177 = vmatpush.bf16.msra.mxu0 %v4032
    %7178 = vmatpush.bf16.msra.mxu0 %v4024
    %7179 = vmatmul.bf16.gmra.mxu0 %v6827
    %v7180 = vpop.f32.mrf.mxu0
    %v7181 = vadd.f32 %v7168, %v7180
    %v7182 = vpop.f32.mrf.mxu0
    %7183 = vdwg.mxu0
    %7184 = vmatpush.bf16.msra.mxu0 %v4144
    %7185 = vmatpush.bf16.msra.mxu0 %v4136
    %7186 = vmatpush.bf16.msra.mxu0 %v4128
    %7187 = vmatpush.bf16.msra.mxu0 %v4120
    %7188 = vmatpush.bf16.msra.mxu0 %v4112
    %7189 = vmatpush.bf16.msra.mxu0 %v4104
    %7190 = vmatpush.bf16.msra.mxu0 %v4096
    %7191 = vmatpush.bf16.msra.mxu0 %v4088
    %7192 = vmatmul.bf16.gmra.mxu0 %v6828
    %v7193 = vpop.f32.mrf.mxu0
    %v7194 = vadd.f32 %v7181, %v7193
    %v7195 = vpop.f32.mrf.mxu0
    %7196 = vdwg.mxu0
    %7197 = vmatpush.bf16.msra.mxu0 %v4208
    %7198 = vmatpush.bf16.msra.mxu0 %v4200
    %7199 = vmatpush.bf16.msra.mxu0 %v4192
    %7200 = vmatpush.bf16.msra.mxu0 %v4184
    %7201 = vmatpush.bf16.msra.mxu0 %v4176
    %7202 = vmatpush.bf16.msra.mxu0 %v4168
    %7203 = vmatpush.bf16.msra.mxu0 %v4160
    %7204 = vmatpush.bf16.msra.mxu0 %v4152
    %7205 = vmatmul.bf16.gmra.mxu0 %v6829
    %v7206 = vpop.f32.mrf.mxu0
    %v7207 = vadd.f32 %v7194, %v7206
    %v7208 = vpop.f32.mrf.mxu0
    %7209 = vdwg.mxu0
    %7210 = vmatpush.bf16.msra.mxu0 %v4272
    %7211 = vmatpush.bf16.msra.mxu0 %v4264
    %7212 = vmatpush.bf16.msra.mxu0 %v4256
    %7213 = vmatpush.bf16.msra.mxu0 %v4248
    %7214 = vmatpush.bf16.msra.mxu0 %v4240
    %7215 = vmatpush.bf16.msra.mxu0 %v4232
    %7216 = vmatpush.bf16.msra.mxu0 %v4224
    %7217 = vmatpush.bf16.msra.mxu0 %v4216
    %7218 = vmatmul.bf16.gmra.mxu0 %v6830
    %v7219 = vpop.f32.mrf.mxu0
    %v7220 = vadd.f32 %v7207, %v7219
    %v7221 = vpop.f32.mrf.mxu0
    %7222 = vdwg.mxu0
    %7223 = vmatpush.bf16.msra.mxu0 %v4336
    %7224 = vmatpush.bf16.msra.mxu0 %v4328
    %7225 = vmatpush.bf16.msra.mxu0 %v4320
    %7226 = vmatpush.bf16.msra.mxu0 %v4312
    %7227 = vmatpush.bf16.msra.mxu0 %v4304
    %7228 = vmatpush.bf16.msra.mxu0 %v4296
    %7229 = vmatpush.bf16.msra.mxu0 %v4288
    %7230 = vmatpush.bf16.msra.mxu0 %v4280
    %7231 = vmatmul.bf16.gmra.mxu0 %v6831
    %v7232 = vpop.f32.mrf.mxu0
    %v7233 = vadd.f32 %v7220, %v7232
    %v7234 = vpop.f32.mrf.mxu0
    %7235 = vdwg.mxu0
    %7236 = vmatpush.bf16.msra.mxu0 %v4400
    %7237 = vmatpush.bf16.msra.mxu0 %v4392
    %7238 = vmatpush.bf16.msra.mxu0 %v4384
    %7239 = vmatpush.bf16.msra.mxu0 %v4376
    %7240 = vmatpush.bf16.msra.mxu0 %v4368
    %7241 = vmatpush.bf16.msra.mxu0 %v4360
    %7242 = vmatpush.bf16.msra.mxu0 %v4352
    %7243 = vmatpush.bf16.msra.mxu0 %v4344
    %7244 = vmatmul.bf16.gmra.mxu0 %v6832
    %v7245 = vpop.f32.mrf.mxu0
    %v7246 = vadd.f32 %v7233, %v7245
    %v7247 = vpop.f32.mrf.mxu0
    %7248 = vdwg.mxu0
    %7249 = vmatpush.bf16.msra.mxu0 %v3953
    %7250 = vmatpush.bf16.msra.mxu0 %v3945
    %7251 = vmatpush.bf16.msra.mxu0 %v3937
    %7252 = vmatpush.bf16.msra.mxu0 %v3929
    %7253 = vmatpush.bf16.msra.mxu0 %v3921
    %7254 = vmatpush.bf16.msra.mxu0 %v3913
    %7255 = vmatpush.bf16.msra.mxu0 %v3905
    %7256 = vmatpush.bf16.msra.mxu0 %v3897
    %7257 = vmatmul.bf16.gmra.mxu0 %v6825
    %v7258 = vpop.f32.mrf.mxu0
    %v7259 = vadd.f32 %v1108, %v7258
    %v7260 = vpop.f32.mrf.mxu0
    %7261 = vdwg.mxu0
    %7262 = vmatpush.bf16.msra.mxu0 %v4017
    %7263 = vmatpush.bf16.msra.mxu0 %v4009
    %7264 = vmatpush.bf16.msra.mxu0 %v4001
    %7265 = vmatpush.bf16.msra.mxu0 %v3993
    %7266 = vmatpush.bf16.msra.mxu0 %v3985
    %7267 = vmatpush.bf16.msra.mxu0 %v3977
    %7268 = vmatpush.bf16.msra.mxu0 %v3969
    %7269 = vmatpush.bf16.msra.mxu0 %v3961
    %7270 = vmatmul.bf16.gmra.mxu0 %v6826
    %v7271 = vpop.f32.mrf.mxu0
    %v7272 = vadd.f32 %v7259, %v7271
    %v7273 = vpop.f32.mrf.mxu0
    %7274 = vdwg.mxu0
    %7275 = vmatpush.bf16.msra.mxu0 %v4081
    %7276 = vmatpush.bf16.msra.mxu0 %v4073
    %7277 = vmatpush.bf16.msra.mxu0 %v4065
    %7278 = vmatpush.bf16.msra.mxu0 %v4057
    %7279 = vmatpush.bf16.msra.mxu0 %v4049
    %7280 = vmatpush.bf16.msra.mxu0 %v4041
    %7281 = vmatpush.bf16.msra.mxu0 %v4033
    %7282 = vmatpush.bf16.msra.mxu0 %v4025
    %7283 = vmatmul.bf16.gmra.mxu0 %v6827
    %v7284 = vpop.f32.mrf.mxu0
    %v7285 = vadd.f32 %v7272, %v7284
    %v7286 = vpop.f32.mrf.mxu0
    %7287 = vdwg.mxu0
    %7288 = vmatpush.bf16.msra.mxu0 %v4145
    %7289 = vmatpush.bf16.msra.mxu0 %v4137
    %7290 = vmatpush.bf16.msra.mxu0 %v4129
    %7291 = vmatpush.bf16.msra.mxu0 %v4121
    %7292 = vmatpush.bf16.msra.mxu0 %v4113
    %7293 = vmatpush.bf16.msra.mxu0 %v4105
    %7294 = vmatpush.bf16.msra.mxu0 %v4097
    %7295 = vmatpush.bf16.msra.mxu0 %v4089
    %7296 = vmatmul.bf16.gmra.mxu0 %v6828
    %v7297 = vpop.f32.mrf.mxu0
    %v7298 = vadd.f32 %v7285, %v7297
    %v7299 = vpop.f32.mrf.mxu0
    %7300 = vdwg.mxu0
    %7301 = vmatpush.bf16.msra.mxu0 %v4209
    %7302 = vmatpush.bf16.msra.mxu0 %v4201
    %7303 = vmatpush.bf16.msra.mxu0 %v4193
    %7304 = vmatpush.bf16.msra.mxu0 %v4185
    %7305 = vmatpush.bf16.msra.mxu0 %v4177
    %7306 = vmatpush.bf16.msra.mxu0 %v4169
    %7307 = vmatpush.bf16.msra.mxu0 %v4161
    %7308 = vmatpush.bf16.msra.mxu0 %v4153
    %7309 = vmatmul.bf16.gmra.mxu0 %v6829
    %v7310 = vpop.f32.mrf.mxu0
    %v7311 = vadd.f32 %v7298, %v7310
    %v7312 = vpop.f32.mrf.mxu0
    %7313 = vdwg.mxu0
    %7314 = vmatpush.bf16.msra.mxu0 %v4273
    %7315 = vmatpush.bf16.msra.mxu0 %v4265
    %7316 = vmatpush.bf16.msra.mxu0 %v4257
    %7317 = vmatpush.bf16.msra.mxu0 %v4249
    %7318 = vmatpush.bf16.msra.mxu0 %v4241
    %7319 = vmatpush.bf16.msra.mxu0 %v4233
    %7320 = vmatpush.bf16.msra.mxu0 %v4225
    %7321 = vmatpush.bf16.msra.mxu0 %v4217
    %7322 = vmatmul.bf16.gmra.mxu0 %v6830
    %v7323 = vpop.f32.mrf.mxu0
    %v7324 = vadd.f32 %v7311, %v7323
    %v7325 = vpop.f32.mrf.mxu0
    %7326 = vdwg.mxu0
    %7327 = vmatpush.bf16.msra.mxu0 %v4337
    %7328 = vmatpush.bf16.msra.mxu0 %v4329
    %7329 = vmatpush.bf16.msra.mxu0 %v4321
    %7330 = vmatpush.bf16.msra.mxu0 %v4313
    %7331 = vmatpush.bf16.msra.mxu0 %v4305
    %7332 = vmatpush.bf16.msra.mxu0 %v4297
    %7333 = vmatpush.bf16.msra.mxu0 %v4289
    %7334 = vmatpush.bf16.msra.mxu0 %v4281
    %7335 = vmatmul.bf16.gmra.mxu0 %v6831
    %v7336 = vpop.f32.mrf.mxu0
    %v7337 = vadd.f32 %v7324, %v7336
    %v7338 = vpop.f32.mrf.mxu0
    %7339 = vdwg.mxu0
    %7340 = vmatpush.bf16.msra.mxu0 %v4401
    %7341 = vmatpush.bf16.msra.mxu0 %v4393
    %7342 = vmatpush.bf16.msra.mxu0 %v4385
    %7343 = vmatpush.bf16.msra.mxu0 %v4377
    %7344 = vmatpush.bf16.msra.mxu0 %v4369
    %7345 = vmatpush.bf16.msra.mxu0 %v4361
    %7346 = vmatpush.bf16.msra.mxu0 %v4353
    %7347 = vmatpush.bf16.msra.mxu0 %v4345
    %7348 = vmatmul.bf16.gmra.mxu0 %v6832
    %v7349 = vpop.f32.mrf.mxu0
    %v7350 = vadd.f32 %v7337, %v7349
    %v7351 = vpop.f32.mrf.mxu0
    %7352 = vdwg.mxu0
    %7353 = vmatpush.bf16.msra.mxu0 %v3954
    %7354 = vmatpush.bf16.msra.mxu0 %v3946
    %7355 = vmatpush.bf16.msra.mxu0 %v3938
    %7356 = vmatpush.bf16.msra.mxu0 %v3930
    %7357 = vmatpush.bf16.msra.mxu0 %v3922
    %7358 = vmatpush.bf16.msra.mxu0 %v3914
    %7359 = vmatpush.bf16.msra.mxu0 %v3906
    %7360 = vmatpush.bf16.msra.mxu0 %v3898
    %7361 = vmatmul.bf16.gmra.mxu0 %v6825
    %v7362 = vpop.f32.mrf.mxu0
    %v7363 = vadd.f32 %v1109, %v7362
    %v7364 = vpop.f32.mrf.mxu0
    %7365 = vdwg.mxu0
    %7366 = vmatpush.bf16.msra.mxu0 %v4018
    %7367 = vmatpush.bf16.msra.mxu0 %v4010
    %7368 = vmatpush.bf16.msra.mxu0 %v4002
    %7369 = vmatpush.bf16.msra.mxu0 %v3994
    %7370 = vmatpush.bf16.msra.mxu0 %v3986
    %7371 = vmatpush.bf16.msra.mxu0 %v3978
    %7372 = vmatpush.bf16.msra.mxu0 %v3970
    %7373 = vmatpush.bf16.msra.mxu0 %v3962
    %7374 = vmatmul.bf16.gmra.mxu0 %v6826
    %v7375 = vpop.f32.mrf.mxu0
    %v7376 = vadd.f32 %v7363, %v7375
    %v7377 = vpop.f32.mrf.mxu0
    %7378 = vdwg.mxu0
    %7379 = vmatpush.bf16.msra.mxu0 %v4082
    %7380 = vmatpush.bf16.msra.mxu0 %v4074
    %7381 = vmatpush.bf16.msra.mxu0 %v4066
    %7382 = vmatpush.bf16.msra.mxu0 %v4058
    %7383 = vmatpush.bf16.msra.mxu0 %v4050
    %7384 = vmatpush.bf16.msra.mxu0 %v4042
    %7385 = vmatpush.bf16.msra.mxu0 %v4034
    %7386 = vmatpush.bf16.msra.mxu0 %v4026
    %7387 = vmatmul.bf16.gmra.mxu0 %v6827
    %v7388 = vpop.f32.mrf.mxu0
    %v7389 = vadd.f32 %v7376, %v7388
    %v7390 = vpop.f32.mrf.mxu0
    %7391 = vdwg.mxu0
    %7392 = vmatpush.bf16.msra.mxu0 %v4146
    %7393 = vmatpush.bf16.msra.mxu0 %v4138
    %7394 = vmatpush.bf16.msra.mxu0 %v4130
    %7395 = vmatpush.bf16.msra.mxu0 %v4122
    %7396 = vmatpush.bf16.msra.mxu0 %v4114
    %7397 = vmatpush.bf16.msra.mxu0 %v4106
    %7398 = vmatpush.bf16.msra.mxu0 %v4098
    %7399 = vmatpush.bf16.msra.mxu0 %v4090
    %7400 = vmatmul.bf16.gmra.mxu0 %v6828
    %v7401 = vpop.f32.mrf.mxu0
    %v7402 = vadd.f32 %v7389, %v7401
    %v7403 = vpop.f32.mrf.mxu0
    %7404 = vdwg.mxu0
    %7405 = vmatpush.bf16.msra.mxu0 %v4210
    %7406 = vmatpush.bf16.msra.mxu0 %v4202
    %7407 = vmatpush.bf16.msra.mxu0 %v4194
    %7408 = vmatpush.bf16.msra.mxu0 %v4186
    %7409 = vmatpush.bf16.msra.mxu0 %v4178
    %7410 = vmatpush.bf16.msra.mxu0 %v4170
    %7411 = vmatpush.bf16.msra.mxu0 %v4162
    %7412 = vmatpush.bf16.msra.mxu0 %v4154
    %7413 = vmatmul.bf16.gmra.mxu0 %v6829
    %v7414 = vpop.f32.mrf.mxu0
    %v7415 = vadd.f32 %v7402, %v7414
    %v7416 = vpop.f32.mrf.mxu0
    %7417 = vdwg.mxu0
    %7418 = vmatpush.bf16.msra.mxu0 %v4274
    %7419 = vmatpush.bf16.msra.mxu0 %v4266
    %7420 = vmatpush.bf16.msra.mxu0 %v4258
    %7421 = vmatpush.bf16.msra.mxu0 %v4250
    %7422 = vmatpush.bf16.msra.mxu0 %v4242
    %7423 = vmatpush.bf16.msra.mxu0 %v4234
    %7424 = vmatpush.bf16.msra.mxu0 %v4226
    %7425 = vmatpush.bf16.msra.mxu0 %v4218
    %7426 = vmatmul.bf16.gmra.mxu0 %v6830
    %v7427 = vpop.f32.mrf.mxu0
    %v7428 = vadd.f32 %v7415, %v7427
    %v7429 = vpop.f32.mrf.mxu0
    %7430 = vdwg.mxu0
    %7431 = vmatpush.bf16.msra.mxu0 %v4338
    %7432 = vmatpush.bf16.msra.mxu0 %v4330
    %7433 = vmatpush.bf16.msra.mxu0 %v4322
    %7434 = vmatpush.bf16.msra.mxu0 %v4314
    %7435 = vmatpush.bf16.msra.mxu0 %v4306
    %7436 = vmatpush.bf16.msra.mxu0 %v4298
    %7437 = vmatpush.bf16.msra.mxu0 %v4290
    %7438 = vmatpush.bf16.msra.mxu0 %v4282
    %7439 = vmatmul.bf16.gmra.mxu0 %v6831
    %v7440 = vpop.f32.mrf.mxu0
    %v7441 = vadd.f32 %v7428, %v7440
    %v7442 = vpop.f32.mrf.mxu0
    %7443 = vdwg.mxu0
    %7444 = vmatpush.bf16.msra.mxu0 %v4402
    %7445 = vmatpush.bf16.msra.mxu0 %v4394
    %7446 = vmatpush.bf16.msra.mxu0 %v4386
    %7447 = vmatpush.bf16.msra.mxu0 %v4378
    %7448 = vmatpush.bf16.msra.mxu0 %v4370
    %7449 = vmatpush.bf16.msra.mxu0 %v4362
    %7450 = vmatpush.bf16.msra.mxu0 %v4354
    %7451 = vmatpush.bf16.msra.mxu0 %v4346
    %7452 = vmatmul.bf16.gmra.mxu0 %v6832
    %v7453 = vpop.f32.mrf.mxu0
    %v7454 = vadd.f32 %v7441, %v7453
    %v7455 = vpop.f32.mrf.mxu0
    %7456 = vdwg.mxu0
    %7457 = vmatpush.bf16.msra.mxu0 %v3955
    %7458 = vmatpush.bf16.msra.mxu0 %v3947
    %7459 = vmatpush.bf16.msra.mxu0 %v3939
    %7460 = vmatpush.bf16.msra.mxu0 %v3931
    %7461 = vmatpush.bf16.msra.mxu0 %v3923
    %7462 = vmatpush.bf16.msra.mxu0 %v3915
    %7463 = vmatpush.bf16.msra.mxu0 %v3907
    %7464 = vmatpush.bf16.msra.mxu0 %v3899
    %7465 = vmatmul.bf16.gmra.mxu0 %v6825
    %v7466 = vpop.f32.mrf.mxu0
    %v7467 = vadd.f32 %v1110, %v7466
    %v7468 = vpop.f32.mrf.mxu0
    %7469 = vdwg.mxu0
    %7470 = vmatpush.bf16.msra.mxu0 %v4019
    %7471 = vmatpush.bf16.msra.mxu0 %v4011
    %7472 = vmatpush.bf16.msra.mxu0 %v4003
    %7473 = vmatpush.bf16.msra.mxu0 %v3995
    %7474 = vmatpush.bf16.msra.mxu0 %v3987
    %7475 = vmatpush.bf16.msra.mxu0 %v3979
    %7476 = vmatpush.bf16.msra.mxu0 %v3971
    %7477 = vmatpush.bf16.msra.mxu0 %v3963
    %7478 = vmatmul.bf16.gmra.mxu0 %v6826
    %v7479 = vpop.f32.mrf.mxu0
    %v7480 = vadd.f32 %v7467, %v7479
    %v7481 = vpop.f32.mrf.mxu0
    %7482 = vdwg.mxu0
    %7483 = vmatpush.bf16.msra.mxu0 %v4083
    %7484 = vmatpush.bf16.msra.mxu0 %v4075
    %7485 = vmatpush.bf16.msra.mxu0 %v4067
    %7486 = vmatpush.bf16.msra.mxu0 %v4059
    %7487 = vmatpush.bf16.msra.mxu0 %v4051
    %7488 = vmatpush.bf16.msra.mxu0 %v4043
    %7489 = vmatpush.bf16.msra.mxu0 %v4035
    %7490 = vmatpush.bf16.msra.mxu0 %v4027
    %7491 = vmatmul.bf16.gmra.mxu0 %v6827
    %v7492 = vpop.f32.mrf.mxu0
    %v7493 = vadd.f32 %v7480, %v7492
    %v7494 = vpop.f32.mrf.mxu0
    %7495 = vdwg.mxu0
    %7496 = vmatpush.bf16.msra.mxu0 %v4147
    %7497 = vmatpush.bf16.msra.mxu0 %v4139
    %7498 = vmatpush.bf16.msra.mxu0 %v4131
    %7499 = vmatpush.bf16.msra.mxu0 %v4123
    %7500 = vmatpush.bf16.msra.mxu0 %v4115
    %7501 = vmatpush.bf16.msra.mxu0 %v4107
    %7502 = vmatpush.bf16.msra.mxu0 %v4099
    %7503 = vmatpush.bf16.msra.mxu0 %v4091
    %7504 = vmatmul.bf16.gmra.mxu0 %v6828
    %v7505 = vpop.f32.mrf.mxu0
    %v7506 = vadd.f32 %v7493, %v7505
    %v7507 = vpop.f32.mrf.mxu0
    %7508 = vdwg.mxu0
    %7509 = vmatpush.bf16.msra.mxu0 %v4211
    %7510 = vmatpush.bf16.msra.mxu0 %v4203
    %7511 = vmatpush.bf16.msra.mxu0 %v4195
    %7512 = vmatpush.bf16.msra.mxu0 %v4187
    %7513 = vmatpush.bf16.msra.mxu0 %v4179
    %7514 = vmatpush.bf16.msra.mxu0 %v4171
    %7515 = vmatpush.bf16.msra.mxu0 %v4163
    %7516 = vmatpush.bf16.msra.mxu0 %v4155
    %7517 = vmatmul.bf16.gmra.mxu0 %v6829
    %v7518 = vpop.f32.mrf.mxu0
    %v7519 = vadd.f32 %v7506, %v7518
    %v7520 = vpop.f32.mrf.mxu0
    %7521 = vdwg.mxu0
    %7522 = vmatpush.bf16.msra.mxu0 %v4275
    %7523 = vmatpush.bf16.msra.mxu0 %v4267
    %7524 = vmatpush.bf16.msra.mxu0 %v4259
    %7525 = vmatpush.bf16.msra.mxu0 %v4251
    %7526 = vmatpush.bf16.msra.mxu0 %v4243
    %7527 = vmatpush.bf16.msra.mxu0 %v4235
    %7528 = vmatpush.bf16.msra.mxu0 %v4227
    %7529 = vmatpush.bf16.msra.mxu0 %v4219
    %7530 = vmatmul.bf16.gmra.mxu0 %v6830
    %v7531 = vpop.f32.mrf.mxu0
    %v7532 = vadd.f32 %v7519, %v7531
    %v7533 = vpop.f32.mrf.mxu0
    %7534 = vdwg.mxu0
    %7535 = vmatpush.bf16.msra.mxu0 %v4339
    %7536 = vmatpush.bf16.msra.mxu0 %v4331
    %7537 = vmatpush.bf16.msra.mxu0 %v4323
    %7538 = vmatpush.bf16.msra.mxu0 %v4315
    %7539 = vmatpush.bf16.msra.mxu0 %v4307
    %7540 = vmatpush.bf16.msra.mxu0 %v4299
    %7541 = vmatpush.bf16.msra.mxu0 %v4291
    %7542 = vmatpush.bf16.msra.mxu0 %v4283
    %7543 = vmatmul.bf16.gmra.mxu0 %v6831
    %v7544 = vpop.f32.mrf.mxu0
    %v7545 = vadd.f32 %v7532, %v7544
    %v7546 = vpop.f32.mrf.mxu0
    %7547 = vdwg.mxu0
    %7548 = vmatpush.bf16.msra.mxu0 %v4403
    %7549 = vmatpush.bf16.msra.mxu0 %v4395
    %7550 = vmatpush.bf16.msra.mxu0 %v4387
    %7551 = vmatpush.bf16.msra.mxu0 %v4379
    %7552 = vmatpush.bf16.msra.mxu0 %v4371
    %7553 = vmatpush.bf16.msra.mxu0 %v4363
    %7554 = vmatpush.bf16.msra.mxu0 %v4355
    %7555 = vmatpush.bf16.msra.mxu0 %v4347
    %7556 = vmatmul.bf16.gmra.mxu0 %v6832
    %v7557 = vpop.f32.mrf.mxu0
    %v7558 = vadd.f32 %v7545, %v7557
    %v7559 = vpop.f32.mrf.mxu0
    %7560 = vdwg.mxu0
    %7561 = vmatpush.bf16.msra.mxu0 %v3956
    %7562 = vmatpush.bf16.msra.mxu0 %v3948
    %7563 = vmatpush.bf16.msra.mxu0 %v3940
    %7564 = vmatpush.bf16.msra.mxu0 %v3932
    %7565 = vmatpush.bf16.msra.mxu0 %v3924
    %7566 = vmatpush.bf16.msra.mxu0 %v3916
    %7567 = vmatpush.bf16.msra.mxu0 %v3908
    %7568 = vmatpush.bf16.msra.mxu0 %v3900
    %7569 = vmatmul.bf16.gmra.mxu0 %v6825
    %v7570 = vpop.f32.mrf.mxu0
    %v7571 = vadd.f32 %v1111, %v7570
    %v7572 = vpop.f32.mrf.mxu0
    %7573 = vdwg.mxu0
    %7574 = vmatpush.bf16.msra.mxu0 %v4020
    %7575 = vmatpush.bf16.msra.mxu0 %v4012
    %7576 = vmatpush.bf16.msra.mxu0 %v4004
    %7577 = vmatpush.bf16.msra.mxu0 %v3996
    %7578 = vmatpush.bf16.msra.mxu0 %v3988
    %7579 = vmatpush.bf16.msra.mxu0 %v3980
    %7580 = vmatpush.bf16.msra.mxu0 %v3972
    %7581 = vmatpush.bf16.msra.mxu0 %v3964
    %7582 = vmatmul.bf16.gmra.mxu0 %v6826
    %v7583 = vpop.f32.mrf.mxu0
    %v7584 = vadd.f32 %v7571, %v7583
    %v7585 = vpop.f32.mrf.mxu0
    %7586 = vdwg.mxu0
    %7587 = vmatpush.bf16.msra.mxu0 %v4084
    %7588 = vmatpush.bf16.msra.mxu0 %v4076
    %7589 = vmatpush.bf16.msra.mxu0 %v4068
    %7590 = vmatpush.bf16.msra.mxu0 %v4060
    %7591 = vmatpush.bf16.msra.mxu0 %v4052
    %7592 = vmatpush.bf16.msra.mxu0 %v4044
    %7593 = vmatpush.bf16.msra.mxu0 %v4036
    %7594 = vmatpush.bf16.msra.mxu0 %v4028
    %7595 = vmatmul.bf16.gmra.mxu0 %v6827
    %v7596 = vpop.f32.mrf.mxu0
    %v7597 = vadd.f32 %v7584, %v7596
    %v7598 = vpop.f32.mrf.mxu0
    %7599 = vdwg.mxu0
    %7600 = vmatpush.bf16.msra.mxu0 %v4148
    %7601 = vmatpush.bf16.msra.mxu0 %v4140
    %7602 = vmatpush.bf16.msra.mxu0 %v4132
    %7603 = vmatpush.bf16.msra.mxu0 %v4124
    %7604 = vmatpush.bf16.msra.mxu0 %v4116
    %7605 = vmatpush.bf16.msra.mxu0 %v4108
    %7606 = vmatpush.bf16.msra.mxu0 %v4100
    %7607 = vmatpush.bf16.msra.mxu0 %v4092
    %7608 = vmatmul.bf16.gmra.mxu0 %v6828
    %v7609 = vpop.f32.mrf.mxu0
    %v7610 = vadd.f32 %v7597, %v7609
    %v7611 = vpop.f32.mrf.mxu0
    %7612 = vdwg.mxu0
    %7613 = vmatpush.bf16.msra.mxu0 %v4212
    %7614 = vmatpush.bf16.msra.mxu0 %v4204
    %7615 = vmatpush.bf16.msra.mxu0 %v4196
    %7616 = vmatpush.bf16.msra.mxu0 %v4188
    %7617 = vmatpush.bf16.msra.mxu0 %v4180
    %7618 = vmatpush.bf16.msra.mxu0 %v4172
    %7619 = vmatpush.bf16.msra.mxu0 %v4164
    %7620 = vmatpush.bf16.msra.mxu0 %v4156
    %7621 = vmatmul.bf16.gmra.mxu0 %v6829
    %v7622 = vpop.f32.mrf.mxu0
    %v7623 = vadd.f32 %v7610, %v7622
    %v7624 = vpop.f32.mrf.mxu0
    %7625 = vdwg.mxu0
    %7626 = vmatpush.bf16.msra.mxu0 %v4276
    %7627 = vmatpush.bf16.msra.mxu0 %v4268
    %7628 = vmatpush.bf16.msra.mxu0 %v4260
    %7629 = vmatpush.bf16.msra.mxu0 %v4252
    %7630 = vmatpush.bf16.msra.mxu0 %v4244
    %7631 = vmatpush.bf16.msra.mxu0 %v4236
    %7632 = vmatpush.bf16.msra.mxu0 %v4228
    %7633 = vmatpush.bf16.msra.mxu0 %v4220
    %7634 = vmatmul.bf16.gmra.mxu0 %v6830
    %v7635 = vpop.f32.mrf.mxu0
    %v7636 = vadd.f32 %v7623, %v7635
    %v7637 = vpop.f32.mrf.mxu0
    %7638 = vdwg.mxu0
    %7639 = vmatpush.bf16.msra.mxu0 %v4340
    %7640 = vmatpush.bf16.msra.mxu0 %v4332
    %7641 = vmatpush.bf16.msra.mxu0 %v4324
    %7642 = vmatpush.bf16.msra.mxu0 %v4316
    %7643 = vmatpush.bf16.msra.mxu0 %v4308
    %7644 = vmatpush.bf16.msra.mxu0 %v4300
    %7645 = vmatpush.bf16.msra.mxu0 %v4292
    %7646 = vmatpush.bf16.msra.mxu0 %v4284
    %7647 = vmatmul.bf16.gmra.mxu0 %v6831
    %v7648 = vpop.f32.mrf.mxu0
    %v7649 = vadd.f32 %v7636, %v7648
    %v7650 = vpop.f32.mrf.mxu0
    %7651 = vdwg.mxu0
    %7652 = vmatpush.bf16.msra.mxu0 %v4404
    %7653 = vmatpush.bf16.msra.mxu0 %v4396
    %7654 = vmatpush.bf16.msra.mxu0 %v4388
    %7655 = vmatpush.bf16.msra.mxu0 %v4380
    %7656 = vmatpush.bf16.msra.mxu0 %v4372
    %7657 = vmatpush.bf16.msra.mxu0 %v4364
    %7658 = vmatpush.bf16.msra.mxu0 %v4356
    %7659 = vmatpush.bf16.msra.mxu0 %v4348
    %7660 = vmatmul.bf16.gmra.mxu0 %v6832
    %v7661 = vpop.f32.mrf.mxu0
    %v7662 = vadd.f32 %v7649, %v7661
    %v7663 = vpop.f32.mrf.mxu0
    %7664 = vdwg.mxu0
    %v7665 = vpack.c.bf16 %v6934, %v6934
    %v7666 = vpack.c.bf16 %v7038, %v7038
    %v7667 = vpack.c.bf16 %v7142, %v7142
    %v7668 = vpack.c.bf16 %v7246, %v7246
    %v7669 = vpack.c.bf16 %v7350, %v7350
    %v7670 = vpack.c.bf16 %v7454, %v7454
    %v7671 = vpack.c.bf16 %v7558, %v7558
    %v7672 = vpack.c.bf16 %v7662, %v7662
    %7673 = vmatpush.bf16.msra.mxu0 %v6155
    %7674 = vmatpush.bf16.msra.mxu0 %v6153
    %7675 = vmatpush.bf16.msra.mxu0 %v6151
    %7676 = vmatpush.bf16.msra.mxu0 %v6149
    %7677 = vmatpush.bf16.msra.mxu0 %v6147
    %7678 = vmatpush.bf16.msra.mxu0 %v6145
    %7679 = vmatpush.bf16.msra.mxu0 %v6143
    %7680 = vmatpush.bf16.msra.mxu0 %v6141
    %7681 = vmatmul.bf16.gmra.mxu0 %v7665
    %v7682 = vpop.f32.mrf.mxu0
    %v7683 = vadd.f32 %v1122, %v7682
    %v7684 = vpop.f32.mrf.mxu0
    %7685 = vdwg.mxu0
    %7686 = vmatpush.bf16.msra.mxu0 %v6171
    %7687 = vmatpush.bf16.msra.mxu0 %v6169
    %7688 = vmatpush.bf16.msra.mxu0 %v6167
    %7689 = vmatpush.bf16.msra.mxu0 %v6165
    %7690 = vmatpush.bf16.msra.mxu0 %v6163
    %7691 = vmatpush.bf16.msra.mxu0 %v6161
    %7692 = vmatpush.bf16.msra.mxu0 %v6159
    %7693 = vmatpush.bf16.msra.mxu0 %v6157
    %7694 = vmatmul.bf16.gmra.mxu0 %v7666
    %v7695 = vpop.f32.mrf.mxu0
    %v7696 = vadd.f32 %v7683, %v7695
    %v7697 = vpop.f32.mrf.mxu0
    %7698 = vdwg.mxu0
    %7699 = vmatpush.bf16.msra.mxu0 %v6187
    %7700 = vmatpush.bf16.msra.mxu0 %v6185
    %7701 = vmatpush.bf16.msra.mxu0 %v6183
    %7702 = vmatpush.bf16.msra.mxu0 %v6181
    %7703 = vmatpush.bf16.msra.mxu0 %v6179
    %7704 = vmatpush.bf16.msra.mxu0 %v6177
    %7705 = vmatpush.bf16.msra.mxu0 %v6175
    %7706 = vmatpush.bf16.msra.mxu0 %v6173
    %7707 = vmatmul.bf16.gmra.mxu0 %v7667
    %v7708 = vpop.f32.mrf.mxu0
    %v7709 = vadd.f32 %v7696, %v7708
    %v7710 = vpop.f32.mrf.mxu0
    %7711 = vdwg.mxu0
    %7712 = vmatpush.bf16.msra.mxu0 %v6203
    %7713 = vmatpush.bf16.msra.mxu0 %v6201
    %7714 = vmatpush.bf16.msra.mxu0 %v6199
    %7715 = vmatpush.bf16.msra.mxu0 %v6197
    %7716 = vmatpush.bf16.msra.mxu0 %v6195
    %7717 = vmatpush.bf16.msra.mxu0 %v6193
    %7718 = vmatpush.bf16.msra.mxu0 %v6191
    %7719 = vmatpush.bf16.msra.mxu0 %v6189
    %7720 = vmatmul.bf16.gmra.mxu0 %v7668
    %v7721 = vpop.f32.mrf.mxu0
    %v7722 = vadd.f32 %v7709, %v7721
    %v7723 = vpop.f32.mrf.mxu0
    %7724 = vdwg.mxu0
    %7725 = vmatpush.bf16.msra.mxu0 %v6219
    %7726 = vmatpush.bf16.msra.mxu0 %v6217
    %7727 = vmatpush.bf16.msra.mxu0 %v6215
    %7728 = vmatpush.bf16.msra.mxu0 %v6213
    %7729 = vmatpush.bf16.msra.mxu0 %v6211
    %7730 = vmatpush.bf16.msra.mxu0 %v6209
    %7731 = vmatpush.bf16.msra.mxu0 %v6207
    %7732 = vmatpush.bf16.msra.mxu0 %v6205
    %7733 = vmatmul.bf16.gmra.mxu0 %v7669
    %v7734 = vpop.f32.mrf.mxu0
    %v7735 = vadd.f32 %v7722, %v7734
    %v7736 = vpop.f32.mrf.mxu0
    %7737 = vdwg.mxu0
    %7738 = vmatpush.bf16.msra.mxu0 %v6235
    %7739 = vmatpush.bf16.msra.mxu0 %v6233
    %7740 = vmatpush.bf16.msra.mxu0 %v6231
    %7741 = vmatpush.bf16.msra.mxu0 %v6229
    %7742 = vmatpush.bf16.msra.mxu0 %v6227
    %7743 = vmatpush.bf16.msra.mxu0 %v6225
    %7744 = vmatpush.bf16.msra.mxu0 %v6223
    %7745 = vmatpush.bf16.msra.mxu0 %v6221
    %7746 = vmatmul.bf16.gmra.mxu0 %v7670
    %v7747 = vpop.f32.mrf.mxu0
    %v7748 = vadd.f32 %v7735, %v7747
    %v7749 = vpop.f32.mrf.mxu0
    %7750 = vdwg.mxu0
    %7751 = vmatpush.bf16.msra.mxu0 %v6251
    %7752 = vmatpush.bf16.msra.mxu0 %v6249
    %7753 = vmatpush.bf16.msra.mxu0 %v6247
    %7754 = vmatpush.bf16.msra.mxu0 %v6245
    %7755 = vmatpush.bf16.msra.mxu0 %v6243
    %7756 = vmatpush.bf16.msra.mxu0 %v6241
    %7757 = vmatpush.bf16.msra.mxu0 %v6239
    %7758 = vmatpush.bf16.msra.mxu0 %v6237
    %7759 = vmatmul.bf16.gmra.mxu0 %v7671
    %v7760 = vpop.f32.mrf.mxu0
    %v7761 = vadd.f32 %v7748, %v7760
    %v7762 = vpop.f32.mrf.mxu0
    %7763 = vdwg.mxu0
    %7764 = vmatpush.bf16.msra.mxu0 %v6267
    %7765 = vmatpush.bf16.msra.mxu0 %v6265
    %7766 = vmatpush.bf16.msra.mxu0 %v6263
    %7767 = vmatpush.bf16.msra.mxu0 %v6261
    %7768 = vmatpush.bf16.msra.mxu0 %v6259
    %7769 = vmatpush.bf16.msra.mxu0 %v6257
    %7770 = vmatpush.bf16.msra.mxu0 %v6255
    %7771 = vmatpush.bf16.msra.mxu0 %v6253
    %7772 = vmatmul.bf16.gmra.mxu0 %v7672
    %v7773 = vpop.f32.mrf.mxu0
    %v7774 = vadd.f32 %v7761, %v7773
    %v7775 = vpop.f32.mrf.mxu0
    %7776 = vdwg.mxu0
    %7777 = vmatpush.bf16.msra.mxu0 %v6156
    %7778 = vmatpush.bf16.msra.mxu0 %v6154
    %7779 = vmatpush.bf16.msra.mxu0 %v6152
    %7780 = vmatpush.bf16.msra.mxu0 %v6150
    %7781 = vmatpush.bf16.msra.mxu0 %v6148
    %7782 = vmatpush.bf16.msra.mxu0 %v6146
    %7783 = vmatpush.bf16.msra.mxu0 %v6144
    %7784 = vmatpush.bf16.msra.mxu0 %v6142
    %7785 = vmatmul.bf16.gmra.mxu0 %v7665
    %v7786 = vpop.f32.mrf.mxu0
    %v7787 = vadd.f32 %v1123, %v7786
    %v7788 = vpop.f32.mrf.mxu0
    %7789 = vdwg.mxu0
    %7790 = vmatpush.bf16.msra.mxu0 %v6172
    %7791 = vmatpush.bf16.msra.mxu0 %v6170
    %7792 = vmatpush.bf16.msra.mxu0 %v6168
    %7793 = vmatpush.bf16.msra.mxu0 %v6166
    %7794 = vmatpush.bf16.msra.mxu0 %v6164
    %7795 = vmatpush.bf16.msra.mxu0 %v6162
    %7796 = vmatpush.bf16.msra.mxu0 %v6160
    %7797 = vmatpush.bf16.msra.mxu0 %v6158
    %7798 = vmatmul.bf16.gmra.mxu0 %v7666
    %v7799 = vpop.f32.mrf.mxu0
    %v7800 = vadd.f32 %v7787, %v7799
    %v7801 = vpop.f32.mrf.mxu0
    %7802 = vdwg.mxu0
    %7803 = vmatpush.bf16.msra.mxu0 %v6188
    %7804 = vmatpush.bf16.msra.mxu0 %v6186
    %7805 = vmatpush.bf16.msra.mxu0 %v6184
    %7806 = vmatpush.bf16.msra.mxu0 %v6182
    %7807 = vmatpush.bf16.msra.mxu0 %v6180
    %7808 = vmatpush.bf16.msra.mxu0 %v6178
    %7809 = vmatpush.bf16.msra.mxu0 %v6176
    %7810 = vmatpush.bf16.msra.mxu0 %v6174
    %7811 = vmatmul.bf16.gmra.mxu0 %v7667
    %v7812 = vpop.f32.mrf.mxu0
    %v7813 = vadd.f32 %v7800, %v7812
    %v7814 = vpop.f32.mrf.mxu0
    %7815 = vdwg.mxu0
    %7816 = vmatpush.bf16.msra.mxu0 %v6204
    %7817 = vmatpush.bf16.msra.mxu0 %v6202
    %7818 = vmatpush.bf16.msra.mxu0 %v6200
    %7819 = vmatpush.bf16.msra.mxu0 %v6198
    %7820 = vmatpush.bf16.msra.mxu0 %v6196
    %7821 = vmatpush.bf16.msra.mxu0 %v6194
    %7822 = vmatpush.bf16.msra.mxu0 %v6192
    %7823 = vmatpush.bf16.msra.mxu0 %v6190
    %7824 = vmatmul.bf16.gmra.mxu0 %v7668
    %v7825 = vpop.f32.mrf.mxu0
    %v7826 = vadd.f32 %v7813, %v7825
    %v7827 = vpop.f32.mrf.mxu0
    %7828 = vdwg.mxu0
    %7829 = vmatpush.bf16.msra.mxu0 %v6220
    %7830 = vmatpush.bf16.msra.mxu0 %v6218
    %7831 = vmatpush.bf16.msra.mxu0 %v6216
    %7832 = vmatpush.bf16.msra.mxu0 %v6214
    %7833 = vmatpush.bf16.msra.mxu0 %v6212
    %7834 = vmatpush.bf16.msra.mxu0 %v6210
    %7835 = vmatpush.bf16.msra.mxu0 %v6208
    %7836 = vmatpush.bf16.msra.mxu0 %v6206
    %7837 = vmatmul.bf16.gmra.mxu0 %v7669
    %v7838 = vpop.f32.mrf.mxu0
    %v7839 = vadd.f32 %v7826, %v7838
    %v7840 = vpop.f32.mrf.mxu0
    %7841 = vdwg.mxu0
    %7842 = vmatpush.bf16.msra.mxu0 %v6236
    %7843 = vmatpush.bf16.msra.mxu0 %v6234
    %7844 = vmatpush.bf16.msra.mxu0 %v6232
    %7845 = vmatpush.bf16.msra.mxu0 %v6230
    %7846 = vmatpush.bf16.msra.mxu0 %v6228
    %7847 = vmatpush.bf16.msra.mxu0 %v6226
    %7848 = vmatpush.bf16.msra.mxu0 %v6224
    %7849 = vmatpush.bf16.msra.mxu0 %v6222
    %7850 = vmatmul.bf16.gmra.mxu0 %v7670
    %v7851 = vpop.f32.mrf.mxu0
    %v7852 = vadd.f32 %v7839, %v7851
    %v7853 = vpop.f32.mrf.mxu0
    %7854 = vdwg.mxu0
    %7855 = vmatpush.bf16.msra.mxu0 %v6252
    %7856 = vmatpush.bf16.msra.mxu0 %v6250
    %7857 = vmatpush.bf16.msra.mxu0 %v6248
    %7858 = vmatpush.bf16.msra.mxu0 %v6246
    %7859 = vmatpush.bf16.msra.mxu0 %v6244
    %7860 = vmatpush.bf16.msra.mxu0 %v6242
    %7861 = vmatpush.bf16.msra.mxu0 %v6240
    %7862 = vmatpush.bf16.msra.mxu0 %v6238
    %7863 = vmatmul.bf16.gmra.mxu0 %v7671
    %v7864 = vpop.f32.mrf.mxu0
    %v7865 = vadd.f32 %v7852, %v7864
    %v7866 = vpop.f32.mrf.mxu0
    %7867 = vdwg.mxu0
    %7868 = vmatpush.bf16.msra.mxu0 %v6268
    %7869 = vmatpush.bf16.msra.mxu0 %v6266
    %7870 = vmatpush.bf16.msra.mxu0 %v6264
    %7871 = vmatpush.bf16.msra.mxu0 %v6262
    %7872 = vmatpush.bf16.msra.mxu0 %v6260
    %7873 = vmatpush.bf16.msra.mxu0 %v6258
    %7874 = vmatpush.bf16.msra.mxu0 %v6256
    %7875 = vmatpush.bf16.msra.mxu0 %v6254
    %7876 = vmatmul.bf16.gmra.mxu0 %v7672
    %v7877 = vpop.f32.mrf.mxu0
    %v7878 = vadd.f32 %v7865, %v7877
    %v7879 = vpop.f32.mrf.mxu0
    %7880 = vdwg.mxu0
    %v7881 = vadd.f32 %v6605, %v7774
    %v7882 = vadd.f32 %v6606, %v7878
    %v7883 = vpack.c.bf16 %v7881, %v7881
    %v7884 = vpack.c.bf16 %v7882, %v7882
    %7885 = vmatpush.bf16.msra.mxu0 %v1933
    %7886 = vmatpush.bf16.msra.mxu0 %v1925
    %7887 = vmatpush.bf16.msra.mxu0 %v1917
    %7888 = vmatpush.bf16.msra.mxu0 %v1909
    %7889 = vmatpush.bf16.msra.mxu0 %v1901
    %7890 = vmatpush.bf16.msra.mxu0 %v1893
    %7891 = vmatpush.bf16.msra.mxu0 %v1885
    %7892 = vmatpush.bf16.msra.mxu0 %v1877
    %7893 = vmatmul.bf16.gmra.mxu0 %v7883
    %v7894 = vpop.f32.mrf.mxu0
    %v7895 = vadd.f32 0.0, %v7894
    %v7896 = vpop.f32.mrf.mxu0
    %7897 = vdwg.mxu0
    %7898 = vmatpush.bf16.msra.mxu0 %v1997
    %7899 = vmatpush.bf16.msra.mxu0 %v1989
    %7900 = vmatpush.bf16.msra.mxu0 %v1981
    %7901 = vmatpush.bf16.msra.mxu0 %v1973
    %7902 = vmatpush.bf16.msra.mxu0 %v1965
    %7903 = vmatpush.bf16.msra.mxu0 %v1957
    %7904 = vmatpush.bf16.msra.mxu0 %v1949
    %7905 = vmatpush.bf16.msra.mxu0 %v1941
    %7906 = vmatmul.bf16.gmra.mxu0 %v7884
    %v7907 = vpop.f32.mrf.mxu0
    %v7908 = vadd.f32 %v7895, %v7907
    %v7909 = vpop.f32.mrf.mxu0
    %7910 = vdwg.mxu0
    %7911 = vmatpush.bf16.msra.mxu0 %v1934
    %7912 = vmatpush.bf16.msra.mxu0 %v1926
    %7913 = vmatpush.bf16.msra.mxu0 %v1918
    %7914 = vmatpush.bf16.msra.mxu0 %v1910
    %7915 = vmatpush.bf16.msra.mxu0 %v1902
    %7916 = vmatpush.bf16.msra.mxu0 %v1894
    %7917 = vmatpush.bf16.msra.mxu0 %v1886
    %7918 = vmatpush.bf16.msra.mxu0 %v1878
    %7919 = vmatmul.bf16.gmra.mxu0 %v7883
    %v7920 = vpop.f32.mrf.mxu0
    %v7921 = vadd.f32 0.0, %v7920
    %v7922 = vpop.f32.mrf.mxu0
    %7923 = vdwg.mxu0
    %7924 = vmatpush.bf16.msra.mxu0 %v1998
    %7925 = vmatpush.bf16.msra.mxu0 %v1990
    %7926 = vmatpush.bf16.msra.mxu0 %v1982
    %7927 = vmatpush.bf16.msra.mxu0 %v1974
    %7928 = vmatpush.bf16.msra.mxu0 %v1966
    %7929 = vmatpush.bf16.msra.mxu0 %v1958
    %7930 = vmatpush.bf16.msra.mxu0 %v1950
    %7931 = vmatpush.bf16.msra.mxu0 %v1942
    %7932 = vmatmul.bf16.gmra.mxu0 %v7884
    %v7933 = vpop.f32.mrf.mxu0
    %v7934 = vadd.f32 %v7921, %v7933
    %v7935 = vpop.f32.mrf.mxu0
    %7936 = vdwg.mxu0
    %7937 = vmatpush.bf16.msra.mxu0 %v1935
    %7938 = vmatpush.bf16.msra.mxu0 %v1927
    %7939 = vmatpush.bf16.msra.mxu0 %v1919
    %7940 = vmatpush.bf16.msra.mxu0 %v1911
    %7941 = vmatpush.bf16.msra.mxu0 %v1903
    %7942 = vmatpush.bf16.msra.mxu0 %v1895
    %7943 = vmatpush.bf16.msra.mxu0 %v1887
    %7944 = vmatpush.bf16.msra.mxu0 %v1879
    %7945 = vmatmul.bf16.gmra.mxu0 %v7883
    %v7946 = vpop.f32.mrf.mxu0
    %v7947 = vadd.f32 0.0, %v7946
    %v7948 = vpop.f32.mrf.mxu0
    %7949 = vdwg.mxu0
    %7950 = vmatpush.bf16.msra.mxu0 %v1999
    %7951 = vmatpush.bf16.msra.mxu0 %v1991
    %7952 = vmatpush.bf16.msra.mxu0 %v1983
    %7953 = vmatpush.bf16.msra.mxu0 %v1975
    %7954 = vmatpush.bf16.msra.mxu0 %v1967
    %7955 = vmatpush.bf16.msra.mxu0 %v1959
    %7956 = vmatpush.bf16.msra.mxu0 %v1951
    %7957 = vmatpush.bf16.msra.mxu0 %v1943
    %7958 = vmatmul.bf16.gmra.mxu0 %v7884
    %v7959 = vpop.f32.mrf.mxu0
    %v7960 = vadd.f32 %v7947, %v7959
    %v7961 = vpop.f32.mrf.mxu0
    %7962 = vdwg.mxu0
    %7963 = vmatpush.bf16.msra.mxu0 %v1936
    %7964 = vmatpush.bf16.msra.mxu0 %v1928
    %7965 = vmatpush.bf16.msra.mxu0 %v1920
    %7966 = vmatpush.bf16.msra.mxu0 %v1912
    %7967 = vmatpush.bf16.msra.mxu0 %v1904
    %7968 = vmatpush.bf16.msra.mxu0 %v1896
    %7969 = vmatpush.bf16.msra.mxu0 %v1888
    %7970 = vmatpush.bf16.msra.mxu0 %v1880
    %7971 = vmatmul.bf16.gmra.mxu0 %v7883
    %v7972 = vpop.f32.mrf.mxu0
    %v7973 = vadd.f32 0.0, %v7972
    %v7974 = vpop.f32.mrf.mxu0
    %7975 = vdwg.mxu0
    %7976 = vmatpush.bf16.msra.mxu0 %v2000
    %7977 = vmatpush.bf16.msra.mxu0 %v1992
    %7978 = vmatpush.bf16.msra.mxu0 %v1984
    %7979 = vmatpush.bf16.msra.mxu0 %v1976
    %7980 = vmatpush.bf16.msra.mxu0 %v1968
    %7981 = vmatpush.bf16.msra.mxu0 %v1960
    %7982 = vmatpush.bf16.msra.mxu0 %v1952
    %7983 = vmatpush.bf16.msra.mxu0 %v1944
    %7984 = vmatmul.bf16.gmra.mxu0 %v7884
    %v7985 = vpop.f32.mrf.mxu0
    %v7986 = vadd.f32 %v7973, %v7985
    %v7987 = vpop.f32.mrf.mxu0
    %7988 = vdwg.mxu0
    %7989 = vmatpush.bf16.msra.mxu0 %v1937
    %7990 = vmatpush.bf16.msra.mxu0 %v1929
    %7991 = vmatpush.bf16.msra.mxu0 %v1921
    %7992 = vmatpush.bf16.msra.mxu0 %v1913
    %7993 = vmatpush.bf16.msra.mxu0 %v1905
    %7994 = vmatpush.bf16.msra.mxu0 %v1897
    %7995 = vmatpush.bf16.msra.mxu0 %v1889
    %7996 = vmatpush.bf16.msra.mxu0 %v1881
    %7997 = vmatmul.bf16.gmra.mxu0 %v7883
    %v7998 = vpop.f32.mrf.mxu0
    %v7999 = vadd.f32 0.0, %v7998
    %v8000 = vpop.f32.mrf.mxu0
    %8001 = vdwg.mxu0
    %8002 = vmatpush.bf16.msra.mxu0 %v2001
    %8003 = vmatpush.bf16.msra.mxu0 %v1993
    %8004 = vmatpush.bf16.msra.mxu0 %v1985
    %8005 = vmatpush.bf16.msra.mxu0 %v1977
    %8006 = vmatpush.bf16.msra.mxu0 %v1969
    %8007 = vmatpush.bf16.msra.mxu0 %v1961
    %8008 = vmatpush.bf16.msra.mxu0 %v1953
    %8009 = vmatpush.bf16.msra.mxu0 %v1945
    %8010 = vmatmul.bf16.gmra.mxu0 %v7884
    %v8011 = vpop.f32.mrf.mxu0
    %v8012 = vadd.f32 %v7999, %v8011
    %v8013 = vpop.f32.mrf.mxu0
    %8014 = vdwg.mxu0
    %8015 = vmatpush.bf16.msra.mxu0 %v1938
    %8016 = vmatpush.bf16.msra.mxu0 %v1930
    %8017 = vmatpush.bf16.msra.mxu0 %v1922
    %8018 = vmatpush.bf16.msra.mxu0 %v1914
    %8019 = vmatpush.bf16.msra.mxu0 %v1906
    %8020 = vmatpush.bf16.msra.mxu0 %v1898
    %8021 = vmatpush.bf16.msra.mxu0 %v1890
    %8022 = vmatpush.bf16.msra.mxu0 %v1882
    %8023 = vmatmul.bf16.gmra.mxu0 %v7883
    %v8024 = vpop.f32.mrf.mxu0
    %v8025 = vadd.f32 0.0, %v8024
    %v8026 = vpop.f32.mrf.mxu0
    %8027 = vdwg.mxu0
    %8028 = vmatpush.bf16.msra.mxu0 %v2002
    %8029 = vmatpush.bf16.msra.mxu0 %v1994
    %8030 = vmatpush.bf16.msra.mxu0 %v1986
    %8031 = vmatpush.bf16.msra.mxu0 %v1978
    %8032 = vmatpush.bf16.msra.mxu0 %v1970
    %8033 = vmatpush.bf16.msra.mxu0 %v1962
    %8034 = vmatpush.bf16.msra.mxu0 %v1954
    %8035 = vmatpush.bf16.msra.mxu0 %v1946
    %8036 = vmatmul.bf16.gmra.mxu0 %v7884
    %v8037 = vpop.f32.mrf.mxu0
    %v8038 = vadd.f32 %v8025, %v8037
    %v8039 = vpop.f32.mrf.mxu0
    %8040 = vdwg.mxu0
    %8041 = vmatpush.bf16.msra.mxu0 %v1939
    %8042 = vmatpush.bf16.msra.mxu0 %v1931
    %8043 = vmatpush.bf16.msra.mxu0 %v1923
    %8044 = vmatpush.bf16.msra.mxu0 %v1915
    %8045 = vmatpush.bf16.msra.mxu0 %v1907
    %8046 = vmatpush.bf16.msra.mxu0 %v1899
    %8047 = vmatpush.bf16.msra.mxu0 %v1891
    %8048 = vmatpush.bf16.msra.mxu0 %v1883
    %8049 = vmatmul.bf16.gmra.mxu0 %v7883
    %v8050 = vpop.f32.mrf.mxu0
    %v8051 = vadd.f32 0.0, %v8050
    %v8052 = vpop.f32.mrf.mxu0
    %8053 = vdwg.mxu0
    %8054 = vmatpush.bf16.msra.mxu0 %v2003
    %8055 = vmatpush.bf16.msra.mxu0 %v1995
    %8056 = vmatpush.bf16.msra.mxu0 %v1987
    %8057 = vmatpush.bf16.msra.mxu0 %v1979
    %8058 = vmatpush.bf16.msra.mxu0 %v1971
    %8059 = vmatpush.bf16.msra.mxu0 %v1963
    %8060 = vmatpush.bf16.msra.mxu0 %v1955
    %8061 = vmatpush.bf16.msra.mxu0 %v1947
    %8062 = vmatmul.bf16.gmra.mxu0 %v7884
    %v8063 = vpop.f32.mrf.mxu0
    %v8064 = vadd.f32 %v8051, %v8063
    %v8065 = vpop.f32.mrf.mxu0
    %8066 = vdwg.mxu0
    %8067 = vmatpush.bf16.msra.mxu0 %v1940
    %8068 = vmatpush.bf16.msra.mxu0 %v1932
    %8069 = vmatpush.bf16.msra.mxu0 %v1924
    %8070 = vmatpush.bf16.msra.mxu0 %v1916
    %8071 = vmatpush.bf16.msra.mxu0 %v1908
    %8072 = vmatpush.bf16.msra.mxu0 %v1900
    %8073 = vmatpush.bf16.msra.mxu0 %v1892
    %8074 = vmatpush.bf16.msra.mxu0 %v1884
    %8075 = vmatmul.bf16.gmra.mxu0 %v7883
    %v8076 = vpop.f32.mrf.mxu0
    %v8077 = vadd.f32 0.0, %v8076
    %v8078 = vpop.f32.mrf.mxu0
    %8079 = vdwg.mxu0
    %8080 = vmatpush.bf16.msra.mxu0 %v2004
    %8081 = vmatpush.bf16.msra.mxu0 %v1996
    %8082 = vmatpush.bf16.msra.mxu0 %v1988
    %8083 = vmatpush.bf16.msra.mxu0 %v1980
    %8084 = vmatpush.bf16.msra.mxu0 %v1972
    %8085 = vmatpush.bf16.msra.mxu0 %v1964
    %8086 = vmatpush.bf16.msra.mxu0 %v1956
    %8087 = vmatpush.bf16.msra.mxu0 %v1948
    %8088 = vmatmul.bf16.gmra.mxu0 %v7884
    %v8089 = vpop.f32.mrf.mxu0
    %v8090 = vadd.f32 %v8077, %v8089
    %v8091 = vpop.f32.mrf.mxu0
    %8092 = vdwg.mxu0
    %v8093 = vadd.f32 %v1397, %v7908
    %v8094 = vadd.f32 %v1410, %v7934
    %v8095 = vadd.f32 %v1423, %v7960
    %v8096 = vadd.f32 %v1436, %v7986
    %v8097 = vadd.f32 %v1449, %v8012
    %v8098 = vadd.f32 %v1462, %v8038
    %v8099 = vadd.f32 %v1475, %v8064
    %v8100 = vadd.f32 %v1488, %v8090
    %v8101 = vpack.c.bf16 %v8093, %v8093
    %v8102 = vpack.c.bf16 %v8094, %v8094
    %v8103 = vpack.c.bf16 %v8095, %v8095
    %v8104 = vpack.c.bf16 %v8096, %v8096
    %v8105 = vpack.c.bf16 %v8097, %v8097
    %v8106 = vpack.c.bf16 %v8098, %v8098
    %v8107 = vpack.c.bf16 %v8099, %v8099
    %v8108 = vpack.c.bf16 %v8100, %v8100
    %8109 = vmatpush.bf16.msra.mxu0 %v3949
    %8110 = vmatpush.bf16.msra.mxu0 %v3941
    %8111 = vmatpush.bf16.msra.mxu0 %v3933
    %8112 = vmatpush.bf16.msra.mxu0 %v3925
    %8113 = vmatpush.bf16.msra.mxu0 %v3917
    %8114 = vmatpush.bf16.msra.mxu0 %v3909
    %8115 = vmatpush.bf16.msra.mxu0 %v3901
    %8116 = vmatpush.bf16.msra.mxu0 %v3893
    %8117 = vmatmul.bf16.gmra.mxu0 %v8101
    %v8118 = vpop.f32.mrf.mxu0
    %v8119 = vadd.f32 %v1104, %v8118
    %v8120 = vpop.f32.mrf.mxu0
    %8121 = vdwg.mxu0
    %8122 = vmatpush.bf16.msra.mxu0 %v4013
    %8123 = vmatpush.bf16.msra.mxu0 %v4005
    %8124 = vmatpush.bf16.msra.mxu0 %v3997
    %8125 = vmatpush.bf16.msra.mxu0 %v3989
    %8126 = vmatpush.bf16.msra.mxu0 %v3981
    %8127 = vmatpush.bf16.msra.mxu0 %v3973
    %8128 = vmatpush.bf16.msra.mxu0 %v3965
    %8129 = vmatpush.bf16.msra.mxu0 %v3957
    %8130 = vmatmul.bf16.gmra.mxu0 %v8102
    %v8131 = vpop.f32.mrf.mxu0
    %v8132 = vadd.f32 %v8119, %v8131
    %v8133 = vpop.f32.mrf.mxu0
    %8134 = vdwg.mxu0
    %8135 = vmatpush.bf16.msra.mxu0 %v4077
    %8136 = vmatpush.bf16.msra.mxu0 %v4069
    %8137 = vmatpush.bf16.msra.mxu0 %v4061
    %8138 = vmatpush.bf16.msra.mxu0 %v4053
    %8139 = vmatpush.bf16.msra.mxu0 %v4045
    %8140 = vmatpush.bf16.msra.mxu0 %v4037
    %8141 = vmatpush.bf16.msra.mxu0 %v4029
    %8142 = vmatpush.bf16.msra.mxu0 %v4021
    %8143 = vmatmul.bf16.gmra.mxu0 %v8103
    %v8144 = vpop.f32.mrf.mxu0
    %v8145 = vadd.f32 %v8132, %v8144
    %v8146 = vpop.f32.mrf.mxu0
    %8147 = vdwg.mxu0
    %8148 = vmatpush.bf16.msra.mxu0 %v4141
    %8149 = vmatpush.bf16.msra.mxu0 %v4133
    %8150 = vmatpush.bf16.msra.mxu0 %v4125
    %8151 = vmatpush.bf16.msra.mxu0 %v4117
    %8152 = vmatpush.bf16.msra.mxu0 %v4109
    %8153 = vmatpush.bf16.msra.mxu0 %v4101
    %8154 = vmatpush.bf16.msra.mxu0 %v4093
    %8155 = vmatpush.bf16.msra.mxu0 %v4085
    %8156 = vmatmul.bf16.gmra.mxu0 %v8104
    %v8157 = vpop.f32.mrf.mxu0
    %v8158 = vadd.f32 %v8145, %v8157
    %v8159 = vpop.f32.mrf.mxu0
    %8160 = vdwg.mxu0
    %8161 = vmatpush.bf16.msra.mxu0 %v4205
    %8162 = vmatpush.bf16.msra.mxu0 %v4197
    %8163 = vmatpush.bf16.msra.mxu0 %v4189
    %8164 = vmatpush.bf16.msra.mxu0 %v4181
    %8165 = vmatpush.bf16.msra.mxu0 %v4173
    %8166 = vmatpush.bf16.msra.mxu0 %v4165
    %8167 = vmatpush.bf16.msra.mxu0 %v4157
    %8168 = vmatpush.bf16.msra.mxu0 %v4149
    %8169 = vmatmul.bf16.gmra.mxu0 %v8105
    %v8170 = vpop.f32.mrf.mxu0
    %v8171 = vadd.f32 %v8158, %v8170
    %v8172 = vpop.f32.mrf.mxu0
    %8173 = vdwg.mxu0
    %8174 = vmatpush.bf16.msra.mxu0 %v4269
    %8175 = vmatpush.bf16.msra.mxu0 %v4261
    %8176 = vmatpush.bf16.msra.mxu0 %v4253
    %8177 = vmatpush.bf16.msra.mxu0 %v4245
    %8178 = vmatpush.bf16.msra.mxu0 %v4237
    %8179 = vmatpush.bf16.msra.mxu0 %v4229
    %8180 = vmatpush.bf16.msra.mxu0 %v4221
    %8181 = vmatpush.bf16.msra.mxu0 %v4213
    %8182 = vmatmul.bf16.gmra.mxu0 %v8106
    %v8183 = vpop.f32.mrf.mxu0
    %v8184 = vadd.f32 %v8171, %v8183
    %v8185 = vpop.f32.mrf.mxu0
    %8186 = vdwg.mxu0
    %8187 = vmatpush.bf16.msra.mxu0 %v4333
    %8188 = vmatpush.bf16.msra.mxu0 %v4325
    %8189 = vmatpush.bf16.msra.mxu0 %v4317
    %8190 = vmatpush.bf16.msra.mxu0 %v4309
    %8191 = vmatpush.bf16.msra.mxu0 %v4301
    %8192 = vmatpush.bf16.msra.mxu0 %v4293
    %8193 = vmatpush.bf16.msra.mxu0 %v4285
    %8194 = vmatpush.bf16.msra.mxu0 %v4277
    %8195 = vmatmul.bf16.gmra.mxu0 %v8107
    %v8196 = vpop.f32.mrf.mxu0
    %v8197 = vadd.f32 %v8184, %v8196
    %v8198 = vpop.f32.mrf.mxu0
    %8199 = vdwg.mxu0
    %8200 = vmatpush.bf16.msra.mxu0 %v4397
    %8201 = vmatpush.bf16.msra.mxu0 %v4389
    %8202 = vmatpush.bf16.msra.mxu0 %v4381
    %8203 = vmatpush.bf16.msra.mxu0 %v4373
    %8204 = vmatpush.bf16.msra.mxu0 %v4365
    %8205 = vmatpush.bf16.msra.mxu0 %v4357
    %8206 = vmatpush.bf16.msra.mxu0 %v4349
    %8207 = vmatpush.bf16.msra.mxu0 %v4341
    %8208 = vmatmul.bf16.gmra.mxu0 %v8108
    %v8209 = vpop.f32.mrf.mxu0
    %v8210 = vadd.f32 %v8197, %v8209
    %v8211 = vpop.f32.mrf.mxu0
    %8212 = vdwg.mxu0
    %8213 = vmatpush.bf16.msra.mxu0 %v3950
    %8214 = vmatpush.bf16.msra.mxu0 %v3942
    %8215 = vmatpush.bf16.msra.mxu0 %v3934
    %8216 = vmatpush.bf16.msra.mxu0 %v3926
    %8217 = vmatpush.bf16.msra.mxu0 %v3918
    %8218 = vmatpush.bf16.msra.mxu0 %v3910
    %8219 = vmatpush.bf16.msra.mxu0 %v3902
    %8220 = vmatpush.bf16.msra.mxu0 %v3894
    %8221 = vmatmul.bf16.gmra.mxu0 %v8101
    %v8222 = vpop.f32.mrf.mxu0
    %v8223 = vadd.f32 %v1105, %v8222
    %v8224 = vpop.f32.mrf.mxu0
    %8225 = vdwg.mxu0
    %8226 = vmatpush.bf16.msra.mxu0 %v4014
    %8227 = vmatpush.bf16.msra.mxu0 %v4006
    %8228 = vmatpush.bf16.msra.mxu0 %v3998
    %8229 = vmatpush.bf16.msra.mxu0 %v3990
    %8230 = vmatpush.bf16.msra.mxu0 %v3982
    %8231 = vmatpush.bf16.msra.mxu0 %v3974
    %8232 = vmatpush.bf16.msra.mxu0 %v3966
    %8233 = vmatpush.bf16.msra.mxu0 %v3958
    %8234 = vmatmul.bf16.gmra.mxu0 %v8102
    %v8235 = vpop.f32.mrf.mxu0
    %v8236 = vadd.f32 %v8223, %v8235
    %v8237 = vpop.f32.mrf.mxu0
    %8238 = vdwg.mxu0
    %8239 = vmatpush.bf16.msra.mxu0 %v4078
    %8240 = vmatpush.bf16.msra.mxu0 %v4070
    %8241 = vmatpush.bf16.msra.mxu0 %v4062
    %8242 = vmatpush.bf16.msra.mxu0 %v4054
    %8243 = vmatpush.bf16.msra.mxu0 %v4046
    %8244 = vmatpush.bf16.msra.mxu0 %v4038
    %8245 = vmatpush.bf16.msra.mxu0 %v4030
    %8246 = vmatpush.bf16.msra.mxu0 %v4022
    %8247 = vmatmul.bf16.gmra.mxu0 %v8103
    %v8248 = vpop.f32.mrf.mxu0
    %v8249 = vadd.f32 %v8236, %v8248
    %v8250 = vpop.f32.mrf.mxu0
    %8251 = vdwg.mxu0
    %8252 = vmatpush.bf16.msra.mxu0 %v4142
    %8253 = vmatpush.bf16.msra.mxu0 %v4134
    %8254 = vmatpush.bf16.msra.mxu0 %v4126
    %8255 = vmatpush.bf16.msra.mxu0 %v4118
    %8256 = vmatpush.bf16.msra.mxu0 %v4110
    %8257 = vmatpush.bf16.msra.mxu0 %v4102
    %8258 = vmatpush.bf16.msra.mxu0 %v4094
    %8259 = vmatpush.bf16.msra.mxu0 %v4086
    %8260 = vmatmul.bf16.gmra.mxu0 %v8104
    %v8261 = vpop.f32.mrf.mxu0
    %v8262 = vadd.f32 %v8249, %v8261
    %v8263 = vpop.f32.mrf.mxu0
    %8264 = vdwg.mxu0
    %8265 = vmatpush.bf16.msra.mxu0 %v4206
    %8266 = vmatpush.bf16.msra.mxu0 %v4198
    %8267 = vmatpush.bf16.msra.mxu0 %v4190
    %8268 = vmatpush.bf16.msra.mxu0 %v4182
    %8269 = vmatpush.bf16.msra.mxu0 %v4174
    %8270 = vmatpush.bf16.msra.mxu0 %v4166
    %8271 = vmatpush.bf16.msra.mxu0 %v4158
    %8272 = vmatpush.bf16.msra.mxu0 %v4150
    %8273 = vmatmul.bf16.gmra.mxu0 %v8105
    %v8274 = vpop.f32.mrf.mxu0
    %v8275 = vadd.f32 %v8262, %v8274
    %v8276 = vpop.f32.mrf.mxu0
    %8277 = vdwg.mxu0
    %8278 = vmatpush.bf16.msra.mxu0 %v4270
    %8279 = vmatpush.bf16.msra.mxu0 %v4262
    %8280 = vmatpush.bf16.msra.mxu0 %v4254
    %8281 = vmatpush.bf16.msra.mxu0 %v4246
    %8282 = vmatpush.bf16.msra.mxu0 %v4238
    %8283 = vmatpush.bf16.msra.mxu0 %v4230
    %8284 = vmatpush.bf16.msra.mxu0 %v4222
    %8285 = vmatpush.bf16.msra.mxu0 %v4214
    %8286 = vmatmul.bf16.gmra.mxu0 %v8106
    %v8287 = vpop.f32.mrf.mxu0
    %v8288 = vadd.f32 %v8275, %v8287
    %v8289 = vpop.f32.mrf.mxu0
    %8290 = vdwg.mxu0
    %8291 = vmatpush.bf16.msra.mxu0 %v4334
    %8292 = vmatpush.bf16.msra.mxu0 %v4326
    %8293 = vmatpush.bf16.msra.mxu0 %v4318
    %8294 = vmatpush.bf16.msra.mxu0 %v4310
    %8295 = vmatpush.bf16.msra.mxu0 %v4302
    %8296 = vmatpush.bf16.msra.mxu0 %v4294
    %8297 = vmatpush.bf16.msra.mxu0 %v4286
    %8298 = vmatpush.bf16.msra.mxu0 %v4278
    %8299 = vmatmul.bf16.gmra.mxu0 %v8107
    %v8300 = vpop.f32.mrf.mxu0
    %v8301 = vadd.f32 %v8288, %v8300
    %v8302 = vpop.f32.mrf.mxu0
    %8303 = vdwg.mxu0
    %8304 = vmatpush.bf16.msra.mxu0 %v4398
    %8305 = vmatpush.bf16.msra.mxu0 %v4390
    %8306 = vmatpush.bf16.msra.mxu0 %v4382
    %8307 = vmatpush.bf16.msra.mxu0 %v4374
    %8308 = vmatpush.bf16.msra.mxu0 %v4366
    %8309 = vmatpush.bf16.msra.mxu0 %v4358
    %8310 = vmatpush.bf16.msra.mxu0 %v4350
    %8311 = vmatpush.bf16.msra.mxu0 %v4342
    %8312 = vmatmul.bf16.gmra.mxu0 %v8108
    %v8313 = vpop.f32.mrf.mxu0
    %v8314 = vadd.f32 %v8301, %v8313
    %v8315 = vpop.f32.mrf.mxu0
    %8316 = vdwg.mxu0
    %8317 = vmatpush.bf16.msra.mxu0 %v3951
    %8318 = vmatpush.bf16.msra.mxu0 %v3943
    %8319 = vmatpush.bf16.msra.mxu0 %v3935
    %8320 = vmatpush.bf16.msra.mxu0 %v3927
    %8321 = vmatpush.bf16.msra.mxu0 %v3919
    %8322 = vmatpush.bf16.msra.mxu0 %v3911
    %8323 = vmatpush.bf16.msra.mxu0 %v3903
    %8324 = vmatpush.bf16.msra.mxu0 %v3895
    %8325 = vmatmul.bf16.gmra.mxu0 %v8101
    %v8326 = vpop.f32.mrf.mxu0
    %v8327 = vadd.f32 %v1106, %v8326
    %v8328 = vpop.f32.mrf.mxu0
    %8329 = vdwg.mxu0
    %8330 = vmatpush.bf16.msra.mxu0 %v4015
    %8331 = vmatpush.bf16.msra.mxu0 %v4007
    %8332 = vmatpush.bf16.msra.mxu0 %v3999
    %8333 = vmatpush.bf16.msra.mxu0 %v3991
    %8334 = vmatpush.bf16.msra.mxu0 %v3983
    %8335 = vmatpush.bf16.msra.mxu0 %v3975
    %8336 = vmatpush.bf16.msra.mxu0 %v3967
    %8337 = vmatpush.bf16.msra.mxu0 %v3959
    %8338 = vmatmul.bf16.gmra.mxu0 %v8102
    %v8339 = vpop.f32.mrf.mxu0
    %v8340 = vadd.f32 %v8327, %v8339
    %v8341 = vpop.f32.mrf.mxu0
    %8342 = vdwg.mxu0
    %8343 = vmatpush.bf16.msra.mxu0 %v4079
    %8344 = vmatpush.bf16.msra.mxu0 %v4071
    %8345 = vmatpush.bf16.msra.mxu0 %v4063
    %8346 = vmatpush.bf16.msra.mxu0 %v4055
    %8347 = vmatpush.bf16.msra.mxu0 %v4047
    %8348 = vmatpush.bf16.msra.mxu0 %v4039
    %8349 = vmatpush.bf16.msra.mxu0 %v4031
    %8350 = vmatpush.bf16.msra.mxu0 %v4023
    %8351 = vmatmul.bf16.gmra.mxu0 %v8103
    %v8352 = vpop.f32.mrf.mxu0
    %v8353 = vadd.f32 %v8340, %v8352
    %v8354 = vpop.f32.mrf.mxu0
    %8355 = vdwg.mxu0
    %8356 = vmatpush.bf16.msra.mxu0 %v4143
    %8357 = vmatpush.bf16.msra.mxu0 %v4135
    %8358 = vmatpush.bf16.msra.mxu0 %v4127
    %8359 = vmatpush.bf16.msra.mxu0 %v4119
    %8360 = vmatpush.bf16.msra.mxu0 %v4111
    %8361 = vmatpush.bf16.msra.mxu0 %v4103
    %8362 = vmatpush.bf16.msra.mxu0 %v4095
    %8363 = vmatpush.bf16.msra.mxu0 %v4087
    %8364 = vmatmul.bf16.gmra.mxu0 %v8104
    %v8365 = vpop.f32.mrf.mxu0
    %v8366 = vadd.f32 %v8353, %v8365
    %v8367 = vpop.f32.mrf.mxu0
    %8368 = vdwg.mxu0
    %8369 = vmatpush.bf16.msra.mxu0 %v4207
    %8370 = vmatpush.bf16.msra.mxu0 %v4199
    %8371 = vmatpush.bf16.msra.mxu0 %v4191
    %8372 = vmatpush.bf16.msra.mxu0 %v4183
    %8373 = vmatpush.bf16.msra.mxu0 %v4175
    %8374 = vmatpush.bf16.msra.mxu0 %v4167
    %8375 = vmatpush.bf16.msra.mxu0 %v4159
    %8376 = vmatpush.bf16.msra.mxu0 %v4151
    %8377 = vmatmul.bf16.gmra.mxu0 %v8105
    %v8378 = vpop.f32.mrf.mxu0
    %v8379 = vadd.f32 %v8366, %v8378
    %v8380 = vpop.f32.mrf.mxu0
    %8381 = vdwg.mxu0
    %8382 = vmatpush.bf16.msra.mxu0 %v4271
    %8383 = vmatpush.bf16.msra.mxu0 %v4263
    %8384 = vmatpush.bf16.msra.mxu0 %v4255
    %8385 = vmatpush.bf16.msra.mxu0 %v4247
    %8386 = vmatpush.bf16.msra.mxu0 %v4239
    %8387 = vmatpush.bf16.msra.mxu0 %v4231
    %8388 = vmatpush.bf16.msra.mxu0 %v4223
    %8389 = vmatpush.bf16.msra.mxu0 %v4215
    %8390 = vmatmul.bf16.gmra.mxu0 %v8106
    %v8391 = vpop.f32.mrf.mxu0
    %v8392 = vadd.f32 %v8379, %v8391
    %v8393 = vpop.f32.mrf.mxu0
    %8394 = vdwg.mxu0
    %8395 = vmatpush.bf16.msra.mxu0 %v4335
    %8396 = vmatpush.bf16.msra.mxu0 %v4327
    %8397 = vmatpush.bf16.msra.mxu0 %v4319
    %8398 = vmatpush.bf16.msra.mxu0 %v4311
    %8399 = vmatpush.bf16.msra.mxu0 %v4303
    %8400 = vmatpush.bf16.msra.mxu0 %v4295
    %8401 = vmatpush.bf16.msra.mxu0 %v4287
    %8402 = vmatpush.bf16.msra.mxu0 %v4279
    %8403 = vmatmul.bf16.gmra.mxu0 %v8107
    %v8404 = vpop.f32.mrf.mxu0
    %v8405 = vadd.f32 %v8392, %v8404
    %v8406 = vpop.f32.mrf.mxu0
    %8407 = vdwg.mxu0
    %8408 = vmatpush.bf16.msra.mxu0 %v4399
    %8409 = vmatpush.bf16.msra.mxu0 %v4391
    %8410 = vmatpush.bf16.msra.mxu0 %v4383
    %8411 = vmatpush.bf16.msra.mxu0 %v4375
    %8412 = vmatpush.bf16.msra.mxu0 %v4367
    %8413 = vmatpush.bf16.msra.mxu0 %v4359
    %8414 = vmatpush.bf16.msra.mxu0 %v4351
    %8415 = vmatpush.bf16.msra.mxu0 %v4343
    %8416 = vmatmul.bf16.gmra.mxu0 %v8108
    %v8417 = vpop.f32.mrf.mxu0
    %v8418 = vadd.f32 %v8405, %v8417
    %v8419 = vpop.f32.mrf.mxu0
    %8420 = vdwg.mxu0
    %8421 = vmatpush.bf16.msra.mxu0 %v3952
    %8422 = vmatpush.bf16.msra.mxu0 %v3944
    %8423 = vmatpush.bf16.msra.mxu0 %v3936
    %8424 = vmatpush.bf16.msra.mxu0 %v3928
    %8425 = vmatpush.bf16.msra.mxu0 %v3920
    %8426 = vmatpush.bf16.msra.mxu0 %v3912
    %8427 = vmatpush.bf16.msra.mxu0 %v3904
    %8428 = vmatpush.bf16.msra.mxu0 %v3896
    %8429 = vmatmul.bf16.gmra.mxu0 %v8101
    %v8430 = vpop.f32.mrf.mxu0
    %v8431 = vadd.f32 %v1107, %v8430
    %v8432 = vpop.f32.mrf.mxu0
    %8433 = vdwg.mxu0
    %8434 = vmatpush.bf16.msra.mxu0 %v4016
    %8435 = vmatpush.bf16.msra.mxu0 %v4008
    %8436 = vmatpush.bf16.msra.mxu0 %v4000
    %8437 = vmatpush.bf16.msra.mxu0 %v3992
    %8438 = vmatpush.bf16.msra.mxu0 %v3984
    %8439 = vmatpush.bf16.msra.mxu0 %v3976
    %8440 = vmatpush.bf16.msra.mxu0 %v3968
    %8441 = vmatpush.bf16.msra.mxu0 %v3960
    %8442 = vmatmul.bf16.gmra.mxu0 %v8102
    %v8443 = vpop.f32.mrf.mxu0
    %v8444 = vadd.f32 %v8431, %v8443
    %v8445 = vpop.f32.mrf.mxu0
    %8446 = vdwg.mxu0
    %8447 = vmatpush.bf16.msra.mxu0 %v4080
    %8448 = vmatpush.bf16.msra.mxu0 %v4072
    %8449 = vmatpush.bf16.msra.mxu0 %v4064
    %8450 = vmatpush.bf16.msra.mxu0 %v4056
    %8451 = vmatpush.bf16.msra.mxu0 %v4048
    %8452 = vmatpush.bf16.msra.mxu0 %v4040
    %8453 = vmatpush.bf16.msra.mxu0 %v4032
    %8454 = vmatpush.bf16.msra.mxu0 %v4024
    %8455 = vmatmul.bf16.gmra.mxu0 %v8103
    %v8456 = vpop.f32.mrf.mxu0
    %v8457 = vadd.f32 %v8444, %v8456
    %v8458 = vpop.f32.mrf.mxu0
    %8459 = vdwg.mxu0
    %8460 = vmatpush.bf16.msra.mxu0 %v4144
    %8461 = vmatpush.bf16.msra.mxu0 %v4136
    %8462 = vmatpush.bf16.msra.mxu0 %v4128
    %8463 = vmatpush.bf16.msra.mxu0 %v4120
    %8464 = vmatpush.bf16.msra.mxu0 %v4112
    %8465 = vmatpush.bf16.msra.mxu0 %v4104
    %8466 = vmatpush.bf16.msra.mxu0 %v4096
    %8467 = vmatpush.bf16.msra.mxu0 %v4088
    %8468 = vmatmul.bf16.gmra.mxu0 %v8104
    %v8469 = vpop.f32.mrf.mxu0
    %v8470 = vadd.f32 %v8457, %v8469
    %v8471 = vpop.f32.mrf.mxu0
    %8472 = vdwg.mxu0
    %8473 = vmatpush.bf16.msra.mxu0 %v4208
    %8474 = vmatpush.bf16.msra.mxu0 %v4200
    %8475 = vmatpush.bf16.msra.mxu0 %v4192
    %8476 = vmatpush.bf16.msra.mxu0 %v4184
    %8477 = vmatpush.bf16.msra.mxu0 %v4176
    %8478 = vmatpush.bf16.msra.mxu0 %v4168
    %8479 = vmatpush.bf16.msra.mxu0 %v4160
    %8480 = vmatpush.bf16.msra.mxu0 %v4152
    %8481 = vmatmul.bf16.gmra.mxu0 %v8105
    %v8482 = vpop.f32.mrf.mxu0
    %v8483 = vadd.f32 %v8470, %v8482
    %v8484 = vpop.f32.mrf.mxu0
    %8485 = vdwg.mxu0
    %8486 = vmatpush.bf16.msra.mxu0 %v4272
    %8487 = vmatpush.bf16.msra.mxu0 %v4264
    %8488 = vmatpush.bf16.msra.mxu0 %v4256
    %8489 = vmatpush.bf16.msra.mxu0 %v4248
    %8490 = vmatpush.bf16.msra.mxu0 %v4240
    %8491 = vmatpush.bf16.msra.mxu0 %v4232
    %8492 = vmatpush.bf16.msra.mxu0 %v4224
    %8493 = vmatpush.bf16.msra.mxu0 %v4216
    %8494 = vmatmul.bf16.gmra.mxu0 %v8106
    %v8495 = vpop.f32.mrf.mxu0
    %v8496 = vadd.f32 %v8483, %v8495
    %v8497 = vpop.f32.mrf.mxu0
    %8498 = vdwg.mxu0
    %8499 = vmatpush.bf16.msra.mxu0 %v4336
    %8500 = vmatpush.bf16.msra.mxu0 %v4328
    %8501 = vmatpush.bf16.msra.mxu0 %v4320
    %8502 = vmatpush.bf16.msra.mxu0 %v4312
    %8503 = vmatpush.bf16.msra.mxu0 %v4304
    %8504 = vmatpush.bf16.msra.mxu0 %v4296
    %8505 = vmatpush.bf16.msra.mxu0 %v4288
    %8506 = vmatpush.bf16.msra.mxu0 %v4280
    %8507 = vmatmul.bf16.gmra.mxu0 %v8107
    %v8508 = vpop.f32.mrf.mxu0
    %v8509 = vadd.f32 %v8496, %v8508
    %v8510 = vpop.f32.mrf.mxu0
    %8511 = vdwg.mxu0
    %8512 = vmatpush.bf16.msra.mxu0 %v4400
    %8513 = vmatpush.bf16.msra.mxu0 %v4392
    %8514 = vmatpush.bf16.msra.mxu0 %v4384
    %8515 = vmatpush.bf16.msra.mxu0 %v4376
    %8516 = vmatpush.bf16.msra.mxu0 %v4368
    %8517 = vmatpush.bf16.msra.mxu0 %v4360
    %8518 = vmatpush.bf16.msra.mxu0 %v4352
    %8519 = vmatpush.bf16.msra.mxu0 %v4344
    %8520 = vmatmul.bf16.gmra.mxu0 %v8108
    %v8521 = vpop.f32.mrf.mxu0
    %v8522 = vadd.f32 %v8509, %v8521
    %v8523 = vpop.f32.mrf.mxu0
    %8524 = vdwg.mxu0
    %8525 = vmatpush.bf16.msra.mxu0 %v3953
    %8526 = vmatpush.bf16.msra.mxu0 %v3945
    %8527 = vmatpush.bf16.msra.mxu0 %v3937
    %8528 = vmatpush.bf16.msra.mxu0 %v3929
    %8529 = vmatpush.bf16.msra.mxu0 %v3921
    %8530 = vmatpush.bf16.msra.mxu0 %v3913
    %8531 = vmatpush.bf16.msra.mxu0 %v3905
    %8532 = vmatpush.bf16.msra.mxu0 %v3897
    %8533 = vmatmul.bf16.gmra.mxu0 %v8101
    %v8534 = vpop.f32.mrf.mxu0
    %v8535 = vadd.f32 %v1108, %v8534
    %v8536 = vpop.f32.mrf.mxu0
    %8537 = vdwg.mxu0
    %8538 = vmatpush.bf16.msra.mxu0 %v4017
    %8539 = vmatpush.bf16.msra.mxu0 %v4009
    %8540 = vmatpush.bf16.msra.mxu0 %v4001
    %8541 = vmatpush.bf16.msra.mxu0 %v3993
    %8542 = vmatpush.bf16.msra.mxu0 %v3985
    %8543 = vmatpush.bf16.msra.mxu0 %v3977
    %8544 = vmatpush.bf16.msra.mxu0 %v3969
    %8545 = vmatpush.bf16.msra.mxu0 %v3961
    %8546 = vmatmul.bf16.gmra.mxu0 %v8102
    %v8547 = vpop.f32.mrf.mxu0
    %v8548 = vadd.f32 %v8535, %v8547
    %v8549 = vpop.f32.mrf.mxu0
    %8550 = vdwg.mxu0
    %8551 = vmatpush.bf16.msra.mxu0 %v4081
    %8552 = vmatpush.bf16.msra.mxu0 %v4073
    %8553 = vmatpush.bf16.msra.mxu0 %v4065
    %8554 = vmatpush.bf16.msra.mxu0 %v4057
    %8555 = vmatpush.bf16.msra.mxu0 %v4049
    %8556 = vmatpush.bf16.msra.mxu0 %v4041
    %8557 = vmatpush.bf16.msra.mxu0 %v4033
    %8558 = vmatpush.bf16.msra.mxu0 %v4025
    %8559 = vmatmul.bf16.gmra.mxu0 %v8103
    %v8560 = vpop.f32.mrf.mxu0
    %v8561 = vadd.f32 %v8548, %v8560
    %v8562 = vpop.f32.mrf.mxu0
    %8563 = vdwg.mxu0
    %8564 = vmatpush.bf16.msra.mxu0 %v4145
    %8565 = vmatpush.bf16.msra.mxu0 %v4137
    %8566 = vmatpush.bf16.msra.mxu0 %v4129
    %8567 = vmatpush.bf16.msra.mxu0 %v4121
    %8568 = vmatpush.bf16.msra.mxu0 %v4113
    %8569 = vmatpush.bf16.msra.mxu0 %v4105
    %8570 = vmatpush.bf16.msra.mxu0 %v4097
    %8571 = vmatpush.bf16.msra.mxu0 %v4089
    %8572 = vmatmul.bf16.gmra.mxu0 %v8104
    %v8573 = vpop.f32.mrf.mxu0
    %v8574 = vadd.f32 %v8561, %v8573
    %v8575 = vpop.f32.mrf.mxu0
    %8576 = vdwg.mxu0
    %8577 = vmatpush.bf16.msra.mxu0 %v4209
    %8578 = vmatpush.bf16.msra.mxu0 %v4201
    %8579 = vmatpush.bf16.msra.mxu0 %v4193
    %8580 = vmatpush.bf16.msra.mxu0 %v4185
    %8581 = vmatpush.bf16.msra.mxu0 %v4177
    %8582 = vmatpush.bf16.msra.mxu0 %v4169
    %8583 = vmatpush.bf16.msra.mxu0 %v4161
    %8584 = vmatpush.bf16.msra.mxu0 %v4153
    %8585 = vmatmul.bf16.gmra.mxu0 %v8105
    %v8586 = vpop.f32.mrf.mxu0
    %v8587 = vadd.f32 %v8574, %v8586
    %v8588 = vpop.f32.mrf.mxu0
    %8589 = vdwg.mxu0
    %8590 = vmatpush.bf16.msra.mxu0 %v4273
    %8591 = vmatpush.bf16.msra.mxu0 %v4265
    %8592 = vmatpush.bf16.msra.mxu0 %v4257
    %8593 = vmatpush.bf16.msra.mxu0 %v4249
    %8594 = vmatpush.bf16.msra.mxu0 %v4241
    %8595 = vmatpush.bf16.msra.mxu0 %v4233
    %8596 = vmatpush.bf16.msra.mxu0 %v4225
    %8597 = vmatpush.bf16.msra.mxu0 %v4217
    %8598 = vmatmul.bf16.gmra.mxu0 %v8106
    %v8599 = vpop.f32.mrf.mxu0
    %v8600 = vadd.f32 %v8587, %v8599
    %v8601 = vpop.f32.mrf.mxu0
    %8602 = vdwg.mxu0
    %8603 = vmatpush.bf16.msra.mxu0 %v4337
    %8604 = vmatpush.bf16.msra.mxu0 %v4329
    %8605 = vmatpush.bf16.msra.mxu0 %v4321
    %8606 = vmatpush.bf16.msra.mxu0 %v4313
    %8607 = vmatpush.bf16.msra.mxu0 %v4305
    %8608 = vmatpush.bf16.msra.mxu0 %v4297
    %8609 = vmatpush.bf16.msra.mxu0 %v4289
    %8610 = vmatpush.bf16.msra.mxu0 %v4281
    %8611 = vmatmul.bf16.gmra.mxu0 %v8107
    %v8612 = vpop.f32.mrf.mxu0
    %v8613 = vadd.f32 %v8600, %v8612
    %v8614 = vpop.f32.mrf.mxu0
    %8615 = vdwg.mxu0
    %8616 = vmatpush.bf16.msra.mxu0 %v4401
    %8617 = vmatpush.bf16.msra.mxu0 %v4393
    %8618 = vmatpush.bf16.msra.mxu0 %v4385
    %8619 = vmatpush.bf16.msra.mxu0 %v4377
    %8620 = vmatpush.bf16.msra.mxu0 %v4369
    %8621 = vmatpush.bf16.msra.mxu0 %v4361
    %8622 = vmatpush.bf16.msra.mxu0 %v4353
    %8623 = vmatpush.bf16.msra.mxu0 %v4345
    %8624 = vmatmul.bf16.gmra.mxu0 %v8108
    %v8625 = vpop.f32.mrf.mxu0
    %v8626 = vadd.f32 %v8613, %v8625
    %v8627 = vpop.f32.mrf.mxu0
    %8628 = vdwg.mxu0
    %8629 = vmatpush.bf16.msra.mxu0 %v3954
    %8630 = vmatpush.bf16.msra.mxu0 %v3946
    %8631 = vmatpush.bf16.msra.mxu0 %v3938
    %8632 = vmatpush.bf16.msra.mxu0 %v3930
    %8633 = vmatpush.bf16.msra.mxu0 %v3922
    %8634 = vmatpush.bf16.msra.mxu0 %v3914
    %8635 = vmatpush.bf16.msra.mxu0 %v3906
    %8636 = vmatpush.bf16.msra.mxu0 %v3898
    %8637 = vmatmul.bf16.gmra.mxu0 %v8101
    %v8638 = vpop.f32.mrf.mxu0
    %v8639 = vadd.f32 %v1109, %v8638
    %v8640 = vpop.f32.mrf.mxu0
    %8641 = vdwg.mxu0
    %8642 = vmatpush.bf16.msra.mxu0 %v4018
    %8643 = vmatpush.bf16.msra.mxu0 %v4010
    %8644 = vmatpush.bf16.msra.mxu0 %v4002
    %8645 = vmatpush.bf16.msra.mxu0 %v3994
    %8646 = vmatpush.bf16.msra.mxu0 %v3986
    %8647 = vmatpush.bf16.msra.mxu0 %v3978
    %8648 = vmatpush.bf16.msra.mxu0 %v3970
    %8649 = vmatpush.bf16.msra.mxu0 %v3962
    %8650 = vmatmul.bf16.gmra.mxu0 %v8102
    %v8651 = vpop.f32.mrf.mxu0
    %v8652 = vadd.f32 %v8639, %v8651
    %v8653 = vpop.f32.mrf.mxu0
    %8654 = vdwg.mxu0
    %8655 = vmatpush.bf16.msra.mxu0 %v4082
    %8656 = vmatpush.bf16.msra.mxu0 %v4074
    %8657 = vmatpush.bf16.msra.mxu0 %v4066
    %8658 = vmatpush.bf16.msra.mxu0 %v4058
    %8659 = vmatpush.bf16.msra.mxu0 %v4050
    %8660 = vmatpush.bf16.msra.mxu0 %v4042
    %8661 = vmatpush.bf16.msra.mxu0 %v4034
    %8662 = vmatpush.bf16.msra.mxu0 %v4026
    %8663 = vmatmul.bf16.gmra.mxu0 %v8103
    %v8664 = vpop.f32.mrf.mxu0
    %v8665 = vadd.f32 %v8652, %v8664
    %v8666 = vpop.f32.mrf.mxu0
    %8667 = vdwg.mxu0
    %8668 = vmatpush.bf16.msra.mxu0 %v4146
    %8669 = vmatpush.bf16.msra.mxu0 %v4138
    %8670 = vmatpush.bf16.msra.mxu0 %v4130
    %8671 = vmatpush.bf16.msra.mxu0 %v4122
    %8672 = vmatpush.bf16.msra.mxu0 %v4114
    %8673 = vmatpush.bf16.msra.mxu0 %v4106
    %8674 = vmatpush.bf16.msra.mxu0 %v4098
    %8675 = vmatpush.bf16.msra.mxu0 %v4090
    %8676 = vmatmul.bf16.gmra.mxu0 %v8104
    %v8677 = vpop.f32.mrf.mxu0
    %v8678 = vadd.f32 %v8665, %v8677
    %v8679 = vpop.f32.mrf.mxu0
    %8680 = vdwg.mxu0
    %8681 = vmatpush.bf16.msra.mxu0 %v4210
    %8682 = vmatpush.bf16.msra.mxu0 %v4202
    %8683 = vmatpush.bf16.msra.mxu0 %v4194
    %8684 = vmatpush.bf16.msra.mxu0 %v4186
    %8685 = vmatpush.bf16.msra.mxu0 %v4178
    %8686 = vmatpush.bf16.msra.mxu0 %v4170
    %8687 = vmatpush.bf16.msra.mxu0 %v4162
    %8688 = vmatpush.bf16.msra.mxu0 %v4154
    %8689 = vmatmul.bf16.gmra.mxu0 %v8105
    %v8690 = vpop.f32.mrf.mxu0
    %v8691 = vadd.f32 %v8678, %v8690
    %v8692 = vpop.f32.mrf.mxu0
    %8693 = vdwg.mxu0
    %8694 = vmatpush.bf16.msra.mxu0 %v4274
    %8695 = vmatpush.bf16.msra.mxu0 %v4266
    %8696 = vmatpush.bf16.msra.mxu0 %v4258
    %8697 = vmatpush.bf16.msra.mxu0 %v4250
    %8698 = vmatpush.bf16.msra.mxu0 %v4242
    %8699 = vmatpush.bf16.msra.mxu0 %v4234
    %8700 = vmatpush.bf16.msra.mxu0 %v4226
    %8701 = vmatpush.bf16.msra.mxu0 %v4218
    %8702 = vmatmul.bf16.gmra.mxu0 %v8106
    %v8703 = vpop.f32.mrf.mxu0
    %v8704 = vadd.f32 %v8691, %v8703
    %v8705 = vpop.f32.mrf.mxu0
    %8706 = vdwg.mxu0
    %8707 = vmatpush.bf16.msra.mxu0 %v4338
    %8708 = vmatpush.bf16.msra.mxu0 %v4330
    %8709 = vmatpush.bf16.msra.mxu0 %v4322
    %8710 = vmatpush.bf16.msra.mxu0 %v4314
    %8711 = vmatpush.bf16.msra.mxu0 %v4306
    %8712 = vmatpush.bf16.msra.mxu0 %v4298
    %8713 = vmatpush.bf16.msra.mxu0 %v4290
    %8714 = vmatpush.bf16.msra.mxu0 %v4282
    %8715 = vmatmul.bf16.gmra.mxu0 %v8107
    %v8716 = vpop.f32.mrf.mxu0
    %v8717 = vadd.f32 %v8704, %v8716
    %v8718 = vpop.f32.mrf.mxu0
    %8719 = vdwg.mxu0
    %8720 = vmatpush.bf16.msra.mxu0 %v4402
    %8721 = vmatpush.bf16.msra.mxu0 %v4394
    %8722 = vmatpush.bf16.msra.mxu0 %v4386
    %8723 = vmatpush.bf16.msra.mxu0 %v4378
    %8724 = vmatpush.bf16.msra.mxu0 %v4370
    %8725 = vmatpush.bf16.msra.mxu0 %v4362
    %8726 = vmatpush.bf16.msra.mxu0 %v4354
    %8727 = vmatpush.bf16.msra.mxu0 %v4346
    %8728 = vmatmul.bf16.gmra.mxu0 %v8108
    %v8729 = vpop.f32.mrf.mxu0
    %v8730 = vadd.f32 %v8717, %v8729
    %v8731 = vpop.f32.mrf.mxu0
    %8732 = vdwg.mxu0
    %8733 = vmatpush.bf16.msra.mxu0 %v3955
    %8734 = vmatpush.bf16.msra.mxu0 %v3947
    %8735 = vmatpush.bf16.msra.mxu0 %v3939
    %8736 = vmatpush.bf16.msra.mxu0 %v3931
    %8737 = vmatpush.bf16.msra.mxu0 %v3923
    %8738 = vmatpush.bf16.msra.mxu0 %v3915
    %8739 = vmatpush.bf16.msra.mxu0 %v3907
    %8740 = vmatpush.bf16.msra.mxu0 %v3899
    %8741 = vmatmul.bf16.gmra.mxu0 %v8101
    %v8742 = vpop.f32.mrf.mxu0
    %v8743 = vadd.f32 %v1110, %v8742
    %v8744 = vpop.f32.mrf.mxu0
    %8745 = vdwg.mxu0
    %8746 = vmatpush.bf16.msra.mxu0 %v4019
    %8747 = vmatpush.bf16.msra.mxu0 %v4011
    %8748 = vmatpush.bf16.msra.mxu0 %v4003
    %8749 = vmatpush.bf16.msra.mxu0 %v3995
    %8750 = vmatpush.bf16.msra.mxu0 %v3987
    %8751 = vmatpush.bf16.msra.mxu0 %v3979
    %8752 = vmatpush.bf16.msra.mxu0 %v3971
    %8753 = vmatpush.bf16.msra.mxu0 %v3963
    %8754 = vmatmul.bf16.gmra.mxu0 %v8102
    %v8755 = vpop.f32.mrf.mxu0
    %v8756 = vadd.f32 %v8743, %v8755
    %v8757 = vpop.f32.mrf.mxu0
    %8758 = vdwg.mxu0
    %8759 = vmatpush.bf16.msra.mxu0 %v4083
    %8760 = vmatpush.bf16.msra.mxu0 %v4075
    %8761 = vmatpush.bf16.msra.mxu0 %v4067
    %8762 = vmatpush.bf16.msra.mxu0 %v4059
    %8763 = vmatpush.bf16.msra.mxu0 %v4051
    %8764 = vmatpush.bf16.msra.mxu0 %v4043
    %8765 = vmatpush.bf16.msra.mxu0 %v4035
    %8766 = vmatpush.bf16.msra.mxu0 %v4027
    %8767 = vmatmul.bf16.gmra.mxu0 %v8103
    %v8768 = vpop.f32.mrf.mxu0
    %v8769 = vadd.f32 %v8756, %v8768
    %v8770 = vpop.f32.mrf.mxu0
    %8771 = vdwg.mxu0
    %8772 = vmatpush.bf16.msra.mxu0 %v4147
    %8773 = vmatpush.bf16.msra.mxu0 %v4139
    %8774 = vmatpush.bf16.msra.mxu0 %v4131
    %8775 = vmatpush.bf16.msra.mxu0 %v4123
    %8776 = vmatpush.bf16.msra.mxu0 %v4115
    %8777 = vmatpush.bf16.msra.mxu0 %v4107
    %8778 = vmatpush.bf16.msra.mxu0 %v4099
    %8779 = vmatpush.bf16.msra.mxu0 %v4091
    %8780 = vmatmul.bf16.gmra.mxu0 %v8104
    %v8781 = vpop.f32.mrf.mxu0
    %v8782 = vadd.f32 %v8769, %v8781
    %v8783 = vpop.f32.mrf.mxu0
    %8784 = vdwg.mxu0
    %8785 = vmatpush.bf16.msra.mxu0 %v4211
    %8786 = vmatpush.bf16.msra.mxu0 %v4203
    %8787 = vmatpush.bf16.msra.mxu0 %v4195
    %8788 = vmatpush.bf16.msra.mxu0 %v4187
    %8789 = vmatpush.bf16.msra.mxu0 %v4179
    %8790 = vmatpush.bf16.msra.mxu0 %v4171
    %8791 = vmatpush.bf16.msra.mxu0 %v4163
    %8792 = vmatpush.bf16.msra.mxu0 %v4155
    %8793 = vmatmul.bf16.gmra.mxu0 %v8105
    %v8794 = vpop.f32.mrf.mxu0
    %v8795 = vadd.f32 %v8782, %v8794
    %v8796 = vpop.f32.mrf.mxu0
    %8797 = vdwg.mxu0
    %8798 = vmatpush.bf16.msra.mxu0 %v4275
    %8799 = vmatpush.bf16.msra.mxu0 %v4267
    %8800 = vmatpush.bf16.msra.mxu0 %v4259
    %8801 = vmatpush.bf16.msra.mxu0 %v4251
    %8802 = vmatpush.bf16.msra.mxu0 %v4243
    %8803 = vmatpush.bf16.msra.mxu0 %v4235
    %8804 = vmatpush.bf16.msra.mxu0 %v4227
    %8805 = vmatpush.bf16.msra.mxu0 %v4219
    %8806 = vmatmul.bf16.gmra.mxu0 %v8106
    %v8807 = vpop.f32.mrf.mxu0
    %v8808 = vadd.f32 %v8795, %v8807
    %v8809 = vpop.f32.mrf.mxu0
    %8810 = vdwg.mxu0
    %8811 = vmatpush.bf16.msra.mxu0 %v4339
    %8812 = vmatpush.bf16.msra.mxu0 %v4331
    %8813 = vmatpush.bf16.msra.mxu0 %v4323
    %8814 = vmatpush.bf16.msra.mxu0 %v4315
    %8815 = vmatpush.bf16.msra.mxu0 %v4307
    %8816 = vmatpush.bf16.msra.mxu0 %v4299
    %8817 = vmatpush.bf16.msra.mxu0 %v4291
    %8818 = vmatpush.bf16.msra.mxu0 %v4283
    %8819 = vmatmul.bf16.gmra.mxu0 %v8107
    %v8820 = vpop.f32.mrf.mxu0
    %v8821 = vadd.f32 %v8808, %v8820
    %v8822 = vpop.f32.mrf.mxu0
    %8823 = vdwg.mxu0
    %8824 = vmatpush.bf16.msra.mxu0 %v4403
    %8825 = vmatpush.bf16.msra.mxu0 %v4395
    %8826 = vmatpush.bf16.msra.mxu0 %v4387
    %8827 = vmatpush.bf16.msra.mxu0 %v4379
    %8828 = vmatpush.bf16.msra.mxu0 %v4371
    %8829 = vmatpush.bf16.msra.mxu0 %v4363
    %8830 = vmatpush.bf16.msra.mxu0 %v4355
    %8831 = vmatpush.bf16.msra.mxu0 %v4347
    %8832 = vmatmul.bf16.gmra.mxu0 %v8108
    %v8833 = vpop.f32.mrf.mxu0
    %v8834 = vadd.f32 %v8821, %v8833
    %v8835 = vpop.f32.mrf.mxu0
    %8836 = vdwg.mxu0
    %8837 = vmatpush.bf16.msra.mxu0 %v3956
    %8838 = vmatpush.bf16.msra.mxu0 %v3948
    %8839 = vmatpush.bf16.msra.mxu0 %v3940
    %8840 = vmatpush.bf16.msra.mxu0 %v3932
    %8841 = vmatpush.bf16.msra.mxu0 %v3924
    %8842 = vmatpush.bf16.msra.mxu0 %v3916
    %8843 = vmatpush.bf16.msra.mxu0 %v3908
    %8844 = vmatpush.bf16.msra.mxu0 %v3900
    %8845 = vmatmul.bf16.gmra.mxu0 %v8101
    %v8846 = vpop.f32.mrf.mxu0
    %v8847 = vadd.f32 %v1111, %v8846
    %v8848 = vpop.f32.mrf.mxu0
    %8849 = vdwg.mxu0
    %8850 = vmatpush.bf16.msra.mxu0 %v4020
    %8851 = vmatpush.bf16.msra.mxu0 %v4012
    %8852 = vmatpush.bf16.msra.mxu0 %v4004
    %8853 = vmatpush.bf16.msra.mxu0 %v3996
    %8854 = vmatpush.bf16.msra.mxu0 %v3988
    %8855 = vmatpush.bf16.msra.mxu0 %v3980
    %8856 = vmatpush.bf16.msra.mxu0 %v3972
    %8857 = vmatpush.bf16.msra.mxu0 %v3964
    %8858 = vmatmul.bf16.gmra.mxu0 %v8102
    %v8859 = vpop.f32.mrf.mxu0
    %v8860 = vadd.f32 %v8847, %v8859
    %v8861 = vpop.f32.mrf.mxu0
    %8862 = vdwg.mxu0
    %8863 = vmatpush.bf16.msra.mxu0 %v4084
    %8864 = vmatpush.bf16.msra.mxu0 %v4076
    %8865 = vmatpush.bf16.msra.mxu0 %v4068
    %8866 = vmatpush.bf16.msra.mxu0 %v4060
    %8867 = vmatpush.bf16.msra.mxu0 %v4052
    %8868 = vmatpush.bf16.msra.mxu0 %v4044
    %8869 = vmatpush.bf16.msra.mxu0 %v4036
    %8870 = vmatpush.bf16.msra.mxu0 %v4028
    %8871 = vmatmul.bf16.gmra.mxu0 %v8103
    %v8872 = vpop.f32.mrf.mxu0
    %v8873 = vadd.f32 %v8860, %v8872
    %v8874 = vpop.f32.mrf.mxu0
    %8875 = vdwg.mxu0
    %8876 = vmatpush.bf16.msra.mxu0 %v4148
    %8877 = vmatpush.bf16.msra.mxu0 %v4140
    %8878 = vmatpush.bf16.msra.mxu0 %v4132
    %8879 = vmatpush.bf16.msra.mxu0 %v4124
    %8880 = vmatpush.bf16.msra.mxu0 %v4116
    %8881 = vmatpush.bf16.msra.mxu0 %v4108
    %8882 = vmatpush.bf16.msra.mxu0 %v4100
    %8883 = vmatpush.bf16.msra.mxu0 %v4092
    %8884 = vmatmul.bf16.gmra.mxu0 %v8104
    %v8885 = vpop.f32.mrf.mxu0
    %v8886 = vadd.f32 %v8873, %v8885
    %v8887 = vpop.f32.mrf.mxu0
    %8888 = vdwg.mxu0
    %8889 = vmatpush.bf16.msra.mxu0 %v4212
    %8890 = vmatpush.bf16.msra.mxu0 %v4204
    %8891 = vmatpush.bf16.msra.mxu0 %v4196
    %8892 = vmatpush.bf16.msra.mxu0 %v4188
    %8893 = vmatpush.bf16.msra.mxu0 %v4180
    %8894 = vmatpush.bf16.msra.mxu0 %v4172
    %8895 = vmatpush.bf16.msra.mxu0 %v4164
    %8896 = vmatpush.bf16.msra.mxu0 %v4156
    %8897 = vmatmul.bf16.gmra.mxu0 %v8105
    %v8898 = vpop.f32.mrf.mxu0
    %v8899 = vadd.f32 %v8886, %v8898
    %v8900 = vpop.f32.mrf.mxu0
    %8901 = vdwg.mxu0
    %8902 = vmatpush.bf16.msra.mxu0 %v4276
    %8903 = vmatpush.bf16.msra.mxu0 %v4268
    %8904 = vmatpush.bf16.msra.mxu0 %v4260
    %8905 = vmatpush.bf16.msra.mxu0 %v4252
    %8906 = vmatpush.bf16.msra.mxu0 %v4244
    %8907 = vmatpush.bf16.msra.mxu0 %v4236
    %8908 = vmatpush.bf16.msra.mxu0 %v4228
    %8909 = vmatpush.bf16.msra.mxu0 %v4220
    %8910 = vmatmul.bf16.gmra.mxu0 %v8106
    %v8911 = vpop.f32.mrf.mxu0
    %v8912 = vadd.f32 %v8899, %v8911
    %v8913 = vpop.f32.mrf.mxu0
    %8914 = vdwg.mxu0
    %8915 = vmatpush.bf16.msra.mxu0 %v4340
    %8916 = vmatpush.bf16.msra.mxu0 %v4332
    %8917 = vmatpush.bf16.msra.mxu0 %v4324
    %8918 = vmatpush.bf16.msra.mxu0 %v4316
    %8919 = vmatpush.bf16.msra.mxu0 %v4308
    %8920 = vmatpush.bf16.msra.mxu0 %v4300
    %8921 = vmatpush.bf16.msra.mxu0 %v4292
    %8922 = vmatpush.bf16.msra.mxu0 %v4284
    %8923 = vmatmul.bf16.gmra.mxu0 %v8107
    %v8924 = vpop.f32.mrf.mxu0
    %v8925 = vadd.f32 %v8912, %v8924
    %v8926 = vpop.f32.mrf.mxu0
    %8927 = vdwg.mxu0
    %8928 = vmatpush.bf16.msra.mxu0 %v4404
    %8929 = vmatpush.bf16.msra.mxu0 %v4396
    %8930 = vmatpush.bf16.msra.mxu0 %v4388
    %8931 = vmatpush.bf16.msra.mxu0 %v4380
    %8932 = vmatpush.bf16.msra.mxu0 %v4372
    %8933 = vmatpush.bf16.msra.mxu0 %v4364
    %8934 = vmatpush.bf16.msra.mxu0 %v4356
    %8935 = vmatpush.bf16.msra.mxu0 %v4348
    %8936 = vmatmul.bf16.gmra.mxu0 %v8108
    %v8937 = vpop.f32.mrf.mxu0
    %v8938 = vadd.f32 %v8925, %v8937
    %v8939 = vpop.f32.mrf.mxu0
    %8940 = vdwg.mxu0
    %v8941 = vpack.c.bf16 %v8210, %v8210
    %v8942 = vpack.c.bf16 %v8314, %v8314
    %v8943 = vpack.c.bf16 %v8418, %v8418
    %v8944 = vpack.c.bf16 %v8522, %v8522
    %v8945 = vpack.c.bf16 %v8626, %v8626
    %v8946 = vpack.c.bf16 %v8730, %v8730
    %v8947 = vpack.c.bf16 %v8834, %v8834
    %v8948 = vpack.c.bf16 %v8938, %v8938
    %8949 = vmatpush.bf16.msra.mxu0 %v6155
    %8950 = vmatpush.bf16.msra.mxu0 %v6153
    %8951 = vmatpush.bf16.msra.mxu0 %v6151
    %8952 = vmatpush.bf16.msra.mxu0 %v6149
    %8953 = vmatpush.bf16.msra.mxu0 %v6147
    %8954 = vmatpush.bf16.msra.mxu0 %v6145
    %8955 = vmatpush.bf16.msra.mxu0 %v6143
    %8956 = vmatpush.bf16.msra.mxu0 %v6141
    %8957 = vmatmul.bf16.gmra.mxu0 %v8941
    %v8958 = vpop.f32.mrf.mxu0
    %v8959 = vadd.f32 %v1122, %v8958
    %v8960 = vpop.f32.mrf.mxu0
    %8961 = vdwg.mxu0
    %8962 = vmatpush.bf16.msra.mxu0 %v6171
    %8963 = vmatpush.bf16.msra.mxu0 %v6169
    %8964 = vmatpush.bf16.msra.mxu0 %v6167
    %8965 = vmatpush.bf16.msra.mxu0 %v6165
    %8966 = vmatpush.bf16.msra.mxu0 %v6163
    %8967 = vmatpush.bf16.msra.mxu0 %v6161
    %8968 = vmatpush.bf16.msra.mxu0 %v6159
    %8969 = vmatpush.bf16.msra.mxu0 %v6157
    %8970 = vmatmul.bf16.gmra.mxu0 %v8942
    %v8971 = vpop.f32.mrf.mxu0
    %v8972 = vadd.f32 %v8959, %v8971
    %v8973 = vpop.f32.mrf.mxu0
    %8974 = vdwg.mxu0
    %8975 = vmatpush.bf16.msra.mxu0 %v6187
    %8976 = vmatpush.bf16.msra.mxu0 %v6185
    %8977 = vmatpush.bf16.msra.mxu0 %v6183
    %8978 = vmatpush.bf16.msra.mxu0 %v6181
    %8979 = vmatpush.bf16.msra.mxu0 %v6179
    %8980 = vmatpush.bf16.msra.mxu0 %v6177
    %8981 = vmatpush.bf16.msra.mxu0 %v6175
    %8982 = vmatpush.bf16.msra.mxu0 %v6173
    %8983 = vmatmul.bf16.gmra.mxu0 %v8943
    %v8984 = vpop.f32.mrf.mxu0
    %v8985 = vadd.f32 %v8972, %v8984
    %v8986 = vpop.f32.mrf.mxu0
    %8987 = vdwg.mxu0
    %8988 = vmatpush.bf16.msra.mxu0 %v6203
    %8989 = vmatpush.bf16.msra.mxu0 %v6201
    %8990 = vmatpush.bf16.msra.mxu0 %v6199
    %8991 = vmatpush.bf16.msra.mxu0 %v6197
    %8992 = vmatpush.bf16.msra.mxu0 %v6195
    %8993 = vmatpush.bf16.msra.mxu0 %v6193
    %8994 = vmatpush.bf16.msra.mxu0 %v6191
    %8995 = vmatpush.bf16.msra.mxu0 %v6189
    %8996 = vmatmul.bf16.gmra.mxu0 %v8944
    %v8997 = vpop.f32.mrf.mxu0
    %v8998 = vadd.f32 %v8985, %v8997
    %v8999 = vpop.f32.mrf.mxu0
    %9000 = vdwg.mxu0
    %9001 = vmatpush.bf16.msra.mxu0 %v6219
    %9002 = vmatpush.bf16.msra.mxu0 %v6217
    %9003 = vmatpush.bf16.msra.mxu0 %v6215
    %9004 = vmatpush.bf16.msra.mxu0 %v6213
    %9005 = vmatpush.bf16.msra.mxu0 %v6211
    %9006 = vmatpush.bf16.msra.mxu0 %v6209
    %9007 = vmatpush.bf16.msra.mxu0 %v6207
    %9008 = vmatpush.bf16.msra.mxu0 %v6205
    %9009 = vmatmul.bf16.gmra.mxu0 %v8945
    %v9010 = vpop.f32.mrf.mxu0
    %v9011 = vadd.f32 %v8998, %v9010
    %v9012 = vpop.f32.mrf.mxu0
    %9013 = vdwg.mxu0
    %9014 = vmatpush.bf16.msra.mxu0 %v6235
    %9015 = vmatpush.bf16.msra.mxu0 %v6233
    %9016 = vmatpush.bf16.msra.mxu0 %v6231
    %9017 = vmatpush.bf16.msra.mxu0 %v6229
    %9018 = vmatpush.bf16.msra.mxu0 %v6227
    %9019 = vmatpush.bf16.msra.mxu0 %v6225
    %9020 = vmatpush.bf16.msra.mxu0 %v6223
    %9021 = vmatpush.bf16.msra.mxu0 %v6221
    %9022 = vmatmul.bf16.gmra.mxu0 %v8946
    %v9023 = vpop.f32.mrf.mxu0
    %v9024 = vadd.f32 %v9011, %v9023
    %v9025 = vpop.f32.mrf.mxu0
    %9026 = vdwg.mxu0
    %9027 = vmatpush.bf16.msra.mxu0 %v6251
    %9028 = vmatpush.bf16.msra.mxu0 %v6249
    %9029 = vmatpush.bf16.msra.mxu0 %v6247
    %9030 = vmatpush.bf16.msra.mxu0 %v6245
    %9031 = vmatpush.bf16.msra.mxu0 %v6243
    %9032 = vmatpush.bf16.msra.mxu0 %v6241
    %9033 = vmatpush.bf16.msra.mxu0 %v6239
    %9034 = vmatpush.bf16.msra.mxu0 %v6237
    %9035 = vmatmul.bf16.gmra.mxu0 %v8947
    %v9036 = vpop.f32.mrf.mxu0
    %v9037 = vadd.f32 %v9024, %v9036
    %v9038 = vpop.f32.mrf.mxu0
    %9039 = vdwg.mxu0
    %9040 = vmatpush.bf16.msra.mxu0 %v6267
    %9041 = vmatpush.bf16.msra.mxu0 %v6265
    %9042 = vmatpush.bf16.msra.mxu0 %v6263
    %9043 = vmatpush.bf16.msra.mxu0 %v6261
    %9044 = vmatpush.bf16.msra.mxu0 %v6259
    %9045 = vmatpush.bf16.msra.mxu0 %v6257
    %9046 = vmatpush.bf16.msra.mxu0 %v6255
    %9047 = vmatpush.bf16.msra.mxu0 %v6253
    %9048 = vmatmul.bf16.gmra.mxu0 %v8948
    %v9049 = vpop.f32.mrf.mxu0
    %v9050 = vadd.f32 %v9037, %v9049
    %v9051 = vpop.f32.mrf.mxu0
    %9052 = vdwg.mxu0
    %9053 = vmatpush.bf16.msra.mxu0 %v6156
    %9054 = vmatpush.bf16.msra.mxu0 %v6154
    %9055 = vmatpush.bf16.msra.mxu0 %v6152
    %9056 = vmatpush.bf16.msra.mxu0 %v6150
    %9057 = vmatpush.bf16.msra.mxu0 %v6148
    %9058 = vmatpush.bf16.msra.mxu0 %v6146
    %9059 = vmatpush.bf16.msra.mxu0 %v6144
    %9060 = vmatpush.bf16.msra.mxu0 %v6142
    %9061 = vmatmul.bf16.gmra.mxu0 %v8941
    %v9062 = vpop.f32.mrf.mxu0
    %v9063 = vadd.f32 %v1123, %v9062
    %v9064 = vpop.f32.mrf.mxu0
    %9065 = vdwg.mxu0
    %9066 = vmatpush.bf16.msra.mxu0 %v6172
    %9067 = vmatpush.bf16.msra.mxu0 %v6170
    %9068 = vmatpush.bf16.msra.mxu0 %v6168
    %9069 = vmatpush.bf16.msra.mxu0 %v6166
    %9070 = vmatpush.bf16.msra.mxu0 %v6164
    %9071 = vmatpush.bf16.msra.mxu0 %v6162
    %9072 = vmatpush.bf16.msra.mxu0 %v6160
    %9073 = vmatpush.bf16.msra.mxu0 %v6158
    %9074 = vmatmul.bf16.gmra.mxu0 %v8942
    %v9075 = vpop.f32.mrf.mxu0
    %v9076 = vadd.f32 %v9063, %v9075
    %v9077 = vpop.f32.mrf.mxu0
    %9078 = vdwg.mxu0
    %9079 = vmatpush.bf16.msra.mxu0 %v6188
    %9080 = vmatpush.bf16.msra.mxu0 %v6186
    %9081 = vmatpush.bf16.msra.mxu0 %v6184
    %9082 = vmatpush.bf16.msra.mxu0 %v6182
    %9083 = vmatpush.bf16.msra.mxu0 %v6180
    %9084 = vmatpush.bf16.msra.mxu0 %v6178
    %9085 = vmatpush.bf16.msra.mxu0 %v6176
    %9086 = vmatpush.bf16.msra.mxu0 %v6174
    %9087 = vmatmul.bf16.gmra.mxu0 %v8943
    %v9088 = vpop.f32.mrf.mxu0
    %v9089 = vadd.f32 %v9076, %v9088
    %v9090 = vpop.f32.mrf.mxu0
    %9091 = vdwg.mxu0
    %9092 = vmatpush.bf16.msra.mxu0 %v6204
    %9093 = vmatpush.bf16.msra.mxu0 %v6202
    %9094 = vmatpush.bf16.msra.mxu0 %v6200
    %9095 = vmatpush.bf16.msra.mxu0 %v6198
    %9096 = vmatpush.bf16.msra.mxu0 %v6196
    %9097 = vmatpush.bf16.msra.mxu0 %v6194
    %9098 = vmatpush.bf16.msra.mxu0 %v6192
    %9099 = vmatpush.bf16.msra.mxu0 %v6190
    %9100 = vmatmul.bf16.gmra.mxu0 %v8944
    %v9101 = vpop.f32.mrf.mxu0
    %v9102 = vadd.f32 %v9089, %v9101
    %v9103 = vpop.f32.mrf.mxu0
    %9104 = vdwg.mxu0
    %9105 = vmatpush.bf16.msra.mxu0 %v6220
    %9106 = vmatpush.bf16.msra.mxu0 %v6218
    %9107 = vmatpush.bf16.msra.mxu0 %v6216
    %9108 = vmatpush.bf16.msra.mxu0 %v6214
    %9109 = vmatpush.bf16.msra.mxu0 %v6212
    %9110 = vmatpush.bf16.msra.mxu0 %v6210
    %9111 = vmatpush.bf16.msra.mxu0 %v6208
    %9112 = vmatpush.bf16.msra.mxu0 %v6206
    %9113 = vmatmul.bf16.gmra.mxu0 %v8945
    %v9114 = vpop.f32.mrf.mxu0
    %v9115 = vadd.f32 %v9102, %v9114
    %v9116 = vpop.f32.mrf.mxu0
    %9117 = vdwg.mxu0
    %9118 = vmatpush.bf16.msra.mxu0 %v6236
    %9119 = vmatpush.bf16.msra.mxu0 %v6234
    %9120 = vmatpush.bf16.msra.mxu0 %v6232
    %9121 = vmatpush.bf16.msra.mxu0 %v6230
    %9122 = vmatpush.bf16.msra.mxu0 %v6228
    %9123 = vmatpush.bf16.msra.mxu0 %v6226
    %9124 = vmatpush.bf16.msra.mxu0 %v6224
    %9125 = vmatpush.bf16.msra.mxu0 %v6222
    %9126 = vmatmul.bf16.gmra.mxu0 %v8946
    %v9127 = vpop.f32.mrf.mxu0
    %v9128 = vadd.f32 %v9115, %v9127
    %v9129 = vpop.f32.mrf.mxu0
    %9130 = vdwg.mxu0
    %9131 = vmatpush.bf16.msra.mxu0 %v6252
    %9132 = vmatpush.bf16.msra.mxu0 %v6250
    %9133 = vmatpush.bf16.msra.mxu0 %v6248
    %9134 = vmatpush.bf16.msra.mxu0 %v6246
    %9135 = vmatpush.bf16.msra.mxu0 %v6244
    %9136 = vmatpush.bf16.msra.mxu0 %v6242
    %9137 = vmatpush.bf16.msra.mxu0 %v6240
    %9138 = vmatpush.bf16.msra.mxu0 %v6238
    %9139 = vmatmul.bf16.gmra.mxu0 %v8947
    %v9140 = vpop.f32.mrf.mxu0
    %v9141 = vadd.f32 %v9128, %v9140
    %v9142 = vpop.f32.mrf.mxu0
    %9143 = vdwg.mxu0
    %9144 = vmatpush.bf16.msra.mxu0 %v6268
    %9145 = vmatpush.bf16.msra.mxu0 %v6266
    %9146 = vmatpush.bf16.msra.mxu0 %v6264
    %9147 = vmatpush.bf16.msra.mxu0 %v6262
    %9148 = vmatpush.bf16.msra.mxu0 %v6260
    %9149 = vmatpush.bf16.msra.mxu0 %v6258
    %9150 = vmatpush.bf16.msra.mxu0 %v6256
    %9151 = vmatpush.bf16.msra.mxu0 %v6254
    %9152 = vmatmul.bf16.gmra.mxu0 %v8948
    %v9153 = vpop.f32.mrf.mxu0
    %v9154 = vadd.f32 %v9141, %v9153
    %v9155 = vpop.f32.mrf.mxu0
    %9156 = vdwg.mxu0
    %v9157 = vadd.f32 %v7881, %v9050
    %v9158 = vadd.f32 %v7882, %v9154
    %v9191 = vperm.slane %v300, %v1225
    %v9192 = vperm.slane %v301, %v1227
    %v9193 = vsel %vm1229, %v9192, %v9191
    %v9194 = vperm.slane %v302, %v1231
    %v9195 = vsel %vm1233, %v9194, %v9193
    %v9196 = vperm.slane %v303, %v1235
    %v9197 = vsel %vm1237, %v9196, %v9195
    %v9198 = vperm.slane %v304, %v1225
    %v9199 = vperm.slane %v305, %v1227
    %v9200 = vsel %vm1229, %v9199, %v9198
    %v9201 = vperm.slane %v306, %v1231
    %v9202 = vsel %vm1233, %v9201, %v9200
    %v9203 = vperm.slane %v307, %v1235
    %v9204 = vsel %vm1237, %v9203, %v9202
    %v9205 = vperm.slane %v308, %v1225
    %v9206 = vperm.slane %v309, %v1227
    %v9207 = vsel %vm1229, %v9206, %v9205
    %v9208 = vperm.slane %v310, %v1231
    %v9209 = vsel %vm1233, %v9208, %v9207
    %v9210 = vperm.slane %v311, %v1235
    %v9211 = vsel %vm1237, %v9210, %v9209
    %v9212 = vperm.slane %v312, %v1225
    %v9213 = vperm.slane %v313, %v1227
    %v9214 = vsel %vm1229, %v9213, %v9212
    %v9215 = vperm.slane %v314, %v1231
    %v9216 = vsel %vm1233, %v9215, %v9214
    %v9217 = vperm.slane %v315, %v1235
    %v9218 = vsel %vm1237, %v9217, %v9216
    %v9219 = vperm.slane %v316, %v1225
    %v9220 = vperm.slane %v317, %v1227
    %v9221 = vsel %vm1229, %v9220, %v9219
    %v9222 = vperm.slane %v318, %v1231
    %v9223 = vsel %vm1233, %v9222, %v9221
    %v9224 = vperm.slane %v319, %v1235
    %v9225 = vsel %vm1237, %v9224, %v9223
    %v9226 = vperm.slane %v320, %v1225
    %v9227 = vperm.slane %v321, %v1227
    %v9228 = vsel %vm1229, %v9227, %v9226
    %v9229 = vperm.slane %v322, %v1231
    %v9230 = vsel %vm1233, %v9229, %v9228
    %v9231 = vperm.slane %v323, %v1235
    %v9232 = vsel %vm1237, %v9231, %v9230
    %v9233 = vperm.slane %v324, %v1225
    %v9234 = vperm.slane %v325, %v1227
    %v9235 = vsel %vm1229, %v9234, %v9233
    %v9236 = vperm.slane %v326, %v1231
    %v9237 = vsel %vm1233, %v9236, %v9235
    %v9238 = vperm.slane %v327, %v1235
    %v9239 = vsel %vm1237, %v9238, %v9237
    %v9240 = vperm.slane %v328, %v1225
    %v9241 = vperm.slane %v329, %v1227
    %v9242 = vsel %vm1229, %v9241, %v9240
    %v9243 = vperm.slane %v330, %v1231
    %v9244 = vsel %vm1233, %v9243, %v9242
    %v9245 = vperm.slane %v331, %v1235
    %v9246 = vsel %vm1237, %v9245, %v9244
    %v9247 = vsel %vm1288, %v9204, %v9197
    %v9248 = vsel %vm1290, %v9211, %v9247
    %v9249 = vsel %vm1292, %v9218, %v9248
    %v9250 = vsel %vm1294, %v9225, %v9249
    %v9251 = vsel %vm1296, %v9232, %v9250
    %v9252 = vsel %vm1298, %v9239, %v9251
    %v9253 = vsel %vm1300, %v9246, %v9252
    %9255 = vst.msk [vmem:[%s9] sm:$0xff] %vm1383, %v9253
    %9256 = vst [vmem:[%s10] sm:$0xff] %v9157
    %9257 = vst [vmem:[%s10 + $0x8] sm:$0xff] %v9158
    %9258 = vst [vmem:[%s11] sm:$0xff] %v8210
    %9259 = vst [vmem:[%s11 + $0x8] sm:$0xff] %v8314
    %9260 = vst [vmem:[%s11 + $0x10] sm:$0xff] %v8418
    %9261 = vst [vmem:[%s11 + $0x18] sm:$0xff] %v8522
    %9262 = vst [vmem:[%s11 + $0x20] sm:$0xff] %v8626
    %9263 = vst [vmem:[%s11 + $0x28] sm:$0xff] %v8730
    %9264 = vst [vmem:[%s11 + $0x30] sm:$0xff] %v8834
    %9265 = vst [vmem:[%s11 + $0x38] sm:$0xff] %v8938
    // Predicated region
    $region66: #{cliff_head_forward.1} parent=1 // pred_check
      _
    $region67: #{cliff_head_forward.1} parent=1 // pred_check_branch
      %9267 = sbr.rel (0) target = $region69
    $region68: #{cliff_head_forward.1} parent=1 // pred_region
      _
    $region69: #{cliff_head_forward.1} parent=1 // pred_fallthru
      _
    // Predicated region
    $region70: #{cliff_head_forward.1} parent=1 // pred_check
      _
    $region71: #{cliff_head_forward.1} parent=1 // pred_check_branch
      %9269 = sbr.rel (0) target = $region73
    $region72: #{cliff_head_forward.1} parent=1 // pred_region
      _
    $region73: #{cliff_head_forward.1} parent=1 // pred_fallthru
      _
    // Predicated region
    $region74: #{cliff_head_forward.1} parent=1 // pred_check
      _
    $region75: #{cliff_head_forward.1} parent=1 // pred_check_branch
      %9271 = sbr.rel (0) target = $region77
    $region76: #{cliff_head_forward.1} parent=1 // pred_region
      _
    $region77: #{cliff_head_forward.1} parent=1 // pred_fallthru
      _
    // Predicated region
    $region78: #{cliff_head_forward.1} parent=1 // pred_check
      _
    $region79: #{cliff_head_forward.1} parent=1 // pred_check_branch
      %9273 = sbr.rel (0) target = $region81
    $region80: #{cliff_head_forward.1} parent=1 // pred_region
      _
    $region81: #{cliff_head_forward.1} parent=1 // pred_fallthru
      _
    // Predicated region
    $region82: #{cliff_head_forward.1} parent=1 // pred_check
      _
    $region83: #{cliff_head_forward.1} parent=1 // pred_check_branch
      %9275 = sbr.rel (0) target = $region85
    $region84: #{cliff_head_forward.1} parent=1 // pred_region
      _
    $region85: #{cliff_head_forward.1} parent=1 // pred_fallthru
      _
    // Predicated region
    $region86: #{cliff_head_forward.1} parent=1 // pred_check
      _
    $region87: #{cliff_head_forward.1} parent=1 // pred_check_branch
      %9277 = sbr.rel (0) target = $region89
    $region88: #{cliff_head_forward.1} parent=1 // pred_region
      _
    $region89: #{cliff_head_forward.1} parent=1 // pred_fallthru
      _
    %9278 = vsyncpa [#allocation3], 1
    %9279 = vsyncpa [#allocation5], 1
    %9280 = vsyncpa [#allocation8], 1
    %9281 = vsyncpa [#allocation11], 1

</llo_original>
